<compile_context>
chip_gen: v5e
topology: v5e:2x2
jax: 0.10.0
libtpu: 0.0.40
codegen_flags: <defaults>
</compile_context>

<pallas_src>
import numpy as np
import jax
import jax.numpy as jnp
from jax import lax
from jax.experimental import pallas as pl
from jax.experimental.pallas import tpu as pltpu

BN_EPS = 1e-5
LRELU_SLOPE = 0.2
LANE = 128   # lane width / MXU-friendly padding target
SUB = 8      # f32 sublane tile


def _layer_cfg(img_channels):
    # (c_in, c_out, kernel, stride, padding) — matches the PyTorch Discriminator.
    return (
        (img_channels, 16, 4, 2, 1),
        (16, 32, 4, 2, 1),
        (32, 64, 3, 2, 0),
        (64, 1, 3, 1, 0),
    )


def _round_up(x, m):
    return -(-x // m) * m


# ---------------------------------------------------------------------------
# In-kernel building blocks (operate on VMEM-resident values only)
# ---------------------------------------------------------------------------
def _bn_lrelu(y, gamma, beta, n_real):
    """Training-mode BatchNorm2d + LeakyReLU(0.2) on a (P_pad, 128) f32 slab.

    Rows >= n_real are exact-zero alignment padding (zero gather rows); they are
    masked out of the variance and their post-BN garbage is never selected by the
    next layer's gather matrices.  Padded lanes stay zero because gamma/beta are
    zero-padded (do not change the packing to pad gamma with 1.0).
    """
    p_pad = y.shape[0]
    inv_n = 1.0 / n_real
    mean = jnp.sum(y, axis=0, keepdims=True) * inv_n        # padded rows are 0
    d = y - mean
    if p_pad != n_real:
        rows = lax.broadcasted_iota(jnp.int32, (p_pad, 1), 0)
        d = d * (rows < n_real).astype(jnp.float32)         # mask padded rows
    var = jnp.sum(d * d, axis=0, keepdims=True) * inv_n     # biased, two-pass
    scale = gamma * lax.rsqrt(var + BN_EPS)                 # gamma folded in
    yn = (y - mean) * scale + beta
    return jnp.maximum(yn, LRELU_SLOPE * yn)                # LeakyReLU(0.2)


def _conv_taps(y_act, g_ref, w_ref):
    """Conv layer as a sum over k*k taps: (G_t @ Y_prev) @ W_t, all in VMEM.

    g_ref: (k*k, P_out_pad, P_in_pad) bf16 one-hot gather (zero rows for the
           alignment padding and for taps that land in the conv's zero border).
    w_ref: (k*k, 128, 128) bf16 per-tap weight, zero channel padding.
    """
    kk, p_out_pad, _ = g_ref.shape
    y_bf = y_act.astype(jnp.bfloat16)
    acc = jnp.zeros((p_out_pad, LANE), jnp.float32)
    for t in range(kk):                                     # static unroll
        taps = jnp.dot(g_ref[t], y_bf,
                       preferred_element_type=jnp.float32).astype(jnp.bfloat16)
        acc = acc + jnp.dot(taps, w_ref[t], preferred_element_type=jnp.float32)
    return acc


def _make_fused_kernel(p_real):
    p1, p2, p3, _ = p_real  # real (unpadded) N*H*W row counts per layer

    def kernel(p1_ref, w1_ref, ga1_ref, be1_ref,
               g2_ref, w2_ref, ga2_ref, be2_ref,
               g3_ref, w3_ref, ga3_ref, be3_ref,
               g4_ref, w4_ref, bias_ref, o_ref):
        # Layer 1: Conv(img_ch->16, k4 s2 p1) + BN + LeakyReLU (im2col'd input)
        y = jnp.dot(p1_ref[...], w1_ref[...], preferred_element_type=jnp.float32)
        y = _bn_lrelu(y, ga1_ref[...], be1_ref[...], p1)
        # Layer 2: Conv(16->32, k4 s2 p1) + BN + LeakyReLU (in-VMEM tap gather)
        y = _conv_taps(y, g2_ref, w2_ref)
        y = _bn_lrelu(y, ga2_ref[...], be2_ref[...], p2)
        # Layer 3: Conv(32->64, k3 s2 p0) + BN + LeakyReLU
        y = _conv_taps(y, g3_ref, w3_ref)
        y = _bn_lrelu(y, ga3_ref[...], be3_ref[...], p3)
        # Layer 4: Conv(64->1, k3 s1 p0) + bias + Sigmoid (EUP reciprocal)
        y = _conv_taps(y, g4_ref, w4_ref) + bias_ref[...]
        o_ref[...] = pl.reciprocal(1.0 + jnp.exp(-y), approx=True)

    return kernel


# ---------------------------------------------------------------------------
# Host-side packing (weights at init; gather matrices / im2col at trace time)
# ---------------------------------------------------------------------------
def _pack_w_mat(w_oihw):
    """Layer-1 weight (C_out,C_in,k,k) -> (128,128) bf16 im2col matmul matrix
    (rows tap-major / channel-minor, zero padded)."""
    c_out, c_in, k, _ = w_oihw.shape
    w = jnp.transpose(w_oihw, (2, 3, 1, 0)).reshape(k * k * c_in, c_out)
    w = jnp.pad(w, ((0, LANE - k * k * c_in), (0, LANE - c_out)))
    return w.astype(jnp.bfloat16)


def _pack_w_taps(w_oihw):
    """(C_out,C_in,k,k) -> (k*k, 128, 128) bf16 per-tap weights, zero channel pad."""
    c_out, c_in, k, _ = w_oihw.shape
    w = jnp.transpose(w_oihw, (2, 3, 1, 0)).reshape(k * k, c_in, c_out)
    w = jnp.pad(w, ((0, 0), (0, LANE - c_in), (0, LANE - c_out)))
    return w.astype(jnp.bfloat16)


def _pack_channel_vec(v):
    """(C,) f32 -> (1,128) zero-padded row.  Zero padding keeps padded BN lanes
    exactly zero — do not pad gamma with ones."""
    return jnp.pad(v.astype(jnp.float32), (0, LANE - v.shape[0])).reshape(1, LANE)


def _im2col_nhwc(x, k, s, p):
    """Strided im2col of the NHWC *network input* (layer 1 only, plain JAX)."""
    N, H, W, C = x.shape
    Ho = (H + 2 * p - k) // s + 1
    Wo = (W + 2 * p - k) // s + 1
    xp = jnp.pad(x, ((0, 0), (p, p), (p, p), (0, 0))) if p else x
    taps = []
    for i in range(k):
        for j in range(k):
            taps.append(lax.slice(
                xp, (0, i, j, 0),
                (N, i + s * (Ho - 1) + 1, j + s * (Wo - 1) + 1, C),
                (1, s, s, 1)))
    patches = jnp.concatenate(taps, axis=-1)                 # (N,Ho,Wo,k*k*C)
    return patches.reshape(N * Ho * Wo, k * k * C)


def _build_gather(n, h_in, w_in, k, s, p, p_in_pad, p_out_pad):
    """One-hot (k*k, P_out_pad, P_in_pad) bf16 gather matrices mapping the previous
    layer's flattened rows to this layer's per-tap rows.  Static geometry; taps in
    the conv's zero border and alignment-padding rows/cols stay all-zero."""
    h_out = (h_in + 2 * p - k) // s + 1
    w_out = (w_in + 2 * p - k) // s + 1
    g = np.zeros((k * k, p_out_pad, p_in_pad), np.float32)
    for di in range(k):
        for dj in range(k):
            t = di * k + dj
            for b in range(n):
                for oh in range(h_out):
                    hi = s * oh + di - p
                    if hi < 0 or hi >= h_in:
                        continue
                    for ow in range(w_out):
                        wi = s * ow + dj - p
                        if wi < 0 or wi >= w_in:
                            continue
                        g[t, b * h_out * w_out + oh * w_out + ow,
                             b * h_in * w_in + hi * w_in + wi] = 1.0
    return jnp.asarray(g, dtype=jnp.bfloat16)


# ---------------------------------------------------------------------------
# Parameters + forward
# ---------------------------------------------------------------------------
def init_discriminator_params(key, img_channels):
    """Deterministic synthetic parameters, packed once into matmul-ready layout."""
    cfg = _layer_cfg(img_channels)
    assert cfg[0][0] * cfg[0][2] ** 2 <= LANE, "layer-1 im2col width must fit 128 lanes"
    params = []
    for li, (c_in, c_out, k, s, p) in enumerate(cfg):
        key, kw, kb, kg, kbe = jax.random.split(key, 5)
        fan_in = c_in * k * k
        w = jax.random.normal(kw, (c_out, c_in, k, k), jnp.float32) * (fan_in ** -0.5)
        layer = {"w_mat": _pack_w_mat(w)} if li == 0 else {"w_taps": _pack_w_taps(w)}
        if li < len(cfg) - 1:
            gamma = 1.0 + 0.1 * jax.random.normal(kg, (c_out,), jnp.float32)
            beta = 0.1 * jax.random.normal(kbe, (c_out,), jnp.float32)
            layer["gamma"] = _pack_channel_vec(gamma)
            layer["beta"] = _pack_channel_vec(beta)
            # Conv bias before training-mode BN cancels exactly -> omitted.
        else:
            bias = 0.05 * jax.random.normal(kb, (c_out,), jnp.float32)
            layer["bias"] = _pack_channel_vec(bias)
        params.append(layer)
    return params


def make_discriminator_forward(img_channels):
    cfg = _layer_cfg(img_channels)  # static Python ints, closed over (not traced)

    @jax.jit
    def forward(x_nchw, params):
        N, _, H, W = x_nchw.shape
        x = jnp.transpose(x_nchw, (0, 2, 3, 1))             # NCHW -> NHWC, once

        # ---- static geometry (trace-time Python) ----
        geom = []                                           # (Ho, Wo, P_real, P_pad)
        h, w = H, W
        for li, (_, _, k, s, p) in enumerate(cfg):
            h = (h + 2 * p - k) // s + 1
            w = (w + 2 * p - k) // s + 1
            pr = N * h * w
            pp = _round_up(pr, SUB if li == len(cfg) - 1 else LANE)
            geom.append((h, w, pr, pp))
        assert geom[-1][:2] == (1, 1), f"unexpected output spatial dims {geom[-1][:2]}"

        # ---- in-kernel gather matrices for layers 2..4 (trace-time constants) ----
        gathers = []
        for li in range(1, len(cfg)):
            _, _, k, s, p = cfg[li]
            gathers.append(_build_gather(N, geom[li - 1][0], geom[li - 1][1],
                                         k, s, p, geom[li - 1][3], geom[li][3]))

        # ---- layer-1 im2col on the raw input (plain JAX, once) ----
        _, _, k0, s0, p0 = cfg[0]
        patches = _im2col_nhwc(x.astype(jnp.bfloat16), k0, s0, p0)
        patches = jnp.pad(patches, ((0, geom[0][3] - patches.shape[0]),
                                    (0, LANE - patches.shape[1])))

        operands = [patches, params[0]["w_mat"], params[0]["gamma"], params[0]["beta"],
                    gathers[0], params[1]["w_taps"], params[1]["gamma"], params[1]["beta"],
                    gathers[1], params[2]["w_taps"], params[2]["gamma"], params[2]["beta"],
                    gathers[2], params[3]["w_taps"], params[3]["bias"]]

        # ---- honest cost estimate ----
        flops = 2 * geom[0][3] * LANE * LANE
        for li in range(1, len(cfg)):
            kk = cfg[li][2] ** 2
            flops += 2 * kk * geom[li][3] * (geom[li - 1][3] + LANE) * LANE
        transcendentals = 3 * LANE + 2 * geom[-1][2]        # BN rsqrt + sigmoid exp/rcp
        bytes_accessed = sum(int(np.prod(a.shape)) * a.dtype.itemsize for a in operands)
        bytes_accessed += geom[-1][3] * LANE * 4

        vmem = pl.BlockSpec(memory_space=pltpu.MemorySpace.VMEM)
        out2d = pl.pallas_call(
            _make_fused_kernel(tuple(g[2] for g in geom)),
            out_shape=jax.ShapeDtypeStruct((geom[-1][3], LANE), jnp.float32),
            in_specs=[vmem] * len(operands),
            out_specs=vmem,
            cost_estimate=pl.CostEstimate(flops=flops,
                                          transcendentals=transcendentals,
                                          bytes_accessed=bytes_accessed),
            # ~4.5 MiB total footprint; 32 MiB scoped limit is safe on v5e/v6e/v7x.
            compiler_params=pltpu.CompilerParams(vmem_limit_bytes=32 * 1024 * 1024),
        )(*operands)

        # Drop lane/row padding; output spatial is 1x1 -> NCHW (N,1,1,1).
        return out2d[:N, :1].reshape(N, 1, 1, 1)

    return forward


if __name__ == "__main__":
    img_channels = 3
    batch = 2

    key = jax.random.PRNGKey(0)
    key_x, key_p = jax.random.split(key)
    # 28x28 input -> 14 -> 7 -> 3 -> 1 (the DCGAN discriminator geometry)
    x = jax.random.normal(key_x, (batch, img_channels, 28, 28), jnp.float32)
    params = init_discriminator_params(key_p, img_channels)

    forward = make_discriminator_forward(img_channels)
    out = jax.block_until_ready(forward(x, params))

    assert out.shape == (batch, 1, 1, 1), out.shape
    assert bool(jnp.all(jnp.isfinite(out)))
    # approx reciprocal (EUP) has ~2^-12 relative error -> loose sigmoid-range bound
    assert float(jnp.min(out)) >= -1e-3
    assert float(jnp.max(out)) <= 1.0 + 1e-3
    print("KERNEL_OK")
</pallas_src>

<mosaic_0001>
module attributes {stable_mosaic.version = 11 : i64} {
  func.func @kernel(%arg0: memref<512x128xbf16, #tpu.memory_space<vmem>>, %arg1: memref<128x128xbf16, #tpu.memory_space<vmem>>, %arg2: memref<1x128xf32, #tpu.memory_space<vmem>>, %arg3: memref<1x128xf32, #tpu.memory_space<vmem>>, %arg4: memref<16x128x512xbf16, #tpu.memory_space<vmem>>, %arg5: memref<16x128x128xbf16, #tpu.memory_space<vmem>>, %arg6: memref<1x128xf32, #tpu.memory_space<vmem>>, %arg7: memref<1x128xf32, #tpu.memory_space<vmem>>, %arg8: memref<9x128x128xbf16, #tpu.memory_space<vmem>>, %arg9: memref<9x128x128xbf16, #tpu.memory_space<vmem>>, %arg10: memref<1x128xf32, #tpu.memory_space<vmem>>, %arg11: memref<1x128xf32, #tpu.memory_space<vmem>>, %arg12: memref<9x8x128xbf16, #tpu.memory_space<vmem>>, %arg13: memref<9x128x128xbf16, #tpu.memory_space<vmem>>, %arg14: memref<1x128xf32, #tpu.memory_space<vmem>>, %arg15: memref<8x128xf32, #tpu.memory_space<vmem>>) attributes {dimension_semantics = [], scalar_prefetch = 0 : i64, scratch_operands = 0 : i64, tpu.core_type = #tpu.core_type<tc>} {
    %c0 = arith.constant 0 : index
    %c0_0 = arith.constant 0 : index
    %0 = vector.load %arg0[%c0, %c0_0] : memref<512x128xbf16, #tpu.memory_space<vmem>>, vector<512x128xbf16>
    %c0_1 = arith.constant 0 : index
    %c0_2 = arith.constant 0 : index
    %1 = vector.load %arg1[%c0_1, %c0_2] : memref<128x128xbf16, #tpu.memory_space<vmem>>, vector<128x128xbf16>
    %cst = arith.constant dense<0.000000e+00> : vector<512x128xf32>
    %2 = tpu.matmul %0, %1, %cst {dimension_numbers = #tpu.dot_dimension_numbers<[1], [0], [0], [1], [0, 0, 1, 1], [], []>} : vector<512x128xbf16>, vector<128x128xbf16>, vector<512x128xf32> -> vector<512x128xf32>
    %c0_3 = arith.constant 0 : index
    %c0_4 = arith.constant 0 : index
    %3 = vector.load %arg2[%c0_3, %c0_4] : memref<1x128xf32, #tpu.memory_space<vmem>>, vector<1x128xf32>
    %c0_5 = arith.constant 0 : index
    %c0_6 = arith.constant 0 : index
    %4 = vector.load %arg3[%c0_5, %c0_6] : memref<1x128xf32, #tpu.memory_space<vmem>>, vector<1x128xf32>
    %cst_7 = arith.constant dense<0.000000e+00> : vector<128xf32>
    %5 = vector.multi_reduction <add>, %2, %cst_7 [0] : vector<512x128xf32> to vector<128xf32>
    %6 = vector.shape_cast %5 : vector<128xf32> to vector<1x128xf32>
    %cst_8 = arith.constant 0.00255102036 : f32
    %7 = vector.broadcast %cst_8 : f32 to vector<1x128xf32>
    %8 = arith.mulf %6, %7 : vector<1x128xf32>
    %9 = vector.broadcast %8 : vector<1x128xf32> to vector<512x128xf32>
    %10 = arith.subf %2, %9 : vector<512x128xf32>
    %11 = tpu.iota {dimensions = array<i32: 0>} : vector<512x1xi32>
    %c392_i32 = arith.constant 392 : i32
    %12 = vector.broadcast %c392_i32 : i32 to vector<512x1xi32>
    %13 = arith.cmpi slt, %11, %12 : vector<512x1xi32>
    %14 = arith.extui %13 : vector<512x1xi1> to vector<512x1xi32>
    %15 = arith.sitofp %14 : vector<512x1xi32> to vector<512x1xf32>
    %16 = vector.broadcast %15 : vector<512x1xf32> to vector<512x128xf32>
    %17 = arith.mulf %10, %16 : vector<512x128xf32>
    %18 = arith.mulf %17, %17 : vector<512x128xf32>
    %cst_9 = arith.constant dense<0.000000e+00> : vector<128xf32>
    %19 = vector.multi_reduction <add>, %18, %cst_9 [0] : vector<512x128xf32> to vector<128xf32>
    %20 = vector.shape_cast %19 : vector<128xf32> to vector<1x128xf32>
    %cst_10 = arith.constant 0.00255102036 : f32
    %21 = vector.broadcast %cst_10 : f32 to vector<1x128xf32>
    %22 = arith.mulf %20, %21 : vector<1x128xf32>
    %cst_11 = arith.constant 9.99999974E-6 : f32
    %23 = vector.broadcast %cst_11 : f32 to vector<1x128xf32>
    %24 = arith.addf %22, %23 : vector<1x128xf32>
    %25 = math.rsqrt %24 : vector<1x128xf32>
    %26 = arith.mulf %3, %25 : vector<1x128xf32>
    %27 = vector.broadcast %8 : vector<1x128xf32> to vector<512x128xf32>
    %28 = arith.subf %2, %27 : vector<512x128xf32>
    %29 = vector.broadcast %26 : vector<1x128xf32> to vector<512x128xf32>
    %30 = arith.mulf %28, %29 : vector<512x128xf32>
    %31 = vector.broadcast %4 : vector<1x128xf32> to vector<512x128xf32>
    %32 = arith.addf %30, %31 : vector<512x128xf32>
    %cst_12 = arith.constant 2.000000e-01 : f32
    %33 = vector.broadcast %cst_12 : f32 to vector<512x128xf32>
    %34 = arith.mulf %33, %32 : vector<512x128xf32>
    %35 = arith.maximumf %32, %34 : vector<512x128xf32>
    %36 = arith.truncf %35 : vector<512x128xf32> to vector<512x128xbf16>
    %cst_13 = arith.constant 0.000000e+00 : f32
    %37 = vector.broadcast %cst_13 : f32 to vector<128x128xf32>
    %c0_14 = arith.constant 0 : index
    %c0_15 = arith.constant 0 : index
    %c0_16 = arith.constant 0 : index
    %38 = vector.load %arg4[%c0_14, %c0_15, %c0_16] : memref<16x128x512xbf16, #tpu.memory_space<vmem>>, vector<1x128x512xbf16>
    %39 = vector.shape_cast %38 : vector<1x128x512xbf16> to vector<128x512xbf16>
    %cst_17 = arith.constant dense<0.000000e+00> : vector<128x128xf32>
    %40 = tpu.matmul %39, %36, %cst_17 {dimension_numbers = #tpu.dot_dimension_numbers<[1], [0], [0], [1], [0, 0, 1, 1], [], []>} : vector<128x512xbf16>, vector<512x128xbf16>, vector<128x128xf32> -> vector<128x128xf32>
    %41 = arith.truncf %40 : vector<128x128xf32> to vector<128x128xbf16>
    %c0_18 = arith.constant 0 : index
    %c0_19 = arith.constant 0 : index
    %c0_20 = arith.constant 0 : index
    %42 = vector.load %arg5[%c0_18, %c0_19, %c0_20] : memref<16x128x128xbf16, #tpu.memory_space<vmem>>, vector<1x128x128xbf16>
    %43 = vector.shape_cast %42 : vector<1x128x128xbf16> to vector<128x128xbf16>
    %cst_21 = arith.constant dense<0.000000e+00> : vector<128x128xf32>
    %44 = tpu.matmul %41, %43, %cst_21 {dimension_numbers = #tpu.dot_dimension_numbers<[1], [0], [0], [1], [0, 0, 1, 1], [], []>} : vector<128x128xbf16>, vector<128x128xbf16>, vector<128x128xf32> -> vector<128x128xf32>
    %45 = arith.addf %37, %44 : vector<128x128xf32>
    %c1 = arith.constant 1 : index
    %c0_22 = arith.constant 0 : index
    %c0_23 = arith.constant 0 : index
    %46 = vector.load %arg4[%c1, %c0_22, %c0_23] : memref<16x128x512xbf16, #tpu.memory_space<vmem>>, vector<1x128x512xbf16>
    %47 = vector.shape_cast %46 : vector<1x128x512xbf16> to vector<128x512xbf16>
    %cst_24 = arith.constant dense<0.000000e+00> : vector<128x128xf32>
    %48 = tpu.matmul %47, %36, %cst_24 {dimension_numbers = #tpu.dot_dimension_numbers<[1], [0], [0], [1], [0, 0, 1, 1], [], []>} : vector<128x512xbf16>, vector<512x128xbf16>, vector<128x128xf32> -> vector<128x128xf32>
    %49 = arith.truncf %48 : vector<128x128xf32> to vector<128x128xbf16>
    %c1_25 = arith.constant 1 : index
    %c0_26 = arith.constant 0 : index
    %c0_27 = arith.constant 0 : index
    %50 = vector.load %arg5[%c1_25, %c0_26, %c0_27] : memref<16x128x128xbf16, #tpu.memory_space<vmem>>, vector<1x128x128xbf16>
    %51 = vector.shape_cast %50 : vector<1x128x128xbf16> to vector<128x128xbf16>
    %cst_28 = arith.constant dense<0.000000e+00> : vector<128x128xf32>
    %52 = tpu.matmul %49, %51, %cst_28 {dimension_numbers = #tpu.dot_dimension_numbers<[1], [0], [0], [1], [0, 0, 1, 1], [], []>} : vector<128x128xbf16>, vector<128x128xbf16>, vector<128x128xf32> -> vector<128x128xf32>
    %53 = arith.addf %45, %52 : vector<128x128xf32>
    %c2 = arith.constant 2 : index
    %c0_29 = arith.constant 0 : index
    %c0_30 = arith.constant 0 : index
    %54 = vector.load %arg4[%c2, %c0_29, %c0_30] : memref<16x128x512xbf16, #tpu.memory_space<vmem>>, vector<1x128x512xbf16>
    %55 = vector.shape_cast %54 : vector<1x128x512xbf16> to vector<128x512xbf16>
    %cst_31 = arith.constant dense<0.000000e+00> : vector<128x128xf32>
    %56 = tpu.matmul %55, %36, %cst_31 {dimension_numbers = #tpu.dot_dimension_numbers<[1], [0], [0], [1], [0, 0, 1, 1], [], []>} : vector<128x512xbf16>, vector<512x128xbf16>, vector<128x128xf32> -> vector<128x128xf32>
    %57 = arith.truncf %56 : vector<128x128xf32> to vector<128x128xbf16>
    %c2_32 = arith.constant 2 : index
    %c0_33 = arith.constant 0 : index
    %c0_34 = arith.constant 0 : index
    %58 = vector.load %arg5[%c2_32, %c0_33, %c0_34] : memref<16x128x128xbf16, #tpu.memory_space<vmem>>, vector<1x128x128xbf16>
    %59 = vector.shape_cast %58 : vector<1x128x128xbf16> to vector<128x128xbf16>
    %cst_35 = arith.constant dense<0.000000e+00> : vector<128x128xf32>
    %60 = tpu.matmul %57, %59, %cst_35 {dimension_numbers = #tpu.dot_dimension_numbers<[1], [0], [0], [1], [0, 0, 1, 1], [], []>} : vector<128x128xbf16>, vector<128x128xbf16>, vector<128x128xf32> -> vector<128x128xf32>
    %61 = arith.addf %53, %60 : vector<128x128xf32>
    %c3 = arith.constant 3 : index
    %c0_36 = arith.constant 0 : index
    %c0_37 = arith.constant 0 : index
    %62 = vector.load %arg4[%c3, %c0_36, %c0_37] : memref<16x128x512xbf16, #tpu.memory_space<vmem>>, vector<1x128x512xbf16>
    %63 = vector.shape_cast %62 : vector<1x128x512xbf16> to vector<128x512xbf16>
    %cst_38 = arith.constant dense<0.000000e+00> : vector<128x128xf32>
    %64 = tpu.matmul %63, %36, %cst_38 {dimension_numbers = #tpu.dot_dimension_numbers<[1], [0], [0], [1], [0, 0, 1, 1], [], []>} : vector<128x512xbf16>, vector<512x128xbf16>, vector<128x128xf32> -> vector<128x128xf32>
    %65 = arith.truncf %64 : vector<128x128xf32> to vector<128x128xbf16>
    %c3_39 = arith.constant 3 : index
    %c0_40 = arith.constant 0 : index
    %c0_41 = arith.constant 0 : index
    %66 = vector.load %arg5[%c3_39, %c0_40, %c0_41] : memref<16x128x128xbf16, #tpu.memory_space<vmem>>, vector<1x128x128xbf16>
    %67 = vector.shape_cast %66 : vector<1x128x128xbf16> to vector<128x128xbf16>
    %cst_42 = arith.constant dense<0.000000e+00> : vector<128x128xf32>
    %68 = tpu.matmul %65, %67, %cst_42 {dimension_numbers = #tpu.dot_dimension_numbers<[1], [0], [0], [1], [0, 0, 1, 1], [], []>} : vector<128x128xbf16>, vector<128x128xbf16>, vector<128x128xf32> -> vector<128x128xf32>
    %69 = arith.addf %61, %68 : vector<128x128xf32>
    %c4 = arith.constant 4 : index
    %c0_43 = arith.constant 0 : index
    %c0_44 = arith.constant 0 : index
    %70 = vector.load %arg4[%c4, %c0_43, %c0_44] : memref<16x128x512xbf16, #tpu.memory_space<vmem>>, vector<1x128x512xbf16>
    %71 = vector.shape_cast %70 : vector<1x128x512xbf16> to vector<128x512xbf16>
    %cst_45 = arith.constant dense<0.000000e+00> : vector<128x128xf32>
    %72 = tpu.matmul %71, %36, %cst_45 {dimension_numbers = #tpu.dot_dimension_numbers<[1], [0], [0], [1], [0, 0, 1, 1], [], []>} : vector<128x512xbf16>, vector<512x128xbf16>, vector<128x128xf32> -> vector<128x128xf32>
    %73 = arith.truncf %72 : vector<128x128xf32> to vector<128x128xbf16>
    %c4_46 = arith.constant 4 : index
    %c0_47 = arith.constant 0 : index
    %c0_48 = arith.constant 0 : index
    %74 = vector.load %arg5[%c4_46, %c0_47, %c0_48] : memref<16x128x128xbf16, #tpu.memory_space<vmem>>, vector<1x128x128xbf16>
    %75 = vector.shape_cast %74 : vector<1x128x128xbf16> to vector<128x128xbf16>
    %cst_49 = arith.constant dense<0.000000e+00> : vector<128x128xf32>
    %76 = tpu.matmul %73, %75, %cst_49 {dimension_numbers = #tpu.dot_dimension_numbers<[1], [0], [0], [1], [0, 0, 1, 1], [], []>} : vector<128x128xbf16>, vector<128x128xbf16>, vector<128x128xf32> -> vector<128x128xf32>
    %77 = arith.addf %69, %76 : vector<128x128xf32>
    %c5 = arith.constant 5 : index
    %c0_50 = arith.constant 0 : index
    %c0_51 = arith.constant 0 : index
    %78 = vector.load %arg4[%c5, %c0_50, %c0_51] : memref<16x128x512xbf16, #tpu.memory_space<vmem>>, vector<1x128x512xbf16>
    %79 = vector.shape_cast %78 : vector<1x128x512xbf16> to vector<128x512xbf16>
    %cst_52 = arith.constant dense<0.000000e+00> : vector<128x128xf32>
    %80 = tpu.matmul %79, %36, %cst_52 {dimension_numbers = #tpu.dot_dimension_numbers<[1], [0], [0], [1], [0, 0, 1, 1], [], []>} : vector<128x512xbf16>, vector<512x128xbf16>, vector<128x128xf32> -> vector<128x128xf32>
    %81 = arith.truncf %80 : vector<128x128xf32> to vector<128x128xbf16>
    %c5_53 = arith.constant 5 : index
    %c0_54 = arith.constant 0 : index
    %c0_55 = arith.constant 0 : index
    %82 = vector.load %arg5[%c5_53, %c0_54, %c0_55] : memref<16x128x128xbf16, #tpu.memory_space<vmem>>, vector<1x128x128xbf16>
    %83 = vector.shape_cast %82 : vector<1x128x128xbf16> to vector<128x128xbf16>
    %cst_56 = arith.constant dense<0.000000e+00> : vector<128x128xf32>
    %84 = tpu.matmul %81, %83, %cst_56 {dimension_numbers = #tpu.dot_dimension_numbers<[1], [0], [0], [1], [0, 0, 1, 1], [], []>} : vector<128x128xbf16>, vector<128x128xbf16>, vector<128x128xf32> -> vector<128x128xf32>
    %85 = arith.addf %77, %84 : vector<128x128xf32>
    %c6 = arith.constant 6 : index
    %c0_57 = arith.constant 0 : index
    %c0_58 = arith.constant 0 : index
    %86 = vector.load %arg4[%c6, %c0_57, %c0_58] : memref<16x128x512xbf16, #tpu.memory_space<vmem>>, vector<1x128x512xbf16>
    %87 = vector.shape_cast %86 : vector<1x128x512xbf16> to vector<128x512xbf16>
    %cst_59 = arith.constant dense<0.000000e+00> : vector<128x128xf32>
    %88 = tpu.matmul %87, %36, %cst_59 {dimension_numbers = #tpu.dot_dimension_numbers<[1], [0], [0], [1], [0, 0, 1, 1], [], []>} : vector<128x512xbf16>, vector<512x128xbf16>, vector<128x128xf32> -> vector<128x128xf32>
    %89 = arith.truncf %88 : vector<128x128xf32> to vector<128x128xbf16>
    %c6_60 = arith.constant 6 : index
    %c0_61 = arith.constant 0 : index
    %c0_62 = arith.constant 0 : index
    %90 = vector.load %arg5[%c6_60, %c0_61, %c0_62] : memref<16x128x128xbf16, #tpu.memory_space<vmem>>, vector<1x128x128xbf16>
    %91 = vector.shape_cast %90 : vector<1x128x128xbf16> to vector<128x128xbf16>
    %cst_63 = arith.constant dense<0.000000e+00> : vector<128x128xf32>
    %92 = tpu.matmul %89, %91, %cst_63 {dimension_numbers = #tpu.dot_dimension_numbers<[1], [0], [0], [1], [0, 0, 1, 1], [], []>} : vector<128x128xbf16>, vector<128x128xbf16>, vector<128x128xf32> -> vector<128x128xf32>
    %93 = arith.addf %85, %92 : vector<128x128xf32>
    %c7 = arith.constant 7 : index
    %c0_64 = arith.constant 0 : index
    %c0_65 = arith.constant 0 : index
    %94 = vector.load %arg4[%c7, %c0_64, %c0_65] : memref<16x128x512xbf16, #tpu.memory_space<vmem>>, vector<1x128x512xbf16>
    %95 = vector.shape_cast %94 : vector<1x128x512xbf16> to vector<128x512xbf16>
    %cst_66 = arith.constant dense<0.000000e+00> : vector<128x128xf32>
    %96 = tpu.matmul %95, %36, %cst_66 {dimension_numbers = #tpu.dot_dimension_numbers<[1], [0], [0], [1], [0, 0, 1, 1], [], []>} : vector<128x512xbf16>, vector<512x128xbf16>, vector<128x128xf32> -> vector<128x128xf32>
    %97 = arith.truncf %96 : vector<128x128xf32> to vector<128x128xbf16>
    %c7_67 = arith.constant 7 : index
    %c0_68 = arith.constant 0 : index
    %c0_69 = arith.constant 0 : index
    %98 = vector.load %arg5[%c7_67, %c0_68, %c0_69] : memref<16x128x128xbf16, #tpu.memory_space<vmem>>, vector<1x128x128xbf16>
    %99 = vector.shape_cast %98 : vector<1x128x128xbf16> to vector<128x128xbf16>
    %cst_70 = arith.constant dense<0.000000e+00> : vector<128x128xf32>
    %100 = tpu.matmul %97, %99, %cst_70 {dimension_numbers = #tpu.dot_dimension_numbers<[1], [0], [0], [1], [0, 0, 1, 1], [], []>} : vector<128x128xbf16>, vector<128x128xbf16>, vector<128x128xf32> -> vector<128x128xf32>
    %101 = arith.addf %93, %100 : vector<128x128xf32>
    %c8 = arith.constant 8 : index
    %c0_71 = arith.constant 0 : index
    %c0_72 = arith.constant 0 : index
    %102 = vector.load %arg4[%c8, %c0_71, %c0_72] : memref<16x128x512xbf16, #tpu.memory_space<vmem>>, vector<1x128x512xbf16>
    %103 = vector.shape_cast %102 : vector<1x128x512xbf16> to vector<128x512xbf16>
    %cst_73 = arith.constant dense<0.000000e+00> : vector<128x128xf32>
    %104 = tpu.matmul %103, %36, %cst_73 {dimension_numbers = #tpu.dot_dimension_numbers<[1], [0], [0], [1], [0, 0, 1, 1], [], []>} : vector<128x512xbf16>, vector<512x128xbf16>, vector<128x128xf32> -> vector<128x128xf32>
    %105 = arith.truncf %104 : vector<128x128xf32> to vector<128x128xbf16>
    %c8_74 = arith.constant 8 : index
    %c0_75 = arith.constant 0 : index
    %c0_76 = arith.constant 0 : index
    %106 = vector.load %arg5[%c8_74, %c0_75, %c0_76] : memref<16x128x128xbf16, #tpu.memory_space<vmem>>, vector<1x128x128xbf16>
    %107 = vector.shape_cast %106 : vector<1x128x128xbf16> to vector<128x128xbf16>
    %cst_77 = arith.constant dense<0.000000e+00> : vector<128x128xf32>
    %108 = tpu.matmul %105, %107, %cst_77 {dimension_numbers = #tpu.dot_dimension_numbers<[1], [0], [0], [1], [0, 0, 1, 1], [], []>} : vector<128x128xbf16>, vector<128x128xbf16>, vector<128x128xf32> -> vector<128x128xf32>
    %109 = arith.addf %101, %108 : vector<128x128xf32>
    %c9 = arith.constant 9 : index
    %c0_78 = arith.constant 0 : index
    %c0_79 = arith.constant 0 : index
    %110 = vector.load %arg4[%c9, %c0_78, %c0_79] : memref<16x128x512xbf16, #tpu.memory_space<vmem>>, vector<1x128x512xbf16>
    %111 = vector.shape_cast %110 : vector<1x128x512xbf16> to vector<128x512xbf16>
    %cst_80 = arith.constant dense<0.000000e+00> : vector<128x128xf32>
    %112 = tpu.matmul %111, %36, %cst_80 {dimension_numbers = #tpu.dot_dimension_numbers<[1], [0], [0], [1], [0, 0, 1, 1], [], []>} : vector<128x512xbf16>, vector<512x128xbf16>, vector<128x128xf32> -> vector<128x128xf32>
    %113 = arith.truncf %112 : vector<128x128xf32> to vector<128x128xbf16>
    %c9_81 = arith.constant 9 : index
    %c0_82 = arith.constant 0 : index
    %c0_83 = arith.constant 0 : index
    %114 = vector.load %arg5[%c9_81, %c0_82, %c0_83] : memref<16x128x128xbf16, #tpu.memory_space<vmem>>, vector<1x128x128xbf16>
    %115 = vector.shape_cast %114 : vector<1x128x128xbf16> to vector<128x128xbf16>
    %cst_84 = arith.constant dense<0.000000e+00> : vector<128x128xf32>
    %116 = tpu.matmul %113, %115, %cst_84 {dimension_numbers = #tpu.dot_dimension_numbers<[1], [0], [0], [1], [0, 0, 1, 1], [], []>} : vector<128x128xbf16>, vector<128x128xbf16>, vector<128x128xf32> -> vector<128x128xf32>
    %117 = arith.addf %109, %116 : vector<128x128xf32>
    %c10 = arith.constant 10 : index
    %c0_85 = arith.constant 0 : index
    %c0_86 = arith.constant 0 : index
    %118 = vector.load %arg4[%c10, %c0_85, %c0_86] : memref<16x128x512xbf16, #tpu.memory_space<vmem>>, vector<1x128x512xbf16>
    %119 = vector.shape_cast %118 : vector<1x128x512xbf16> to vector<128x512xbf16>
    %cst_87 = arith.constant dense<0.000000e+00> : vector<128x128xf32>
    %120 = tpu.matmul %119, %36, %cst_87 {dimension_numbers = #tpu.dot_dimension_numbers<[1], [0], [0], [1], [0, 0, 1, 1], [], []>} : vector<128x512xbf16>, vector<512x128xbf16>, vector<128x128xf32> -> vector<128x128xf32>
    %121 = arith.truncf %120 : vector<128x128xf32> to vector<128x128xbf16>
    %c10_88 = arith.constant 10 : index
    %c0_89 = arith.constant 0 : index
    %c0_90 = arith.constant 0 : index
    %122 = vector.load %arg5[%c10_88, %c0_89, %c0_90] : memref<16x128x128xbf16, #tpu.memory_space<vmem>>, vector<1x128x128xbf16>
    %123 = vector.shape_cast %122 : vector<1x128x128xbf16> to vector<128x128xbf16>
    %cst_91 = arith.constant dense<0.000000e+00> : vector<128x128xf32>
    %124 = tpu.matmul %121, %123, %cst_91 {dimension_numbers = #tpu.dot_dimension_numbers<[1], [0], [0], [1], [0, 0, 1, 1], [], []>} : vector<128x128xbf16>, vector<128x128xbf16>, vector<128x128xf32> -> vector<128x128xf32>
    %125 = arith.addf %117, %124 : vector<128x128xf32>
    %c11 = arith.constant 11 : index
    %c0_92 = arith.constant 0 : index
    %c0_93 = arith.constant 0 : index
    %126 = vector.load %arg4[%c11, %c0_92, %c0_93] : memref<16x128x512xbf16, #tpu.memory_space<vmem>>, vector<1x128x512xbf16>
    %127 = vector.shape_cast %126 : vector<1x128x512xbf16> to vector<128x512xbf16>
    %cst_94 = arith.constant dense<0.000000e+00> : vector<128x128xf32>
    %128 = tpu.matmul %127, %36, %cst_94 {dimension_numbers = #tpu.dot_dimension_numbers<[1], [0], [0], [1], [0, 0, 1, 1], [], []>} : vector<128x512xbf16>, vector<512x128xbf16>, vector<128x128xf32> -> vector<128x128xf32>
    %129 = arith.truncf %128 : vector<128x128xf32> to vector<128x128xbf16>
    %c11_95 = arith.constant 11 : index
    %c0_96 = arith.constant 0 : index
    %c0_97 = arith.constant 0 : index
    %130 = vector.load %arg5[%c11_95, %c0_96, %c0_97] : memref<16x128x128xbf16, #tpu.memory_space<vmem>>, vector<1x128x128xbf16>
    %131 = vector.shape_cast %130 : vector<1x128x128xbf16> to vector<128x128xbf16>
    %cst_98 = arith.constant dense<0.000000e+00> : vector<128x128xf32>
    %132 = tpu.matmul %129, %131, %cst_98 {dimension_numbers = #tpu.dot_dimension_numbers<[1], [0], [0], [1], [0, 0, 1, 1], [], []>} : vector<128x128xbf16>, vector<128x128xbf16>, vector<128x128xf32> -> vector<128x128xf32>
    %133 = arith.addf %125, %132 : vector<128x128xf32>
    %c12 = arith.constant 12 : index
    %c0_99 = arith.constant 0 : index
    %c0_100 = arith.constant 0 : index
    %134 = vector.load %arg4[%c12, %c0_99, %c0_100] : memref<16x128x512xbf16, #tpu.memory_space<vmem>>, vector<1x128x512xbf16>
    %135 = vector.shape_cast %134 : vector<1x128x512xbf16> to vector<128x512xbf16>
    %cst_101 = arith.constant dense<0.000000e+00> : vector<128x128xf32>
    %136 = tpu.matmul %135, %36, %cst_101 {dimension_numbers = #tpu.dot_dimension_numbers<[1], [0], [0], [1], [0, 0, 1, 1], [], []>} : vector<128x512xbf16>, vector<512x128xbf16>, vector<128x128xf32> -> vector<128x128xf32>
    %137 = arith.truncf %136 : vector<128x128xf32> to vector<128x128xbf16>
    %c12_102 = arith.constant 12 : index
    %c0_103 = arith.constant 0 : index
    %c0_104 = arith.constant 0 : index
    %138 = vector.load %arg5[%c12_102, %c0_103, %c0_104] : memref<16x128x128xbf16, #tpu.memory_space<vmem>>, vector<1x128x128xbf16>
    %139 = vector.shape_cast %138 : vector<1x128x128xbf16> to vector<128x128xbf16>
    %cst_105 = arith.constant dense<0.000000e+00> : vector<128x128xf32>
    %140 = tpu.matmul %137, %139, %cst_105 {dimension_numbers = #tpu.dot_dimension_numbers<[1], [0], [0], [1], [0, 0, 1, 1], [], []>} : vector<128x128xbf16>, vector<128x128xbf16>, vector<128x128xf32> -> vector<128x128xf32>
    %141 = arith.addf %133, %140 : vector<128x128xf32>
    %c13 = arith.constant 13 : index
    %c0_106 = arith.constant 0 : index
    %c0_107 = arith.constant 0 : index
    %142 = vector.load %arg4[%c13, %c0_106, %c0_107] : memref<16x128x512xbf16, #tpu.memory_space<vmem>>, vector<1x128x512xbf16>
    %143 = vector.shape_cast %142 : vector<1x128x512xbf16> to vector<128x512xbf16>
    %cst_108 = arith.constant dense<0.000000e+00> : vector<128x128xf32>
    %144 = tpu.matmul %143, %36, %cst_108 {dimension_numbers = #tpu.dot_dimension_numbers<[1], [0], [0], [1], [0, 0, 1, 1], [], []>} : vector<128x512xbf16>, vector<512x128xbf16>, vector<128x128xf32> -> vector<128x128xf32>
    %145 = arith.truncf %144 : vector<128x128xf32> to vector<128x128xbf16>
    %c13_109 = arith.constant 13 : index
    %c0_110 = arith.constant 0 : index
    %c0_111 = arith.constant 0 : index
    %146 = vector.load %arg5[%c13_109, %c0_110, %c0_111] : memref<16x128x128xbf16, #tpu.memory_space<vmem>>, vector<1x128x128xbf16>
    %147 = vector.shape_cast %146 : vector<1x128x128xbf16> to vector<128x128xbf16>
    %cst_112 = arith.constant dense<0.000000e+00> : vector<128x128xf32>
    %148 = tpu.matmul %145, %147, %cst_112 {dimension_numbers = #tpu.dot_dimension_numbers<[1], [0], [0], [1], [0, 0, 1, 1], [], []>} : vector<128x128xbf16>, vector<128x128xbf16>, vector<128x128xf32> -> vector<128x128xf32>
    %149 = arith.addf %141, %148 : vector<128x128xf32>
    %c14 = arith.constant 14 : index
    %c0_113 = arith.constant 0 : index
    %c0_114 = arith.constant 0 : index
    %150 = vector.load %arg4[%c14, %c0_113, %c0_114] : memref<16x128x512xbf16, #tpu.memory_space<vmem>>, vector<1x128x512xbf16>
    %151 = vector.shape_cast %150 : vector<1x128x512xbf16> to vector<128x512xbf16>
    %cst_115 = arith.constant dense<0.000000e+00> : vector<128x128xf32>
    %152 = tpu.matmul %151, %36, %cst_115 {dimension_numbers = #tpu.dot_dimension_numbers<[1], [0], [0], [1], [0, 0, 1, 1], [], []>} : vector<128x512xbf16>, vector<512x128xbf16>, vector<128x128xf32> -> vector<128x128xf32>
    %153 = arith.truncf %152 : vector<128x128xf32> to vector<128x128xbf16>
    %c14_116 = arith.constant 14 : index
    %c0_117 = arith.constant 0 : index
    %c0_118 = arith.constant 0 : index
    %154 = vector.load %arg5[%c14_116, %c0_117, %c0_118] : memref<16x128x128xbf16, #tpu.memory_space<vmem>>, vector<1x128x128xbf16>
    %155 = vector.shape_cast %154 : vector<1x128x128xbf16> to vector<128x128xbf16>
    %cst_119 = arith.constant dense<0.000000e+00> : vector<128x128xf32>
    %156 = tpu.matmul %153, %155, %cst_119 {dimension_numbers = #tpu.dot_dimension_numbers<[1], [0], [0], [1], [0, 0, 1, 1], [], []>} : vector<128x128xbf16>, vector<128x128xbf16>, vector<128x128xf32> -> vector<128x128xf32>
    %157 = arith.addf %149, %156 : vector<128x128xf32>
    %c15 = arith.constant 15 : index
    %c0_120 = arith.constant 0 : index
    %c0_121 = arith.constant 0 : index
    %158 = vector.load %arg4[%c15, %c0_120, %c0_121] : memref<16x128x512xbf16, #tpu.memory_space<vmem>>, vector<1x128x512xbf16>
    %159 = vector.shape_cast %158 : vector<1x128x512xbf16> to vector<128x512xbf16>
    %cst_122 = arith.constant dense<0.000000e+00> : vector<128x128xf32>
    %160 = tpu.matmul %159, %36, %cst_122 {dimension_numbers = #tpu.dot_dimension_numbers<[1], [0], [0], [1], [0, 0, 1, 1], [], []>} : vector<128x512xbf16>, vector<512x128xbf16>, vector<128x128xf32> -> vector<128x128xf32>
    %161 = arith.truncf %160 : vector<128x128xf32> to vector<128x128xbf16>
    %c15_123 = arith.constant 15 : index
    %c0_124 = arith.constant 0 : index
    %c0_125 = arith.constant 0 : index
    %162 = vector.load %arg5[%c15_123, %c0_124, %c0_125] : memref<16x128x128xbf16, #tpu.memory_space<vmem>>, vector<1x128x128xbf16>
    %163 = vector.shape_cast %162 : vector<1x128x128xbf16> to vector<128x128xbf16>
    %cst_126 = arith.constant dense<0.000000e+00> : vector<128x128xf32>
    %164 = tpu.matmul %161, %163, %cst_126 {dimension_numbers = #tpu.dot_dimension_numbers<[1], [0], [0], [1], [0, 0, 1, 1], [], []>} : vector<128x128xbf16>, vector<128x128xbf16>, vector<128x128xf32> -> vector<128x128xf32>
    %165 = arith.addf %157, %164 : vector<128x128xf32>
    %c0_127 = arith.constant 0 : index
    %c0_128 = arith.constant 0 : index
    %166 = vector.load %arg6[%c0_127, %c0_128] : memref<1x128xf32, #tpu.memory_space<vmem>>, vector<1x128xf32>
    %c0_129 = arith.constant 0 : index
    %c0_130 = arith.constant 0 : index
    %167 = vector.load %arg7[%c0_129, %c0_130] : memref<1x128xf32, #tpu.memory_space<vmem>>, vector<1x128xf32>
    %cst_131 = arith.constant dense<0.000000e+00> : vector<128xf32>
    %168 = vector.multi_reduction <add>, %165, %cst_131 [0] : vector<128x128xf32> to vector<128xf32>
    %169 = vector.shape_cast %168 : vector<128xf32> to vector<1x128xf32>
    %cst_132 = arith.constant 0.0102040814 : f32
    %170 = vector.broadcast %cst_132 : f32 to vector<1x128xf32>
    %171 = arith.mulf %169, %170 : vector<1x128xf32>
    %172 = vector.broadcast %171 : vector<1x128xf32> to vector<128x128xf32>
    %173 = arith.subf %165, %172 : vector<128x128xf32>
    %174 = tpu.iota {dimensions = array<i32: 0>} : vector<128x1xi32>
    %c98_i32 = arith.constant 98 : i32
    %175 = vector.broadcast %c98_i32 : i32 to vector<128x1xi32>
    %176 = arith.cmpi slt, %174, %175 : vector<128x1xi32>
    %177 = arith.extui %176 : vector<128x1xi1> to vector<128x1xi32>
    %178 = arith.sitofp %177 : vector<128x1xi32> to vector<128x1xf32>
    %179 = vector.broadcast %178 : vector<128x1xf32> to vector<128x128xf32>
    %180 = arith.mulf %173, %179 : vector<128x128xf32>
    %181 = arith.mulf %180, %180 : vector<128x128xf32>
    %cst_133 = arith.constant dense<0.000000e+00> : vector<128xf32>
    %182 = vector.multi_reduction <add>, %181, %cst_133 [0] : vector<128x128xf32> to vector<128xf32>
    %183 = vector.shape_cast %182 : vector<128xf32> to vector<1x128xf32>
    %cst_134 = arith.constant 0.0102040814 : f32
    %184 = vector.broadcast %cst_134 : f32 to vector<1x128xf32>
    %185 = arith.mulf %183, %184 : vector<1x128xf32>
    %cst_135 = arith.constant 9.99999974E-6 : f32
    %186 = vector.broadcast %cst_135 : f32 to vector<1x128xf32>
    %187 = arith.addf %185, %186 : vector<1x128xf32>
    %188 = math.rsqrt %187 : vector<1x128xf32>
    %189 = arith.mulf %166, %188 : vector<1x128xf32>
    %190 = vector.broadcast %171 : vector<1x128xf32> to vector<128x128xf32>
    %191 = arith.subf %165, %190 : vector<128x128xf32>
    %192 = vector.broadcast %189 : vector<1x128xf32> to vector<128x128xf32>
    %193 = arith.mulf %191, %192 : vector<128x128xf32>
    %194 = vector.broadcast %167 : vector<1x128xf32> to vector<128x128xf32>
    %195 = arith.addf %193, %194 : vector<128x128xf32>
    %cst_136 = arith.constant 2.000000e-01 : f32
    %196 = vector.broadcast %cst_136 : f32 to vector<128x128xf32>
    %197 = arith.mulf %196, %195 : vector<128x128xf32>
    %198 = arith.maximumf %195, %197 : vector<128x128xf32>
    %199 = arith.truncf %198 : vector<128x128xf32> to vector<128x128xbf16>
    %cst_137 = arith.constant 0.000000e+00 : f32
    %200 = vector.broadcast %cst_137 : f32 to vector<128x128xf32>
    %c0_138 = arith.constant 0 : index
    %c0_139 = arith.constant 0 : index
    %c0_140 = arith.constant 0 : index
    %201 = vector.load %arg8[%c0_138, %c0_139, %c0_140] : memref<9x128x128xbf16, #tpu.memory_space<vmem>>, vector<1x128x128xbf16>
    %202 = vector.shape_cast %201 : vector<1x128x128xbf16> to vector<128x128xbf16>
    %cst_141 = arith.constant dense<0.000000e+00> : vector<128x128xf32>
    %203 = tpu.matmul %202, %199, %cst_141 {dimension_numbers = #tpu.dot_dimension_numbers<[1], [0], [0], [1], [0, 0, 1, 1], [], []>} : vector<128x128xbf16>, vector<128x128xbf16>, vector<128x128xf32> -> vector<128x128xf32>
    %204 = arith.truncf %203 : vector<128x128xf32> to vector<128x128xbf16>
    %c0_142 = arith.constant 0 : index
    %c0_143 = arith.constant 0 : index
    %c0_144 = arith.constant 0 : index
    %205 = vector.load %arg9[%c0_142, %c0_143, %c0_144] : memref<9x128x128xbf16, #tpu.memory_space<vmem>>, vector<1x128x128xbf16>
    %206 = vector.shape_cast %205 : vector<1x128x128xbf16> to vector<128x128xbf16>
    %cst_145 = arith.constant dense<0.000000e+00> : vector<128x128xf32>
    %207 = tpu.matmul %204, %206, %cst_145 {dimension_numbers = #tpu.dot_dimension_numbers<[1], [0], [0], [1], [0, 0, 1, 1], [], []>} : vector<128x128xbf16>, vector<128x128xbf16>, vector<128x128xf32> -> vector<128x128xf32>
    %208 = arith.addf %200, %207 : vector<128x128xf32>
    %c1_146 = arith.constant 1 : index
    %c0_147 = arith.constant 0 : index
    %c0_148 = arith.constant 0 : index
    %209 = vector.load %arg8[%c1_146, %c0_147, %c0_148] : memref<9x128x128xbf16, #tpu.memory_space<vmem>>, vector<1x128x128xbf16>
    %210 = vector.shape_cast %209 : vector<1x128x128xbf16> to vector<128x128xbf16>
    %cst_149 = arith.constant dense<0.000000e+00> : vector<128x128xf32>
    %211 = tpu.matmul %210, %199, %cst_149 {dimension_numbers = #tpu.dot_dimension_numbers<[1], [0], [0], [1], [0, 0, 1, 1], [], []>} : vector<128x128xbf16>, vector<128x128xbf16>, vector<128x128xf32> -> vector<128x128xf32>
    %212 = arith.truncf %211 : vector<128x128xf32> to vector<128x128xbf16>
    %c1_150 = arith.constant 1 : index
    %c0_151 = arith.constant 0 : index
    %c0_152 = arith.constant 0 : index
    %213 = vector.load %arg9[%c1_150, %c0_151, %c0_152] : memref<9x128x128xbf16, #tpu.memory_space<vmem>>, vector<1x128x128xbf16>
    %214 = vector.shape_cast %213 : vector<1x128x128xbf16> to vector<128x128xbf16>
    %cst_153 = arith.constant dense<0.000000e+00> : vector<128x128xf32>
    %215 = tpu.matmul %212, %214, %cst_153 {dimension_numbers = #tpu.dot_dimension_numbers<[1], [0], [0], [1], [0, 0, 1, 1], [], []>} : vector<128x128xbf16>, vector<128x128xbf16>, vector<128x128xf32> -> vector<128x128xf32>
    %216 = arith.addf %208, %215 : vector<128x128xf32>
    %c2_154 = arith.constant 2 : index
    %c0_155 = arith.constant 0 : index
    %c0_156 = arith.constant 0 : index
    %217 = vector.load %arg8[%c2_154, %c0_155, %c0_156] : memref<9x128x128xbf16, #tpu.memory_space<vmem>>, vector<1x128x128xbf16>
    %218 = vector.shape_cast %217 : vector<1x128x128xbf16> to vector<128x128xbf16>
    %cst_157 = arith.constant dense<0.000000e+00> : vector<128x128xf32>
    %219 = tpu.matmul %218, %199, %cst_157 {dimension_numbers = #tpu.dot_dimension_numbers<[1], [0], [0], [1], [0, 0, 1, 1], [], []>} : vector<128x128xbf16>, vector<128x128xbf16>, vector<128x128xf32> -> vector<128x128xf32>
    %220 = arith.truncf %219 : vector<128x128xf32> to vector<128x128xbf16>
    %c2_158 = arith.constant 2 : index
    %c0_159 = arith.constant 0 : index
    %c0_160 = arith.constant 0 : index
    %221 = vector.load %arg9[%c2_158, %c0_159, %c0_160] : memref<9x128x128xbf16, #tpu.memory_space<vmem>>, vector<1x128x128xbf16>
    %222 = vector.shape_cast %221 : vector<1x128x128xbf16> to vector<128x128xbf16>
    %cst_161 = arith.constant dense<0.000000e+00> : vector<128x128xf32>
    %223 = tpu.matmul %220, %222, %cst_161 {dimension_numbers = #tpu.dot_dimension_numbers<[1], [0], [0], [1], [0, 0, 1, 1], [], []>} : vector<128x128xbf16>, vector<128x128xbf16>, vector<128x128xf32> -> vector<128x128xf32>
    %224 = arith.addf %216, %223 : vector<128x128xf32>
    %c3_162 = arith.constant 3 : index
    %c0_163 = arith.constant 0 : index
    %c0_164 = arith.constant 0 : index
    %225 = vector.load %arg8[%c3_162, %c0_163, %c0_164] : memref<9x128x128xbf16, #tpu.memory_space<vmem>>, vector<1x128x128xbf16>
    %226 = vector.shape_cast %225 : vector<1x128x128xbf16> to vector<128x128xbf16>
    %cst_165 = arith.constant dense<0.000000e+00> : vector<128x128xf32>
    %227 = tpu.matmul %226, %199, %cst_165 {dimension_numbers = #tpu.dot_dimension_numbers<[1], [0], [0], [1], [0, 0, 1, 1], [], []>} : vector<128x128xbf16>, vector<128x128xbf16>, vector<128x128xf32> -> vector<128x128xf32>
    %228 = arith.truncf %227 : vector<128x128xf32> to vector<128x128xbf16>
    %c3_166 = arith.constant 3 : index
    %c0_167 = arith.constant 0 : index
    %c0_168 = arith.constant 0 : index
    %229 = vector.load %arg9[%c3_166, %c0_167, %c0_168] : memref<9x128x128xbf16, #tpu.memory_space<vmem>>, vector<1x128x128xbf16>
    %230 = vector.shape_cast %229 : vector<1x128x128xbf16> to vector<128x128xbf16>
    %cst_169 = arith.constant dense<0.000000e+00> : vector<128x128xf32>
    %231 = tpu.matmul %228, %230, %cst_169 {dimension_numbers = #tpu.dot_dimension_numbers<[1], [0], [0], [1], [0, 0, 1, 1], [], []>} : vector<128x128xbf16>, vector<128x128xbf16>, vector<128x128xf32> -> vector<128x128xf32>
    %232 = arith.addf %224, %231 : vector<128x128xf32>
    %c4_170 = arith.constant 4 : index
    %c0_171 = arith.constant 0 : index
    %c0_172 = arith.constant 0 : index
    %233 = vector.load %arg8[%c4_170, %c0_171, %c0_172] : memref<9x128x128xbf16, #tpu.memory_space<vmem>>, vector<1x128x128xbf16>
    %234 = vector.shape_cast %233 : vector<1x128x128xbf16> to vector<128x128xbf16>
    %cst_173 = arith.constant dense<0.000000e+00> : vector<128x128xf32>
    %235 = tpu.matmul %234, %199, %cst_173 {dimension_numbers = #tpu.dot_dimension_numbers<[1], [0], [0], [1], [0, 0, 1, 1], [], []>} : vector<128x128xbf16>, vector<128x128xbf16>, vector<128x128xf32> -> vector<128x128xf32>
    %236 = arith.truncf %235 : vector<128x128xf32> to vector<128x128xbf16>
    %c4_174 = arith.constant 4 : index
    %c0_175 = arith.constant 0 : index
    %c0_176 = arith.constant 0 : index
    %237 = vector.load %arg9[%c4_174, %c0_175, %c0_176] : memref<9x128x128xbf16, #tpu.memory_space<vmem>>, vector<1x128x128xbf16>
    %238 = vector.shape_cast %237 : vector<1x128x128xbf16> to vector<128x128xbf16>
    %cst_177 = arith.constant dense<0.000000e+00> : vector<128x128xf32>
    %239 = tpu.matmul %236, %238, %cst_177 {dimension_numbers = #tpu.dot_dimension_numbers<[1], [0], [0], [1], [0, 0, 1, 1], [], []>} : vector<128x128xbf16>, vector<128x128xbf16>, vector<128x128xf32> -> vector<128x128xf32>
    %240 = arith.addf %232, %239 : vector<128x128xf32>
    %c5_178 = arith.constant 5 : index
    %c0_179 = arith.constant 0 : index
    %c0_180 = arith.constant 0 : index
    %241 = vector.load %arg8[%c5_178, %c0_179, %c0_180] : memref<9x128x128xbf16, #tpu.memory_space<vmem>>, vector<1x128x128xbf16>
    %242 = vector.shape_cast %241 : vector<1x128x128xbf16> to vector<128x128xbf16>
    %cst_181 = arith.constant dense<0.000000e+00> : vector<128x128xf32>
    %243 = tpu.matmul %242, %199, %cst_181 {dimension_numbers = #tpu.dot_dimension_numbers<[1], [0], [0], [1], [0, 0, 1, 1], [], []>} : vector<128x128xbf16>, vector<128x128xbf16>, vector<128x128xf32> -> vector<128x128xf32>
    %244 = arith.truncf %243 : vector<128x128xf32> to vector<128x128xbf16>
    %c5_182 = arith.constant 5 : index
    %c0_183 = arith.constant 0 : index
    %c0_184 = arith.constant 0 : index
    %245 = vector.load %arg9[%c5_182, %c0_183, %c0_184] : memref<9x128x128xbf16, #tpu.memory_space<vmem>>, vector<1x128x128xbf16>
    %246 = vector.shape_cast %245 : vector<1x128x128xbf16> to vector<128x128xbf16>
    %cst_185 = arith.constant dense<0.000000e+00> : vector<128x128xf32>
    %247 = tpu.matmul %244, %246, %cst_185 {dimension_numbers = #tpu.dot_dimension_numbers<[1], [0], [0], [1], [0, 0, 1, 1], [], []>} : vector<128x128xbf16>, vector<128x128xbf16>, vector<128x128xf32> -> vector<128x128xf32>
    %248 = arith.addf %240, %247 : vector<128x128xf32>
    %c6_186 = arith.constant 6 : index
    %c0_187 = arith.constant 0 : index
    %c0_188 = arith.constant 0 : index
    %249 = vector.load %arg8[%c6_186, %c0_187, %c0_188] : memref<9x128x128xbf16, #tpu.memory_space<vmem>>, vector<1x128x128xbf16>
    %250 = vector.shape_cast %249 : vector<1x128x128xbf16> to vector<128x128xbf16>
    %cst_189 = arith.constant dense<0.000000e+00> : vector<128x128xf32>
    %251 = tpu.matmul %250, %199, %cst_189 {dimension_numbers = #tpu.dot_dimension_numbers<[1], [0], [0], [1], [0, 0, 1, 1], [], []>} : vector<128x128xbf16>, vector<128x128xbf16>, vector<128x128xf32> -> vector<128x128xf32>
    %252 = arith.truncf %251 : vector<128x128xf32> to vector<128x128xbf16>
    %c6_190 = arith.constant 6 : index
    %c0_191 = arith.constant 0 : index
    %c0_192 = arith.constant 0 : index
    %253 = vector.load %arg9[%c6_190, %c0_191, %c0_192] : memref<9x128x128xbf16, #tpu.memory_space<vmem>>, vector<1x128x128xbf16>
    %254 = vector.shape_cast %253 : vector<1x128x128xbf16> to vector<128x128xbf16>
    %cst_193 = arith.constant dense<0.000000e+00> : vector<128x128xf32>
    %255 = tpu.matmul %252, %254, %cst_193 {dimension_numbers = #tpu.dot_dimension_numbers<[1], [0], [0], [1], [0, 0, 1, 1], [], []>} : vector<128x128xbf16>, vector<128x128xbf16>, vector<128x128xf32> -> vector<128x128xf32>
    %256 = arith.addf %248, %255 : vector<128x128xf32>
    %c7_194 = arith.constant 7 : index
    %c0_195 = arith.constant 0 : index
    %c0_196 = arith.constant 0 : index
    %257 = vector.load %arg8[%c7_194, %c0_195, %c0_196] : memref<9x128x128xbf16, #tpu.memory_space<vmem>>, vector<1x128x128xbf16>
    %258 = vector.shape_cast %257 : vector<1x128x128xbf16> to vector<128x128xbf16>
    %cst_197 = arith.constant dense<0.000000e+00> : vector<128x128xf32>
    %259 = tpu.matmul %258, %199, %cst_197 {dimension_numbers = #tpu.dot_dimension_numbers<[1], [0], [0], [1], [0, 0, 1, 1], [], []>} : vector<128x128xbf16>, vector<128x128xbf16>, vector<128x128xf32> -> vector<128x128xf32>
    %260 = arith.truncf %259 : vector<128x128xf32> to vector<128x128xbf16>
    %c7_198 = arith.constant 7 : index
    %c0_199 = arith.constant 0 : index
    %c0_200 = arith.constant 0 : index
    %261 = vector.load %arg9[%c7_198, %c0_199, %c0_200] : memref<9x128x128xbf16, #tpu.memory_space<vmem>>, vector<1x128x128xbf16>
    %262 = vector.shape_cast %261 : vector<1x128x128xbf16> to vector<128x128xbf16>
    %cst_201 = arith.constant dense<0.000000e+00> : vector<128x128xf32>
    %263 = tpu.matmul %260, %262, %cst_201 {dimension_numbers = #tpu.dot_dimension_numbers<[1], [0], [0], [1], [0, 0, 1, 1], [], []>} : vector<128x128xbf16>, vector<128x128xbf16>, vector<128x128xf32> -> vector<128x128xf32>
    %264 = arith.addf %256, %263 : vector<128x128xf32>
    %c8_202 = arith.constant 8 : index
    %c0_203 = arith.constant 0 : index
    %c0_204 = arith.constant 0 : index
    %265 = vector.load %arg8[%c8_202, %c0_203, %c0_204] : memref<9x128x128xbf16, #tpu.memory_space<vmem>>, vector<1x128x128xbf16>
    %266 = vector.shape_cast %265 : vector<1x128x128xbf16> to vector<128x128xbf16>
    %cst_205 = arith.constant dense<0.000000e+00> : vector<128x128xf32>
    %267 = tpu.matmul %266, %199, %cst_205 {dimension_numbers = #tpu.dot_dimension_numbers<[1], [0], [0], [1], [0, 0, 1, 1], [], []>} : vector<128x128xbf16>, vector<128x128xbf16>, vector<128x128xf32> -> vector<128x128xf32>
    %268 = arith.truncf %267 : vector<128x128xf32> to vector<128x128xbf16>
    %c8_206 = arith.constant 8 : index
    %c0_207 = arith.constant 0 : index
    %c0_208 = arith.constant 0 : index
    %269 = vector.load %arg9[%c8_206, %c0_207, %c0_208] : memref<9x128x128xbf16, #tpu.memory_space<vmem>>, vector<1x128x128xbf16>
    %270 = vector.shape_cast %269 : vector<1x128x128xbf16> to vector<128x128xbf16>
    %cst_209 = arith.constant dense<0.000000e+00> : vector<128x128xf32>
    %271 = tpu.matmul %268, %270, %cst_209 {dimension_numbers = #tpu.dot_dimension_numbers<[1], [0], [0], [1], [0, 0, 1, 1], [], []>} : vector<128x128xbf16>, vector<128x128xbf16>, vector<128x128xf32> -> vector<128x128xf32>
    %272 = arith.addf %264, %271 : vector<128x128xf32>
    %c0_210 = arith.constant 0 : index
    %c0_211 = arith.constant 0 : index
    %273 = vector.load %arg10[%c0_210, %c0_211] : memref<1x128xf32, #tpu.memory_space<vmem>>, vector<1x128xf32>
    %c0_212 = arith.constant 0 : index
    %c0_213 = arith.constant 0 : index
    %274 = vector.load %arg11[%c0_212, %c0_213] : memref<1x128xf32, #tpu.memory_space<vmem>>, vector<1x128xf32>
    %cst_214 = arith.constant dense<0.000000e+00> : vector<128xf32>
    %275 = vector.multi_reduction <add>, %272, %cst_214 [0] : vector<128x128xf32> to vector<128xf32>
    %276 = vector.shape_cast %275 : vector<128xf32> to vector<1x128xf32>
    %cst_215 = arith.constant 0.055555556 : f32
    %277 = vector.broadcast %cst_215 : f32 to vector<1x128xf32>
    %278 = arith.mulf %276, %277 : vector<1x128xf32>
    %279 = vector.broadcast %278 : vector<1x128xf32> to vector<128x128xf32>
    %280 = arith.subf %272, %279 : vector<128x128xf32>
    %281 = tpu.iota {dimensions = array<i32: 0>} : vector<128x1xi32>
    %c18_i32 = arith.constant 18 : i32
    %282 = vector.broadcast %c18_i32 : i32 to vector<128x1xi32>
    %283 = arith.cmpi slt, %281, %282 : vector<128x1xi32>
    %284 = arith.extui %283 : vector<128x1xi1> to vector<128x1xi32>
    %285 = arith.sitofp %284 : vector<128x1xi32> to vector<128x1xf32>
    %286 = vector.broadcast %285 : vector<128x1xf32> to vector<128x128xf32>
    %287 = arith.mulf %280, %286 : vector<128x128xf32>
    %288 = arith.mulf %287, %287 : vector<128x128xf32>
    %cst_216 = arith.constant dense<0.000000e+00> : vector<128xf32>
    %289 = vector.multi_reduction <add>, %288, %cst_216 [0] : vector<128x128xf32> to vector<128xf32>
    %290 = vector.shape_cast %289 : vector<128xf32> to vector<1x128xf32>
    %cst_217 = arith.constant 0.055555556 : f32
    %291 = vector.broadcast %cst_217 : f32 to vector<1x128xf32>
    %292 = arith.mulf %290, %291 : vector<1x128xf32>
    %cst_218 = arith.constant 9.99999974E-6 : f32
    %293 = vector.broadcast %cst_218 : f32 to vector<1x128xf32>
    %294 = arith.addf %292, %293 : vector<1x128xf32>
    %295 = math.rsqrt %294 : vector<1x128xf32>
    %296 = arith.mulf %273, %295 : vector<1x128xf32>
    %297 = vector.broadcast %278 : vector<1x128xf32> to vector<128x128xf32>
    %298 = arith.subf %272, %297 : vector<128x128xf32>
    %299 = vector.broadcast %296 : vector<1x128xf32> to vector<128x128xf32>
    %300 = arith.mulf %298, %299 : vector<128x128xf32>
    %301 = vector.broadcast %274 : vector<1x128xf32> to vector<128x128xf32>
    %302 = arith.addf %300, %301 : vector<128x128xf32>
    %cst_219 = arith.constant 2.000000e-01 : f32
    %303 = vector.broadcast %cst_219 : f32 to vector<128x128xf32>
    %304 = arith.mulf %303, %302 : vector<128x128xf32>
    %305 = arith.maximumf %302, %304 : vector<128x128xf32>
    %306 = arith.truncf %305 : vector<128x128xf32> to vector<128x128xbf16>
    %cst_220 = arith.constant 0.000000e+00 : f32
    %307 = vector.broadcast %cst_220 : f32 to vector<8x128xf32>
    %c0_221 = arith.constant 0 : index
    %c0_222 = arith.constant 0 : index
    %c0_223 = arith.constant 0 : index
    %308 = vector.load %arg12[%c0_221, %c0_222, %c0_223] : memref<9x8x128xbf16, #tpu.memory_space<vmem>>, vector<1x8x128xbf16>
    %309 = vector.shape_cast %308 : vector<1x8x128xbf16> to vector<8x128xbf16>
    %cst_224 = arith.constant dense<0.000000e+00> : vector<8x128xf32>
    %310 = tpu.matmul %309, %306, %cst_224 {dimension_numbers = #tpu.dot_dimension_numbers<[1], [0], [0], [1], [0, 0, 1, 1], [], []>} : vector<8x128xbf16>, vector<128x128xbf16>, vector<8x128xf32> -> vector<8x128xf32>
    %311 = arith.truncf %310 : vector<8x128xf32> to vector<8x128xbf16>
    %c0_225 = arith.constant 0 : index
    %c0_226 = arith.constant 0 : index
    %c0_227 = arith.constant 0 : index
    %312 = vector.load %arg13[%c0_225, %c0_226, %c0_227] : memref<9x128x128xbf16, #tpu.memory_space<vmem>>, vector<1x128x128xbf16>
    %313 = vector.shape_cast %312 : vector<1x128x128xbf16> to vector<128x128xbf16>
    %cst_228 = arith.constant dense<0.000000e+00> : vector<8x128xf32>
    %314 = tpu.matmul %311, %313, %cst_228 {dimension_numbers = #tpu.dot_dimension_numbers<[1], [0], [0], [1], [0, 0, 1, 1], [], []>} : vector<8x128xbf16>, vector<128x128xbf16>, vector<8x128xf32> -> vector<8x128xf32>
    %315 = arith.addf %307, %314 : vector<8x128xf32>
    %c1_229 = arith.constant 1 : index
    %c0_230 = arith.constant 0 : index
    %c0_231 = arith.constant 0 : index
    %316 = vector.load %arg12[%c1_229, %c0_230, %c0_231] : memref<9x8x128xbf16, #tpu.memory_space<vmem>>, vector<1x8x128xbf16>
    %317 = vector.shape_cast %316 : vector<1x8x128xbf16> to vector<8x128xbf16>
    %cst_232 = arith.constant dense<0.000000e+00> : vector<8x128xf32>
    %318 = tpu.matmul %317, %306, %cst_232 {dimension_numbers = #tpu.dot_dimension_numbers<[1], [0], [0], [1], [0, 0, 1, 1], [], []>} : vector<8x128xbf16>, vector<128x128xbf16>, vector<8x128xf32> -> vector<8x128xf32>
    %319 = arith.truncf %318 : vector<8x128xf32> to vector<8x128xbf16>
    %c1_233 = arith.constant 1 : index
    %c0_234 = arith.constant 0 : index
    %c0_235 = arith.constant 0 : index
    %320 = vector.load %arg13[%c1_233, %c0_234, %c0_235] : memref<9x128x128xbf16, #tpu.memory_space<vmem>>, vector<1x128x128xbf16>
    %321 = vector.shape_cast %320 : vector<1x128x128xbf16> to vector<128x128xbf16>
    %cst_236 = arith.constant dense<0.000000e+00> : vector<8x128xf32>
    %322 = tpu.matmul %319, %321, %cst_236 {dimension_numbers = #tpu.dot_dimension_numbers<[1], [0], [0], [1], [0, 0, 1, 1], [], []>} : vector<8x128xbf16>, vector<128x128xbf16>, vector<8x128xf32> -> vector<8x128xf32>
    %323 = arith.addf %315, %322 : vector<8x128xf32>
    %c2_237 = arith.constant 2 : index
    %c0_238 = arith.constant 0 : index
    %c0_239 = arith.constant 0 : index
    %324 = vector.load %arg12[%c2_237, %c0_238, %c0_239] : memref<9x8x128xbf16, #tpu.memory_space<vmem>>, vector<1x8x128xbf16>
    %325 = vector.shape_cast %324 : vector<1x8x128xbf16> to vector<8x128xbf16>
    %cst_240 = arith.constant dense<0.000000e+00> : vector<8x128xf32>
    %326 = tpu.matmul %325, %306, %cst_240 {dimension_numbers = #tpu.dot_dimension_numbers<[1], [0], [0], [1], [0, 0, 1, 1], [], []>} : vector<8x128xbf16>, vector<128x128xbf16>, vector<8x128xf32> -> vector<8x128xf32>
    %327 = arith.truncf %326 : vector<8x128xf32> to vector<8x128xbf16>
    %c2_241 = arith.constant 2 : index
    %c0_242 = arith.constant 0 : index
    %c0_243 = arith.constant 0 : index
    %328 = vector.load %arg13[%c2_241, %c0_242, %c0_243] : memref<9x128x128xbf16, #tpu.memory_space<vmem>>, vector<1x128x128xbf16>
    %329 = vector.shape_cast %328 : vector<1x128x128xbf16> to vector<128x128xbf16>
    %cst_244 = arith.constant dense<0.000000e+00> : vector<8x128xf32>
    %330 = tpu.matmul %327, %329, %cst_244 {dimension_numbers = #tpu.dot_dimension_numbers<[1], [0], [0], [1], [0, 0, 1, 1], [], []>} : vector<8x128xbf16>, vector<128x128xbf16>, vector<8x128xf32> -> vector<8x128xf32>
    %331 = arith.addf %323, %330 : vector<8x128xf32>
    %c3_245 = arith.constant 3 : index
    %c0_246 = arith.constant 0 : index
    %c0_247 = arith.constant 0 : index
    %332 = vector.load %arg12[%c3_245, %c0_246, %c0_247] : memref<9x8x128xbf16, #tpu.memory_space<vmem>>, vector<1x8x128xbf16>
    %333 = vector.shape_cast %332 : vector<1x8x128xbf16> to vector<8x128xbf16>
    %cst_248 = arith.constant dense<0.000000e+00> : vector<8x128xf32>
    %334 = tpu.matmul %333, %306, %cst_248 {dimension_numbers = #tpu.dot_dimension_numbers<[1], [0], [0], [1], [0, 0, 1, 1], [], []>} : vector<8x128xbf16>, vector<128x128xbf16>, vector<8x128xf32> -> vector<8x128xf32>
    %335 = arith.truncf %334 : vector<8x128xf32> to vector<8x128xbf16>
    %c3_249 = arith.constant 3 : index
    %c0_250 = arith.constant 0 : index
    %c0_251 = arith.constant 0 : index
    %336 = vector.load %arg13[%c3_249, %c0_250, %c0_251] : memref<9x128x128xbf16, #tpu.memory_space<vmem>>, vector<1x128x128xbf16>
    %337 = vector.shape_cast %336 : vector<1x128x128xbf16> to vector<128x128xbf16>
    %cst_252 = arith.constant dense<0.000000e+00> : vector<8x128xf32>
    %338 = tpu.matmul %335, %337, %cst_252 {dimension_numbers = #tpu.dot_dimension_numbers<[1], [0], [0], [1], [0, 0, 1, 1], [], []>} : vector<8x128xbf16>, vector<128x128xbf16>, vector<8x128xf32> -> vector<8x128xf32>
    %339 = arith.addf %331, %338 : vector<8x128xf32>
    %c4_253 = arith.constant 4 : index
    %c0_254 = arith.constant 0 : index
    %c0_255 = arith.constant 0 : index
    %340 = vector.load %arg12[%c4_253, %c0_254, %c0_255] : memref<9x8x128xbf16, #tpu.memory_space<vmem>>, vector<1x8x128xbf16>
    %341 = vector.shape_cast %340 : vector<1x8x128xbf16> to vector<8x128xbf16>
    %cst_256 = arith.constant dense<0.000000e+00> : vector<8x128xf32>
    %342 = tpu.matmul %341, %306, %cst_256 {dimension_numbers = #tpu.dot_dimension_numbers<[1], [0], [0], [1], [0, 0, 1, 1], [], []>} : vector<8x128xbf16>, vector<128x128xbf16>, vector<8x128xf32> -> vector<8x128xf32>
    %343 = arith.truncf %342 : vector<8x128xf32> to vector<8x128xbf16>
    %c4_257 = arith.constant 4 : index
    %c0_258 = arith.constant 0 : index
    %c0_259 = arith.constant 0 : index
    %344 = vector.load %arg13[%c4_257, %c0_258, %c0_259] : memref<9x128x128xbf16, #tpu.memory_space<vmem>>, vector<1x128x128xbf16>
    %345 = vector.shape_cast %344 : vector<1x128x128xbf16> to vector<128x128xbf16>
    %cst_260 = arith.constant dense<0.000000e+00> : vector<8x128xf32>
    %346 = tpu.matmul %343, %345, %cst_260 {dimension_numbers = #tpu.dot_dimension_numbers<[1], [0], [0], [1], [0, 0, 1, 1], [], []>} : vector<8x128xbf16>, vector<128x128xbf16>, vector<8x128xf32> -> vector<8x128xf32>
    %347 = arith.addf %339, %346 : vector<8x128xf32>
    %c5_261 = arith.constant 5 : index
    %c0_262 = arith.constant 0 : index
    %c0_263 = arith.constant 0 : index
    %348 = vector.load %arg12[%c5_261, %c0_262, %c0_263] : memref<9x8x128xbf16, #tpu.memory_space<vmem>>, vector<1x8x128xbf16>
    %349 = vector.shape_cast %348 : vector<1x8x128xbf16> to vector<8x128xbf16>
    %cst_264 = arith.constant dense<0.000000e+00> : vector<8x128xf32>
    %350 = tpu.matmul %349, %306, %cst_264 {dimension_numbers = #tpu.dot_dimension_numbers<[1], [0], [0], [1], [0, 0, 1, 1], [], []>} : vector<8x128xbf16>, vector<128x128xbf16>, vector<8x128xf32> -> vector<8x128xf32>
    %351 = arith.truncf %350 : vector<8x128xf32> to vector<8x128xbf16>
    %c5_265 = arith.constant 5 : index
    %c0_266 = arith.constant 0 : index
    %c0_267 = arith.constant 0 : index
    %352 = vector.load %arg13[%c5_265, %c0_266, %c0_267] : memref<9x128x128xbf16, #tpu.memory_space<vmem>>, vector<1x128x128xbf16>
    %353 = vector.shape_cast %352 : vector<1x128x128xbf16> to vector<128x128xbf16>
    %cst_268 = arith.constant dense<0.000000e+00> : vector<8x128xf32>
    %354 = tpu.matmul %351, %353, %cst_268 {dimension_numbers = #tpu.dot_dimension_numbers<[1], [0], [0], [1], [0, 0, 1, 1], [], []>} : vector<8x128xbf16>, vector<128x128xbf16>, vector<8x128xf32> -> vector<8x128xf32>
    %355 = arith.addf %347, %354 : vector<8x128xf32>
    %c6_269 = arith.constant 6 : index
    %c0_270 = arith.constant 0 : index
    %c0_271 = arith.constant 0 : index
    %356 = vector.load %arg12[%c6_269, %c0_270, %c0_271] : memref<9x8x128xbf16, #tpu.memory_space<vmem>>, vector<1x8x128xbf16>
    %357 = vector.shape_cast %356 : vector<1x8x128xbf16> to vector<8x128xbf16>
    %cst_272 = arith.constant dense<0.000000e+00> : vector<8x128xf32>
    %358 = tpu.matmul %357, %306, %cst_272 {dimension_numbers = #tpu.dot_dimension_numbers<[1], [0], [0], [1], [0, 0, 1, 1], [], []>} : vector<8x128xbf16>, vector<128x128xbf16>, vector<8x128xf32> -> vector<8x128xf32>
    %359 = arith.truncf %358 : vector<8x128xf32> to vector<8x128xbf16>
    %c6_273 = arith.constant 6 : index
    %c0_274 = arith.constant 0 : index
    %c0_275 = arith.constant 0 : index
    %360 = vector.load %arg13[%c6_273, %c0_274, %c0_275] : memref<9x128x128xbf16, #tpu.memory_space<vmem>>, vector<1x128x128xbf16>
    %361 = vector.shape_cast %360 : vector<1x128x128xbf16> to vector<128x128xbf16>
    %cst_276 = arith.constant dense<0.000000e+00> : vector<8x128xf32>
    %362 = tpu.matmul %359, %361, %cst_276 {dimension_numbers = #tpu.dot_dimension_numbers<[1], [0], [0], [1], [0, 0, 1, 1], [], []>} : vector<8x128xbf16>, vector<128x128xbf16>, vector<8x128xf32> -> vector<8x128xf32>
    %363 = arith.addf %355, %362 : vector<8x128xf32>
    %c7_277 = arith.constant 7 : index
    %c0_278 = arith.constant 0 : index
    %c0_279 = arith.constant 0 : index
    %364 = vector.load %arg12[%c7_277, %c0_278, %c0_279] : memref<9x8x128xbf16, #tpu.memory_space<vmem>>, vector<1x8x128xbf16>
    %365 = vector.shape_cast %364 : vector<1x8x128xbf16> to vector<8x128xbf16>
    %cst_280 = arith.constant dense<0.000000e+00> : vector<8x128xf32>
    %366 = tpu.matmul %365, %306, %cst_280 {dimension_numbers = #tpu.dot_dimension_numbers<[1], [0], [0], [1], [0, 0, 1, 1], [], []>} : vector<8x128xbf16>, vector<128x128xbf16>, vector<8x128xf32> -> vector<8x128xf32>
    %367 = arith.truncf %366 : vector<8x128xf32> to vector<8x128xbf16>
    %c7_281 = arith.constant 7 : index
    %c0_282 = arith.constant 0 : index
    %c0_283 = arith.constant 0 : index
    %368 = vector.load %arg13[%c7_281, %c0_282, %c0_283] : memref<9x128x128xbf16, #tpu.memory_space<vmem>>, vector<1x128x128xbf16>
    %369 = vector.shape_cast %368 : vector<1x128x128xbf16> to vector<128x128xbf16>
    %cst_284 = arith.constant dense<0.000000e+00> : vector<8x128xf32>
    %370 = tpu.matmul %367, %369, %cst_284 {dimension_numbers = #tpu.dot_dimension_numbers<[1], [0], [0], [1], [0, 0, 1, 1], [], []>} : vector<8x128xbf16>, vector<128x128xbf16>, vector<8x128xf32> -> vector<8x128xf32>
    %371 = arith.addf %363, %370 : vector<8x128xf32>
    %c8_285 = arith.constant 8 : index
    %c0_286 = arith.constant 0 : index
    %c0_287 = arith.constant 0 : index
    %372 = vector.load %arg12[%c8_285, %c0_286, %c0_287] : memref<9x8x128xbf16, #tpu.memory_space<vmem>>, vector<1x8x128xbf16>
    %373 = vector.shape_cast %372 : vector<1x8x128xbf16> to vector<8x128xbf16>
    %cst_288 = arith.constant dense<0.000000e+00> : vector<8x128xf32>
    %374 = tpu.matmul %373, %306, %cst_288 {dimension_numbers = #tpu.dot_dimension_numbers<[1], [0], [0], [1], [0, 0, 1, 1], [], []>} : vector<8x128xbf16>, vector<128x128xbf16>, vector<8x128xf32> -> vector<8x128xf32>
    %375 = arith.truncf %374 : vector<8x128xf32> to vector<8x128xbf16>
    %c8_289 = arith.constant 8 : index
    %c0_290 = arith.constant 0 : index
    %c0_291 = arith.constant 0 : index
    %376 = vector.load %arg13[%c8_289, %c0_290, %c0_291] : memref<9x128x128xbf16, #tpu.memory_space<vmem>>, vector<1x128x128xbf16>
    %377 = vector.shape_cast %376 : vector<1x128x128xbf16> to vector<128x128xbf16>
    %cst_292 = arith.constant dense<0.000000e+00> : vector<8x128xf32>
    %378 = tpu.matmul %375, %377, %cst_292 {dimension_numbers = #tpu.dot_dimension_numbers<[1], [0], [0], [1], [0, 0, 1, 1], [], []>} : vector<8x128xbf16>, vector<128x128xbf16>, vector<8x128xf32> -> vector<8x128xf32>
    %379 = arith.addf %371, %378 : vector<8x128xf32>
    %c0_293 = arith.constant 0 : index
    %c0_294 = arith.constant 0 : index
    %380 = vector.load %arg14[%c0_293, %c0_294] : memref<1x128xf32, #tpu.memory_space<vmem>>, vector<1x128xf32>
    %381 = vector.broadcast %380 : vector<1x128xf32> to vector<8x128xf32>
    %382 = arith.addf %379, %381 : vector<8x128xf32>
    %cst_295 = arith.constant 0.000000e+00 : f32
    %383 = vector.broadcast %cst_295 : f32 to vector<8x128xf32>
    %384 = arith.subf %383, %382 : vector<8x128xf32>
    %385 = math.exp %384 : vector<8x128xf32>
    %cst_296 = arith.constant 1.000000e+00 : f32
    %386 = vector.broadcast %cst_296 : f32 to vector<8x128xf32>
    %387 = arith.addf %386, %385 : vector<8x128xf32>
    %388 = tpu.reciprocal %387 {approx = true} : vector<8x128xf32> -> vector<8x128xf32>
    %c0_297 = arith.constant 0 : index
    %c0_298 = arith.constant 0 : index
    %389 = vector.load %arg15[%c0_297, %c0_298] : memref<8x128xf32, #tpu.memory_space<vmem>>, vector<8x128xf32>
    tpu.vector_store %arg15[%c0_297, %c0_298], %388 {strides = array<i32>} : memref<8x128xf32, #tpu.memory_space<vmem>>, vector<8x128xf32>,
    return
  }
}

</mosaic_0001>

<llo_original>
// kernel: forward.1
$region0: #{forward.1}
  #allocation0 [shape = 'u32[]', space=smem, size = 0x4, offset = 0x4, fixed_abs, tag = 'smem constant byte address 0x4 - core index']
  #allocation1 [shape = 'u32[72,128]{1,0:T(1,128)}', space=vmem, size = 0x9000, scoped, tag = 'internal scratch']
  %s0 = inlined_call_operand.vmem [shape: bf16[512,128], index: 0, kind: input, shape index: {}]
  %s1 = inlined_call_operand.vmem [shape: bf16[128,128], index: 1, kind: input, shape index: {}]
  %s2 = inlined_call_operand.vmem [shape: f32[1,128], index: 2, kind: input, shape index: {}]
  %s3 = inlined_call_operand.vmem [shape: f32[1,128], index: 3, kind: input, shape index: {}]
  %s4 = inlined_call_operand.vmem [shape: bf16[16,128,512], index: 4, kind: input, shape index: {}]
  %s5 = inlined_call_operand.vmem [shape: bf16[16,128,128], index: 5, kind: input, shape index: {}]
  %s6 = inlined_call_operand.vmem [shape: f32[1,128], index: 6, kind: input, shape index: {}]
  %s7 = inlined_call_operand.vmem [shape: f32[1,128], index: 7, kind: input, shape index: {}]
  %s8 = inlined_call_operand.vmem [shape: bf16[9,128,128], index: 8, kind: input, shape index: {}]
  %s9 = inlined_call_operand.vmem [shape: bf16[9,128,128], index: 9, kind: input, shape index: {}]
  %s10 = inlined_call_operand.vmem [shape: f32[1,128], index: 10, kind: input, shape index: {}]
  %s11 = inlined_call_operand.vmem [shape: f32[1,128], index: 11, kind: input, shape index: {}]
  %s12 = inlined_call_operand.vmem [shape: bf16[9,8,128], index: 12, kind: input, shape index: {}]
  %s13 = inlined_call_operand.vmem [shape: bf16[9,128,128], index: 13, kind: input, shape index: {}]
  %s14 = inlined_call_operand.vmem [shape: f32[1,128], index: 14, kind: input, shape index: {}]
  %s15 = inlined_call_operand.vmem [shape: f32[8,128], index: 15, kind: output, shape index: {}]
  %s16 = sld [smem:[#allocation0]]
  $region70: #{forward.1} parent=0
    _
  %s18 = ssub.s32 1, %s16
  %s19 = scalar_select 0, %s18, %s16
  // Predicated region
  $region2: #{forward.1} parent=0 // pred_check
    _
  $region3: #{forward.1} parent=0 // pred_check_branch
    %21 = sbr.rel (0) target = $region5
  $region4: #{forward.1} parent=0 // pred_region
    _
  $region5: #{forward.1} parent=0 // pred_fallthru
    _
  // Predicated region
  $region6: #{forward.1} parent=0 // pred_check
    _
  $region7: #{forward.1} parent=0 // pred_check_branch
    %23 = sbr.rel (0) target = $region9
  $region8: #{forward.1} parent=0 // pred_region
    _
  $region9: #{forward.1} parent=0 // pred_fallthru
    _
  // Predicated region
  $region10: #{forward.1} parent=0 // pred_check
    _
  $region11: #{forward.1} parent=0 // pred_check_branch
    %25 = sbr.rel (0) target = $region13
  $region12: #{forward.1} parent=0 // pred_region
    _
  $region13: #{forward.1} parent=0 // pred_fallthru
    _
  // Predicated region
  $region14: #{forward.1} parent=0 // pred_check
    _
  $region15: #{forward.1} parent=0 // pred_check_branch
    %27 = sbr.rel (0) target = $region17
  $region16: #{forward.1} parent=0 // pred_region
    _
  $region17: #{forward.1} parent=0 // pred_fallthru
    _
  // Predicated region
  $region18: #{forward.1} parent=0 // pred_check
    _
  $region19: #{forward.1} parent=0 // pred_check_branch
    %29 = sbr.rel (0) target = $region21
  $region20: #{forward.1} parent=0 // pred_region
    _
  $region21: #{forward.1} parent=0 // pred_fallthru
    _
  // Predicated region
  $region22: #{forward.1} parent=0 // pred_check
    _
  $region23: #{forward.1} parent=0 // pred_check_branch
    %31 = sbr.rel (0) target = $region25
  $region24: #{forward.1} parent=0 // pred_region
    _
  $region25: #{forward.1} parent=0 // pred_fallthru
    _
  // Predicated region
  $region26: #{forward.1} parent=0 // pred_check
    _
  $region27: #{forward.1} parent=0 // pred_check_branch
    %33 = sbr.rel (0) target = $region29
  $region28: #{forward.1} parent=0 // pred_region
    _
  $region29: #{forward.1} parent=0 // pred_fallthru
    _
  // Predicated region
  $region30: #{forward.1} parent=0 // pred_check
    _
  $region31: #{forward.1} parent=0 // pred_check_branch
    %35 = sbr.rel (0) target = $region33
  $region32: #{forward.1} parent=0 // pred_region
    _
  $region33: #{forward.1} parent=0 // pred_fallthru
    _
  // Predicated region
  $region34: #{forward.1} parent=0 // pred_check
    _
  $region35: #{forward.1} parent=0 // pred_check_branch
    %37 = sbr.rel (0) target = $region37
  $region36: #{forward.1} parent=0 // pred_region
    _
  $region37: #{forward.1} parent=0 // pred_fallthru
    _
  // Predicated region
  $region38: #{forward.1} parent=0 // pred_check
    _
  $region39: #{forward.1} parent=0 // pred_check_branch
    %39 = sbr.rel (0) target = $region41
  $region40: #{forward.1} parent=0 // pred_region
    _
  $region41: #{forward.1} parent=0 // pred_fallthru
    _
  // Predicated region
  $region42: #{forward.1} parent=0 // pred_check
    _
  $region43: #{forward.1} parent=0 // pred_check_branch
    %41 = sbr.rel (0) target = $region45
  $region44: #{forward.1} parent=0 // pred_region
    _
  $region45: #{forward.1} parent=0 // pred_fallthru
    _
  // Predicated region
  $region46: #{forward.1} parent=0 // pred_check
    _
  $region47: #{forward.1} parent=0 // pred_check_branch
    %43 = sbr.rel (0) target = $region49
  $region48: #{forward.1} parent=0 // pred_region
    _
  $region49: #{forward.1} parent=0 // pred_fallthru
    _
  // Predicated region
  $region50: #{forward.1} parent=0 // pred_check
    _
  $region51: #{forward.1} parent=0 // pred_check_branch
    %45 = sbr.rel (0) target = $region53
  $region52: #{forward.1} parent=0 // pred_region
    _
  $region53: #{forward.1} parent=0 // pred_fallthru
    _
  // Predicated region
  $region54: #{forward.1} parent=0 // pred_check
    _
  $region55: #{forward.1} parent=0 // pred_check_branch
    %47 = sbr.rel (0) target = $region57
  $region56: #{forward.1} parent=0 // pred_region
    _
  $region57: #{forward.1} parent=0 // pred_fallthru
    _
  // Predicated region
  $region58: #{forward.1} parent=0 // pred_check
    _
  $region59: #{forward.1} parent=0 // pred_check_branch
    %49 = sbr.rel (0) target = $region61
  $region60: #{forward.1} parent=0 // pred_region
    _
  $region61: #{forward.1} parent=0 // pred_fallthru
    _
  %v50 = vld [vmem:[%s0] sm:$0xf]
  %v51 = vld [vmem:[%s0 + $0x4] sm:$0xf]
  %v52 = vld [vmem:[%s0 + $0x8] sm:$0xf]
  %v53 = vld [vmem:[%s0 + $0xc] sm:$0xf]
  %v54 = vld [vmem:[%s0 + $0x10] sm:$0xf]
  %v55 = vld [vmem:[%s0 + $0x14] sm:$0xf]
  %v56 = vld [vmem:[%s0 + $0x18] sm:$0xf]
  %v57 = vld [vmem:[%s0 + $0x1c] sm:$0xf]
  %v58 = vld [vmem:[%s0 + $0x20] sm:$0xf]
  %v59 = vld [vmem:[%s0 + $0x24] sm:$0xf]
  %v60 = vld [vmem:[%s0 + $0x28] sm:$0xf]
  %v61 = vld [vmem:[%s0 + $0x2c] sm:$0xf]
  %v62 = vld [vmem:[%s0 + $0x30] sm:$0xf]
  %v63 = vld [vmem:[%s0 + $0x34] sm:$0xf]
  %v64 = vld [vmem:[%s0 + $0x38] sm:$0xf]
  %v65 = vld [vmem:[%s0 + $0x3c] sm:$0xf]
  %v66 = vld [vmem:[%s0 + $0x40] sm:$0xf]
  %v67 = vld [vmem:[%s0 + $0x44] sm:$0xf]
  %v68 = vld [vmem:[%s0 + $0x48] sm:$0xf]
  %v69 = vld [vmem:[%s0 + $0x4c] sm:$0xf]
  %v70 = vld [vmem:[%s0 + $0x50] sm:$0xf]
  %v71 = vld [vmem:[%s0 + $0x54] sm:$0xf]
  %v72 = vld [vmem:[%s0 + $0x58] sm:$0xf]
  %v73 = vld [vmem:[%s0 + $0x5c] sm:$0xf]
  %v74 = vld [vmem:[%s0 + $0x60] sm:$0xf]
  %v75 = vld [vmem:[%s0 + $0x64] sm:$0xf]
  %v76 = vld [vmem:[%s0 + $0x68] sm:$0xf]
  %v77 = vld [vmem:[%s0 + $0x6c] sm:$0xf]
  %v78 = vld [vmem:[%s0 + $0x70] sm:$0xf]
  %v79 = vld [vmem:[%s0 + $0x74] sm:$0xf]
  %v80 = vld [vmem:[%s0 + $0x78] sm:$0xf]
  %v81 = vld [vmem:[%s0 + $0x7c] sm:$0xf]
  %v82 = vld [vmem:[%s0 + $0x80] sm:$0xf]
  %v83 = vld [vmem:[%s0 + $0x84] sm:$0xf]
  %v84 = vld [vmem:[%s0 + $0x88] sm:$0xf]
  %v85 = vld [vmem:[%s0 + $0x8c] sm:$0xf]
  %v86 = vld [vmem:[%s0 + $0x90] sm:$0xf]
  %v87 = vld [vmem:[%s0 + $0x94] sm:$0xf]
  %v88 = vld [vmem:[%s0 + $0x98] sm:$0xf]
  %v89 = vld [vmem:[%s0 + $0x9c] sm:$0xf]
  %v90 = vld [vmem:[%s0 + $0xa0] sm:$0xf]
  %v91 = vld [vmem:[%s0 + $0xa4] sm:$0xf]
  %v92 = vld [vmem:[%s0 + $0xa8] sm:$0xf]
  %v93 = vld [vmem:[%s0 + $0xac] sm:$0xf]
  %v94 = vld [vmem:[%s0 + $0xb0] sm:$0xf]
  %v95 = vld [vmem:[%s0 + $0xb4] sm:$0xf]
  %v96 = vld [vmem:[%s0 + $0xb8] sm:$0xf]
  %v97 = vld [vmem:[%s0 + $0xbc] sm:$0xf]
  %v98 = vld [vmem:[%s0 + $0xc0] sm:$0xf]
  %v99 = vld [vmem:[%s0 + $0xc4] sm:$0xf]
  %v100 = vld [vmem:[%s0 + $0xc8] sm:$0xf]
  %v101 = vld [vmem:[%s0 + $0xcc] sm:$0xf]
  %v102 = vld [vmem:[%s0 + $0xd0] sm:$0xf]
  %v103 = vld [vmem:[%s0 + $0xd4] sm:$0xf]
  %v104 = vld [vmem:[%s0 + $0xd8] sm:$0xf]
  %v105 = vld [vmem:[%s0 + $0xdc] sm:$0xf]
  %v106 = vld [vmem:[%s0 + $0xe0] sm:$0xf]
  %v107 = vld [vmem:[%s0 + $0xe4] sm:$0xf]
  %v108 = vld [vmem:[%s0 + $0xe8] sm:$0xf]
  %v109 = vld [vmem:[%s0 + $0xec] sm:$0xf]
  %v110 = vld [vmem:[%s0 + $0xf0] sm:$0xf]
  %v111 = vld [vmem:[%s0 + $0xf4] sm:$0xf]
  %v112 = vld [vmem:[%s0 + $0xf8] sm:$0xf]
  %v113 = vld [vmem:[%s0 + $0xfc] sm:$0xf]
  %v114 = vld [vmem:[%s1] sm:$0xf]
  %v115 = vld [vmem:[%s1 + $0x4] sm:$0xf]
  %v116 = vld [vmem:[%s1 + $0x8] sm:$0xf]
  %v117 = vld [vmem:[%s1 + $0xc] sm:$0xf]
  %v118 = vld [vmem:[%s1 + $0x10] sm:$0xf]
  %v119 = vld [vmem:[%s1 + $0x14] sm:$0xf]
  %v120 = vld [vmem:[%s1 + $0x18] sm:$0xf]
  %v121 = vld [vmem:[%s1 + $0x1c] sm:$0xf]
  %v122 = vld [vmem:[%s1 + $0x20] sm:$0xf]
  %v123 = vld [vmem:[%s1 + $0x24] sm:$0xf]
  %v124 = vld [vmem:[%s1 + $0x28] sm:$0xf]
  %v125 = vld [vmem:[%s1 + $0x2c] sm:$0xf]
  %v126 = vld [vmem:[%s1 + $0x30] sm:$0xf]
  %v127 = vld [vmem:[%s1 + $0x34] sm:$0xf]
  %v128 = vld [vmem:[%s1 + $0x38] sm:$0xf]
  %v129 = vld [vmem:[%s1 + $0x3c] sm:$0xf]
  %v194 = vunpack.c.l.b16 %v50
  %v195 = vunpack.c.l.b16 %v51
  %v196 = vunpack.c.l.b16 %v52
  %v197 = vunpack.c.l.b16 %v53
  %v198 = vunpack.c.l.b16 %v54
  %v199 = vunpack.c.l.b16 %v55
  %v200 = vunpack.c.l.b16 %v56
  %v201 = vunpack.c.l.b16 %v57
  %v202 = vunpack.c.l.b16 %v58
  %v203 = vunpack.c.l.b16 %v59
  %v204 = vunpack.c.l.b16 %v60
  %v205 = vunpack.c.l.b16 %v61
  %v206 = vunpack.c.l.b16 %v62
  %v207 = vunpack.c.l.b16 %v63
  %v208 = vunpack.c.l.b16 %v64
  %v209 = vunpack.c.l.b16 %v65
  %v210 = vunpack.c.l.b16 %v66
  %v211 = vunpack.c.l.b16 %v67
  %v212 = vunpack.c.l.b16 %v68
  %v213 = vunpack.c.l.b16 %v69
  %v214 = vunpack.c.l.b16 %v70
  %v215 = vunpack.c.l.b16 %v71
  %v216 = vunpack.c.l.b16 %v72
  %v217 = vunpack.c.l.b16 %v73
  %v218 = vunpack.c.l.b16 %v74
  %v219 = vunpack.c.l.b16 %v75
  %v220 = vunpack.c.l.b16 %v76
  %v221 = vunpack.c.l.b16 %v77
  %v222 = vunpack.c.l.b16 %v78
  %v223 = vunpack.c.l.b16 %v79
  %v224 = vunpack.c.l.b16 %v80
  %v225 = vunpack.c.l.b16 %v81
  %v226 = vunpack.c.l.b16 %v82
  %v227 = vunpack.c.l.b16 %v83
  %v228 = vunpack.c.l.b16 %v84
  %v229 = vunpack.c.l.b16 %v85
  %v230 = vunpack.c.l.b16 %v86
  %v231 = vunpack.c.l.b16 %v87
  %v232 = vunpack.c.l.b16 %v88
  %v233 = vunpack.c.l.b16 %v89
  %v234 = vunpack.c.l.b16 %v90
  %v235 = vunpack.c.l.b16 %v91
  %v236 = vunpack.c.l.b16 %v92
  %v237 = vunpack.c.l.b16 %v93
  %v238 = vunpack.c.l.b16 %v94
  %v239 = vunpack.c.l.b16 %v95
  %v240 = vunpack.c.l.b16 %v96
  %v241 = vunpack.c.l.b16 %v97
  %v242 = vunpack.c.l.b16 %v98
  %v243 = vunpack.c.l.b16 %v99
  %v244 = vunpack.c.l.b16 %v100
  %v245 = vunpack.c.l.b16 %v101
  %v246 = vunpack.c.l.b16 %v102
  %v247 = vunpack.c.l.b16 %v103
  %v248 = vunpack.c.l.b16 %v104
  %v249 = vunpack.c.l.b16 %v105
  %v250 = vunpack.c.l.b16 %v106
  %v251 = vunpack.c.l.b16 %v107
  %v252 = vunpack.c.l.b16 %v108
  %v253 = vunpack.c.l.b16 %v109
  %v254 = vunpack.c.l.b16 %v110
  %v255 = vunpack.c.l.b16 %v111
  %v256 = vunpack.c.l.b16 %v112
  %v257 = vunpack.c.l.b16 %v113
  %v258 = vpack.c.b16 %v195, %v194
  %v259 = vpack.c.b16 %v197, %v196
  %v260 = vpack.c.b16 %v199, %v198
  %v261 = vpack.c.b16 %v201, %v200
  %v262 = vpack.c.b16 %v203, %v202
  %v263 = vpack.c.b16 %v205, %v204
  %v264 = vpack.c.b16 %v207, %v206
  %v265 = vpack.c.b16 %v209, %v208
  %v266 = vpack.c.b16 %v211, %v210
  %v267 = vpack.c.b16 %v213, %v212
  %v268 = vpack.c.b16 %v215, %v214
  %v269 = vpack.c.b16 %v217, %v216
  %v270 = vpack.c.b16 %v219, %v218
  %v271 = vpack.c.b16 %v221, %v220
  %v272 = vpack.c.b16 %v223, %v222
  %v273 = vpack.c.b16 %v225, %v224
  %v274 = vpack.c.b16 %v227, %v226
  %v275 = vpack.c.b16 %v229, %v228
  %v276 = vpack.c.b16 %v231, %v230
  %v277 = vpack.c.b16 %v233, %v232
  %v278 = vpack.c.b16 %v235, %v234
  %v279 = vpack.c.b16 %v237, %v236
  %v280 = vpack.c.b16 %v239, %v238
  %v281 = vpack.c.b16 %v241, %v240
  %v282 = vpack.c.b16 %v243, %v242
  %v283 = vpack.c.b16 %v245, %v244
  %v284 = vpack.c.b16 %v247, %v246
  %v285 = vpack.c.b16 %v249, %v248
  %v286 = vpack.c.b16 %v251, %v250
  %v287 = vpack.c.b16 %v253, %v252
  %v288 = vpack.c.b16 %v255, %v254
  %v289 = vpack.c.b16 %v257, %v256
  %v338 = vunpack.c.l.b16 %v114
  %v339 = vunpack.c.l.b16 %v115
  %v340 = vunpack.c.l.b16 %v116
  %v341 = vunpack.c.l.b16 %v117
  %v342 = vunpack.c.l.b16 %v118
  %v343 = vunpack.c.l.b16 %v119
  %v344 = vunpack.c.l.b16 %v120
  %v345 = vunpack.c.l.b16 %v121
  %v346 = vunpack.c.l.b16 %v122
  %v347 = vunpack.c.l.b16 %v123
  %v348 = vunpack.c.l.b16 %v124
  %v349 = vunpack.c.l.b16 %v125
  %v350 = vunpack.c.l.b16 %v126
  %v351 = vunpack.c.l.b16 %v127
  %v352 = vunpack.c.l.b16 %v128
  %v353 = vunpack.c.l.b16 %v129
  %v354 = vpack.c.b16 %v339, %v338
  %v355 = vpack.c.b16 %v341, %v340
  %v356 = vpack.c.b16 %v343, %v342
  %v357 = vpack.c.b16 %v345, %v344
  %v358 = vpack.c.b16 %v347, %v346
  %v359 = vpack.c.b16 %v349, %v348
  %v360 = vpack.c.b16 %v351, %v350
  %v361 = vpack.c.b16 %v353, %v352
  %370 = vmatpush.bf16.msra.mxu0 %v361
  %371 = vmatpush.bf16.msra.mxu0 %v360
  %372 = vmatpush.bf16.msra.mxu0 %v359
  %373 = vmatpush.bf16.msra.mxu0 %v358
  %374 = vmatpush.bf16.msra.mxu0 %v357
  %375 = vmatpush.bf16.msra.mxu0 %v356
  %376 = vmatpush.bf16.msra.mxu0 %v355
  %377 = vmatpush.bf16.msra.mxu0 %v354
  %378 = vmatmul.bf16.gmra.mxu0 %v258
  %v379 = vpop.f32.mrf.mxu0
  %v380 = vadd.f32 0.0, %v379
  %v381 = vpop.f32.mrf.mxu0
  %v382 = vadd.f32 0.0, %v381
  %383 = vmatmul.bf16.gmra.mxu0 %v259
  %v384 = vpop.f32.mrf.mxu0
  %v385 = vadd.f32 0.0, %v384
  %v386 = vpop.f32.mrf.mxu0
  %v387 = vadd.f32 0.0, %v386
  %388 = vmatmul.bf16.gmra.mxu0 %v260
  %v389 = vpop.f32.mrf.mxu0
  %v390 = vadd.f32 0.0, %v389
  %v391 = vpop.f32.mrf.mxu0
  %v392 = vadd.f32 0.0, %v391
  %393 = vmatmul.bf16.gmra.mxu0 %v261
  %v394 = vpop.f32.mrf.mxu0
  %v395 = vadd.f32 0.0, %v394
  %v396 = vpop.f32.mrf.mxu0
  %v397 = vadd.f32 0.0, %v396
  %398 = vmatmul.bf16.gmra.mxu0 %v262
  %v399 = vpop.f32.mrf.mxu0
  %v400 = vadd.f32 0.0, %v399
  %v401 = vpop.f32.mrf.mxu0
  %v402 = vadd.f32 0.0, %v401
  %403 = vmatmul.bf16.gmra.mxu0 %v263
  %v404 = vpop.f32.mrf.mxu0
  %v405 = vadd.f32 0.0, %v404
  %v406 = vpop.f32.mrf.mxu0
  %v407 = vadd.f32 0.0, %v406
  %408 = vmatmul.bf16.gmra.mxu0 %v264
  %v409 = vpop.f32.mrf.mxu0
  %v410 = vadd.f32 0.0, %v409
  %v411 = vpop.f32.mrf.mxu0
  %v412 = vadd.f32 0.0, %v411
  %413 = vmatmul.bf16.gmra.mxu0 %v265
  %v414 = vpop.f32.mrf.mxu0
  %v415 = vadd.f32 0.0, %v414
  %v416 = vpop.f32.mrf.mxu0
  %v417 = vadd.f32 0.0, %v416
  %418 = vmatmul.bf16.gmra.mxu0 %v266
  %v419 = vpop.f32.mrf.mxu0
  %v420 = vadd.f32 0.0, %v419
  %v421 = vpop.f32.mrf.mxu0
  %v422 = vadd.f32 0.0, %v421
  %423 = vmatmul.bf16.gmra.mxu0 %v267
  %v424 = vpop.f32.mrf.mxu0
  %v425 = vadd.f32 0.0, %v424
  %v426 = vpop.f32.mrf.mxu0
  %v427 = vadd.f32 0.0, %v426
  %428 = vmatmul.bf16.gmra.mxu0 %v268
  %v429 = vpop.f32.mrf.mxu0
  %v430 = vadd.f32 0.0, %v429
  %v431 = vpop.f32.mrf.mxu0
  %v432 = vadd.f32 0.0, %v431
  %433 = vmatmul.bf16.gmra.mxu0 %v269
  %v434 = vpop.f32.mrf.mxu0
  %v435 = vadd.f32 0.0, %v434
  %v436 = vpop.f32.mrf.mxu0
  %v437 = vadd.f32 0.0, %v436
  %438 = vmatmul.bf16.gmra.mxu0 %v270
  %v439 = vpop.f32.mrf.mxu0
  %v440 = vadd.f32 0.0, %v439
  %v441 = vpop.f32.mrf.mxu0
  %v442 = vadd.f32 0.0, %v441
  %443 = vmatmul.bf16.gmra.mxu0 %v271
  %v444 = vpop.f32.mrf.mxu0
  %v445 = vadd.f32 0.0, %v444
  %v446 = vpop.f32.mrf.mxu0
  %v447 = vadd.f32 0.0, %v446
  %448 = vmatmul.bf16.gmra.mxu0 %v272
  %v449 = vpop.f32.mrf.mxu0
  %v450 = vadd.f32 0.0, %v449
  %v451 = vpop.f32.mrf.mxu0
  %v452 = vadd.f32 0.0, %v451
  %453 = vmatmul.bf16.gmra.mxu0 %v273
  %v454 = vpop.f32.mrf.mxu0
  %v455 = vadd.f32 0.0, %v454
  %v456 = vpop.f32.mrf.mxu0
  %v457 = vadd.f32 0.0, %v456
  %458 = vmatmul.bf16.gmra.mxu0 %v274
  %v459 = vpop.f32.mrf.mxu0
  %v460 = vadd.f32 0.0, %v459
  %v461 = vpop.f32.mrf.mxu0
  %v462 = vadd.f32 0.0, %v461
  %463 = vmatmul.bf16.gmra.mxu0 %v275
  %v464 = vpop.f32.mrf.mxu0
  %v465 = vadd.f32 0.0, %v464
  %v466 = vpop.f32.mrf.mxu0
  %v467 = vadd.f32 0.0, %v466
  %468 = vmatmul.bf16.gmra.mxu0 %v276
  %v469 = vpop.f32.mrf.mxu0
  %v470 = vadd.f32 0.0, %v469
  %v471 = vpop.f32.mrf.mxu0
  %v472 = vadd.f32 0.0, %v471
  %473 = vmatmul.bf16.gmra.mxu0 %v277
  %v474 = vpop.f32.mrf.mxu0
  %v475 = vadd.f32 0.0, %v474
  %v476 = vpop.f32.mrf.mxu0
  %v477 = vadd.f32 0.0, %v476
  %478 = vmatmul.bf16.gmra.mxu0 %v278
  %v479 = vpop.f32.mrf.mxu0
  %v480 = vadd.f32 0.0, %v479
  %v481 = vpop.f32.mrf.mxu0
  %v482 = vadd.f32 0.0, %v481
  %483 = vmatmul.bf16.gmra.mxu0 %v279
  %v484 = vpop.f32.mrf.mxu0
  %v485 = vadd.f32 0.0, %v484
  %v486 = vpop.f32.mrf.mxu0
  %v487 = vadd.f32 0.0, %v486
  %488 = vmatmul.bf16.gmra.mxu0 %v280
  %v489 = vpop.f32.mrf.mxu0
  %v490 = vadd.f32 0.0, %v489
  %v491 = vpop.f32.mrf.mxu0
  %v492 = vadd.f32 0.0, %v491
  %493 = vmatmul.bf16.gmra.mxu0 %v281
  %v494 = vpop.f32.mrf.mxu0
  %v495 = vadd.f32 0.0, %v494
  %v496 = vpop.f32.mrf.mxu0
  %v497 = vadd.f32 0.0, %v496
  %498 = vmatmul.bf16.gmra.mxu0 %v282
  %v499 = vpop.f32.mrf.mxu0
  %v500 = vadd.f32 0.0, %v499
  %v501 = vpop.f32.mrf.mxu0
  %v502 = vadd.f32 0.0, %v501
  %503 = vmatmul.bf16.gmra.mxu0 %v283
  %v504 = vpop.f32.mrf.mxu0
  %v505 = vadd.f32 0.0, %v504
  %v506 = vpop.f32.mrf.mxu0
  %v507 = vadd.f32 0.0, %v506
  %508 = vmatmul.bf16.gmra.mxu0 %v284
  %v509 = vpop.f32.mrf.mxu0
  %v510 = vadd.f32 0.0, %v509
  %v511 = vpop.f32.mrf.mxu0
  %v512 = vadd.f32 0.0, %v511
  %513 = vmatmul.bf16.gmra.mxu0 %v285
  %v514 = vpop.f32.mrf.mxu0
  %v515 = vadd.f32 0.0, %v514
  %v516 = vpop.f32.mrf.mxu0
  %v517 = vadd.f32 0.0, %v516
  %518 = vmatmul.bf16.gmra.mxu0 %v286
  %v519 = vpop.f32.mrf.mxu0
  %v520 = vadd.f32 0.0, %v519
  %v521 = vpop.f32.mrf.mxu0
  %v522 = vadd.f32 0.0, %v521
  %523 = vmatmul.bf16.gmra.mxu0 %v287
  %v524 = vpop.f32.mrf.mxu0
  %v525 = vadd.f32 0.0, %v524
  %v526 = vpop.f32.mrf.mxu0
  %v527 = vadd.f32 0.0, %v526
  %528 = vmatmul.bf16.gmra.mxu0 %v288
  %v529 = vpop.f32.mrf.mxu0
  %v530 = vadd.f32 0.0, %v529
  %v531 = vpop.f32.mrf.mxu0
  %v532 = vadd.f32 0.0, %v531
  %533 = vmatmul.bf16.gmra.mxu0 %v289
  %v534 = vpop.f32.mrf.mxu0
  %v535 = vadd.f32 0.0, %v534
  %v536 = vpop.f32.mrf.mxu0
  %v537 = vadd.f32 0.0, %v536
  %538 = vdwg.mxu0
  %v539 = vld [vmem:[%s2] sm:$0x1]
  %v540 = vld [vmem:[%s3] sm:$0x1]
  %v541 = vadd.f32 %v380, %v382
  %v542 = vadd.f32 %v541, %v385
  %v543 = vadd.f32 %v542, %v387
  %v544 = vadd.f32 %v543, %v390
  %v545 = vadd.f32 %v544, %v392
  %v546 = vadd.f32 %v545, %v395
  %v547 = vadd.f32 %v546, %v397
  %v548 = vadd.f32 %v547, %v400
  %v549 = vadd.f32 %v548, %v402
  %v550 = vadd.f32 %v549, %v405
  %v551 = vadd.f32 %v550, %v407
  %v552 = vadd.f32 %v551, %v410
  %v553 = vadd.f32 %v552, %v412
  %v554 = vadd.f32 %v553, %v415
  %v555 = vadd.f32 %v554, %v417
  %v556 = vadd.f32 %v555, %v420
  %v557 = vadd.f32 %v556, %v422
  %v558 = vadd.f32 %v557, %v425
  %v559 = vadd.f32 %v558, %v427
  %v560 = vadd.f32 %v559, %v430
  %v561 = vadd.f32 %v560, %v432
  %v562 = vadd.f32 %v561, %v435
  %v563 = vadd.f32 %v562, %v437
  %v564 = vadd.f32 %v563, %v440
  %v565 = vadd.f32 %v564, %v442
  %v566 = vadd.f32 %v565, %v445
  %v567 = vadd.f32 %v566, %v447
  %v568 = vadd.f32 %v567, %v450
  %v569 = vadd.f32 %v568, %v452
  %v570 = vadd.f32 %v569, %v455
  %v571 = vadd.f32 %v570, %v457
  %v572 = vadd.f32 %v571, %v460
  %v573 = vadd.f32 %v572, %v462
  %v574 = vadd.f32 %v573, %v465
  %v575 = vadd.f32 %v574, %v467
  %v576 = vadd.f32 %v575, %v470
  %v577 = vadd.f32 %v576, %v472
  %v578 = vadd.f32 %v577, %v475
  %v579 = vadd.f32 %v578, %v477
  %v580 = vadd.f32 %v579, %v480
  %v581 = vadd.f32 %v580, %v482
  %v582 = vadd.f32 %v581, %v485
  %v583 = vadd.f32 %v582, %v487
  %v584 = vadd.f32 %v583, %v490
  %v585 = vadd.f32 %v584, %v492
  %v586 = vadd.f32 %v585, %v495
  %v587 = vadd.f32 %v586, %v497
  %v588 = vadd.f32 %v587, %v500
  %v589 = vadd.f32 %v588, %v502
  %v590 = vadd.f32 %v589, %v505
  %v591 = vadd.f32 %v590, %v507
  %v592 = vadd.f32 %v591, %v510
  %v593 = vadd.f32 %v592, %v512
  %v594 = vadd.f32 %v593, %v515
  %v595 = vadd.f32 %v594, %v517
  %v596 = vadd.f32 %v595, %v520
  %v597 = vadd.f32 %v596, %v522
  %v598 = vadd.f32 %v597, %v525
  %v599 = vadd.f32 %v598, %v527
  %v600 = vadd.f32 %v599, %v530
  %v601 = vadd.f32 %v600, %v532
  %v602 = vadd.f32 %v601, %v535
  %v603 = vadd.f32 %v602, %v537
  %v604 = vrot.slane %v603, 4
  %v605 = vadd.f32 %v603, %v604
  %v606 = vrot.slane %v605, 2
  %v607 = vadd.f32 %v605, %v606
  %v608 = vrot.slane %v607, 1
  %v609 = vadd.f32 %v607, %v608
  %v610 = vmul.f32 %v609, 0.0025510204
  %v611 = vsub.f32 %v380, %v610
  %v612 = vsub.f32 %v382, %v610
  %v613 = vsub.f32 %v385, %v610
  %v614 = vsub.f32 %v387, %v610
  %v615 = vsub.f32 %v390, %v610
  %v616 = vsub.f32 %v392, %v610
  %v617 = vsub.f32 %v395, %v610
  %v618 = vsub.f32 %v397, %v610
  %v619 = vsub.f32 %v400, %v610
  %v620 = vsub.f32 %v402, %v610
  %v621 = vsub.f32 %v405, %v610
  %v622 = vsub.f32 %v407, %v610
  %v623 = vsub.f32 %v410, %v610
  %v624 = vsub.f32 %v412, %v610
  %v625 = vsub.f32 %v415, %v610
  %v626 = vsub.f32 %v417, %v610
  %v627 = vsub.f32 %v420, %v610
  %v628 = vsub.f32 %v422, %v610
  %v629 = vsub.f32 %v425, %v610
  %v630 = vsub.f32 %v427, %v610
  %v631 = vsub.f32 %v430, %v610
  %v632 = vsub.f32 %v432, %v610
  %v633 = vsub.f32 %v435, %v610
  %v634 = vsub.f32 %v437, %v610
  %v635 = vsub.f32 %v440, %v610
  %v636 = vsub.f32 %v442, %v610
  %v637 = vsub.f32 %v445, %v610
  %v638 = vsub.f32 %v447, %v610
  %v639 = vsub.f32 %v450, %v610
  %v640 = vsub.f32 %v452, %v610
  %v641 = vsub.f32 %v455, %v610
  %v642 = vsub.f32 %v457, %v610
  %v643 = vsub.f32 %v460, %v610
  %v644 = vsub.f32 %v462, %v610
  %v645 = vsub.f32 %v465, %v610
  %v646 = vsub.f32 %v467, %v610
  %v647 = vsub.f32 %v470, %v610
  %v648 = vsub.f32 %v472, %v610
  %v649 = vsub.f32 %v475, %v610
  %v650 = vsub.f32 %v477, %v610
  %v651 = vsub.f32 %v480, %v610
  %v652 = vsub.f32 %v482, %v610
  %v653 = vsub.f32 %v485, %v610
  %v654 = vsub.f32 %v487, %v610
  %v655 = vsub.f32 %v490, %v610
  %v656 = vsub.f32 %v492, %v610
  %v657 = vsub.f32 %v495, %v610
  %v658 = vsub.f32 %v497, %v610
  %v659 = vsub.f32 %v500, %v610
  %v660 = vsub.f32 %v502, %v610
  %v661 = vsub.f32 %v505, %v610
  %v662 = vsub.f32 %v507, %v610
  %v663 = vsub.f32 %v510, %v610
  %v664 = vsub.f32 %v512, %v610
  %v665 = vsub.f32 %v515, %v610
  %v666 = vsub.f32 %v517, %v610
  %v667 = vsub.f32 %v520, %v610
  %v668 = vsub.f32 %v522, %v610
  %v669 = vsub.f32 %v525, %v610
  %v670 = vsub.f32 %v527, %v610
  %v671 = vsub.f32 %v530, %v610
  %v672 = vsub.f32 %v532, %v610
  %v673 = vsub.f32 %v535, %v610
  %v674 = vsub.f32 %v537, %v610
  %v675 = vlaneseq
  %v676 = vshrl.u32 %v675, 7
  %v677 = vadd.s32 %v676, 8
  %v678 = vadd.s32 %v676, 16
  %v679 = vadd.s32 %v676, 24
  %v680 = vadd.s32 %v676, 32
  %v681 = vadd.s32 %v676, 40
  %v682 = vadd.s32 %v676, 48
  %v683 = vadd.s32 %v676, 56
  %v684 = vadd.s32 %v676, 64
  %v685 = vadd.s32 %v676, 72
  %v686 = vadd.s32 %v676, 80
  %v687 = vadd.s32 %v676, 88
  %v688 = vadd.s32 %v676, 96
  %v689 = vadd.s32 %v676, 104
  %v690 = vadd.s32 %v676, 112
  %v691 = vadd.s32 %v676, 120
  %v692 = vadd.s32 %v676, 128
  %v693 = vadd.s32 %v676, 136
  %v694 = vadd.s32 %v676, 144
  %v695 = vadd.s32 %v676, 152
  %v696 = vadd.s32 %v676, 160
  %v697 = vadd.s32 %v676, 168
  %v698 = vadd.s32 %v676, 176
  %v699 = vadd.s32 %v676, 184
  %v700 = vadd.s32 %v676, 192
  %v701 = vadd.s32 %v676, 200
  %v702 = vadd.s32 %v676, 208
  %v703 = vadd.s32 %v676, 216
  %v704 = vadd.s32 %v676, 224
  %v705 = vadd.s32 %v676, 232
  %v706 = vadd.s32 %v676, 240
  %v707 = vadd.s32 %v676, 248
  %v708 = vadd.s32 %v676, 256
  %v709 = vadd.s32 %v676, 264
  %v710 = vadd.s32 %v676, 272
  %v711 = vadd.s32 %v676, 280
  %v712 = vadd.s32 %v676, 288
  %v713 = vadd.s32 %v676, 296
  %v714 = vadd.s32 %v676, 304
  %v715 = vadd.s32 %v676, 312
  %v716 = vadd.s32 %v676, 320
  %v717 = vadd.s32 %v676, 328
  %v718 = vadd.s32 %v676, 336
  %v719 = vadd.s32 %v676, 344
  %v720 = vadd.s32 %v676, 352
  %v721 = vadd.s32 %v676, 360
  %v722 = vadd.s32 %v676, 368
  %v723 = vadd.s32 %v676, 376
  %v724 = vadd.s32 %v676, 384
  %v725 = vadd.s32 %v676, 392
  %v726 = vadd.s32 %v676, 400
  %v727 = vadd.s32 %v676, 408
  %v728 = vadd.s32 %v676, 416
  %v729 = vadd.s32 %v676, 424
  %v730 = vadd.s32 %v676, 432
  %v731 = vadd.s32 %v676, 440
  %v732 = vadd.s32 %v676, 448
  %v733 = vadd.s32 %v676, 456
  %v734 = vadd.s32 %v676, 464
  %v735 = vadd.s32 %v676, 472
  %v736 = vadd.s32 %v676, 480
  %v737 = vadd.s32 %v676, 488
  %v738 = vadd.s32 %v676, 496
  %v739 = vadd.s32 %v676, 504
  %vm740 = vcmp.lt.s32.totalorder %v676, 392
  %vm741 = vcmp.lt.s32.totalorder %v677, 392
  %vm742 = vcmp.lt.s32.totalorder %v678, 392
  %vm743 = vcmp.lt.s32.totalorder %v679, 392
  %vm744 = vcmp.lt.s32.totalorder %v680, 392
  %vm745 = vcmp.lt.s32.totalorder %v681, 392
  %vm746 = vcmp.lt.s32.totalorder %v682, 392
  %vm747 = vcmp.lt.s32.totalorder %v683, 392
  %vm748 = vcmp.lt.s32.totalorder %v684, 392
  %vm749 = vcmp.lt.s32.totalorder %v685, 392
  %vm750 = vcmp.lt.s32.totalorder %v686, 392
  %vm751 = vcmp.lt.s32.totalorder %v687, 392
  %vm752 = vcmp.lt.s32.totalorder %v688, 392
  %vm753 = vcmp.lt.s32.totalorder %v689, 392
  %vm754 = vcmp.lt.s32.totalorder %v690, 392
  %vm755 = vcmp.lt.s32.totalorder %v691, 392
  %vm756 = vcmp.lt.s32.totalorder %v692, 392
  %vm757 = vcmp.lt.s32.totalorder %v693, 392
  %vm758 = vcmp.lt.s32.totalorder %v694, 392
  %vm759 = vcmp.lt.s32.totalorder %v695, 392
  %vm760 = vcmp.lt.s32.totalorder %v696, 392
  %vm761 = vcmp.lt.s32.totalorder %v697, 392
  %vm762 = vcmp.lt.s32.totalorder %v698, 392
  %vm763 = vcmp.lt.s32.totalorder %v699, 392
  %vm764 = vcmp.lt.s32.totalorder %v700, 392
  %vm765 = vcmp.lt.s32.totalorder %v701, 392
  %vm766 = vcmp.lt.s32.totalorder %v702, 392
  %vm767 = vcmp.lt.s32.totalorder %v703, 392
  %vm768 = vcmp.lt.s32.totalorder %v704, 392
  %vm769 = vcmp.lt.s32.totalorder %v705, 392
  %vm770 = vcmp.lt.s32.totalorder %v706, 392
  %vm771 = vcmp.lt.s32.totalorder %v707, 392
  %vm772 = vcmp.lt.s32.totalorder %v708, 392
  %vm773 = vcmp.lt.s32.totalorder %v709, 392
  %vm774 = vcmp.lt.s32.totalorder %v710, 392
  %vm775 = vcmp.lt.s32.totalorder %v711, 392
  %vm776 = vcmp.lt.s32.totalorder %v712, 392
  %vm777 = vcmp.lt.s32.totalorder %v713, 392
  %vm778 = vcmp.lt.s32.totalorder %v714, 392
  %vm779 = vcmp.lt.s32.totalorder %v715, 392
  %vm780 = vcmp.lt.s32.totalorder %v716, 392
  %vm781 = vcmp.lt.s32.totalorder %v717, 392
  %vm782 = vcmp.lt.s32.totalorder %v718, 392
  %vm783 = vcmp.lt.s32.totalorder %v719, 392
  %vm784 = vcmp.lt.s32.totalorder %v720, 392
  %vm785 = vcmp.lt.s32.totalorder %v721, 392
  %vm786 = vcmp.lt.s32.totalorder %v722, 392
  %vm787 = vcmp.lt.s32.totalorder %v723, 392
  %vm788 = vcmp.lt.s32.totalorder %v724, 392
  %vm789 = vcmp.lt.s32.totalorder %v725, 392
  %vm790 = vcmp.lt.s32.totalorder %v726, 392
  %vm791 = vcmp.lt.s32.totalorder %v727, 392
  %vm792 = vcmp.lt.s32.totalorder %v728, 392
  %vm793 = vcmp.lt.s32.totalorder %v729, 392
  %vm794 = vcmp.lt.s32.totalorder %v730, 392
  %vm795 = vcmp.lt.s32.totalorder %v731, 392
  %vm796 = vcmp.lt.s32.totalorder %v732, 392
  %vm797 = vcmp.lt.s32.totalorder %v733, 392
  %vm798 = vcmp.lt.s32.totalorder %v734, 392
  %vm799 = vcmp.lt.s32.totalorder %v735, 392
  %vm800 = vcmp.lt.s32.totalorder %v736, 392
  %vm801 = vcmp.lt.s32.totalorder %v737, 392
  %vm802 = vcmp.lt.s32.totalorder %v738, 392
  %vm803 = vcmp.lt.s32.totalorder %v739, 392
  %v804 = vsel %vm740, 1, 0
  %v805 = vsel %vm741, 1, 0
  %v806 = vsel %vm742, 1, 0
  %v807 = vsel %vm743, 1, 0
  %v808 = vsel %vm744, 1, 0
  %v809 = vsel %vm745, 1, 0
  %v810 = vsel %vm746, 1, 0
  %v811 = vsel %vm747, 1, 0
  %v812 = vsel %vm748, 1, 0
  %v813 = vsel %vm749, 1, 0
  %v814 = vsel %vm750, 1, 0
  %v815 = vsel %vm751, 1, 0
  %v816 = vsel %vm752, 1, 0
  %v817 = vsel %vm753, 1, 0
  %v818 = vsel %vm754, 1, 0
  %v819 = vsel %vm755, 1, 0
  %v820 = vsel %vm756, 1, 0
  %v821 = vsel %vm757, 1, 0
  %v822 = vsel %vm758, 1, 0
  %v823 = vsel %vm759, 1, 0
  %v824 = vsel %vm760, 1, 0
  %v825 = vsel %vm761, 1, 0
  %v826 = vsel %vm762, 1, 0
  %v827 = vsel %vm763, 1, 0
  %v828 = vsel %vm764, 1, 0
  %v829 = vsel %vm765, 1, 0
  %v830 = vsel %vm766, 1, 0
  %v831 = vsel %vm767, 1, 0
  %v832 = vsel %vm768, 1, 0
  %v833 = vsel %vm769, 1, 0
  %v834 = vsel %vm770, 1, 0
  %v835 = vsel %vm771, 1, 0
  %v836 = vsel %vm772, 1, 0
  %v837 = vsel %vm773, 1, 0
  %v838 = vsel %vm774, 1, 0
  %v839 = vsel %vm775, 1, 0
  %v840 = vsel %vm776, 1, 0
  %v841 = vsel %vm777, 1, 0
  %v842 = vsel %vm778, 1, 0
  %v843 = vsel %vm779, 1, 0
  %v844 = vsel %vm780, 1, 0
  %v845 = vsel %vm781, 1, 0
  %v846 = vsel %vm782, 1, 0
  %v847 = vsel %vm783, 1, 0
  %v848 = vsel %vm784, 1, 0
  %v849 = vsel %vm785, 1, 0
  %v850 = vsel %vm786, 1, 0
  %v851 = vsel %vm787, 1, 0
  %v852 = vsel %vm788, 1, 0
  %v853 = vsel %vm789, 1, 0
  %v854 = vsel %vm790, 1, 0
  %v855 = vsel %vm791, 1, 0
  %v856 = vsel %vm792, 1, 0
  %v857 = vsel %vm793, 1, 0
  %v858 = vsel %vm794, 1, 0
  %v859 = vsel %vm795, 1, 0
  %v860 = vsel %vm796, 1, 0
  %v861 = vsel %vm797, 1, 0
  %v862 = vsel %vm798, 1, 0
  %v863 = vsel %vm799, 1, 0
  %v864 = vsel %vm800, 1, 0
  %v865 = vsel %vm801, 1, 0
  %v866 = vsel %vm802, 1, 0
  %v867 = vsel %vm803, 1, 0
  %v868 = vcvt.s32.f32 %v804
  %v869 = vcvt.s32.f32 %v805
  %v870 = vcvt.s32.f32 %v806
  %v871 = vcvt.s32.f32 %v807
  %v872 = vcvt.s32.f32 %v808
  %v873 = vcvt.s32.f32 %v809
  %v874 = vcvt.s32.f32 %v810
  %v875 = vcvt.s32.f32 %v811
  %v876 = vcvt.s32.f32 %v812
  %v877 = vcvt.s32.f32 %v813
  %v878 = vcvt.s32.f32 %v814
  %v879 = vcvt.s32.f32 %v815
  %v880 = vcvt.s32.f32 %v816
  %v881 = vcvt.s32.f32 %v817
  %v882 = vcvt.s32.f32 %v818
  %v883 = vcvt.s32.f32 %v819
  %v884 = vcvt.s32.f32 %v820
  %v885 = vcvt.s32.f32 %v821
  %v886 = vcvt.s32.f32 %v822
  %v887 = vcvt.s32.f32 %v823
  %v888 = vcvt.s32.f32 %v824
  %v889 = vcvt.s32.f32 %v825
  %v890 = vcvt.s32.f32 %v826
  %v891 = vcvt.s32.f32 %v827
  %v892 = vcvt.s32.f32 %v828
  %v893 = vcvt.s32.f32 %v829
  %v894 = vcvt.s32.f32 %v830
  %v895 = vcvt.s32.f32 %v831
  %v896 = vcvt.s32.f32 %v832
  %v897 = vcvt.s32.f32 %v833
  %v898 = vcvt.s32.f32 %v834
  %v899 = vcvt.s32.f32 %v835
  %v900 = vcvt.s32.f32 %v836
  %v901 = vcvt.s32.f32 %v837
  %v902 = vcvt.s32.f32 %v838
  %v903 = vcvt.s32.f32 %v839
  %v904 = vcvt.s32.f32 %v840
  %v905 = vcvt.s32.f32 %v841
  %v906 = vcvt.s32.f32 %v842
  %v907 = vcvt.s32.f32 %v843
  %v908 = vcvt.s32.f32 %v844
  %v909 = vcvt.s32.f32 %v845
  %v910 = vcvt.s32.f32 %v846
  %v911 = vcvt.s32.f32 %v847
  %v912 = vcvt.s32.f32 %v848
  %v913 = vcvt.s32.f32 %v849
  %v914 = vcvt.s32.f32 %v850
  %v915 = vcvt.s32.f32 %v851
  %v916 = vcvt.s32.f32 %v852
  %v917 = vcvt.s32.f32 %v853
  %v918 = vcvt.s32.f32 %v854
  %v919 = vcvt.s32.f32 %v855
  %v920 = vcvt.s32.f32 %v856
  %v921 = vcvt.s32.f32 %v857
  %v922 = vcvt.s32.f32 %v858
  %v923 = vcvt.s32.f32 %v859
  %v924 = vcvt.s32.f32 %v860
  %v925 = vcvt.s32.f32 %v861
  %v926 = vcvt.s32.f32 %v862
  %v927 = vcvt.s32.f32 %v863
  %v928 = vcvt.s32.f32 %v864
  %v929 = vcvt.s32.f32 %v865
  %v930 = vcvt.s32.f32 %v866
  %v931 = vcvt.s32.f32 %v867
  %v932 = vmul.f32 %v611, %v868
  %v933 = vmul.f32 %v612, %v869
  %v934 = vmul.f32 %v613, %v870
  %v935 = vmul.f32 %v614, %v871
  %v936 = vmul.f32 %v615, %v872
  %v937 = vmul.f32 %v616, %v873
  %v938 = vmul.f32 %v617, %v874
  %v939 = vmul.f32 %v618, %v875
  %v940 = vmul.f32 %v619, %v876
  %v941 = vmul.f32 %v620, %v877
  %v942 = vmul.f32 %v621, %v878
  %v943 = vmul.f32 %v622, %v879
  %v944 = vmul.f32 %v623, %v880
  %v945 = vmul.f32 %v624, %v881
  %v946 = vmul.f32 %v625, %v882
  %v947 = vmul.f32 %v626, %v883
  %v948 = vmul.f32 %v627, %v884
  %v949 = vmul.f32 %v628, %v885
  %v950 = vmul.f32 %v629, %v886
  %v951 = vmul.f32 %v630, %v887
  %v952 = vmul.f32 %v631, %v888
  %v953 = vmul.f32 %v632, %v889
  %v954 = vmul.f32 %v633, %v890
  %v955 = vmul.f32 %v634, %v891
  %v956 = vmul.f32 %v635, %v892
  %v957 = vmul.f32 %v636, %v893
  %v958 = vmul.f32 %v637, %v894
  %v959 = vmul.f32 %v638, %v895
  %v960 = vmul.f32 %v639, %v896
  %v961 = vmul.f32 %v640, %v897
  %v962 = vmul.f32 %v641, %v898
  %v963 = vmul.f32 %v642, %v899
  %v964 = vmul.f32 %v643, %v900
  %v965 = vmul.f32 %v644, %v901
  %v966 = vmul.f32 %v645, %v902
  %v967 = vmul.f32 %v646, %v903
  %v968 = vmul.f32 %v647, %v904
  %v969 = vmul.f32 %v648, %v905
  %v970 = vmul.f32 %v649, %v906
  %v971 = vmul.f32 %v650, %v907
  %v972 = vmul.f32 %v651, %v908
  %v973 = vmul.f32 %v652, %v909
  %v974 = vmul.f32 %v653, %v910
  %v975 = vmul.f32 %v654, %v911
  %v976 = vmul.f32 %v655, %v912
  %v977 = vmul.f32 %v656, %v913
  %v978 = vmul.f32 %v657, %v914
  %v979 = vmul.f32 %v658, %v915
  %v980 = vmul.f32 %v659, %v916
  %v981 = vmul.f32 %v660, %v917
  %v982 = vmul.f32 %v661, %v918
  %v983 = vmul.f32 %v662, %v919
  %v984 = vmul.f32 %v663, %v920
  %v985 = vmul.f32 %v664, %v921
  %v986 = vmul.f32 %v665, %v922
  %v987 = vmul.f32 %v666, %v923
  %v988 = vmul.f32 %v667, %v924
  %v989 = vmul.f32 %v668, %v925
  %v990 = vmul.f32 %v669, %v926
  %v991 = vmul.f32 %v670, %v927
  %v992 = vmul.f32 %v671, %v928
  %v993 = vmul.f32 %v672, %v929
  %v994 = vmul.f32 %v673, %v930
  %v995 = vmul.f32 %v674, %v931
  %v996 = vmul.f32 %v932, %v932
  %v997 = vmul.f32 %v933, %v933
  %v998 = vmul.f32 %v934, %v934
  %v999 = vmul.f32 %v935, %v935
  %v1000 = vmul.f32 %v936, %v936
  %v1001 = vmul.f32 %v937, %v937
  %v1002 = vmul.f32 %v938, %v938
  %v1003 = vmul.f32 %v939, %v939
  %v1004 = vmul.f32 %v940, %v940
  %v1005 = vmul.f32 %v941, %v941
  %v1006 = vmul.f32 %v942, %v942
  %v1007 = vmul.f32 %v943, %v943
  %v1008 = vmul.f32 %v944, %v944
  %v1009 = vmul.f32 %v945, %v945
  %v1010 = vmul.f32 %v946, %v946
  %v1011 = vmul.f32 %v947, %v947
  %v1012 = vmul.f32 %v948, %v948
  %v1013 = vmul.f32 %v949, %v949
  %v1014 = vmul.f32 %v950, %v950
  %v1015 = vmul.f32 %v951, %v951
  %v1016 = vmul.f32 %v952, %v952
  %v1017 = vmul.f32 %v953, %v953
  %v1018 = vmul.f32 %v954, %v954
  %v1019 = vmul.f32 %v955, %v955
  %v1020 = vmul.f32 %v956, %v956
  %v1021 = vmul.f32 %v957, %v957
  %v1022 = vmul.f32 %v958, %v958
  %v1023 = vmul.f32 %v959, %v959
  %v1024 = vmul.f32 %v960, %v960
  %v1025 = vmul.f32 %v961, %v961
  %v1026 = vmul.f32 %v962, %v962
  %v1027 = vmul.f32 %v963, %v963
  %v1028 = vmul.f32 %v964, %v964
  %v1029 = vmul.f32 %v965, %v965
  %v1030 = vmul.f32 %v966, %v966
  %v1031 = vmul.f32 %v967, %v967
  %v1032 = vmul.f32 %v968, %v968
  %v1033 = vmul.f32 %v969, %v969
  %v1034 = vmul.f32 %v970, %v970
  %v1035 = vmul.f32 %v971, %v971
  %v1036 = vmul.f32 %v972, %v972
  %v1037 = vmul.f32 %v973, %v973
  %v1038 = vmul.f32 %v974, %v974
  %v1039 = vmul.f32 %v975, %v975
  %v1040 = vmul.f32 %v976, %v976
  %v1041 = vmul.f32 %v977, %v977
  %v1042 = vmul.f32 %v978, %v978
  %v1043 = vmul.f32 %v979, %v979
  %v1044 = vmul.f32 %v980, %v980
  %v1045 = vmul.f32 %v981, %v981
  %v1046 = vmul.f32 %v982, %v982
  %v1047 = vmul.f32 %v983, %v983
  %v1048 = vmul.f32 %v984, %v984
  %v1049 = vmul.f32 %v985, %v985
  %v1050 = vmul.f32 %v986, %v986
  %v1051 = vmul.f32 %v987, %v987
  %v1052 = vmul.f32 %v988, %v988
  %v1053 = vmul.f32 %v989, %v989
  %v1054 = vmul.f32 %v990, %v990
  %v1055 = vmul.f32 %v991, %v991
  %v1056 = vmul.f32 %v992, %v992
  %v1057 = vmul.f32 %v993, %v993
  %v1058 = vmul.f32 %v994, %v994
  %v1059 = vmul.f32 %v995, %v995
  %v1060 = vadd.f32 %v996, %v997
  %v1061 = vadd.f32 %v1060, %v998
  %v1062 = vadd.f32 %v1061, %v999
  %v1063 = vadd.f32 %v1062, %v1000
  %v1064 = vadd.f32 %v1063, %v1001
  %v1065 = vadd.f32 %v1064, %v1002
  %v1066 = vadd.f32 %v1065, %v1003
  %v1067 = vadd.f32 %v1066, %v1004
  %v1068 = vadd.f32 %v1067, %v1005
  %v1069 = vadd.f32 %v1068, %v1006
  %v1070 = vadd.f32 %v1069, %v1007
  %v1071 = vadd.f32 %v1070, %v1008
  %v1072 = vadd.f32 %v1071, %v1009
  %v1073 = vadd.f32 %v1072, %v1010
  %v1074 = vadd.f32 %v1073, %v1011
  %v1075 = vadd.f32 %v1074, %v1012
  %v1076 = vadd.f32 %v1075, %v1013
  %v1077 = vadd.f32 %v1076, %v1014
  %v1078 = vadd.f32 %v1077, %v1015
  %v1079 = vadd.f32 %v1078, %v1016
  %v1080 = vadd.f32 %v1079, %v1017
  %v1081 = vadd.f32 %v1080, %v1018
  %v1082 = vadd.f32 %v1081, %v1019
  %v1083 = vadd.f32 %v1082, %v1020
  %v1084 = vadd.f32 %v1083, %v1021
  %v1085 = vadd.f32 %v1084, %v1022
  %v1086 = vadd.f32 %v1085, %v1023
  %v1087 = vadd.f32 %v1086, %v1024
  %v1088 = vadd.f32 %v1087, %v1025
  %v1089 = vadd.f32 %v1088, %v1026
  %v1090 = vadd.f32 %v1089, %v1027
  %v1091 = vadd.f32 %v1090, %v1028
  %v1092 = vadd.f32 %v1091, %v1029
  %v1093 = vadd.f32 %v1092, %v1030
  %v1094 = vadd.f32 %v1093, %v1031
  %v1095 = vadd.f32 %v1094, %v1032
  %v1096 = vadd.f32 %v1095, %v1033
  %v1097 = vadd.f32 %v1096, %v1034
  %v1098 = vadd.f32 %v1097, %v1035
  %v1099 = vadd.f32 %v1098, %v1036
  %v1100 = vadd.f32 %v1099, %v1037
  %v1101 = vadd.f32 %v1100, %v1038
  %v1102 = vadd.f32 %v1101, %v1039
  %v1103 = vadd.f32 %v1102, %v1040
  %v1104 = vadd.f32 %v1103, %v1041
  %v1105 = vadd.f32 %v1104, %v1042
  %v1106 = vadd.f32 %v1105, %v1043
  %v1107 = vadd.f32 %v1106, %v1044
  %v1108 = vadd.f32 %v1107, %v1045
  %v1109 = vadd.f32 %v1108, %v1046
  %v1110 = vadd.f32 %v1109, %v1047
  %v1111 = vadd.f32 %v1110, %v1048
  %v1112 = vadd.f32 %v1111, %v1049
  %v1113 = vadd.f32 %v1112, %v1050
  %v1114 = vadd.f32 %v1113, %v1051
  %v1115 = vadd.f32 %v1114, %v1052
  %v1116 = vadd.f32 %v1115, %v1053
  %v1117 = vadd.f32 %v1116, %v1054
  %v1118 = vadd.f32 %v1117, %v1055
  %v1119 = vadd.f32 %v1118, %v1056
  %v1120 = vadd.f32 %v1119, %v1057
  %v1121 = vadd.f32 %v1120, %v1058
  %v1122 = vadd.f32 %v1121, %v1059
  %v1123 = vrot.slane %v1122, 4
  %v1124 = vadd.f32 %v1122, %v1123
  %v1125 = vrot.slane %v1124, 2
  %v1126 = vadd.f32 %v1124, %v1125
  %v1127 = vrot.slane %v1126, 1
  %v1128 = vadd.f32 %v1126, %v1127
  %v1129 = vmul.f32 %v1128, 0.0025510204
  %v1130 = vadd.f32 %v1129, 1e-05
  %v1131 = vrsqrt.pop %v1130
  %v1132 = vmul.f32 %v1131, %v1130
  %v1133 = vmul.f32 %v1132, %v1131
  %v1134 = vmul.f32 0.5, %v1133
  %v1135 = vsub.f32 1.5, %v1134
  %v1136 = vmul.f32 %v1131, %v1135
  %vm1137 = vweird.f32 %v1130
  %vm1138 = vweird.f32 %v1131
  %vm1139 = vmor %vm1137, %vm1138
  %v1140 = vsel %vm1139, %v1131, %v1136
  %v1141 = vmul.f32 %v539, %v1140
  %v1143 = vperm.slane %v1141, 0
  %v1145 = vmul.f32 %v611, %v1143
  %v1146 = vmul.f32 %v612, %v1143
  %v1147 = vmul.f32 %v613, %v1143
  %v1148 = vmul.f32 %v614, %v1143
  %v1149 = vmul.f32 %v615, %v1143
  %v1150 = vmul.f32 %v616, %v1143
  %v1151 = vmul.f32 %v617, %v1143
  %v1152 = vmul.f32 %v618, %v1143
  %v1153 = vmul.f32 %v619, %v1143
  %v1154 = vmul.f32 %v620, %v1143
  %v1155 = vmul.f32 %v621, %v1143
  %v1156 = vmul.f32 %v622, %v1143
  %v1157 = vmul.f32 %v623, %v1143
  %v1158 = vmul.f32 %v624, %v1143
  %v1159 = vmul.f32 %v625, %v1143
  %v1160 = vmul.f32 %v626, %v1143
  %v1161 = vmul.f32 %v627, %v1143
  %v1162 = vmul.f32 %v628, %v1143
  %v1163 = vmul.f32 %v629, %v1143
  %v1164 = vmul.f32 %v630, %v1143
  %v1165 = vmul.f32 %v631, %v1143
  %v1166 = vmul.f32 %v632, %v1143
  %v1167 = vmul.f32 %v633, %v1143
  %v1168 = vmul.f32 %v634, %v1143
  %v1169 = vmul.f32 %v635, %v1143
  %v1170 = vmul.f32 %v636, %v1143
  %v1171 = vmul.f32 %v637, %v1143
  %v1172 = vmul.f32 %v638, %v1143
  %v1173 = vmul.f32 %v639, %v1143
  %v1174 = vmul.f32 %v640, %v1143
  %v1175 = vmul.f32 %v641, %v1143
  %v1176 = vmul.f32 %v642, %v1143
  %v1177 = vmul.f32 %v643, %v1143
  %v1178 = vmul.f32 %v644, %v1143
  %v1179 = vmul.f32 %v645, %v1143
  %v1180 = vmul.f32 %v646, %v1143
  %v1181 = vmul.f32 %v647, %v1143
  %v1182 = vmul.f32 %v648, %v1143
  %v1183 = vmul.f32 %v649, %v1143
  %v1184 = vmul.f32 %v650, %v1143
  %v1185 = vmul.f32 %v651, %v1143
  %v1186 = vmul.f32 %v652, %v1143
  %v1187 = vmul.f32 %v653, %v1143
  %v1188 = vmul.f32 %v654, %v1143
  %v1189 = vmul.f32 %v655, %v1143
  %v1190 = vmul.f32 %v656, %v1143
  %v1191 = vmul.f32 %v657, %v1143
  %v1192 = vmul.f32 %v658, %v1143
  %v1193 = vmul.f32 %v659, %v1143
  %v1194 = vmul.f32 %v660, %v1143
  %v1195 = vmul.f32 %v661, %v1143
  %v1196 = vmul.f32 %v662, %v1143
  %v1197 = vmul.f32 %v663, %v1143
  %v1198 = vmul.f32 %v664, %v1143
  %v1199 = vmul.f32 %v665, %v1143
  %v1200 = vmul.f32 %v666, %v1143
  %v1201 = vmul.f32 %v667, %v1143
  %v1202 = vmul.f32 %v668, %v1143
  %v1203 = vmul.f32 %v669, %v1143
  %v1204 = vmul.f32 %v670, %v1143
  %v1205 = vmul.f32 %v671, %v1143
  %v1206 = vmul.f32 %v672, %v1143
  %v1207 = vmul.f32 %v673, %v1143
  %v1208 = vmul.f32 %v674, %v1143
  %v1210 = vperm.slane %v540, 0
  %v1212 = vadd.f32 %v1145, %v1210
  %v1213 = vadd.f32 %v1146, %v1210
  %v1214 = vadd.f32 %v1147, %v1210
  %v1215 = vadd.f32 %v1148, %v1210
  %v1216 = vadd.f32 %v1149, %v1210
  %v1217 = vadd.f32 %v1150, %v1210
  %v1218 = vadd.f32 %v1151, %v1210
  %v1219 = vadd.f32 %v1152, %v1210
  %v1220 = vadd.f32 %v1153, %v1210
  %v1221 = vadd.f32 %v1154, %v1210
  %v1222 = vadd.f32 %v1155, %v1210
  %v1223 = vadd.f32 %v1156, %v1210
  %v1224 = vadd.f32 %v1157, %v1210
  %v1225 = vadd.f32 %v1158, %v1210
  %v1226 = vadd.f32 %v1159, %v1210
  %v1227 = vadd.f32 %v1160, %v1210
  %v1228 = vadd.f32 %v1161, %v1210
  %v1229 = vadd.f32 %v1162, %v1210
  %v1230 = vadd.f32 %v1163, %v1210
  %v1231 = vadd.f32 %v1164, %v1210
  %v1232 = vadd.f32 %v1165, %v1210
  %v1233 = vadd.f32 %v1166, %v1210
  %v1234 = vadd.f32 %v1167, %v1210
  %v1235 = vadd.f32 %v1168, %v1210
  %v1236 = vadd.f32 %v1169, %v1210
  %v1237 = vadd.f32 %v1170, %v1210
  %v1238 = vadd.f32 %v1171, %v1210
  %v1239 = vadd.f32 %v1172, %v1210
  %v1240 = vadd.f32 %v1173, %v1210
  %v1241 = vadd.f32 %v1174, %v1210
  %v1242 = vadd.f32 %v1175, %v1210
  %v1243 = vadd.f32 %v1176, %v1210
  %v1244 = vadd.f32 %v1177, %v1210
  %v1245 = vadd.f32 %v1178, %v1210
  %v1246 = vadd.f32 %v1179, %v1210
  %v1247 = vadd.f32 %v1180, %v1210
  %v1248 = vadd.f32 %v1181, %v1210
  %v1249 = vadd.f32 %v1182, %v1210
  %v1250 = vadd.f32 %v1183, %v1210
  %v1251 = vadd.f32 %v1184, %v1210
  %v1252 = vadd.f32 %v1185, %v1210
  %v1253 = vadd.f32 %v1186, %v1210
  %v1254 = vadd.f32 %v1187, %v1210
  %v1255 = vadd.f32 %v1188, %v1210
  %v1256 = vadd.f32 %v1189, %v1210
  %v1257 = vadd.f32 %v1190, %v1210
  %v1258 = vadd.f32 %v1191, %v1210
  %v1259 = vadd.f32 %v1192, %v1210
  %v1260 = vadd.f32 %v1193, %v1210
  %v1261 = vadd.f32 %v1194, %v1210
  %v1262 = vadd.f32 %v1195, %v1210
  %v1263 = vadd.f32 %v1196, %v1210
  %v1264 = vadd.f32 %v1197, %v1210
  %v1265 = vadd.f32 %v1198, %v1210
  %v1266 = vadd.f32 %v1199, %v1210
  %v1267 = vadd.f32 %v1200, %v1210
  %v1268 = vadd.f32 %v1201, %v1210
  %v1269 = vadd.f32 %v1202, %v1210
  %v1270 = vadd.f32 %v1203, %v1210
  %v1271 = vadd.f32 %v1204, %v1210
  %v1272 = vadd.f32 %v1205, %v1210
  %v1273 = vadd.f32 %v1206, %v1210
  %v1274 = vadd.f32 %v1207, %v1210
  %v1275 = vadd.f32 %v1208, %v1210
  %v1276 = vmul.f32 %v1212, 0.2
  %v1277 = vmul.f32 %v1213, 0.2
  %v1278 = vmul.f32 %v1214, 0.2
  %v1279 = vmul.f32 %v1215, 0.2
  %v1280 = vmul.f32 %v1216, 0.2
  %v1281 = vmul.f32 %v1217, 0.2
  %v1282 = vmul.f32 %v1218, 0.2
  %v1283 = vmul.f32 %v1219, 0.2
  %v1284 = vmul.f32 %v1220, 0.2
  %v1285 = vmul.f32 %v1221, 0.2
  %v1286 = vmul.f32 %v1222, 0.2
  %v1287 = vmul.f32 %v1223, 0.2
  %v1288 = vmul.f32 %v1224, 0.2
  %v1289 = vmul.f32 %v1225, 0.2
  %v1290 = vmul.f32 %v1226, 0.2
  %v1291 = vmul.f32 %v1227, 0.2
  %v1292 = vmul.f32 %v1228, 0.2
  %v1293 = vmul.f32 %v1229, 0.2
  %v1294 = vmul.f32 %v1230, 0.2
  %v1295 = vmul.f32 %v1231, 0.2
  %v1296 = vmul.f32 %v1232, 0.2
  %v1297 = vmul.f32 %v1233, 0.2
  %v1298 = vmul.f32 %v1234, 0.2
  %v1299 = vmul.f32 %v1235, 0.2
  %v1300 = vmul.f32 %v1236, 0.2
  %v1301 = vmul.f32 %v1237, 0.2
  %v1302 = vmul.f32 %v1238, 0.2
  %v1303 = vmul.f32 %v1239, 0.2
  %v1304 = vmul.f32 %v1240, 0.2
  %v1305 = vmul.f32 %v1241, 0.2
  %v1306 = vmul.f32 %v1242, 0.2
  %v1307 = vmul.f32 %v1243, 0.2
  %v1308 = vmul.f32 %v1244, 0.2
  %v1309 = vmul.f32 %v1245, 0.2
  %v1310 = vmul.f32 %v1246, 0.2
  %v1311 = vmul.f32 %v1247, 0.2
  %v1312 = vmul.f32 %v1248, 0.2
  %v1313 = vmul.f32 %v1249, 0.2
  %v1314 = vmul.f32 %v1250, 0.2
  %v1315 = vmul.f32 %v1251, 0.2
  %v1316 = vmul.f32 %v1252, 0.2
  %v1317 = vmul.f32 %v1253, 0.2
  %v1318 = vmul.f32 %v1254, 0.2
  %v1319 = vmul.f32 %v1255, 0.2
  %v1320 = vmul.f32 %v1256, 0.2
  %v1321 = vmul.f32 %v1257, 0.2
  %v1322 = vmul.f32 %v1258, 0.2
  %v1323 = vmul.f32 %v1259, 0.2
  %v1324 = vmul.f32 %v1260, 0.2
  %v1325 = vmul.f32 %v1261, 0.2
  %v1326 = vmul.f32 %v1262, 0.2
  %v1327 = vmul.f32 %v1263, 0.2
  %v1328 = vmul.f32 %v1264, 0.2
  %v1329 = vmul.f32 %v1265, 0.2
  %v1330 = vmul.f32 %v1266, 0.2
  %v1331 = vmul.f32 %v1267, 0.2
  %v1332 = vmul.f32 %v1268, 0.2
  %v1333 = vmul.f32 %v1269, 0.2
  %v1334 = vmul.f32 %v1270, 0.2
  %v1335 = vmul.f32 %v1271, 0.2
  %v1336 = vmul.f32 %v1272, 0.2
  %v1337 = vmul.f32 %v1273, 0.2
  %v1338 = vmul.f32 %v1274, 0.2
  %v1339 = vmul.f32 %v1275, 0.2
  %v1340 = vmax.f32 %v1212, %v1276
  %v1341 = vmax.f32 %v1213, %v1277
  %v1342 = vmax.f32 %v1214, %v1278
  %v1343 = vmax.f32 %v1215, %v1279
  %v1344 = vmax.f32 %v1216, %v1280
  %v1345 = vmax.f32 %v1217, %v1281
  %v1346 = vmax.f32 %v1218, %v1282
  %v1347 = vmax.f32 %v1219, %v1283
  %v1348 = vmax.f32 %v1220, %v1284
  %v1349 = vmax.f32 %v1221, %v1285
  %v1350 = vmax.f32 %v1222, %v1286
  %v1351 = vmax.f32 %v1223, %v1287
  %v1352 = vmax.f32 %v1224, %v1288
  %v1353 = vmax.f32 %v1225, %v1289
  %v1354 = vmax.f32 %v1226, %v1290
  %v1355 = vmax.f32 %v1227, %v1291
  %v1356 = vmax.f32 %v1228, %v1292
  %v1357 = vmax.f32 %v1229, %v1293
  %v1358 = vmax.f32 %v1230, %v1294
  %v1359 = vmax.f32 %v1231, %v1295
  %v1360 = vmax.f32 %v1232, %v1296
  %v1361 = vmax.f32 %v1233, %v1297
  %v1362 = vmax.f32 %v1234, %v1298
  %v1363 = vmax.f32 %v1235, %v1299
  %v1364 = vmax.f32 %v1236, %v1300
  %v1365 = vmax.f32 %v1237, %v1301
  %v1366 = vmax.f32 %v1238, %v1302
  %v1367 = vmax.f32 %v1239, %v1303
  %v1368 = vmax.f32 %v1240, %v1304
  %v1369 = vmax.f32 %v1241, %v1305
  %v1370 = vmax.f32 %v1242, %v1306
  %v1371 = vmax.f32 %v1243, %v1307
  %v1372 = vmax.f32 %v1244, %v1308
  %v1373 = vmax.f32 %v1245, %v1309
  %v1374 = vmax.f32 %v1246, %v1310
  %v1375 = vmax.f32 %v1247, %v1311
  %v1376 = vmax.f32 %v1248, %v1312
  %v1377 = vmax.f32 %v1249, %v1313
  %v1378 = vmax.f32 %v1250, %v1314
  %v1379 = vmax.f32 %v1251, %v1315
  %v1380 = vmax.f32 %v1252, %v1316
  %v1381 = vmax.f32 %v1253, %v1317
  %v1382 = vmax.f32 %v1254, %v1318
  %v1383 = vmax.f32 %v1255, %v1319
  %v1384 = vmax.f32 %v1256, %v1320
  %v1385 = vmax.f32 %v1257, %v1321
  %v1386 = vmax.f32 %v1258, %v1322
  %v1387 = vmax.f32 %v1259, %v1323
  %v1388 = vmax.f32 %v1260, %v1324
  %v1389 = vmax.f32 %v1261, %v1325
  %v1390 = vmax.f32 %v1262, %v1326
  %v1391 = vmax.f32 %v1263, %v1327
  %v1392 = vmax.f32 %v1264, %v1328
  %v1393 = vmax.f32 %v1265, %v1329
  %v1394 = vmax.f32 %v1266, %v1330
  %v1395 = vmax.f32 %v1267, %v1331
  %v1396 = vmax.f32 %v1268, %v1332
  %v1397 = vmax.f32 %v1269, %v1333
  %v1398 = vmax.f32 %v1270, %v1334
  %v1399 = vmax.f32 %v1271, %v1335
  %v1400 = vmax.f32 %v1272, %v1336
  %v1401 = vmax.f32 %v1273, %v1337
  %v1402 = vmax.f32 %v1274, %v1338
  %v1403 = vmax.f32 %v1275, %v1339
  %v1404 = vpack.c.bf16 %v1341, %v1340
  %v1405 = vpack.c.bf16 %v1343, %v1342
  %v1406 = vpack.c.bf16 %v1345, %v1344
  %v1407 = vpack.c.bf16 %v1347, %v1346
  %v1408 = vpack.c.bf16 %v1349, %v1348
  %v1409 = vpack.c.bf16 %v1351, %v1350
  %v1410 = vpack.c.bf16 %v1353, %v1352
  %v1411 = vpack.c.bf16 %v1355, %v1354
  %v1412 = vpack.c.bf16 %v1357, %v1356
  %v1413 = vpack.c.bf16 %v1359, %v1358
  %v1414 = vpack.c.bf16 %v1361, %v1360
  %v1415 = vpack.c.bf16 %v1363, %v1362
  %v1416 = vpack.c.bf16 %v1365, %v1364
  %v1417 = vpack.c.bf16 %v1367, %v1366
  %v1418 = vpack.c.bf16 %v1369, %v1368
  %v1419 = vpack.c.bf16 %v1371, %v1370
  %v1420 = vpack.c.bf16 %v1373, %v1372
  %v1421 = vpack.c.bf16 %v1375, %v1374
  %v1422 = vpack.c.bf16 %v1377, %v1376
  %v1423 = vpack.c.bf16 %v1379, %v1378
  %v1424 = vpack.c.bf16 %v1381, %v1380
  %v1425 = vpack.c.bf16 %v1383, %v1382
  %v1426 = vpack.c.bf16 %v1385, %v1384
  %v1427 = vpack.c.bf16 %v1387, %v1386
  %v1428 = vpack.c.bf16 %v1389, %v1388
  %v1429 = vpack.c.bf16 %v1391, %v1390
  %v1430 = vpack.c.bf16 %v1393, %v1392
  %v1431 = vpack.c.bf16 %v1395, %v1394
  %v1432 = vpack.c.bf16 %v1397, %v1396
  %v1433 = vpack.c.bf16 %v1399, %v1398
  %v1434 = vpack.c.bf16 %v1401, %v1400
  %v1435 = vpack.c.bf16 %v1403, %v1402
  %v1436 = vld [vmem:[%s4] sm:$0xff]
  %v1437 = vld [vmem:[%s4 + $0x8] sm:$0xff]
  %v1438 = vld [vmem:[%s4 + $0x10] sm:$0xff]
  %v1439 = vld [vmem:[%s4 + $0x18] sm:$0xff]
  %v1440 = vld [vmem:[%s4 + $0x20] sm:$0xff]
  %v1441 = vld [vmem:[%s4 + $0x28] sm:$0xff]
  %v1442 = vld [vmem:[%s4 + $0x30] sm:$0xff]
  %v1443 = vld [vmem:[%s4 + $0x38] sm:$0xff]
  %v1444 = vld [vmem:[%s4 + $0x40] sm:$0xff]
  %v1445 = vld [vmem:[%s4 + $0x48] sm:$0xff]
  %v1446 = vld [vmem:[%s4 + $0x50] sm:$0xff]
  %v1447 = vld [vmem:[%s4 + $0x58] sm:$0xff]
  %v1448 = vld [vmem:[%s4 + $0x60] sm:$0xff]
  %v1449 = vld [vmem:[%s4 + $0x68] sm:$0xff]
  %v1450 = vld [vmem:[%s4 + $0x70] sm:$0xff]
  %v1451 = vld [vmem:[%s4 + $0x78] sm:$0xff]
  %v1452 = vld [vmem:[%s4 + $0x80] sm:$0xff]
  %v1453 = vld [vmem:[%s4 + $0x88] sm:$0xff]
  %v1454 = vld [vmem:[%s4 + $0x90] sm:$0xff]
  %v1455 = vld [vmem:[%s4 + $0x98] sm:$0xff]
  %v1456 = vld [vmem:[%s4 + $0xa0] sm:$0xff]
  %v1457 = vld [vmem:[%s4 + $0xa8] sm:$0xff]
  %v1458 = vld [vmem:[%s4 + $0xb0] sm:$0xff]
  %v1459 = vld [vmem:[%s4 + $0xb8] sm:$0xff]
  %v1460 = vld [vmem:[%s4 + $0xc0] sm:$0xff]
  %v1461 = vld [vmem:[%s4 + $0xc8] sm:$0xff]
  %v1462 = vld [vmem:[%s4 + $0xd0] sm:$0xff]
  %v1463 = vld [vmem:[%s4 + $0xd8] sm:$0xff]
  %v1464 = vld [vmem:[%s4 + $0xe0] sm:$0xff]
  %v1465 = vld [vmem:[%s4 + $0xe8] sm:$0xff]
  %v1466 = vld [vmem:[%s4 + $0xf0] sm:$0xff]
  %v1467 = vld [vmem:[%s4 + $0xf8] sm:$0xff]
  %v1500 = vunpack.c.l.b16 %v1436
  %v1501 = vunpack.c.h.b16 %v1436
  %v1502 = vunpack.c.l.b16 %v1437
  %v1503 = vunpack.c.h.b16 %v1437
  %v1504 = vunpack.c.l.b16 %v1438
  %v1505 = vunpack.c.h.b16 %v1438
  %v1506 = vunpack.c.l.b16 %v1439
  %v1507 = vunpack.c.h.b16 %v1439
  %v1508 = vunpack.c.l.b16 %v1440
  %v1509 = vunpack.c.h.b16 %v1440
  %v1510 = vunpack.c.l.b16 %v1441
  %v1511 = vunpack.c.h.b16 %v1441
  %v1512 = vunpack.c.l.b16 %v1442
  %v1513 = vunpack.c.h.b16 %v1442
  %v1514 = vunpack.c.l.b16 %v1443
  %v1515 = vunpack.c.h.b16 %v1443
  %v1516 = vunpack.c.l.b16 %v1444
  %v1517 = vunpack.c.h.b16 %v1444
  %v1518 = vunpack.c.l.b16 %v1445
  %v1519 = vunpack.c.h.b16 %v1445
  %v1520 = vunpack.c.l.b16 %v1446
  %v1521 = vunpack.c.h.b16 %v1446
  %v1522 = vunpack.c.l.b16 %v1447
  %v1523 = vunpack.c.h.b16 %v1447
  %v1524 = vunpack.c.l.b16 %v1448
  %v1525 = vunpack.c.h.b16 %v1448
  %v1526 = vunpack.c.l.b16 %v1449
  %v1527 = vunpack.c.h.b16 %v1449
  %v1528 = vunpack.c.l.b16 %v1450
  %v1529 = vunpack.c.h.b16 %v1450
  %v1530 = vunpack.c.l.b16 %v1451
  %v1531 = vunpack.c.h.b16 %v1451
  %v1532 = vunpack.c.l.b16 %v1452
  %v1533 = vunpack.c.h.b16 %v1452
  %v1534 = vunpack.c.l.b16 %v1453
  %v1535 = vunpack.c.h.b16 %v1453
  %v1536 = vunpack.c.l.b16 %v1454
  %v1537 = vunpack.c.h.b16 %v1454
  %v1538 = vunpack.c.l.b16 %v1455
  %v1539 = vunpack.c.h.b16 %v1455
  %v1540 = vunpack.c.l.b16 %v1456
  %v1541 = vunpack.c.h.b16 %v1456
  %v1542 = vunpack.c.l.b16 %v1457
  %v1543 = vunpack.c.h.b16 %v1457
  %v1544 = vunpack.c.l.b16 %v1458
  %v1545 = vunpack.c.h.b16 %v1458
  %v1546 = vunpack.c.l.b16 %v1459
  %v1547 = vunpack.c.h.b16 %v1459
  %v1548 = vunpack.c.l.b16 %v1460
  %v1549 = vunpack.c.h.b16 %v1460
  %v1550 = vunpack.c.l.b16 %v1461
  %v1551 = vunpack.c.h.b16 %v1461
  %v1552 = vunpack.c.l.b16 %v1462
  %v1553 = vunpack.c.h.b16 %v1462
  %v1554 = vunpack.c.l.b16 %v1463
  %v1555 = vunpack.c.h.b16 %v1463
  %v1556 = vunpack.c.l.b16 %v1464
  %v1557 = vunpack.c.h.b16 %v1464
  %v1558 = vunpack.c.l.b16 %v1465
  %v1559 = vunpack.c.h.b16 %v1465
  %v1560 = vunpack.c.l.b16 %v1466
  %v1561 = vunpack.c.h.b16 %v1466
  %v1562 = vunpack.c.l.b16 %v1467
  %v1563 = vunpack.c.h.b16 %v1467
  %v1564 = vpack.c.b16 %v1504, %v1500
  %v1565 = vpack.c.b16 %v1505, %v1501
  %v1566 = vpack.c.b16 %v1506, %v1502
  %v1567 = vpack.c.b16 %v1507, %v1503
  %v1568 = vpack.c.b16 %v1512, %v1508
  %v1569 = vpack.c.b16 %v1513, %v1509
  %v1570 = vpack.c.b16 %v1514, %v1510
  %v1571 = vpack.c.b16 %v1515, %v1511
  %v1572 = vpack.c.b16 %v1520, %v1516
  %v1573 = vpack.c.b16 %v1521, %v1517
  %v1574 = vpack.c.b16 %v1522, %v1518
  %v1575 = vpack.c.b16 %v1523, %v1519
  %v1576 = vpack.c.b16 %v1528, %v1524
  %v1577 = vpack.c.b16 %v1529, %v1525
  %v1578 = vpack.c.b16 %v1530, %v1526
  %v1579 = vpack.c.b16 %v1531, %v1527
  %v1580 = vpack.c.b16 %v1536, %v1532
  %v1581 = vpack.c.b16 %v1537, %v1533
  %v1582 = vpack.c.b16 %v1538, %v1534
  %v1583 = vpack.c.b16 %v1539, %v1535
  %v1584 = vpack.c.b16 %v1544, %v1540
  %v1585 = vpack.c.b16 %v1545, %v1541
  %v1586 = vpack.c.b16 %v1546, %v1542
  %v1587 = vpack.c.b16 %v1547, %v1543
  %v1588 = vpack.c.b16 %v1552, %v1548
  %v1589 = vpack.c.b16 %v1553, %v1549
  %v1590 = vpack.c.b16 %v1554, %v1550
  %v1591 = vpack.c.b16 %v1555, %v1551
  %v1592 = vpack.c.b16 %v1560, %v1556
  %v1593 = vpack.c.b16 %v1561, %v1557
  %v1594 = vpack.c.b16 %v1562, %v1558
  %v1595 = vpack.c.b16 %v1563, %v1559
  %1628 = vmatpush.bf16.msra.mxu0 %v1411
  %1629 = vmatpush.bf16.msra.mxu0 %v1410
  %1630 = vmatpush.bf16.msra.mxu0 %v1409
  %1631 = vmatpush.bf16.msra.mxu0 %v1408
  %1632 = vmatpush.bf16.msra.mxu0 %v1407
  %1633 = vmatpush.bf16.msra.mxu0 %v1406
  %1634 = vmatpush.bf16.msra.mxu0 %v1405
  %1635 = vmatpush.bf16.msra.mxu0 %v1404
  %1636 = vmatmul.bf16.gmra.mxu0 %v1564
  %v1637 = vpop.f32.mrf.mxu0
  %v1638 = vadd.f32 0.0, %v1637
  %v1639 = vpop.f32.mrf.mxu0
  %v1640 = vadd.f32 0.0, %v1639
  %1641 = vmatmul.bf16.gmra.mxu0 %v1568
  %v1642 = vpop.f32.mrf.mxu0
  %v1643 = vadd.f32 0.0, %v1642
  %v1644 = vpop.f32.mrf.mxu0
  %v1645 = vadd.f32 0.0, %v1644
  %1646 = vmatmul.bf16.gmra.mxu0 %v1572
  %v1647 = vpop.f32.mrf.mxu0
  %v1648 = vadd.f32 0.0, %v1647
  %v1649 = vpop.f32.mrf.mxu0
  %v1650 = vadd.f32 0.0, %v1649
  %1651 = vmatmul.bf16.gmra.mxu0 %v1576
  %v1652 = vpop.f32.mrf.mxu0
  %v1653 = vadd.f32 0.0, %v1652
  %v1654 = vpop.f32.mrf.mxu0
  %v1655 = vadd.f32 0.0, %v1654
  %1656 = vmatmul.bf16.gmra.mxu0 %v1580
  %v1657 = vpop.f32.mrf.mxu0
  %v1658 = vadd.f32 0.0, %v1657
  %v1659 = vpop.f32.mrf.mxu0
  %v1660 = vadd.f32 0.0, %v1659
  %1661 = vmatmul.bf16.gmra.mxu0 %v1584
  %v1662 = vpop.f32.mrf.mxu0
  %v1663 = vadd.f32 0.0, %v1662
  %v1664 = vpop.f32.mrf.mxu0
  %v1665 = vadd.f32 0.0, %v1664
  %1666 = vmatmul.bf16.gmra.mxu0 %v1588
  %v1667 = vpop.f32.mrf.mxu0
  %v1668 = vadd.f32 0.0, %v1667
  %v1669 = vpop.f32.mrf.mxu0
  %v1670 = vadd.f32 0.0, %v1669
  %1671 = vmatmul.bf16.gmra.mxu0 %v1592
  %v1672 = vpop.f32.mrf.mxu0
  %v1673 = vadd.f32 0.0, %v1672
  %v1674 = vpop.f32.mrf.mxu0
  %v1675 = vadd.f32 0.0, %v1674
  %1676 = vdwg.mxu0
  %1677 = vmatpush.bf16.msra.mxu0 %v1419
  %1678 = vmatpush.bf16.msra.mxu0 %v1418
  %1679 = vmatpush.bf16.msra.mxu0 %v1417
  %1680 = vmatpush.bf16.msra.mxu0 %v1416
  %1681 = vmatpush.bf16.msra.mxu0 %v1415
  %1682 = vmatpush.bf16.msra.mxu0 %v1414
  %1683 = vmatpush.bf16.msra.mxu0 %v1413
  %1684 = vmatpush.bf16.msra.mxu0 %v1412
  %1685 = vmatmul.bf16.gmra.mxu0 %v1565
  %v1686 = vpop.f32.mrf.mxu0
  %v1687 = vadd.f32 %v1638, %v1686
  %v1688 = vpop.f32.mrf.mxu0
  %v1689 = vadd.f32 %v1640, %v1688
  %1690 = vmatmul.bf16.gmra.mxu0 %v1569
  %v1691 = vpop.f32.mrf.mxu0
  %v1692 = vadd.f32 %v1643, %v1691
  %v1693 = vpop.f32.mrf.mxu0
  %v1694 = vadd.f32 %v1645, %v1693
  %1695 = vmatmul.bf16.gmra.mxu0 %v1573
  %v1696 = vpop.f32.mrf.mxu0
  %v1697 = vadd.f32 %v1648, %v1696
  %v1698 = vpop.f32.mrf.mxu0
  %v1699 = vadd.f32 %v1650, %v1698
  %1700 = vmatmul.bf16.gmra.mxu0 %v1577
  %v1701 = vpop.f32.mrf.mxu0
  %v1702 = vadd.f32 %v1653, %v1701
  %v1703 = vpop.f32.mrf.mxu0
  %v1704 = vadd.f32 %v1655, %v1703
  %1705 = vmatmul.bf16.gmra.mxu0 %v1581
  %v1706 = vpop.f32.mrf.mxu0
  %v1707 = vadd.f32 %v1658, %v1706
  %v1708 = vpop.f32.mrf.mxu0
  %v1709 = vadd.f32 %v1660, %v1708
  %1710 = vmatmul.bf16.gmra.mxu0 %v1585
  %v1711 = vpop.f32.mrf.mxu0
  %v1712 = vadd.f32 %v1663, %v1711
  %v1713 = vpop.f32.mrf.mxu0
  %v1714 = vadd.f32 %v1665, %v1713
  %1715 = vmatmul.bf16.gmra.mxu0 %v1589
  %v1716 = vpop.f32.mrf.mxu0
  %v1717 = vadd.f32 %v1668, %v1716
  %v1718 = vpop.f32.mrf.mxu0
  %v1719 = vadd.f32 %v1670, %v1718
  %1720 = vmatmul.bf16.gmra.mxu0 %v1593
  %v1721 = vpop.f32.mrf.mxu0
  %v1722 = vadd.f32 %v1673, %v1721
  %v1723 = vpop.f32.mrf.mxu0
  %v1724 = vadd.f32 %v1675, %v1723
  %1725 = vdwg.mxu0
  %1726 = vmatpush.bf16.msra.mxu0 %v1427
  %1727 = vmatpush.bf16.msra.mxu0 %v1426
  %1728 = vmatpush.bf16.msra.mxu0 %v1425
  %1729 = vmatpush.bf16.msra.mxu0 %v1424
  %1730 = vmatpush.bf16.msra.mxu0 %v1423
  %1731 = vmatpush.bf16.msra.mxu0 %v1422
  %1732 = vmatpush.bf16.msra.mxu0 %v1421
  %1733 = vmatpush.bf16.msra.mxu0 %v1420
  %1734 = vmatmul.bf16.gmra.mxu0 %v1566
  %v1735 = vpop.f32.mrf.mxu0
  %v1736 = vadd.f32 %v1687, %v1735
  %v1737 = vpop.f32.mrf.mxu0
  %v1738 = vadd.f32 %v1689, %v1737
  %1739 = vmatmul.bf16.gmra.mxu0 %v1570
  %v1740 = vpop.f32.mrf.mxu0
  %v1741 = vadd.f32 %v1692, %v1740
  %v1742 = vpop.f32.mrf.mxu0
  %v1743 = vadd.f32 %v1694, %v1742
  %1744 = vmatmul.bf16.gmra.mxu0 %v1574
  %v1745 = vpop.f32.mrf.mxu0
  %v1746 = vadd.f32 %v1697, %v1745
  %v1747 = vpop.f32.mrf.mxu0
  %v1748 = vadd.f32 %v1699, %v1747
  %1749 = vmatmul.bf16.gmra.mxu0 %v1578
  %v1750 = vpop.f32.mrf.mxu0
  %v1751 = vadd.f32 %v1702, %v1750
  %v1752 = vpop.f32.mrf.mxu0
  %v1753 = vadd.f32 %v1704, %v1752
  %1754 = vmatmul.bf16.gmra.mxu0 %v1582
  %v1755 = vpop.f32.mrf.mxu0
  %v1756 = vadd.f32 %v1707, %v1755
  %v1757 = vpop.f32.mrf.mxu0
  %v1758 = vadd.f32 %v1709, %v1757
  %1759 = vmatmul.bf16.gmra.mxu0 %v1586
  %v1760 = vpop.f32.mrf.mxu0
  %v1761 = vadd.f32 %v1712, %v1760
  %v1762 = vpop.f32.mrf.mxu0
  %v1763 = vadd.f32 %v1714, %v1762
  %1764 = vmatmul.bf16.gmra.mxu0 %v1590
  %v1765 = vpop.f32.mrf.mxu0
  %v1766 = vadd.f32 %v1717, %v1765
  %v1767 = vpop.f32.mrf.mxu0
  %v1768 = vadd.f32 %v1719, %v1767
  %1769 = vmatmul.bf16.gmra.mxu0 %v1594
  %v1770 = vpop.f32.mrf.mxu0
  %v1771 = vadd.f32 %v1722, %v1770
  %v1772 = vpop.f32.mrf.mxu0
  %v1773 = vadd.f32 %v1724, %v1772
  %1774 = vdwg.mxu0
  %1775 = vmatpush.bf16.msra.mxu0 %v1435
  %1776 = vmatpush.bf16.msra.mxu0 %v1434
  %1777 = vmatpush.bf16.msra.mxu0 %v1433
  %1778 = vmatpush.bf16.msra.mxu0 %v1432
  %1779 = vmatpush.bf16.msra.mxu0 %v1431
  %1780 = vmatpush.bf16.msra.mxu0 %v1430
  %1781 = vmatpush.bf16.msra.mxu0 %v1429
  %1782 = vmatpush.bf16.msra.mxu0 %v1428
  %1783 = vmatmul.bf16.gmra.mxu0 %v1567
  %v1784 = vpop.f32.mrf.mxu0
  %v1785 = vadd.f32 %v1736, %v1784
  %v1786 = vpop.f32.mrf.mxu0
  %v1787 = vadd.f32 %v1738, %v1786
  %1788 = vmatmul.bf16.gmra.mxu0 %v1571
  %v1789 = vpop.f32.mrf.mxu0
  %v1790 = vadd.f32 %v1741, %v1789
  %v1791 = vpop.f32.mrf.mxu0
  %v1792 = vadd.f32 %v1743, %v1791
  %1793 = vmatmul.bf16.gmra.mxu0 %v1575
  %v1794 = vpop.f32.mrf.mxu0
  %v1795 = vadd.f32 %v1746, %v1794
  %v1796 = vpop.f32.mrf.mxu0
  %v1797 = vadd.f32 %v1748, %v1796
  %1798 = vmatmul.bf16.gmra.mxu0 %v1579
  %v1799 = vpop.f32.mrf.mxu0
  %v1800 = vadd.f32 %v1751, %v1799
  %v1801 = vpop.f32.mrf.mxu0
  %v1802 = vadd.f32 %v1753, %v1801
  %1803 = vmatmul.bf16.gmra.mxu0 %v1583
  %v1804 = vpop.f32.mrf.mxu0
  %v1805 = vadd.f32 %v1756, %v1804
  %v1806 = vpop.f32.mrf.mxu0
  %v1807 = vadd.f32 %v1758, %v1806
  %1808 = vmatmul.bf16.gmra.mxu0 %v1587
  %v1809 = vpop.f32.mrf.mxu0
  %v1810 = vadd.f32 %v1761, %v1809
  %v1811 = vpop.f32.mrf.mxu0
  %v1812 = vadd.f32 %v1763, %v1811
  %1813 = vmatmul.bf16.gmra.mxu0 %v1591
  %v1814 = vpop.f32.mrf.mxu0
  %v1815 = vadd.f32 %v1766, %v1814
  %v1816 = vpop.f32.mrf.mxu0
  %v1817 = vadd.f32 %v1768, %v1816
  %1818 = vmatmul.bf16.gmra.mxu0 %v1595
  %v1819 = vpop.f32.mrf.mxu0
  %v1820 = vadd.f32 %v1771, %v1819
  %v1821 = vpop.f32.mrf.mxu0
  %v1822 = vadd.f32 %v1773, %v1821
  %1823 = vdwg.mxu0
  %v1824 = vpack.c.bf16 %v1787, %v1785
  %v1825 = vpack.c.bf16 %v1792, %v1790
  %v1826 = vpack.c.bf16 %v1797, %v1795
  %v1827 = vpack.c.bf16 %v1802, %v1800
  %v1828 = vpack.c.bf16 %v1807, %v1805
  %v1829 = vpack.c.bf16 %v1812, %v1810
  %v1830 = vpack.c.bf16 %v1817, %v1815
  %v1831 = vpack.c.bf16 %v1822, %v1820
  %v1832 = vld [vmem:[%s5] sm:$0xf]
  %v1833 = vld [vmem:[%s5 + $0x4] sm:$0xf]
  %v1834 = vld [vmem:[%s5 + $0x8] sm:$0xf]
  %v1835 = vld [vmem:[%s5 + $0xc] sm:$0xf]
  %v1836 = vld [vmem:[%s5 + $0x10] sm:$0xf]
  %v1837 = vld [vmem:[%s5 + $0x14] sm:$0xf]
  %v1838 = vld [vmem:[%s5 + $0x18] sm:$0xf]
  %v1839 = vld [vmem:[%s5 + $0x1c] sm:$0xf]
  %v1840 = vld [vmem:[%s5 + $0x20] sm:$0xf]
  %v1841 = vld [vmem:[%s5 + $0x24] sm:$0xf]
  %v1842 = vld [vmem:[%s5 + $0x28] sm:$0xf]
  %v1843 = vld [vmem:[%s5 + $0x2c] sm:$0xf]
  %v1844 = vld [vmem:[%s5 + $0x30] sm:$0xf]
  %v1845 = vld [vmem:[%s5 + $0x34] sm:$0xf]
  %v1846 = vld [vmem:[%s5 + $0x38] sm:$0xf]
  %v1847 = vld [vmem:[%s5 + $0x3c] sm:$0xf]
  %s1848 = scalar_lea.vmem %s4, 256
  %v1849 = vld [vmem:[%s1848] sm:$0xff]
  %v1850 = vld [vmem:[%s1848 + $0x8] sm:$0xff]
  %v1851 = vld [vmem:[%s1848 + $0x10] sm:$0xff]
  %v1852 = vld [vmem:[%s1848 + $0x18] sm:$0xff]
  %v1853 = vld [vmem:[%s1848 + $0x20] sm:$0xff]
  %v1854 = vld [vmem:[%s1848 + $0x28] sm:$0xff]
  %v1855 = vld [vmem:[%s1848 + $0x30] sm:$0xff]
  %v1856 = vld [vmem:[%s1848 + $0x38] sm:$0xff]
  %v1857 = vld [vmem:[%s1848 + $0x40] sm:$0xff]
  %v1858 = vld [vmem:[%s1848 + $0x48] sm:$0xff]
  %v1859 = vld [vmem:[%s1848 + $0x50] sm:$0xff]
  %v1860 = vld [vmem:[%s1848 + $0x58] sm:$0xff]
  %v1861 = vld [vmem:[%s1848 + $0x60] sm:$0xff]
  %v1862 = vld [vmem:[%s1848 + $0x68] sm:$0xff]
  %v1863 = vld [vmem:[%s1848 + $0x70] sm:$0xff]
  %v1864 = vld [vmem:[%s1848 + $0x78] sm:$0xff]
  %v1865 = vld [vmem:[%s1848 + $0x80] sm:$0xff]
  %v1866 = vld [vmem:[%s1848 + $0x88] sm:$0xff]
  %v1867 = vld [vmem:[%s1848 + $0x90] sm:$0xff]
  %v1868 = vld [vmem:[%s1848 + $0x98] sm:$0xff]
  %v1869 = vld [vmem:[%s1848 + $0xa0] sm:$0xff]
  %v1870 = vld [vmem:[%s1848 + $0xa8] sm:$0xff]
  %v1871 = vld [vmem:[%s1848 + $0xb0] sm:$0xff]
  %v1872 = vld [vmem:[%s1848 + $0xb8] sm:$0xff]
  %v1873 = vld [vmem:[%s1848 + $0xc0] sm:$0xff]
  %v1874 = vld [vmem:[%s1848 + $0xc8] sm:$0xff]
  %v1875 = vld [vmem:[%s1848 + $0xd0] sm:$0xff]
  %v1876 = vld [vmem:[%s1848 + $0xd8] sm:$0xff]
  %v1877 = vld [vmem:[%s1848 + $0xe0] sm:$0xff]
  %v1878 = vld [vmem:[%s1848 + $0xe8] sm:$0xff]
  %v1879 = vld [vmem:[%s1848 + $0xf0] sm:$0xff]
  %v1880 = vld [vmem:[%s1848 + $0xf8] sm:$0xff]
  %v1913 = vunpack.c.l.b16 %v1849
  %v1914 = vunpack.c.h.b16 %v1849
  %v1915 = vunpack.c.l.b16 %v1850
  %v1916 = vunpack.c.h.b16 %v1850
  %v1917 = vunpack.c.l.b16 %v1851
  %v1918 = vunpack.c.h.b16 %v1851
  %v1919 = vunpack.c.l.b16 %v1852
  %v1920 = vunpack.c.h.b16 %v1852
  %v1921 = vunpack.c.l.b16 %v1853
  %v1922 = vunpack.c.h.b16 %v1853
  %v1923 = vunpack.c.l.b16 %v1854
  %v1924 = vunpack.c.h.b16 %v1854
  %v1925 = vunpack.c.l.b16 %v1855
  %v1926 = vunpack.c.h.b16 %v1855
  %v1927 = vunpack.c.l.b16 %v1856
  %v1928 = vunpack.c.h.b16 %v1856
  %v1929 = vunpack.c.l.b16 %v1857
  %v1930 = vunpack.c.h.b16 %v1857
  %v1931 = vunpack.c.l.b16 %v1858
  %v1932 = vunpack.c.h.b16 %v1858
  %v1933 = vunpack.c.l.b16 %v1859
  %v1934 = vunpack.c.h.b16 %v1859
  %v1935 = vunpack.c.l.b16 %v1860
  %v1936 = vunpack.c.h.b16 %v1860
  %v1937 = vunpack.c.l.b16 %v1861
  %v1938 = vunpack.c.h.b16 %v1861
  %v1939 = vunpack.c.l.b16 %v1862
  %v1940 = vunpack.c.h.b16 %v1862
  %v1941 = vunpack.c.l.b16 %v1863
  %v1942 = vunpack.c.h.b16 %v1863
  %v1943 = vunpack.c.l.b16 %v1864
  %v1944 = vunpack.c.h.b16 %v1864
  %v1945 = vunpack.c.l.b16 %v1865
  %v1946 = vunpack.c.h.b16 %v1865
  %v1947 = vunpack.c.l.b16 %v1866
  %v1948 = vunpack.c.h.b16 %v1866
  %v1949 = vunpack.c.l.b16 %v1867
  %v1950 = vunpack.c.h.b16 %v1867
  %v1951 = vunpack.c.l.b16 %v1868
  %v1952 = vunpack.c.h.b16 %v1868
  %v1953 = vunpack.c.l.b16 %v1869
  %v1954 = vunpack.c.h.b16 %v1869
  %v1955 = vunpack.c.l.b16 %v1870
  %v1956 = vunpack.c.h.b16 %v1870
  %v1957 = vunpack.c.l.b16 %v1871
  %v1958 = vunpack.c.h.b16 %v1871
  %v1959 = vunpack.c.l.b16 %v1872
  %v1960 = vunpack.c.h.b16 %v1872
  %v1961 = vunpack.c.l.b16 %v1873
  %v1962 = vunpack.c.h.b16 %v1873
  %v1963 = vunpack.c.l.b16 %v1874
  %v1964 = vunpack.c.h.b16 %v1874
  %v1965 = vunpack.c.l.b16 %v1875
  %v1966 = vunpack.c.h.b16 %v1875
  %v1967 = vunpack.c.l.b16 %v1876
  %v1968 = vunpack.c.h.b16 %v1876
  %v1969 = vunpack.c.l.b16 %v1877
  %v1970 = vunpack.c.h.b16 %v1877
  %v1971 = vunpack.c.l.b16 %v1878
  %v1972 = vunpack.c.h.b16 %v1878
  %v1973 = vunpack.c.l.b16 %v1879
  %v1974 = vunpack.c.h.b16 %v1879
  %v1975 = vunpack.c.l.b16 %v1880
  %v1976 = vunpack.c.h.b16 %v1880
  %v1977 = vpack.c.b16 %v1917, %v1913
  %v1978 = vpack.c.b16 %v1918, %v1914
  %v1979 = vpack.c.b16 %v1919, %v1915
  %v1980 = vpack.c.b16 %v1920, %v1916
  %v1981 = vpack.c.b16 %v1925, %v1921
  %v1982 = vpack.c.b16 %v1926, %v1922
  %v1983 = vpack.c.b16 %v1927, %v1923
  %v1984 = vpack.c.b16 %v1928, %v1924
  %v1985 = vpack.c.b16 %v1933, %v1929
  %v1986 = vpack.c.b16 %v1934, %v1930
  %v1987 = vpack.c.b16 %v1935, %v1931
  %v1988 = vpack.c.b16 %v1936, %v1932
  %v1989 = vpack.c.b16 %v1941, %v1937
  %v1990 = vpack.c.b16 %v1942, %v1938
  %v1991 = vpack.c.b16 %v1943, %v1939
  %v1992 = vpack.c.b16 %v1944, %v1940
  %v1993 = vpack.c.b16 %v1949, %v1945
  %v1994 = vpack.c.b16 %v1950, %v1946
  %v1995 = vpack.c.b16 %v1951, %v1947
  %v1996 = vpack.c.b16 %v1952, %v1948
  %v1997 = vpack.c.b16 %v1957, %v1953
  %v1998 = vpack.c.b16 %v1958, %v1954
  %v1999 = vpack.c.b16 %v1959, %v1955
  %v2000 = vpack.c.b16 %v1960, %v1956
  %v2001 = vpack.c.b16 %v1965, %v1961
  %v2002 = vpack.c.b16 %v1966, %v1962
  %v2003 = vpack.c.b16 %v1967, %v1963
  %v2004 = vpack.c.b16 %v1968, %v1964
  %v2005 = vpack.c.b16 %v1973, %v1969
  %v2006 = vpack.c.b16 %v1974, %v1970
  %v2007 = vpack.c.b16 %v1975, %v1971
  %v2008 = vpack.c.b16 %v1976, %v1972
  %2041 = vmatpush.bf16.msra.mxu0 %v1411
  %2042 = vmatpush.bf16.msra.mxu0 %v1410
  %2043 = vmatpush.bf16.msra.mxu0 %v1409
  %2044 = vmatpush.bf16.msra.mxu0 %v1408
  %2045 = vmatpush.bf16.msra.mxu0 %v1407
  %2046 = vmatpush.bf16.msra.mxu0 %v1406
  %2047 = vmatpush.bf16.msra.mxu0 %v1405
  %2048 = vmatpush.bf16.msra.mxu0 %v1404
  %2049 = vmatmul.bf16.gmra.mxu0 %v1977
  %v2050 = vpop.f32.mrf.mxu0
  %v2051 = vadd.f32 0.0, %v2050
  %v2052 = vpop.f32.mrf.mxu0
  %v2053 = vadd.f32 0.0, %v2052
  %2054 = vmatmul.bf16.gmra.mxu0 %v1981
  %v2055 = vpop.f32.mrf.mxu0
  %v2056 = vadd.f32 0.0, %v2055
  %v2057 = vpop.f32.mrf.mxu0
  %v2058 = vadd.f32 0.0, %v2057
  %2059 = vmatmul.bf16.gmra.mxu0 %v1985
  %v2060 = vpop.f32.mrf.mxu0
  %v2061 = vadd.f32 0.0, %v2060
  %v2062 = vpop.f32.mrf.mxu0
  %v2063 = vadd.f32 0.0, %v2062
  %2064 = vmatmul.bf16.gmra.mxu0 %v1989
  %v2065 = vpop.f32.mrf.mxu0
  %v2066 = vadd.f32 0.0, %v2065
  %v2067 = vpop.f32.mrf.mxu0
  %v2068 = vadd.f32 0.0, %v2067
  %2069 = vmatmul.bf16.gmra.mxu0 %v1993
  %v2070 = vpop.f32.mrf.mxu0
  %v2071 = vadd.f32 0.0, %v2070
  %v2072 = vpop.f32.mrf.mxu0
  %v2073 = vadd.f32 0.0, %v2072
  %2074 = vmatmul.bf16.gmra.mxu0 %v1997
  %v2075 = vpop.f32.mrf.mxu0
  %v2076 = vadd.f32 0.0, %v2075
  %v2077 = vpop.f32.mrf.mxu0
  %v2078 = vadd.f32 0.0, %v2077
  %2079 = vmatmul.bf16.gmra.mxu0 %v2001
  %v2080 = vpop.f32.mrf.mxu0
  %v2081 = vadd.f32 0.0, %v2080
  %v2082 = vpop.f32.mrf.mxu0
  %v2083 = vadd.f32 0.0, %v2082
  %2084 = vmatmul.bf16.gmra.mxu0 %v2005
  %v2085 = vpop.f32.mrf.mxu0
  %v2086 = vadd.f32 0.0, %v2085
  %v2087 = vpop.f32.mrf.mxu0
  %v2088 = vadd.f32 0.0, %v2087
  %2089 = vdwg.mxu0
  %2090 = vmatpush.bf16.msra.mxu0 %v1419
  %2091 = vmatpush.bf16.msra.mxu0 %v1418
  %2092 = vmatpush.bf16.msra.mxu0 %v1417
  %2093 = vmatpush.bf16.msra.mxu0 %v1416
  %2094 = vmatpush.bf16.msra.mxu0 %v1415
  %2095 = vmatpush.bf16.msra.mxu0 %v1414
  %2096 = vmatpush.bf16.msra.mxu0 %v1413
  %2097 = vmatpush.bf16.msra.mxu0 %v1412
  %2098 = vmatmul.bf16.gmra.mxu0 %v1978
  %v2099 = vpop.f32.mrf.mxu0
  %v2100 = vadd.f32 %v2051, %v2099
  %v2101 = vpop.f32.mrf.mxu0
  %v2102 = vadd.f32 %v2053, %v2101
  %2103 = vmatmul.bf16.gmra.mxu0 %v1982
  %v2104 = vpop.f32.mrf.mxu0
  %v2105 = vadd.f32 %v2056, %v2104
  %v2106 = vpop.f32.mrf.mxu0
  %v2107 = vadd.f32 %v2058, %v2106
  %2108 = vmatmul.bf16.gmra.mxu0 %v1986
  %v2109 = vpop.f32.mrf.mxu0
  %v2110 = vadd.f32 %v2061, %v2109
  %v2111 = vpop.f32.mrf.mxu0
  %v2112 = vadd.f32 %v2063, %v2111
  %2113 = vmatmul.bf16.gmra.mxu0 %v1990
  %v2114 = vpop.f32.mrf.mxu0
  %v2115 = vadd.f32 %v2066, %v2114
  %v2116 = vpop.f32.mrf.mxu0
  %v2117 = vadd.f32 %v2068, %v2116
  %2118 = vmatmul.bf16.gmra.mxu0 %v1994
  %v2119 = vpop.f32.mrf.mxu0
  %v2120 = vadd.f32 %v2071, %v2119
  %v2121 = vpop.f32.mrf.mxu0
  %v2122 = vadd.f32 %v2073, %v2121
  %2123 = vmatmul.bf16.gmra.mxu0 %v1998
  %v2124 = vpop.f32.mrf.mxu0
  %v2125 = vadd.f32 %v2076, %v2124
  %v2126 = vpop.f32.mrf.mxu0
  %v2127 = vadd.f32 %v2078, %v2126
  %2128 = vmatmul.bf16.gmra.mxu0 %v2002
  %v2129 = vpop.f32.mrf.mxu0
  %v2130 = vadd.f32 %v2081, %v2129
  %v2131 = vpop.f32.mrf.mxu0
  %v2132 = vadd.f32 %v2083, %v2131
  %2133 = vmatmul.bf16.gmra.mxu0 %v2006
  %v2134 = vpop.f32.mrf.mxu0
  %v2135 = vadd.f32 %v2086, %v2134
  %v2136 = vpop.f32.mrf.mxu0
  %v2137 = vadd.f32 %v2088, %v2136
  %2138 = vdwg.mxu0
  %2139 = vmatpush.bf16.msra.mxu0 %v1427
  %2140 = vmatpush.bf16.msra.mxu0 %v1426
  %2141 = vmatpush.bf16.msra.mxu0 %v1425
  %2142 = vmatpush.bf16.msra.mxu0 %v1424
  %2143 = vmatpush.bf16.msra.mxu0 %v1423
  %2144 = vmatpush.bf16.msra.mxu0 %v1422
  %2145 = vmatpush.bf16.msra.mxu0 %v1421
  %2146 = vmatpush.bf16.msra.mxu0 %v1420
  %2147 = vmatmul.bf16.gmra.mxu0 %v1979
  %v2148 = vpop.f32.mrf.mxu0
  %v2149 = vadd.f32 %v2100, %v2148
  %v2150 = vpop.f32.mrf.mxu0
  %v2151 = vadd.f32 %v2102, %v2150
  %2152 = vmatmul.bf16.gmra.mxu0 %v1983
  %v2153 = vpop.f32.mrf.mxu0
  %v2154 = vadd.f32 %v2105, %v2153
  %v2155 = vpop.f32.mrf.mxu0
  %v2156 = vadd.f32 %v2107, %v2155
  %2157 = vmatmul.bf16.gmra.mxu0 %v1987
  %v2158 = vpop.f32.mrf.mxu0
  %v2159 = vadd.f32 %v2110, %v2158
  %v2160 = vpop.f32.mrf.mxu0
  %v2161 = vadd.f32 %v2112, %v2160
  %2162 = vmatmul.bf16.gmra.mxu0 %v1991
  %v2163 = vpop.f32.mrf.mxu0
  %v2164 = vadd.f32 %v2115, %v2163
  %v2165 = vpop.f32.mrf.mxu0
  %v2166 = vadd.f32 %v2117, %v2165
  %2167 = vmatmul.bf16.gmra.mxu0 %v1995
  %v2168 = vpop.f32.mrf.mxu0
  %v2169 = vadd.f32 %v2120, %v2168
  %v2170 = vpop.f32.mrf.mxu0
  %v2171 = vadd.f32 %v2122, %v2170
  %2172 = vmatmul.bf16.gmra.mxu0 %v1999
  %v2173 = vpop.f32.mrf.mxu0
  %v2174 = vadd.f32 %v2125, %v2173
  %v2175 = vpop.f32.mrf.mxu0
  %v2176 = vadd.f32 %v2127, %v2175
  %2177 = vmatmul.bf16.gmra.mxu0 %v2003
  %v2178 = vpop.f32.mrf.mxu0
  %v2179 = vadd.f32 %v2130, %v2178
  %v2180 = vpop.f32.mrf.mxu0
  %v2181 = vadd.f32 %v2132, %v2180
  %2182 = vmatmul.bf16.gmra.mxu0 %v2007
  %v2183 = vpop.f32.mrf.mxu0
  %v2184 = vadd.f32 %v2135, %v2183
  %v2185 = vpop.f32.mrf.mxu0
  %v2186 = vadd.f32 %v2137, %v2185
  %2187 = vdwg.mxu0
  %2188 = vmatpush.bf16.msra.mxu0 %v1435
  %2189 = vmatpush.bf16.msra.mxu0 %v1434
  %2190 = vmatpush.bf16.msra.mxu0 %v1433
  %2191 = vmatpush.bf16.msra.mxu0 %v1432
  %2192 = vmatpush.bf16.msra.mxu0 %v1431
  %2193 = vmatpush.bf16.msra.mxu0 %v1430
  %2194 = vmatpush.bf16.msra.mxu0 %v1429
  %2195 = vmatpush.bf16.msra.mxu0 %v1428
  %2196 = vmatmul.bf16.gmra.mxu0 %v1980
  %v2197 = vpop.f32.mrf.mxu0
  %v2198 = vadd.f32 %v2149, %v2197
  %v2199 = vpop.f32.mrf.mxu0
  %v2200 = vadd.f32 %v2151, %v2199
  %2201 = vmatmul.bf16.gmra.mxu0 %v1984
  %v2202 = vpop.f32.mrf.mxu0
  %v2203 = vadd.f32 %v2154, %v2202
  %v2204 = vpop.f32.mrf.mxu0
  %v2205 = vadd.f32 %v2156, %v2204
  %2206 = vmatmul.bf16.gmra.mxu0 %v1988
  %v2207 = vpop.f32.mrf.mxu0
  %v2208 = vadd.f32 %v2159, %v2207
  %v2209 = vpop.f32.mrf.mxu0
  %v2210 = vadd.f32 %v2161, %v2209
  %2211 = vmatmul.bf16.gmra.mxu0 %v1992
  %v2212 = vpop.f32.mrf.mxu0
  %v2213 = vadd.f32 %v2164, %v2212
  %v2214 = vpop.f32.mrf.mxu0
  %v2215 = vadd.f32 %v2166, %v2214
  %2216 = vmatmul.bf16.gmra.mxu0 %v1996
  %v2217 = vpop.f32.mrf.mxu0
  %v2218 = vadd.f32 %v2169, %v2217
  %v2219 = vpop.f32.mrf.mxu0
  %v2220 = vadd.f32 %v2171, %v2219
  %2221 = vmatmul.bf16.gmra.mxu0 %v2000
  %v2222 = vpop.f32.mrf.mxu0
  %v2223 = vadd.f32 %v2174, %v2222
  %v2224 = vpop.f32.mrf.mxu0
  %v2225 = vadd.f32 %v2176, %v2224
  %2226 = vmatmul.bf16.gmra.mxu0 %v2004
  %v2227 = vpop.f32.mrf.mxu0
  %v2228 = vadd.f32 %v2179, %v2227
  %v2229 = vpop.f32.mrf.mxu0
  %v2230 = vadd.f32 %v2181, %v2229
  %2231 = vmatmul.bf16.gmra.mxu0 %v2008
  %v2232 = vpop.f32.mrf.mxu0
  %v2233 = vadd.f32 %v2184, %v2232
  %v2234 = vpop.f32.mrf.mxu0
  %v2235 = vadd.f32 %v2186, %v2234
  %2236 = vdwg.mxu0
  %v2237 = vpack.c.bf16 %v2200, %v2198
  %v2238 = vpack.c.bf16 %v2205, %v2203
  %v2239 = vpack.c.bf16 %v2210, %v2208
  %v2240 = vpack.c.bf16 %v2215, %v2213
  %v2241 = vpack.c.bf16 %v2220, %v2218
  %v2242 = vpack.c.bf16 %v2225, %v2223
  %v2243 = vpack.c.bf16 %v2230, %v2228
  %v2244 = vpack.c.bf16 %v2235, %v2233
  %s2245 = scalar_lea.vmem %s5, 64
  %v2246 = vld [vmem:[%s2245] sm:$0xf]
  %v2247 = vld [vmem:[%s2245 + $0x4] sm:$0xf]
  %v2248 = vld [vmem:[%s2245 + $0x8] sm:$0xf]
  %v2249 = vld [vmem:[%s2245 + $0xc] sm:$0xf]
  %v2250 = vld [vmem:[%s2245 + $0x10] sm:$0xf]
  %v2251 = vld [vmem:[%s2245 + $0x14] sm:$0xf]
  %v2252 = vld [vmem:[%s2245 + $0x18] sm:$0xf]
  %v2253 = vld [vmem:[%s2245 + $0x1c] sm:$0xf]
  %v2254 = vld [vmem:[%s2245 + $0x20] sm:$0xf]
  %v2255 = vld [vmem:[%s2245 + $0x24] sm:$0xf]
  %v2256 = vld [vmem:[%s2245 + $0x28] sm:$0xf]
  %v2257 = vld [vmem:[%s2245 + $0x2c] sm:$0xf]
  %v2258 = vld [vmem:[%s2245 + $0x30] sm:$0xf]
  %v2259 = vld [vmem:[%s2245 + $0x34] sm:$0xf]
  %v2260 = vld [vmem:[%s2245 + $0x38] sm:$0xf]
  %v2261 = vld [vmem:[%s2245 + $0x3c] sm:$0xf]
  %v2278 = vunpack.c.l.b16 %v2246
  %v2279 = vunpack.c.l.b16 %v2247
  %v2280 = vunpack.c.l.b16 %v2248
  %v2281 = vunpack.c.l.b16 %v2249
  %v2282 = vunpack.c.l.b16 %v2250
  %v2283 = vunpack.c.l.b16 %v2251
  %v2284 = vunpack.c.l.b16 %v2252
  %v2285 = vunpack.c.l.b16 %v2253
  %v2286 = vunpack.c.l.b16 %v2254
  %v2287 = vunpack.c.l.b16 %v2255
  %v2288 = vunpack.c.l.b16 %v2256
  %v2289 = vunpack.c.l.b16 %v2257
  %v2290 = vunpack.c.l.b16 %v2258
  %v2291 = vunpack.c.l.b16 %v2259
  %v2292 = vunpack.c.l.b16 %v2260
  %v2293 = vunpack.c.l.b16 %v2261
  %v2294 = vpack.c.b16 %v2279, %v2278
  %v2295 = vpack.c.b16 %v2281, %v2280
  %v2296 = vpack.c.b16 %v2283, %v2282
  %v2297 = vpack.c.b16 %v2285, %v2284
  %v2298 = vpack.c.b16 %v2287, %v2286
  %v2299 = vpack.c.b16 %v2289, %v2288
  %v2300 = vpack.c.b16 %v2291, %v2290
  %v2301 = vpack.c.b16 %v2293, %v2292
  %2310 = vmatpush.bf16.msra.mxu0 %v2301
  %2311 = vmatpush.bf16.msra.mxu0 %v2300
  %2312 = vmatpush.bf16.msra.mxu0 %v2299
  %2313 = vmatpush.bf16.msra.mxu0 %v2298
  %2314 = vmatpush.bf16.msra.mxu0 %v2297
  %2315 = vmatpush.bf16.msra.mxu0 %v2296
  %2316 = vmatpush.bf16.msra.mxu0 %v2295
  %2317 = vmatpush.bf16.msra.mxu0 %v2294
  %2318 = vmatmul.bf16.gmra.mxu0 %v2237
  %v2319 = vpop.f32.mrf.mxu0
  %v2320 = vadd.f32 0.0, %v2319
  %v2321 = vpop.f32.mrf.mxu0
  %v2322 = vadd.f32 0.0, %v2321
  %2323 = vmatmul.bf16.gmra.mxu0 %v2238
  %v2324 = vpop.f32.mrf.mxu0
  %v2325 = vadd.f32 0.0, %v2324
  %v2326 = vpop.f32.mrf.mxu0
  %v2327 = vadd.f32 0.0, %v2326
  %2328 = vmatmul.bf16.gmra.mxu0 %v2239
  %v2329 = vpop.f32.mrf.mxu0
  %v2330 = vadd.f32 0.0, %v2329
  %v2331 = vpop.f32.mrf.mxu0
  %v2332 = vadd.f32 0.0, %v2331
  %2333 = vmatmul.bf16.gmra.mxu0 %v2240
  %v2334 = vpop.f32.mrf.mxu0
  %v2335 = vadd.f32 0.0, %v2334
  %v2336 = vpop.f32.mrf.mxu0
  %v2337 = vadd.f32 0.0, %v2336
  %2338 = vmatmul.bf16.gmra.mxu0 %v2241
  %v2339 = vpop.f32.mrf.mxu0
  %v2340 = vadd.f32 0.0, %v2339
  %v2341 = vpop.f32.mrf.mxu0
  %v2342 = vadd.f32 0.0, %v2341
  %2343 = vmatmul.bf16.gmra.mxu0 %v2242
  %v2344 = vpop.f32.mrf.mxu0
  %v2345 = vadd.f32 0.0, %v2344
  %v2346 = vpop.f32.mrf.mxu0
  %v2347 = vadd.f32 0.0, %v2346
  %2348 = vmatmul.bf16.gmra.mxu0 %v2243
  %v2349 = vpop.f32.mrf.mxu0
  %v2350 = vadd.f32 0.0, %v2349
  %v2351 = vpop.f32.mrf.mxu0
  %v2352 = vadd.f32 0.0, %v2351
  %2353 = vmatmul.bf16.gmra.mxu0 %v2244
  %v2354 = vpop.f32.mrf.mxu0
  %v2355 = vadd.f32 0.0, %v2354
  %v2356 = vpop.f32.mrf.mxu0
  %v2357 = vadd.f32 0.0, %v2356
  %2358 = vdwg.mxu0
  %v2375 = vunpack.c.l.b16 %v1832
  %v2376 = vunpack.c.l.b16 %v1833
  %v2377 = vunpack.c.l.b16 %v1834
  %v2378 = vunpack.c.l.b16 %v1835
  %v2379 = vunpack.c.l.b16 %v1836
  %v2380 = vunpack.c.l.b16 %v1837
  %v2381 = vunpack.c.l.b16 %v1838
  %v2382 = vunpack.c.l.b16 %v1839
  %v2383 = vunpack.c.l.b16 %v1840
  %v2384 = vunpack.c.l.b16 %v1841
  %v2385 = vunpack.c.l.b16 %v1842
  %v2386 = vunpack.c.l.b16 %v1843
  %v2387 = vunpack.c.l.b16 %v1844
  %v2388 = vunpack.c.l.b16 %v1845
  %v2389 = vunpack.c.l.b16 %v1846
  %v2390 = vunpack.c.l.b16 %v1847
  %v2391 = vpack.c.b16 %v2376, %v2375
  %v2392 = vpack.c.b16 %v2378, %v2377
  %v2393 = vpack.c.b16 %v2380, %v2379
  %v2394 = vpack.c.b16 %v2382, %v2381
  %v2395 = vpack.c.b16 %v2384, %v2383
  %v2396 = vpack.c.b16 %v2386, %v2385
  %v2397 = vpack.c.b16 %v2388, %v2387
  %v2398 = vpack.c.b16 %v2390, %v2389
  %2407 = vmatpush.bf16.msra.mxu0 %v2398
  %2408 = vmatpush.bf16.msra.mxu0 %v2397
  %2409 = vmatpush.bf16.msra.mxu0 %v2396
  %2410 = vmatpush.bf16.msra.mxu0 %v2395
  %2411 = vmatpush.bf16.msra.mxu0 %v2394
  %2412 = vmatpush.bf16.msra.mxu0 %v2393
  %2413 = vmatpush.bf16.msra.mxu0 %v2392
  %2414 = vmatpush.bf16.msra.mxu0 %v2391
  %2415 = vmatmul.bf16.gmra.mxu0 %v1824
  %v2416 = vpop.f32.mrf.mxu0
  %v2417 = vadd.f32 %v2320, %v2416
  %v2418 = vpop.f32.mrf.mxu0
  %v2419 = vadd.f32 %v2322, %v2418
  %2420 = vmatmul.bf16.gmra.mxu0 %v1825
  %v2421 = vpop.f32.mrf.mxu0
  %v2422 = vadd.f32 %v2325, %v2421
  %v2423 = vpop.f32.mrf.mxu0
  %v2424 = vadd.f32 %v2327, %v2423
  %2425 = vmatmul.bf16.gmra.mxu0 %v1826
  %v2426 = vpop.f32.mrf.mxu0
  %v2427 = vadd.f32 %v2330, %v2426
  %v2428 = vpop.f32.mrf.mxu0
  %v2429 = vadd.f32 %v2332, %v2428
  %2430 = vmatmul.bf16.gmra.mxu0 %v1827
  %v2431 = vpop.f32.mrf.mxu0
  %v2432 = vadd.f32 %v2335, %v2431
  %v2433 = vpop.f32.mrf.mxu0
  %v2434 = vadd.f32 %v2337, %v2433
  %2435 = vmatmul.bf16.gmra.mxu0 %v1828
  %v2436 = vpop.f32.mrf.mxu0
  %v2437 = vadd.f32 %v2340, %v2436
  %v2438 = vpop.f32.mrf.mxu0
  %v2439 = vadd.f32 %v2342, %v2438
  %2440 = vmatmul.bf16.gmra.mxu0 %v1829
  %v2441 = vpop.f32.mrf.mxu0
  %v2442 = vadd.f32 %v2345, %v2441
  %v2443 = vpop.f32.mrf.mxu0
  %v2444 = vadd.f32 %v2347, %v2443
  %2445 = vmatmul.bf16.gmra.mxu0 %v1830
  %v2446 = vpop.f32.mrf.mxu0
  %v2447 = vadd.f32 %v2350, %v2446
  %v2448 = vpop.f32.mrf.mxu0
  %v2449 = vadd.f32 %v2352, %v2448
  %2450 = vmatmul.bf16.gmra.mxu0 %v1831
  %v2451 = vpop.f32.mrf.mxu0
  %v2452 = vadd.f32 %v2355, %v2451
  %v2453 = vpop.f32.mrf.mxu0
  %v2454 = vadd.f32 %v2357, %v2453
  %2455 = vdwg.mxu0
  %s2456 = scalar_lea.vmem %s4, 512
  %v2457 = vld [vmem:[%s2456] sm:$0xff]
  %v2458 = vld [vmem:[%s2456 + $0x8] sm:$0xff]
  %v2459 = vld [vmem:[%s2456 + $0x10] sm:$0xff]
  %v2460 = vld [vmem:[%s2456 + $0x18] sm:$0xff]
  %v2461 = vld [vmem:[%s2456 + $0x20] sm:$0xff]
  %v2462 = vld [vmem:[%s2456 + $0x28] sm:$0xff]
  %v2463 = vld [vmem:[%s2456 + $0x30] sm:$0xff]
  %v2464 = vld [vmem:[%s2456 + $0x38] sm:$0xff]
  %v2465 = vld [vmem:[%s2456 + $0x40] sm:$0xff]
  %v2466 = vld [vmem:[%s2456 + $0x48] sm:$0xff]
  %v2467 = vld [vmem:[%s2456 + $0x50] sm:$0xff]
  %v2468 = vld [vmem:[%s2456 + $0x58] sm:$0xff]
  %v2469 = vld [vmem:[%s2456 + $0x60] sm:$0xff]
  %v2470 = vld [vmem:[%s2456 + $0x68] sm:$0xff]
  %v2471 = vld [vmem:[%s2456 + $0x70] sm:$0xff]
  %v2472 = vld [vmem:[%s2456 + $0x78] sm:$0xff]
  %v2473 = vld [vmem:[%s2456 + $0x80] sm:$0xff]
  %v2474 = vld [vmem:[%s2456 + $0x88] sm:$0xff]
  %v2475 = vld [vmem:[%s2456 + $0x90] sm:$0xff]
  %v2476 = vld [vmem:[%s2456 + $0x98] sm:$0xff]
  %v2477 = vld [vmem:[%s2456 + $0xa0] sm:$0xff]
  %v2478 = vld [vmem:[%s2456 + $0xa8] sm:$0xff]
  %v2479 = vld [vmem:[%s2456 + $0xb0] sm:$0xff]
  %v2480 = vld [vmem:[%s2456 + $0xb8] sm:$0xff]
  %v2481 = vld [vmem:[%s2456 + $0xc0] sm:$0xff]
  %v2482 = vld [vmem:[%s2456 + $0xc8] sm:$0xff]
  %v2483 = vld [vmem:[%s2456 + $0xd0] sm:$0xff]
  %v2484 = vld [vmem:[%s2456 + $0xd8] sm:$0xff]
  %v2485 = vld [vmem:[%s2456 + $0xe0] sm:$0xff]
  %v2486 = vld [vmem:[%s2456 + $0xe8] sm:$0xff]
  %v2487 = vld [vmem:[%s2456 + $0xf0] sm:$0xff]
  %v2488 = vld [vmem:[%s2456 + $0xf8] sm:$0xff]
  %v2521 = vunpack.c.l.b16 %v2457
  %v2522 = vunpack.c.h.b16 %v2457
  %v2523 = vunpack.c.l.b16 %v2458
  %v2524 = vunpack.c.h.b16 %v2458
  %v2525 = vunpack.c.l.b16 %v2459
  %v2526 = vunpack.c.h.b16 %v2459
  %v2527 = vunpack.c.l.b16 %v2460
  %v2528 = vunpack.c.h.b16 %v2460
  %v2529 = vunpack.c.l.b16 %v2461
  %v2530 = vunpack.c.h.b16 %v2461
  %v2531 = vunpack.c.l.b16 %v2462
  %v2532 = vunpack.c.h.b16 %v2462
  %v2533 = vunpack.c.l.b16 %v2463
  %v2534 = vunpack.c.h.b16 %v2463
  %v2535 = vunpack.c.l.b16 %v2464
  %v2536 = vunpack.c.h.b16 %v2464
  %v2537 = vunpack.c.l.b16 %v2465
  %v2538 = vunpack.c.h.b16 %v2465
  %v2539 = vunpack.c.l.b16 %v2466
  %v2540 = vunpack.c.h.b16 %v2466
  %v2541 = vunpack.c.l.b16 %v2467
  %v2542 = vunpack.c.h.b16 %v2467
  %v2543 = vunpack.c.l.b16 %v2468
  %v2544 = vunpack.c.h.b16 %v2468
  %v2545 = vunpack.c.l.b16 %v2469
  %v2546 = vunpack.c.h.b16 %v2469
  %v2547 = vunpack.c.l.b16 %v2470
  %v2548 = vunpack.c.h.b16 %v2470
  %v2549 = vunpack.c.l.b16 %v2471
  %v2550 = vunpack.c.h.b16 %v2471
  %v2551 = vunpack.c.l.b16 %v2472
  %v2552 = vunpack.c.h.b16 %v2472
  %v2553 = vunpack.c.l.b16 %v2473
  %v2554 = vunpack.c.h.b16 %v2473
  %v2555 = vunpack.c.l.b16 %v2474
  %v2556 = vunpack.c.h.b16 %v2474
  %v2557 = vunpack.c.l.b16 %v2475
  %v2558 = vunpack.c.h.b16 %v2475
  %v2559 = vunpack.c.l.b16 %v2476
  %v2560 = vunpack.c.h.b16 %v2476
  %v2561 = vunpack.c.l.b16 %v2477
  %v2562 = vunpack.c.h.b16 %v2477
  %v2563 = vunpack.c.l.b16 %v2478
  %v2564 = vunpack.c.h.b16 %v2478
  %v2565 = vunpack.c.l.b16 %v2479
  %v2566 = vunpack.c.h.b16 %v2479
  %v2567 = vunpack.c.l.b16 %v2480
  %v2568 = vunpack.c.h.b16 %v2480
  %v2569 = vunpack.c.l.b16 %v2481
  %v2570 = vunpack.c.h.b16 %v2481
  %v2571 = vunpack.c.l.b16 %v2482
  %v2572 = vunpack.c.h.b16 %v2482
  %v2573 = vunpack.c.l.b16 %v2483
  %v2574 = vunpack.c.h.b16 %v2483
  %v2575 = vunpack.c.l.b16 %v2484
  %v2576 = vunpack.c.h.b16 %v2484
  %v2577 = vunpack.c.l.b16 %v2485
  %v2578 = vunpack.c.h.b16 %v2485
  %v2579 = vunpack.c.l.b16 %v2486
  %v2580 = vunpack.c.h.b16 %v2486
  %v2581 = vunpack.c.l.b16 %v2487
  %v2582 = vunpack.c.h.b16 %v2487
  %v2583 = vunpack.c.l.b16 %v2488
  %v2584 = vunpack.c.h.b16 %v2488
  %v2585 = vpack.c.b16 %v2525, %v2521
  %v2586 = vpack.c.b16 %v2526, %v2522
  %v2587 = vpack.c.b16 %v2527, %v2523
  %v2588 = vpack.c.b16 %v2528, %v2524
  %v2589 = vpack.c.b16 %v2533, %v2529
  %v2590 = vpack.c.b16 %v2534, %v2530
  %v2591 = vpack.c.b16 %v2535, %v2531
  %v2592 = vpack.c.b16 %v2536, %v2532
  %v2593 = vpack.c.b16 %v2541, %v2537
  %v2594 = vpack.c.b16 %v2542, %v2538
  %v2595 = vpack.c.b16 %v2543, %v2539
  %v2596 = vpack.c.b16 %v2544, %v2540
  %v2597 = vpack.c.b16 %v2549, %v2545
  %v2598 = vpack.c.b16 %v2550, %v2546
  %v2599 = vpack.c.b16 %v2551, %v2547
  %v2600 = vpack.c.b16 %v2552, %v2548
  %v2601 = vpack.c.b16 %v2557, %v2553
  %v2602 = vpack.c.b16 %v2558, %v2554
  %v2603 = vpack.c.b16 %v2559, %v2555
  %v2604 = vpack.c.b16 %v2560, %v2556
  %v2605 = vpack.c.b16 %v2565, %v2561
  %v2606 = vpack.c.b16 %v2566, %v2562
  %v2607 = vpack.c.b16 %v2567, %v2563
  %v2608 = vpack.c.b16 %v2568, %v2564
  %v2609 = vpack.c.b16 %v2573, %v2569
  %v2610 = vpack.c.b16 %v2574, %v2570
  %v2611 = vpack.c.b16 %v2575, %v2571
  %v2612 = vpack.c.b16 %v2576, %v2572
  %v2613 = vpack.c.b16 %v2581, %v2577
  %v2614 = vpack.c.b16 %v2582, %v2578
  %v2615 = vpack.c.b16 %v2583, %v2579
  %v2616 = vpack.c.b16 %v2584, %v2580
  %2649 = vmatpush.bf16.msra.mxu0 %v1411
  %2650 = vmatpush.bf16.msra.mxu0 %v1410
  %2651 = vmatpush.bf16.msra.mxu0 %v1409
  %2652 = vmatpush.bf16.msra.mxu0 %v1408
  %2653 = vmatpush.bf16.msra.mxu0 %v1407
  %2654 = vmatpush.bf16.msra.mxu0 %v1406
  %2655 = vmatpush.bf16.msra.mxu0 %v1405
  %2656 = vmatpush.bf16.msra.mxu0 %v1404
  %2657 = vmatmul.bf16.gmra.mxu0 %v2585
  %v2658 = vpop.f32.mrf.mxu0
  %v2659 = vadd.f32 0.0, %v2658
  %v2660 = vpop.f32.mrf.mxu0
  %v2661 = vadd.f32 0.0, %v2660
  %2662 = vmatmul.bf16.gmra.mxu0 %v2589
  %v2663 = vpop.f32.mrf.mxu0
  %v2664 = vadd.f32 0.0, %v2663
  %v2665 = vpop.f32.mrf.mxu0
  %v2666 = vadd.f32 0.0, %v2665
  %2667 = vmatmul.bf16.gmra.mxu0 %v2593
  %v2668 = vpop.f32.mrf.mxu0
  %v2669 = vadd.f32 0.0, %v2668
  %v2670 = vpop.f32.mrf.mxu0
  %v2671 = vadd.f32 0.0, %v2670
  %2672 = vmatmul.bf16.gmra.mxu0 %v2597
  %v2673 = vpop.f32.mrf.mxu0
  %v2674 = vadd.f32 0.0, %v2673
  %v2675 = vpop.f32.mrf.mxu0
  %v2676 = vadd.f32 0.0, %v2675
  %2677 = vmatmul.bf16.gmra.mxu0 %v2601
  %v2678 = vpop.f32.mrf.mxu0
  %v2679 = vadd.f32 0.0, %v2678
  %v2680 = vpop.f32.mrf.mxu0
  %v2681 = vadd.f32 0.0, %v2680
  %2682 = vmatmul.bf16.gmra.mxu0 %v2605
  %v2683 = vpop.f32.mrf.mxu0
  %v2684 = vadd.f32 0.0, %v2683
  %v2685 = vpop.f32.mrf.mxu0
  %v2686 = vadd.f32 0.0, %v2685
  %2687 = vmatmul.bf16.gmra.mxu0 %v2609
  %v2688 = vpop.f32.mrf.mxu0
  %v2689 = vadd.f32 0.0, %v2688
  %v2690 = vpop.f32.mrf.mxu0
  %v2691 = vadd.f32 0.0, %v2690
  %2692 = vmatmul.bf16.gmra.mxu0 %v2613
  %v2693 = vpop.f32.mrf.mxu0
  %v2694 = vadd.f32 0.0, %v2693
  %v2695 = vpop.f32.mrf.mxu0
  %v2696 = vadd.f32 0.0, %v2695
  %2697 = vdwg.mxu0
  %2698 = vmatpush.bf16.msra.mxu0 %v1419
  %2699 = vmatpush.bf16.msra.mxu0 %v1418
  %2700 = vmatpush.bf16.msra.mxu0 %v1417
  %2701 = vmatpush.bf16.msra.mxu0 %v1416
  %2702 = vmatpush.bf16.msra.mxu0 %v1415
  %2703 = vmatpush.bf16.msra.mxu0 %v1414
  %2704 = vmatpush.bf16.msra.mxu0 %v1413
  %2705 = vmatpush.bf16.msra.mxu0 %v1412
  %2706 = vmatmul.bf16.gmra.mxu0 %v2586
  %v2707 = vpop.f32.mrf.mxu0
  %v2708 = vadd.f32 %v2659, %v2707
  %v2709 = vpop.f32.mrf.mxu0
  %v2710 = vadd.f32 %v2661, %v2709
  %2711 = vmatmul.bf16.gmra.mxu0 %v2590
  %v2712 = vpop.f32.mrf.mxu0
  %v2713 = vadd.f32 %v2664, %v2712
  %v2714 = vpop.f32.mrf.mxu0
  %v2715 = vadd.f32 %v2666, %v2714
  %2716 = vmatmul.bf16.gmra.mxu0 %v2594
  %v2717 = vpop.f32.mrf.mxu0
  %v2718 = vadd.f32 %v2669, %v2717
  %v2719 = vpop.f32.mrf.mxu0
  %v2720 = vadd.f32 %v2671, %v2719
  %2721 = vmatmul.bf16.gmra.mxu0 %v2598
  %v2722 = vpop.f32.mrf.mxu0
  %v2723 = vadd.f32 %v2674, %v2722
  %v2724 = vpop.f32.mrf.mxu0
  %v2725 = vadd.f32 %v2676, %v2724
  %2726 = vmatmul.bf16.gmra.mxu0 %v2602
  %v2727 = vpop.f32.mrf.mxu0
  %v2728 = vadd.f32 %v2679, %v2727
  %v2729 = vpop.f32.mrf.mxu0
  %v2730 = vadd.f32 %v2681, %v2729
  %2731 = vmatmul.bf16.gmra.mxu0 %v2606
  %v2732 = vpop.f32.mrf.mxu0
  %v2733 = vadd.f32 %v2684, %v2732
  %v2734 = vpop.f32.mrf.mxu0
  %v2735 = vadd.f32 %v2686, %v2734
  %2736 = vmatmul.bf16.gmra.mxu0 %v2610
  %v2737 = vpop.f32.mrf.mxu0
  %v2738 = vadd.f32 %v2689, %v2737
  %v2739 = vpop.f32.mrf.mxu0
  %v2740 = vadd.f32 %v2691, %v2739
  %2741 = vmatmul.bf16.gmra.mxu0 %v2614
  %v2742 = vpop.f32.mrf.mxu0
  %v2743 = vadd.f32 %v2694, %v2742
  %v2744 = vpop.f32.mrf.mxu0
  %v2745 = vadd.f32 %v2696, %v2744
  %2746 = vdwg.mxu0
  %2747 = vmatpush.bf16.msra.mxu0 %v1427
  %2748 = vmatpush.bf16.msra.mxu0 %v1426
  %2749 = vmatpush.bf16.msra.mxu0 %v1425
  %2750 = vmatpush.bf16.msra.mxu0 %v1424
  %2751 = vmatpush.bf16.msra.mxu0 %v1423
  %2752 = vmatpush.bf16.msra.mxu0 %v1422
  %2753 = vmatpush.bf16.msra.mxu0 %v1421
  %2754 = vmatpush.bf16.msra.mxu0 %v1420
  %2755 = vmatmul.bf16.gmra.mxu0 %v2587
  %v2756 = vpop.f32.mrf.mxu0
  %v2757 = vadd.f32 %v2708, %v2756
  %v2758 = vpop.f32.mrf.mxu0
  %v2759 = vadd.f32 %v2710, %v2758
  %2760 = vmatmul.bf16.gmra.mxu0 %v2591
  %v2761 = vpop.f32.mrf.mxu0
  %v2762 = vadd.f32 %v2713, %v2761
  %v2763 = vpop.f32.mrf.mxu0
  %v2764 = vadd.f32 %v2715, %v2763
  %2765 = vmatmul.bf16.gmra.mxu0 %v2595
  %v2766 = vpop.f32.mrf.mxu0
  %v2767 = vadd.f32 %v2718, %v2766
  %v2768 = vpop.f32.mrf.mxu0
  %v2769 = vadd.f32 %v2720, %v2768
  %2770 = vmatmul.bf16.gmra.mxu0 %v2599
  %v2771 = vpop.f32.mrf.mxu0
  %v2772 = vadd.f32 %v2723, %v2771
  %v2773 = vpop.f32.mrf.mxu0
  %v2774 = vadd.f32 %v2725, %v2773
  %2775 = vmatmul.bf16.gmra.mxu0 %v2603
  %v2776 = vpop.f32.mrf.mxu0
  %v2777 = vadd.f32 %v2728, %v2776
  %v2778 = vpop.f32.mrf.mxu0
  %v2779 = vadd.f32 %v2730, %v2778
  %2780 = vmatmul.bf16.gmra.mxu0 %v2607
  %v2781 = vpop.f32.mrf.mxu0
  %v2782 = vadd.f32 %v2733, %v2781
  %v2783 = vpop.f32.mrf.mxu0
  %v2784 = vadd.f32 %v2735, %v2783
  %2785 = vmatmul.bf16.gmra.mxu0 %v2611
  %v2786 = vpop.f32.mrf.mxu0
  %v2787 = vadd.f32 %v2738, %v2786
  %v2788 = vpop.f32.mrf.mxu0
  %v2789 = vadd.f32 %v2740, %v2788
  %2790 = vmatmul.bf16.gmra.mxu0 %v2615
  %v2791 = vpop.f32.mrf.mxu0
  %v2792 = vadd.f32 %v2743, %v2791
  %v2793 = vpop.f32.mrf.mxu0
  %v2794 = vadd.f32 %v2745, %v2793
  %2795 = vdwg.mxu0
  %2796 = vmatpush.bf16.msra.mxu0 %v1435
  %2797 = vmatpush.bf16.msra.mxu0 %v1434
  %2798 = vmatpush.bf16.msra.mxu0 %v1433
  %2799 = vmatpush.bf16.msra.mxu0 %v1432
  %2800 = vmatpush.bf16.msra.mxu0 %v1431
  %2801 = vmatpush.bf16.msra.mxu0 %v1430
  %2802 = vmatpush.bf16.msra.mxu0 %v1429
  %2803 = vmatpush.bf16.msra.mxu0 %v1428
  %2804 = vmatmul.bf16.gmra.mxu0 %v2588
  %v2805 = vpop.f32.mrf.mxu0
  %v2806 = vadd.f32 %v2757, %v2805
  %v2807 = vpop.f32.mrf.mxu0
  %v2808 = vadd.f32 %v2759, %v2807
  %2809 = vmatmul.bf16.gmra.mxu0 %v2592
  %v2810 = vpop.f32.mrf.mxu0
  %v2811 = vadd.f32 %v2762, %v2810
  %v2812 = vpop.f32.mrf.mxu0
  %v2813 = vadd.f32 %v2764, %v2812
  %2814 = vmatmul.bf16.gmra.mxu0 %v2596
  %v2815 = vpop.f32.mrf.mxu0
  %v2816 = vadd.f32 %v2767, %v2815
  %v2817 = vpop.f32.mrf.mxu0
  %v2818 = vadd.f32 %v2769, %v2817
  %2819 = vmatmul.bf16.gmra.mxu0 %v2600
  %v2820 = vpop.f32.mrf.mxu0
  %v2821 = vadd.f32 %v2772, %v2820
  %v2822 = vpop.f32.mrf.mxu0
  %v2823 = vadd.f32 %v2774, %v2822
  %2824 = vmatmul.bf16.gmra.mxu0 %v2604
  %v2825 = vpop.f32.mrf.mxu0
  %v2826 = vadd.f32 %v2777, %v2825
  %v2827 = vpop.f32.mrf.mxu0
  %v2828 = vadd.f32 %v2779, %v2827
  %2829 = vmatmul.bf16.gmra.mxu0 %v2608
  %v2830 = vpop.f32.mrf.mxu0
  %v2831 = vadd.f32 %v2782, %v2830
  %v2832 = vpop.f32.mrf.mxu0
  %v2833 = vadd.f32 %v2784, %v2832
  %2834 = vmatmul.bf16.gmra.mxu0 %v2612
  %v2835 = vpop.f32.mrf.mxu0
  %v2836 = vadd.f32 %v2787, %v2835
  %v2837 = vpop.f32.mrf.mxu0
  %v2838 = vadd.f32 %v2789, %v2837
  %2839 = vmatmul.bf16.gmra.mxu0 %v2616
  %v2840 = vpop.f32.mrf.mxu0
  %v2841 = vadd.f32 %v2792, %v2840
  %v2842 = vpop.f32.mrf.mxu0
  %v2843 = vadd.f32 %v2794, %v2842
  %2844 = vdwg.mxu0
  %v2845 = vpack.c.bf16 %v2808, %v2806
  %v2846 = vpack.c.bf16 %v2813, %v2811
  %v2847 = vpack.c.bf16 %v2818, %v2816
  %v2848 = vpack.c.bf16 %v2823, %v2821
  %v2849 = vpack.c.bf16 %v2828, %v2826
  %v2850 = vpack.c.bf16 %v2833, %v2831
  %v2851 = vpack.c.bf16 %v2838, %v2836
  %v2852 = vpack.c.bf16 %v2843, %v2841
  %s2853 = scalar_lea.vmem %s5, 128
  %v2854 = vld [vmem:[%s2853] sm:$0xf]
  %v2855 = vld [vmem:[%s2853 + $0x4] sm:$0xf]
  %v2856 = vld [vmem:[%s2853 + $0x8] sm:$0xf]
  %v2857 = vld [vmem:[%s2853 + $0xc] sm:$0xf]
  %v2858 = vld [vmem:[%s2853 + $0x10] sm:$0xf]
  %v2859 = vld [vmem:[%s2853 + $0x14] sm:$0xf]
  %v2860 = vld [vmem:[%s2853 + $0x18] sm:$0xf]
  %v2861 = vld [vmem:[%s2853 + $0x1c] sm:$0xf]
  %v2862 = vld [vmem:[%s2853 + $0x20] sm:$0xf]
  %v2863 = vld [vmem:[%s2853 + $0x24] sm:$0xf]
  %v2864 = vld [vmem:[%s2853 + $0x28] sm:$0xf]
  %v2865 = vld [vmem:[%s2853 + $0x2c] sm:$0xf]
  %v2866 = vld [vmem:[%s2853 + $0x30] sm:$0xf]
  %v2867 = vld [vmem:[%s2853 + $0x34] sm:$0xf]
  %v2868 = vld [vmem:[%s2853 + $0x38] sm:$0xf]
  %v2869 = vld [vmem:[%s2853 + $0x3c] sm:$0xf]
  %v2886 = vunpack.c.l.b16 %v2854
  %v2887 = vunpack.c.l.b16 %v2855
  %v2888 = vunpack.c.l.b16 %v2856
  %v2889 = vunpack.c.l.b16 %v2857
  %v2890 = vunpack.c.l.b16 %v2858
  %v2891 = vunpack.c.l.b16 %v2859
  %v2892 = vunpack.c.l.b16 %v2860
  %v2893 = vunpack.c.l.b16 %v2861
  %v2894 = vunpack.c.l.b16 %v2862
  %v2895 = vunpack.c.l.b16 %v2863
  %v2896 = vunpack.c.l.b16 %v2864
  %v2897 = vunpack.c.l.b16 %v2865
  %v2898 = vunpack.c.l.b16 %v2866
  %v2899 = vunpack.c.l.b16 %v2867
  %v2900 = vunpack.c.l.b16 %v2868
  %v2901 = vunpack.c.l.b16 %v2869
  %v2902 = vpack.c.b16 %v2887, %v2886
  %v2903 = vpack.c.b16 %v2889, %v2888
  %v2904 = vpack.c.b16 %v2891, %v2890
  %v2905 = vpack.c.b16 %v2893, %v2892
  %v2906 = vpack.c.b16 %v2895, %v2894
  %v2907 = vpack.c.b16 %v2897, %v2896
  %v2908 = vpack.c.b16 %v2899, %v2898
  %v2909 = vpack.c.b16 %v2901, %v2900
  %2918 = vmatpush.bf16.msra.mxu0 %v2909
  %2919 = vmatpush.bf16.msra.mxu0 %v2908
  %2920 = vmatpush.bf16.msra.mxu0 %v2907
  %2921 = vmatpush.bf16.msra.mxu0 %v2906
  %2922 = vmatpush.bf16.msra.mxu0 %v2905
  %2923 = vmatpush.bf16.msra.mxu0 %v2904
  %2924 = vmatpush.bf16.msra.mxu0 %v2903
  %2925 = vmatpush.bf16.msra.mxu0 %v2902
  %2926 = vmatmul.bf16.gmra.mxu0 %v2845
  %v2927 = vpop.f32.mrf.mxu0
  %v2928 = vadd.f32 0.0, %v2927
  %v2929 = vpop.f32.mrf.mxu0
  %v2930 = vadd.f32 0.0, %v2929
  %2931 = vmatmul.bf16.gmra.mxu0 %v2846
  %v2932 = vpop.f32.mrf.mxu0
  %v2933 = vadd.f32 0.0, %v2932
  %v2934 = vpop.f32.mrf.mxu0
  %v2935 = vadd.f32 0.0, %v2934
  %2936 = vmatmul.bf16.gmra.mxu0 %v2847
  %v2937 = vpop.f32.mrf.mxu0
  %v2938 = vadd.f32 0.0, %v2937
  %v2939 = vpop.f32.mrf.mxu0
  %v2940 = vadd.f32 0.0, %v2939
  %2941 = vmatmul.bf16.gmra.mxu0 %v2848
  %v2942 = vpop.f32.mrf.mxu0
  %v2943 = vadd.f32 0.0, %v2942
  %v2944 = vpop.f32.mrf.mxu0
  %v2945 = vadd.f32 0.0, %v2944
  %2946 = vmatmul.bf16.gmra.mxu0 %v2849
  %v2947 = vpop.f32.mrf.mxu0
  %v2948 = vadd.f32 0.0, %v2947
  %v2949 = vpop.f32.mrf.mxu0
  %v2950 = vadd.f32 0.0, %v2949
  %2951 = vmatmul.bf16.gmra.mxu0 %v2850
  %v2952 = vpop.f32.mrf.mxu0
  %v2953 = vadd.f32 0.0, %v2952
  %v2954 = vpop.f32.mrf.mxu0
  %v2955 = vadd.f32 0.0, %v2954
  %2956 = vmatmul.bf16.gmra.mxu0 %v2851
  %v2957 = vpop.f32.mrf.mxu0
  %v2958 = vadd.f32 0.0, %v2957
  %v2959 = vpop.f32.mrf.mxu0
  %v2960 = vadd.f32 0.0, %v2959
  %2961 = vmatmul.bf16.gmra.mxu0 %v2852
  %v2962 = vpop.f32.mrf.mxu0
  %v2963 = vadd.f32 0.0, %v2962
  %v2964 = vpop.f32.mrf.mxu0
  %v2965 = vadd.f32 0.0, %v2964
  %2966 = vdwg.mxu0
  %v2967 = vadd.f32 %v2417, %v2928
  %v2968 = vadd.f32 %v2419, %v2930
  %v2969 = vadd.f32 %v2422, %v2933
  %v2970 = vadd.f32 %v2424, %v2935
  %v2971 = vadd.f32 %v2427, %v2938
  %v2972 = vadd.f32 %v2429, %v2940
  %v2973 = vadd.f32 %v2432, %v2943
  %v2974 = vadd.f32 %v2434, %v2945
  %v2975 = vadd.f32 %v2437, %v2948
  %v2976 = vadd.f32 %v2439, %v2950
  %v2977 = vadd.f32 %v2442, %v2953
  %v2978 = vadd.f32 %v2444, %v2955
  %v2979 = vadd.f32 %v2447, %v2958
  %v2980 = vadd.f32 %v2449, %v2960
  %v2981 = vadd.f32 %v2452, %v2963
  %v2982 = vadd.f32 %v2454, %v2965
  %s2983 = scalar_lea.vmem %s4, 768
  %v2984 = vld [vmem:[%s2983] sm:$0xff]
  %v2985 = vld [vmem:[%s2983 + $0x8] sm:$0xff]
  %v2986 = vld [vmem:[%s2983 + $0x10] sm:$0xff]
  %v2987 = vld [vmem:[%s2983 + $0x18] sm:$0xff]
  %v2988 = vld [vmem:[%s2983 + $0x20] sm:$0xff]
  %v2989 = vld [vmem:[%s2983 + $0x28] sm:$0xff]
  %v2990 = vld [vmem:[%s2983 + $0x30] sm:$0xff]
  %v2991 = vld [vmem:[%s2983 + $0x38] sm:$0xff]
  %v2992 = vld [vmem:[%s2983 + $0x40] sm:$0xff]
  %v2993 = vld [vmem:[%s2983 + $0x48] sm:$0xff]
  %v2994 = vld [vmem:[%s2983 + $0x50] sm:$0xff]
  %v2995 = vld [vmem:[%s2983 + $0x58] sm:$0xff]
  %v2996 = vld [vmem:[%s2983 + $0x60] sm:$0xff]
  %v2997 = vld [vmem:[%s2983 + $0x68] sm:$0xff]
  %v2998 = vld [vmem:[%s2983 + $0x70] sm:$0xff]
  %v2999 = vld [vmem:[%s2983 + $0x78] sm:$0xff]
  %v3000 = vld [vmem:[%s2983 + $0x80] sm:$0xff]
  %v3001 = vld [vmem:[%s2983 + $0x88] sm:$0xff]
  %v3002 = vld [vmem:[%s2983 + $0x90] sm:$0xff]
  %v3003 = vld [vmem:[%s2983 + $0x98] sm:$0xff]
  %v3004 = vld [vmem:[%s2983 + $0xa0] sm:$0xff]
  %v3005 = vld [vmem:[%s2983 + $0xa8] sm:$0xff]
  %v3006 = vld [vmem:[%s2983 + $0xb0] sm:$0xff]
  %v3007 = vld [vmem:[%s2983 + $0xb8] sm:$0xff]
  %v3008 = vld [vmem:[%s2983 + $0xc0] sm:$0xff]
  %v3009 = vld [vmem:[%s2983 + $0xc8] sm:$0xff]
  %v3010 = vld [vmem:[%s2983 + $0xd0] sm:$0xff]
  %v3011 = vld [vmem:[%s2983 + $0xd8] sm:$0xff]
  %v3012 = vld [vmem:[%s2983 + $0xe0] sm:$0xff]
  %v3013 = vld [vmem:[%s2983 + $0xe8] sm:$0xff]
  %v3014 = vld [vmem:[%s2983 + $0xf0] sm:$0xff]
  %v3015 = vld [vmem:[%s2983 + $0xf8] sm:$0xff]
  %v3048 = vunpack.c.l.b16 %v2984
  %v3049 = vunpack.c.h.b16 %v2984
  %v3050 = vunpack.c.l.b16 %v2985
  %v3051 = vunpack.c.h.b16 %v2985
  %v3052 = vunpack.c.l.b16 %v2986
  %v3053 = vunpack.c.h.b16 %v2986
  %v3054 = vunpack.c.l.b16 %v2987
  %v3055 = vunpack.c.h.b16 %v2987
  %v3056 = vunpack.c.l.b16 %v2988
  %v3057 = vunpack.c.h.b16 %v2988
  %v3058 = vunpack.c.l.b16 %v2989
  %v3059 = vunpack.c.h.b16 %v2989
  %v3060 = vunpack.c.l.b16 %v2990
  %v3061 = vunpack.c.h.b16 %v2990
  %v3062 = vunpack.c.l.b16 %v2991
  %v3063 = vunpack.c.h.b16 %v2991
  %v3064 = vunpack.c.l.b16 %v2992
  %v3065 = vunpack.c.h.b16 %v2992
  %v3066 = vunpack.c.l.b16 %v2993
  %v3067 = vunpack.c.h.b16 %v2993
  %v3068 = vunpack.c.l.b16 %v2994
  %v3069 = vunpack.c.h.b16 %v2994
  %v3070 = vunpack.c.l.b16 %v2995
  %v3071 = vunpack.c.h.b16 %v2995
  %v3072 = vunpack.c.l.b16 %v2996
  %v3073 = vunpack.c.h.b16 %v2996
  %v3074 = vunpack.c.l.b16 %v2997
  %v3075 = vunpack.c.h.b16 %v2997
  %v3076 = vunpack.c.l.b16 %v2998
  %v3077 = vunpack.c.h.b16 %v2998
  %v3078 = vunpack.c.l.b16 %v2999
  %v3079 = vunpack.c.h.b16 %v2999
  %v3080 = vunpack.c.l.b16 %v3000
  %v3081 = vunpack.c.h.b16 %v3000
  %v3082 = vunpack.c.l.b16 %v3001
  %v3083 = vunpack.c.h.b16 %v3001
  %v3084 = vunpack.c.l.b16 %v3002
  %v3085 = vunpack.c.h.b16 %v3002
  %v3086 = vunpack.c.l.b16 %v3003
  %v3087 = vunpack.c.h.b16 %v3003
  %v3088 = vunpack.c.l.b16 %v3004
  %v3089 = vunpack.c.h.b16 %v3004
  %v3090 = vunpack.c.l.b16 %v3005
  %v3091 = vunpack.c.h.b16 %v3005
  %v3092 = vunpack.c.l.b16 %v3006
  %v3093 = vunpack.c.h.b16 %v3006
  %v3094 = vunpack.c.l.b16 %v3007
  %v3095 = vunpack.c.h.b16 %v3007
  %v3096 = vunpack.c.l.b16 %v3008
  %v3097 = vunpack.c.h.b16 %v3008
  %v3098 = vunpack.c.l.b16 %v3009
  %v3099 = vunpack.c.h.b16 %v3009
  %v3100 = vunpack.c.l.b16 %v3010
  %v3101 = vunpack.c.h.b16 %v3010
  %v3102 = vunpack.c.l.b16 %v3011
  %v3103 = vunpack.c.h.b16 %v3011
  %v3104 = vunpack.c.l.b16 %v3012
  %v3105 = vunpack.c.h.b16 %v3012
  %v3106 = vunpack.c.l.b16 %v3013
  %v3107 = vunpack.c.h.b16 %v3013
  %v3108 = vunpack.c.l.b16 %v3014
  %v3109 = vunpack.c.h.b16 %v3014
  %v3110 = vunpack.c.l.b16 %v3015
  %v3111 = vunpack.c.h.b16 %v3015
  %v3112 = vpack.c.b16 %v3052, %v3048
  %v3113 = vpack.c.b16 %v3053, %v3049
  %v3114 = vpack.c.b16 %v3054, %v3050
  %v3115 = vpack.c.b16 %v3055, %v3051
  %v3116 = vpack.c.b16 %v3060, %v3056
  %v3117 = vpack.c.b16 %v3061, %v3057
  %v3118 = vpack.c.b16 %v3062, %v3058
  %v3119 = vpack.c.b16 %v3063, %v3059
  %v3120 = vpack.c.b16 %v3068, %v3064
  %v3121 = vpack.c.b16 %v3069, %v3065
  %v3122 = vpack.c.b16 %v3070, %v3066
  %v3123 = vpack.c.b16 %v3071, %v3067
  %v3124 = vpack.c.b16 %v3076, %v3072
  %v3125 = vpack.c.b16 %v3077, %v3073
  %v3126 = vpack.c.b16 %v3078, %v3074
  %v3127 = vpack.c.b16 %v3079, %v3075
  %v3128 = vpack.c.b16 %v3084, %v3080
  %v3129 = vpack.c.b16 %v3085, %v3081
  %v3130 = vpack.c.b16 %v3086, %v3082
  %v3131 = vpack.c.b16 %v3087, %v3083
  %v3132 = vpack.c.b16 %v3092, %v3088
  %v3133 = vpack.c.b16 %v3093, %v3089
  %v3134 = vpack.c.b16 %v3094, %v3090
  %v3135 = vpack.c.b16 %v3095, %v3091
  %v3136 = vpack.c.b16 %v3100, %v3096
  %v3137 = vpack.c.b16 %v3101, %v3097
  %v3138 = vpack.c.b16 %v3102, %v3098
  %v3139 = vpack.c.b16 %v3103, %v3099
  %v3140 = vpack.c.b16 %v3108, %v3104
  %v3141 = vpack.c.b16 %v3109, %v3105
  %v3142 = vpack.c.b16 %v3110, %v3106
  %v3143 = vpack.c.b16 %v3111, %v3107
  %3176 = vmatpush.bf16.msra.mxu0 %v1411
  %3177 = vmatpush.bf16.msra.mxu0 %v1410
  %3178 = vmatpush.bf16.msra.mxu0 %v1409
  %3179 = vmatpush.bf16.msra.mxu0 %v1408
  %3180 = vmatpush.bf16.msra.mxu0 %v1407
  %3181 = vmatpush.bf16.msra.mxu0 %v1406
  %3182 = vmatpush.bf16.msra.mxu0 %v1405
  %3183 = vmatpush.bf16.msra.mxu0 %v1404
  %3184 = vmatmul.bf16.gmra.mxu0 %v3112
  %v3185 = vpop.f32.mrf.mxu0
  %v3186 = vadd.f32 0.0, %v3185
  %v3187 = vpop.f32.mrf.mxu0
  %v3188 = vadd.f32 0.0, %v3187
  %3189 = vmatmul.bf16.gmra.mxu0 %v3116
  %v3190 = vpop.f32.mrf.mxu0
  %v3191 = vadd.f32 0.0, %v3190
  %v3192 = vpop.f32.mrf.mxu0
  %v3193 = vadd.f32 0.0, %v3192
  %3194 = vmatmul.bf16.gmra.mxu0 %v3120
  %v3195 = vpop.f32.mrf.mxu0
  %v3196 = vadd.f32 0.0, %v3195
  %v3197 = vpop.f32.mrf.mxu0
  %v3198 = vadd.f32 0.0, %v3197
  %3199 = vmatmul.bf16.gmra.mxu0 %v3124
  %v3200 = vpop.f32.mrf.mxu0
  %v3201 = vadd.f32 0.0, %v3200
  %v3202 = vpop.f32.mrf.mxu0
  %v3203 = vadd.f32 0.0, %v3202
  %3204 = vmatmul.bf16.gmra.mxu0 %v3128
  %v3205 = vpop.f32.mrf.mxu0
  %v3206 = vadd.f32 0.0, %v3205
  %v3207 = vpop.f32.mrf.mxu0
  %v3208 = vadd.f32 0.0, %v3207
  %3209 = vmatmul.bf16.gmra.mxu0 %v3132
  %v3210 = vpop.f32.mrf.mxu0
  %v3211 = vadd.f32 0.0, %v3210
  %v3212 = vpop.f32.mrf.mxu0
  %v3213 = vadd.f32 0.0, %v3212
  %3214 = vmatmul.bf16.gmra.mxu0 %v3136
  %v3215 = vpop.f32.mrf.mxu0
  %v3216 = vadd.f32 0.0, %v3215
  %v3217 = vpop.f32.mrf.mxu0
  %v3218 = vadd.f32 0.0, %v3217
  %3219 = vmatmul.bf16.gmra.mxu0 %v3140
  %v3220 = vpop.f32.mrf.mxu0
  %v3221 = vadd.f32 0.0, %v3220
  %v3222 = vpop.f32.mrf.mxu0
  %v3223 = vadd.f32 0.0, %v3222
  %3224 = vdwg.mxu0
  %3225 = vmatpush.bf16.msra.mxu0 %v1419
  %3226 = vmatpush.bf16.msra.mxu0 %v1418
  %3227 = vmatpush.bf16.msra.mxu0 %v1417
  %3228 = vmatpush.bf16.msra.mxu0 %v1416
  %3229 = vmatpush.bf16.msra.mxu0 %v1415
  %3230 = vmatpush.bf16.msra.mxu0 %v1414
  %3231 = vmatpush.bf16.msra.mxu0 %v1413
  %3232 = vmatpush.bf16.msra.mxu0 %v1412
  %3233 = vmatmul.bf16.gmra.mxu0 %v3113
  %v3234 = vpop.f32.mrf.mxu0
  %v3235 = vadd.f32 %v3186, %v3234
  %v3236 = vpop.f32.mrf.mxu0
  %v3237 = vadd.f32 %v3188, %v3236
  %3238 = vmatmul.bf16.gmra.mxu0 %v3117
  %v3239 = vpop.f32.mrf.mxu0
  %v3240 = vadd.f32 %v3191, %v3239
  %v3241 = vpop.f32.mrf.mxu0
  %v3242 = vadd.f32 %v3193, %v3241
  %3243 = vmatmul.bf16.gmra.mxu0 %v3121
  %v3244 = vpop.f32.mrf.mxu0
  %v3245 = vadd.f32 %v3196, %v3244
  %v3246 = vpop.f32.mrf.mxu0
  %v3247 = vadd.f32 %v3198, %v3246
  %3248 = vmatmul.bf16.gmra.mxu0 %v3125
  %v3249 = vpop.f32.mrf.mxu0
  %v3250 = vadd.f32 %v3201, %v3249
  %v3251 = vpop.f32.mrf.mxu0
  %v3252 = vadd.f32 %v3203, %v3251
  %3253 = vmatmul.bf16.gmra.mxu0 %v3129
  %v3254 = vpop.f32.mrf.mxu0
  %v3255 = vadd.f32 %v3206, %v3254
  %v3256 = vpop.f32.mrf.mxu0
  %v3257 = vadd.f32 %v3208, %v3256
  %3258 = vmatmul.bf16.gmra.mxu0 %v3133
  %v3259 = vpop.f32.mrf.mxu0
  %v3260 = vadd.f32 %v3211, %v3259
  %v3261 = vpop.f32.mrf.mxu0
  %v3262 = vadd.f32 %v3213, %v3261
  %3263 = vmatmul.bf16.gmra.mxu0 %v3137
  %v3264 = vpop.f32.mrf.mxu0
  %v3265 = vadd.f32 %v3216, %v3264
  %v3266 = vpop.f32.mrf.mxu0
  %v3267 = vadd.f32 %v3218, %v3266
  %3268 = vmatmul.bf16.gmra.mxu0 %v3141
  %v3269 = vpop.f32.mrf.mxu0
  %v3270 = vadd.f32 %v3221, %v3269
  %v3271 = vpop.f32.mrf.mxu0
  %v3272 = vadd.f32 %v3223, %v3271
  %3273 = vdwg.mxu0
  %3274 = vmatpush.bf16.msra.mxu0 %v1427
  %3275 = vmatpush.bf16.msra.mxu0 %v1426
  %3276 = vmatpush.bf16.msra.mxu0 %v1425
  %3277 = vmatpush.bf16.msra.mxu0 %v1424
  %3278 = vmatpush.bf16.msra.mxu0 %v1423
  %3279 = vmatpush.bf16.msra.mxu0 %v1422
  %3280 = vmatpush.bf16.msra.mxu0 %v1421
  %3281 = vmatpush.bf16.msra.mxu0 %v1420
  %3282 = vmatmul.bf16.gmra.mxu0 %v3114
  %v3283 = vpop.f32.mrf.mxu0
  %v3284 = vadd.f32 %v3235, %v3283
  %v3285 = vpop.f32.mrf.mxu0
  %v3286 = vadd.f32 %v3237, %v3285
  %3287 = vmatmul.bf16.gmra.mxu0 %v3118
  %v3288 = vpop.f32.mrf.mxu0
  %v3289 = vadd.f32 %v3240, %v3288
  %v3290 = vpop.f32.mrf.mxu0
  %v3291 = vadd.f32 %v3242, %v3290
  %3292 = vmatmul.bf16.gmra.mxu0 %v3122
  %v3293 = vpop.f32.mrf.mxu0
  %v3294 = vadd.f32 %v3245, %v3293
  %v3295 = vpop.f32.mrf.mxu0
  %v3296 = vadd.f32 %v3247, %v3295
  %3297 = vmatmul.bf16.gmra.mxu0 %v3126
  %v3298 = vpop.f32.mrf.mxu0
  %v3299 = vadd.f32 %v3250, %v3298
  %v3300 = vpop.f32.mrf.mxu0
  %v3301 = vadd.f32 %v3252, %v3300
  %3302 = vmatmul.bf16.gmra.mxu0 %v3130
  %v3303 = vpop.f32.mrf.mxu0
  %v3304 = vadd.f32 %v3255, %v3303
  %v3305 = vpop.f32.mrf.mxu0
  %v3306 = vadd.f32 %v3257, %v3305
  %3307 = vmatmul.bf16.gmra.mxu0 %v3134
  %v3308 = vpop.f32.mrf.mxu0
  %v3309 = vadd.f32 %v3260, %v3308
  %v3310 = vpop.f32.mrf.mxu0
  %v3311 = vadd.f32 %v3262, %v3310
  %3312 = vmatmul.bf16.gmra.mxu0 %v3138
  %v3313 = vpop.f32.mrf.mxu0
  %v3314 = vadd.f32 %v3265, %v3313
  %v3315 = vpop.f32.mrf.mxu0
  %v3316 = vadd.f32 %v3267, %v3315
  %3317 = vmatmul.bf16.gmra.mxu0 %v3142
  %v3318 = vpop.f32.mrf.mxu0
  %v3319 = vadd.f32 %v3270, %v3318
  %v3320 = vpop.f32.mrf.mxu0
  %v3321 = vadd.f32 %v3272, %v3320
  %3322 = vdwg.mxu0
  %3323 = vmatpush.bf16.msra.mxu0 %v1435
  %3324 = vmatpush.bf16.msra.mxu0 %v1434
  %3325 = vmatpush.bf16.msra.mxu0 %v1433
  %3326 = vmatpush.bf16.msra.mxu0 %v1432
  %3327 = vmatpush.bf16.msra.mxu0 %v1431
  %3328 = vmatpush.bf16.msra.mxu0 %v1430
  %3329 = vmatpush.bf16.msra.mxu0 %v1429
  %3330 = vmatpush.bf16.msra.mxu0 %v1428
  %3331 = vmatmul.bf16.gmra.mxu0 %v3115
  %v3332 = vpop.f32.mrf.mxu0
  %v3333 = vadd.f32 %v3284, %v3332
  %v3334 = vpop.f32.mrf.mxu0
  %v3335 = vadd.f32 %v3286, %v3334
  %3336 = vmatmul.bf16.gmra.mxu0 %v3119
  %v3337 = vpop.f32.mrf.mxu0
  %v3338 = vadd.f32 %v3289, %v3337
  %v3339 = vpop.f32.mrf.mxu0
  %v3340 = vadd.f32 %v3291, %v3339
  %3341 = vmatmul.bf16.gmra.mxu0 %v3123
  %v3342 = vpop.f32.mrf.mxu0
  %v3343 = vadd.f32 %v3294, %v3342
  %v3344 = vpop.f32.mrf.mxu0
  %v3345 = vadd.f32 %v3296, %v3344
  %3346 = vmatmul.bf16.gmra.mxu0 %v3127
  %v3347 = vpop.f32.mrf.mxu0
  %v3348 = vadd.f32 %v3299, %v3347
  %v3349 = vpop.f32.mrf.mxu0
  %v3350 = vadd.f32 %v3301, %v3349
  %3351 = vmatmul.bf16.gmra.mxu0 %v3131
  %v3352 = vpop.f32.mrf.mxu0
  %v3353 = vadd.f32 %v3304, %v3352
  %v3354 = vpop.f32.mrf.mxu0
  %v3355 = vadd.f32 %v3306, %v3354
  %3356 = vmatmul.bf16.gmra.mxu0 %v3135
  %v3357 = vpop.f32.mrf.mxu0
  %v3358 = vadd.f32 %v3309, %v3357
  %v3359 = vpop.f32.mrf.mxu0
  %v3360 = vadd.f32 %v3311, %v3359
  %3361 = vmatmul.bf16.gmra.mxu0 %v3139
  %v3362 = vpop.f32.mrf.mxu0
  %v3363 = vadd.f32 %v3314, %v3362
  %v3364 = vpop.f32.mrf.mxu0
  %v3365 = vadd.f32 %v3316, %v3364
  %3366 = vmatmul.bf16.gmra.mxu0 %v3143
  %v3367 = vpop.f32.mrf.mxu0
  %v3368 = vadd.f32 %v3319, %v3367
  %v3369 = vpop.f32.mrf.mxu0
  %v3370 = vadd.f32 %v3321, %v3369
  %3371 = vdwg.mxu0
  %v3372 = vpack.c.bf16 %v3335, %v3333
  %v3373 = vpack.c.bf16 %v3340, %v3338
  %v3374 = vpack.c.bf16 %v3345, %v3343
  %v3375 = vpack.c.bf16 %v3350, %v3348
  %v3376 = vpack.c.bf16 %v3355, %v3353
  %v3377 = vpack.c.bf16 %v3360, %v3358
  %v3378 = vpack.c.bf16 %v3365, %v3363
  %v3379 = vpack.c.bf16 %v3370, %v3368
  %s3380 = scalar_lea.vmem %s5, 192
  %v3381 = vld [vmem:[%s3380] sm:$0xf]
  %v3382 = vld [vmem:[%s3380 + $0x4] sm:$0xf]
  %v3383 = vld [vmem:[%s3380 + $0x8] sm:$0xf]
  %v3384 = vld [vmem:[%s3380 + $0xc] sm:$0xf]
  %v3385 = vld [vmem:[%s3380 + $0x10] sm:$0xf]
  %v3386 = vld [vmem:[%s3380 + $0x14] sm:$0xf]
  %v3387 = vld [vmem:[%s3380 + $0x18] sm:$0xf]
  %v3388 = vld [vmem:[%s3380 + $0x1c] sm:$0xf]
  %v3389 = vld [vmem:[%s3380 + $0x20] sm:$0xf]
  %v3390 = vld [vmem:[%s3380 + $0x24] sm:$0xf]
  %v3391 = vld [vmem:[%s3380 + $0x28] sm:$0xf]
  %v3392 = vld [vmem:[%s3380 + $0x2c] sm:$0xf]
  %v3393 = vld [vmem:[%s3380 + $0x30] sm:$0xf]
  %v3394 = vld [vmem:[%s3380 + $0x34] sm:$0xf]
  %v3395 = vld [vmem:[%s3380 + $0x38] sm:$0xf]
  %v3396 = vld [vmem:[%s3380 + $0x3c] sm:$0xf]
  %v3413 = vunpack.c.l.b16 %v3381
  %v3414 = vunpack.c.l.b16 %v3382
  %v3415 = vunpack.c.l.b16 %v3383
  %v3416 = vunpack.c.l.b16 %v3384
  %v3417 = vunpack.c.l.b16 %v3385
  %v3418 = vunpack.c.l.b16 %v3386
  %v3419 = vunpack.c.l.b16 %v3387
  %v3420 = vunpack.c.l.b16 %v3388
  %v3421 = vunpack.c.l.b16 %v3389
  %v3422 = vunpack.c.l.b16 %v3390
  %v3423 = vunpack.c.l.b16 %v3391
  %v3424 = vunpack.c.l.b16 %v3392
  %v3425 = vunpack.c.l.b16 %v3393
  %v3426 = vunpack.c.l.b16 %v3394
  %v3427 = vunpack.c.l.b16 %v3395
  %v3428 = vunpack.c.l.b16 %v3396
  %v3429 = vpack.c.b16 %v3414, %v3413
  %v3430 = vpack.c.b16 %v3416, %v3415
  %v3431 = vpack.c.b16 %v3418, %v3417
  %v3432 = vpack.c.b16 %v3420, %v3419
  %v3433 = vpack.c.b16 %v3422, %v3421
  %v3434 = vpack.c.b16 %v3424, %v3423
  %v3435 = vpack.c.b16 %v3426, %v3425
  %v3436 = vpack.c.b16 %v3428, %v3427
  %3445 = vmatpush.bf16.msra.mxu0 %v3436
  %3446 = vmatpush.bf16.msra.mxu0 %v3435
  %3447 = vmatpush.bf16.msra.mxu0 %v3434
  %3448 = vmatpush.bf16.msra.mxu0 %v3433
  %3449 = vmatpush.bf16.msra.mxu0 %v3432
  %3450 = vmatpush.bf16.msra.mxu0 %v3431
  %3451 = vmatpush.bf16.msra.mxu0 %v3430
  %3452 = vmatpush.bf16.msra.mxu0 %v3429
  %3453 = vmatmul.bf16.gmra.mxu0 %v3372
  %v3454 = vpop.f32.mrf.mxu0
  %v3455 = vadd.f32 0.0, %v3454
  %v3456 = vpop.f32.mrf.mxu0
  %v3457 = vadd.f32 0.0, %v3456
  %3458 = vmatmul.bf16.gmra.mxu0 %v3373
  %v3459 = vpop.f32.mrf.mxu0
  %v3460 = vadd.f32 0.0, %v3459
  %v3461 = vpop.f32.mrf.mxu0
  %v3462 = vadd.f32 0.0, %v3461
  %3463 = vmatmul.bf16.gmra.mxu0 %v3374
  %v3464 = vpop.f32.mrf.mxu0
  %v3465 = vadd.f32 0.0, %v3464
  %v3466 = vpop.f32.mrf.mxu0
  %v3467 = vadd.f32 0.0, %v3466
  %3468 = vmatmul.bf16.gmra.mxu0 %v3375
  %v3469 = vpop.f32.mrf.mxu0
  %v3470 = vadd.f32 0.0, %v3469
  %v3471 = vpop.f32.mrf.mxu0
  %v3472 = vadd.f32 0.0, %v3471
  %3473 = vmatmul.bf16.gmra.mxu0 %v3376
  %v3474 = vpop.f32.mrf.mxu0
  %v3475 = vadd.f32 0.0, %v3474
  %v3476 = vpop.f32.mrf.mxu0
  %v3477 = vadd.f32 0.0, %v3476
  %3478 = vmatmul.bf16.gmra.mxu0 %v3377
  %v3479 = vpop.f32.mrf.mxu0
  %v3480 = vadd.f32 0.0, %v3479
  %v3481 = vpop.f32.mrf.mxu0
  %v3482 = vadd.f32 0.0, %v3481
  %3483 = vmatmul.bf16.gmra.mxu0 %v3378
  %v3484 = vpop.f32.mrf.mxu0
  %v3485 = vadd.f32 0.0, %v3484
  %v3486 = vpop.f32.mrf.mxu0
  %v3487 = vadd.f32 0.0, %v3486
  %3488 = vmatmul.bf16.gmra.mxu0 %v3379
  %v3489 = vpop.f32.mrf.mxu0
  %v3490 = vadd.f32 0.0, %v3489
  %v3491 = vpop.f32.mrf.mxu0
  %v3492 = vadd.f32 0.0, %v3491
  %3493 = vdwg.mxu0
  %v3494 = vadd.f32 %v2967, %v3455
  %v3495 = vadd.f32 %v2968, %v3457
  %v3496 = vadd.f32 %v2969, %v3460
  %v3497 = vadd.f32 %v2970, %v3462
  %v3498 = vadd.f32 %v2971, %v3465
  %v3499 = vadd.f32 %v2972, %v3467
  %v3500 = vadd.f32 %v2973, %v3470
  %v3501 = vadd.f32 %v2974, %v3472
  %v3502 = vadd.f32 %v2975, %v3475
  %v3503 = vadd.f32 %v2976, %v3477
  %v3504 = vadd.f32 %v2977, %v3480
  %v3505 = vadd.f32 %v2978, %v3482
  %v3506 = vadd.f32 %v2979, %v3485
  %v3507 = vadd.f32 %v2980, %v3487
  %v3508 = vadd.f32 %v2981, %v3490
  %v3509 = vadd.f32 %v2982, %v3492
  %s3510 = scalar_lea.vmem %s4, 1024
  %v3511 = vld [vmem:[%s3510] sm:$0xff]
  %v3512 = vld [vmem:[%s3510 + $0x8] sm:$0xff]
  %v3513 = vld [vmem:[%s3510 + $0x10] sm:$0xff]
  %v3514 = vld [vmem:[%s3510 + $0x18] sm:$0xff]
  %v3515 = vld [vmem:[%s3510 + $0x20] sm:$0xff]
  %v3516 = vld [vmem:[%s3510 + $0x28] sm:$0xff]
  %v3517 = vld [vmem:[%s3510 + $0x30] sm:$0xff]
  %v3518 = vld [vmem:[%s3510 + $0x38] sm:$0xff]
  %v3519 = vld [vmem:[%s3510 + $0x40] sm:$0xff]
  %v3520 = vld [vmem:[%s3510 + $0x48] sm:$0xff]
  %v3521 = vld [vmem:[%s3510 + $0x50] sm:$0xff]
  %v3522 = vld [vmem:[%s3510 + $0x58] sm:$0xff]
  %v3523 = vld [vmem:[%s3510 + $0x60] sm:$0xff]
  %v3524 = vld [vmem:[%s3510 + $0x68] sm:$0xff]
  %v3525 = vld [vmem:[%s3510 + $0x70] sm:$0xff]
  %v3526 = vld [vmem:[%s3510 + $0x78] sm:$0xff]
  %v3527 = vld [vmem:[%s3510 + $0x80] sm:$0xff]
  %v3528 = vld [vmem:[%s3510 + $0x88] sm:$0xff]
  %v3529 = vld [vmem:[%s3510 + $0x90] sm:$0xff]
  %v3530 = vld [vmem:[%s3510 + $0x98] sm:$0xff]
  %v3531 = vld [vmem:[%s3510 + $0xa0] sm:$0xff]
  %v3532 = vld [vmem:[%s3510 + $0xa8] sm:$0xff]
  %v3533 = vld [vmem:[%s3510 + $0xb0] sm:$0xff]
  %v3534 = vld [vmem:[%s3510 + $0xb8] sm:$0xff]
  %v3535 = vld [vmem:[%s3510 + $0xc0] sm:$0xff]
  %v3536 = vld [vmem:[%s3510 + $0xc8] sm:$0xff]
  %v3537 = vld [vmem:[%s3510 + $0xd0] sm:$0xff]
  %v3538 = vld [vmem:[%s3510 + $0xd8] sm:$0xff]
  %v3539 = vld [vmem:[%s3510 + $0xe0] sm:$0xff]
  %v3540 = vld [vmem:[%s3510 + $0xe8] sm:$0xff]
  %v3541 = vld [vmem:[%s3510 + $0xf0] sm:$0xff]
  %v3542 = vld [vmem:[%s3510 + $0xf8] sm:$0xff]
  %v3575 = vunpack.c.l.b16 %v3511
  %v3576 = vunpack.c.h.b16 %v3511
  %v3577 = vunpack.c.l.b16 %v3512
  %v3578 = vunpack.c.h.b16 %v3512
  %v3579 = vunpack.c.l.b16 %v3513
  %v3580 = vunpack.c.h.b16 %v3513
  %v3581 = vunpack.c.l.b16 %v3514
  %v3582 = vunpack.c.h.b16 %v3514
  %v3583 = vunpack.c.l.b16 %v3515
  %v3584 = vunpack.c.h.b16 %v3515
  %v3585 = vunpack.c.l.b16 %v3516
  %v3586 = vunpack.c.h.b16 %v3516
  %v3587 = vunpack.c.l.b16 %v3517
  %v3588 = vunpack.c.h.b16 %v3517
  %v3589 = vunpack.c.l.b16 %v3518
  %v3590 = vunpack.c.h.b16 %v3518
  %v3591 = vunpack.c.l.b16 %v3519
  %v3592 = vunpack.c.h.b16 %v3519
  %v3593 = vunpack.c.l.b16 %v3520
  %v3594 = vunpack.c.h.b16 %v3520
  %v3595 = vunpack.c.l.b16 %v3521
  %v3596 = vunpack.c.h.b16 %v3521
  %v3597 = vunpack.c.l.b16 %v3522
  %v3598 = vunpack.c.h.b16 %v3522
  %v3599 = vunpack.c.l.b16 %v3523
  %v3600 = vunpack.c.h.b16 %v3523
  %v3601 = vunpack.c.l.b16 %v3524
  %v3602 = vunpack.c.h.b16 %v3524
  %v3603 = vunpack.c.l.b16 %v3525
  %v3604 = vunpack.c.h.b16 %v3525
  %v3605 = vunpack.c.l.b16 %v3526
  %v3606 = vunpack.c.h.b16 %v3526
  %v3607 = vunpack.c.l.b16 %v3527
  %v3608 = vunpack.c.h.b16 %v3527
  %v3609 = vunpack.c.l.b16 %v3528
  %v3610 = vunpack.c.h.b16 %v3528
  %v3611 = vunpack.c.l.b16 %v3529
  %v3612 = vunpack.c.h.b16 %v3529
  %v3613 = vunpack.c.l.b16 %v3530
  %v3614 = vunpack.c.h.b16 %v3530
  %v3615 = vunpack.c.l.b16 %v3531
  %v3616 = vunpack.c.h.b16 %v3531
  %v3617 = vunpack.c.l.b16 %v3532
  %v3618 = vunpack.c.h.b16 %v3532
  %v3619 = vunpack.c.l.b16 %v3533
  %v3620 = vunpack.c.h.b16 %v3533
  %v3621 = vunpack.c.l.b16 %v3534
  %v3622 = vunpack.c.h.b16 %v3534
  %v3623 = vunpack.c.l.b16 %v3535
  %v3624 = vunpack.c.h.b16 %v3535
  %v3625 = vunpack.c.l.b16 %v3536
  %v3626 = vunpack.c.h.b16 %v3536
  %v3627 = vunpack.c.l.b16 %v3537
  %v3628 = vunpack.c.h.b16 %v3537
  %v3629 = vunpack.c.l.b16 %v3538
  %v3630 = vunpack.c.h.b16 %v3538
  %v3631 = vunpack.c.l.b16 %v3539
  %v3632 = vunpack.c.h.b16 %v3539
  %v3633 = vunpack.c.l.b16 %v3540
  %v3634 = vunpack.c.h.b16 %v3540
  %v3635 = vunpack.c.l.b16 %v3541
  %v3636 = vunpack.c.h.b16 %v3541
  %v3637 = vunpack.c.l.b16 %v3542
  %v3638 = vunpack.c.h.b16 %v3542
  %v3639 = vpack.c.b16 %v3579, %v3575
  %v3640 = vpack.c.b16 %v3580, %v3576
  %v3641 = vpack.c.b16 %v3581, %v3577
  %v3642 = vpack.c.b16 %v3582, %v3578
  %v3643 = vpack.c.b16 %v3587, %v3583
  %v3644 = vpack.c.b16 %v3588, %v3584
  %v3645 = vpack.c.b16 %v3589, %v3585
  %v3646 = vpack.c.b16 %v3590, %v3586
  %v3647 = vpack.c.b16 %v3595, %v3591
  %v3648 = vpack.c.b16 %v3596, %v3592
  %v3649 = vpack.c.b16 %v3597, %v3593
  %v3650 = vpack.c.b16 %v3598, %v3594
  %v3651 = vpack.c.b16 %v3603, %v3599
  %v3652 = vpack.c.b16 %v3604, %v3600
  %v3653 = vpack.c.b16 %v3605, %v3601
  %v3654 = vpack.c.b16 %v3606, %v3602
  %v3655 = vpack.c.b16 %v3611, %v3607
  %v3656 = vpack.c.b16 %v3612, %v3608
  %v3657 = vpack.c.b16 %v3613, %v3609
  %v3658 = vpack.c.b16 %v3614, %v3610
  %v3659 = vpack.c.b16 %v3619, %v3615
  %v3660 = vpack.c.b16 %v3620, %v3616
  %v3661 = vpack.c.b16 %v3621, %v3617
  %v3662 = vpack.c.b16 %v3622, %v3618
  %v3663 = vpack.c.b16 %v3627, %v3623
  %v3664 = vpack.c.b16 %v3628, %v3624
  %v3665 = vpack.c.b16 %v3629, %v3625
  %v3666 = vpack.c.b16 %v3630, %v3626
  %v3667 = vpack.c.b16 %v3635, %v3631
  %v3668 = vpack.c.b16 %v3636, %v3632
  %v3669 = vpack.c.b16 %v3637, %v3633
  %v3670 = vpack.c.b16 %v3638, %v3634
  %3703 = vmatpush.bf16.msra.mxu0 %v1411
  %3704 = vmatpush.bf16.msra.mxu0 %v1410
  %3705 = vmatpush.bf16.msra.mxu0 %v1409
  %3706 = vmatpush.bf16.msra.mxu0 %v1408
  %3707 = vmatpush.bf16.msra.mxu0 %v1407
  %3708 = vmatpush.bf16.msra.mxu0 %v1406
  %3709 = vmatpush.bf16.msra.mxu0 %v1405
  %3710 = vmatpush.bf16.msra.mxu0 %v1404
  %3711 = vmatmul.bf16.gmra.mxu0 %v3639
  %v3712 = vpop.f32.mrf.mxu0
  %v3713 = vadd.f32 0.0, %v3712
  %v3714 = vpop.f32.mrf.mxu0
  %v3715 = vadd.f32 0.0, %v3714
  %3716 = vmatmul.bf16.gmra.mxu0 %v3643
  %v3717 = vpop.f32.mrf.mxu0
  %v3718 = vadd.f32 0.0, %v3717
  %v3719 = vpop.f32.mrf.mxu0
  %v3720 = vadd.f32 0.0, %v3719
  %3721 = vmatmul.bf16.gmra.mxu0 %v3647
  %v3722 = vpop.f32.mrf.mxu0
  %v3723 = vadd.f32 0.0, %v3722
  %v3724 = vpop.f32.mrf.mxu0
  %v3725 = vadd.f32 0.0, %v3724
  %3726 = vmatmul.bf16.gmra.mxu0 %v3651
  %v3727 = vpop.f32.mrf.mxu0
  %v3728 = vadd.f32 0.0, %v3727
  %v3729 = vpop.f32.mrf.mxu0
  %v3730 = vadd.f32 0.0, %v3729
  %3731 = vmatmul.bf16.gmra.mxu0 %v3655
  %v3732 = vpop.f32.mrf.mxu0
  %v3733 = vadd.f32 0.0, %v3732
  %v3734 = vpop.f32.mrf.mxu0
  %v3735 = vadd.f32 0.0, %v3734
  %3736 = vmatmul.bf16.gmra.mxu0 %v3659
  %v3737 = vpop.f32.mrf.mxu0
  %v3738 = vadd.f32 0.0, %v3737
  %v3739 = vpop.f32.mrf.mxu0
  %v3740 = vadd.f32 0.0, %v3739
  %3741 = vmatmul.bf16.gmra.mxu0 %v3663
  %v3742 = vpop.f32.mrf.mxu0
  %v3743 = vadd.f32 0.0, %v3742
  %v3744 = vpop.f32.mrf.mxu0
  %v3745 = vadd.f32 0.0, %v3744
  %3746 = vmatmul.bf16.gmra.mxu0 %v3667
  %v3747 = vpop.f32.mrf.mxu0
  %v3748 = vadd.f32 0.0, %v3747
  %v3749 = vpop.f32.mrf.mxu0
  %v3750 = vadd.f32 0.0, %v3749
  %3751 = vdwg.mxu0
  %3752 = vmatpush.bf16.msra.mxu0 %v1419
  %3753 = vmatpush.bf16.msra.mxu0 %v1418
  %3754 = vmatpush.bf16.msra.mxu0 %v1417
  %3755 = vmatpush.bf16.msra.mxu0 %v1416
  %3756 = vmatpush.bf16.msra.mxu0 %v1415
  %3757 = vmatpush.bf16.msra.mxu0 %v1414
  %3758 = vmatpush.bf16.msra.mxu0 %v1413
  %3759 = vmatpush.bf16.msra.mxu0 %v1412
  %3760 = vmatmul.bf16.gmra.mxu0 %v3640
  %v3761 = vpop.f32.mrf.mxu0
  %v3762 = vadd.f32 %v3713, %v3761
  %v3763 = vpop.f32.mrf.mxu0
  %v3764 = vadd.f32 %v3715, %v3763
  %3765 = vmatmul.bf16.gmra.mxu0 %v3644
  %v3766 = vpop.f32.mrf.mxu0
  %v3767 = vadd.f32 %v3718, %v3766
  %v3768 = vpop.f32.mrf.mxu0
  %v3769 = vadd.f32 %v3720, %v3768
  %3770 = vmatmul.bf16.gmra.mxu0 %v3648
  %v3771 = vpop.f32.mrf.mxu0
  %v3772 = vadd.f32 %v3723, %v3771
  %v3773 = vpop.f32.mrf.mxu0
  %v3774 = vadd.f32 %v3725, %v3773
  %3775 = vmatmul.bf16.gmra.mxu0 %v3652
  %v3776 = vpop.f32.mrf.mxu0
  %v3777 = vadd.f32 %v3728, %v3776
  %v3778 = vpop.f32.mrf.mxu0
  %v3779 = vadd.f32 %v3730, %v3778
  %3780 = vmatmul.bf16.gmra.mxu0 %v3656
  %v3781 = vpop.f32.mrf.mxu0
  %v3782 = vadd.f32 %v3733, %v3781
  %v3783 = vpop.f32.mrf.mxu0
  %v3784 = vadd.f32 %v3735, %v3783
  %3785 = vmatmul.bf16.gmra.mxu0 %v3660
  %v3786 = vpop.f32.mrf.mxu0
  %v3787 = vadd.f32 %v3738, %v3786
  %v3788 = vpop.f32.mrf.mxu0
  %v3789 = vadd.f32 %v3740, %v3788
  %3790 = vmatmul.bf16.gmra.mxu0 %v3664
  %v3791 = vpop.f32.mrf.mxu0
  %v3792 = vadd.f32 %v3743, %v3791
  %v3793 = vpop.f32.mrf.mxu0
  %v3794 = vadd.f32 %v3745, %v3793
  %3795 = vmatmul.bf16.gmra.mxu0 %v3668
  %v3796 = vpop.f32.mrf.mxu0
  %v3797 = vadd.f32 %v3748, %v3796
  %v3798 = vpop.f32.mrf.mxu0
  %v3799 = vadd.f32 %v3750, %v3798
  %3800 = vdwg.mxu0
  %3801 = vmatpush.bf16.msra.mxu0 %v1427
  %3802 = vmatpush.bf16.msra.mxu0 %v1426
  %3803 = vmatpush.bf16.msra.mxu0 %v1425
  %3804 = vmatpush.bf16.msra.mxu0 %v1424
  %3805 = vmatpush.bf16.msra.mxu0 %v1423
  %3806 = vmatpush.bf16.msra.mxu0 %v1422
  %3807 = vmatpush.bf16.msra.mxu0 %v1421
  %3808 = vmatpush.bf16.msra.mxu0 %v1420
  %3809 = vmatmul.bf16.gmra.mxu0 %v3641
  %v3810 = vpop.f32.mrf.mxu0
  %v3811 = vadd.f32 %v3762, %v3810
  %v3812 = vpop.f32.mrf.mxu0
  %v3813 = vadd.f32 %v3764, %v3812
  %3814 = vmatmul.bf16.gmra.mxu0 %v3645
  %v3815 = vpop.f32.mrf.mxu0
  %v3816 = vadd.f32 %v3767, %v3815
  %v3817 = vpop.f32.mrf.mxu0
  %v3818 = vadd.f32 %v3769, %v3817
  %3819 = vmatmul.bf16.gmra.mxu0 %v3649
  %v3820 = vpop.f32.mrf.mxu0
  %v3821 = vadd.f32 %v3772, %v3820
  %v3822 = vpop.f32.mrf.mxu0
  %v3823 = vadd.f32 %v3774, %v3822
  %3824 = vmatmul.bf16.gmra.mxu0 %v3653
  %v3825 = vpop.f32.mrf.mxu0
  %v3826 = vadd.f32 %v3777, %v3825
  %v3827 = vpop.f32.mrf.mxu0
  %v3828 = vadd.f32 %v3779, %v3827
  %3829 = vmatmul.bf16.gmra.mxu0 %v3657
  %v3830 = vpop.f32.mrf.mxu0
  %v3831 = vadd.f32 %v3782, %v3830
  %v3832 = vpop.f32.mrf.mxu0
  %v3833 = vadd.f32 %v3784, %v3832
  %3834 = vmatmul.bf16.gmra.mxu0 %v3661
  %v3835 = vpop.f32.mrf.mxu0
  %v3836 = vadd.f32 %v3787, %v3835
  %v3837 = vpop.f32.mrf.mxu0
  %v3838 = vadd.f32 %v3789, %v3837
  %3839 = vmatmul.bf16.gmra.mxu0 %v3665
  %v3840 = vpop.f32.mrf.mxu0
  %v3841 = vadd.f32 %v3792, %v3840
  %v3842 = vpop.f32.mrf.mxu0
  %v3843 = vadd.f32 %v3794, %v3842
  %3844 = vmatmul.bf16.gmra.mxu0 %v3669
  %v3845 = vpop.f32.mrf.mxu0
  %v3846 = vadd.f32 %v3797, %v3845
  %v3847 = vpop.f32.mrf.mxu0
  %v3848 = vadd.f32 %v3799, %v3847
  %3849 = vdwg.mxu0
  %3850 = vmatpush.bf16.msra.mxu0 %v1435
  %3851 = vmatpush.bf16.msra.mxu0 %v1434
  %3852 = vmatpush.bf16.msra.mxu0 %v1433
  %3853 = vmatpush.bf16.msra.mxu0 %v1432
  %3854 = vmatpush.bf16.msra.mxu0 %v1431
  %3855 = vmatpush.bf16.msra.mxu0 %v1430
  %3856 = vmatpush.bf16.msra.mxu0 %v1429
  %3857 = vmatpush.bf16.msra.mxu0 %v1428
  %3858 = vmatmul.bf16.gmra.mxu0 %v3642
  %v3859 = vpop.f32.mrf.mxu0
  %v3860 = vadd.f32 %v3811, %v3859
  %v3861 = vpop.f32.mrf.mxu0
  %v3862 = vadd.f32 %v3813, %v3861
  %3863 = vmatmul.bf16.gmra.mxu0 %v3646
  %v3864 = vpop.f32.mrf.mxu0
  %v3865 = vadd.f32 %v3816, %v3864
  %v3866 = vpop.f32.mrf.mxu0
  %v3867 = vadd.f32 %v3818, %v3866
  %3868 = vmatmul.bf16.gmra.mxu0 %v3650
  %v3869 = vpop.f32.mrf.mxu0
  %v3870 = vadd.f32 %v3821, %v3869
  %v3871 = vpop.f32.mrf.mxu0
  %v3872 = vadd.f32 %v3823, %v3871
  %3873 = vmatmul.bf16.gmra.mxu0 %v3654
  %v3874 = vpop.f32.mrf.mxu0
  %v3875 = vadd.f32 %v3826, %v3874
  %v3876 = vpop.f32.mrf.mxu0
  %v3877 = vadd.f32 %v3828, %v3876
  %3878 = vmatmul.bf16.gmra.mxu0 %v3658
  %v3879 = vpop.f32.mrf.mxu0
  %v3880 = vadd.f32 %v3831, %v3879
  %v3881 = vpop.f32.mrf.mxu0
  %v3882 = vadd.f32 %v3833, %v3881
  %3883 = vmatmul.bf16.gmra.mxu0 %v3662
  %v3884 = vpop.f32.mrf.mxu0
  %v3885 = vadd.f32 %v3836, %v3884
  %v3886 = vpop.f32.mrf.mxu0
  %v3887 = vadd.f32 %v3838, %v3886
  %3888 = vmatmul.bf16.gmra.mxu0 %v3666
  %v3889 = vpop.f32.mrf.mxu0
  %v3890 = vadd.f32 %v3841, %v3889
  %v3891 = vpop.f32.mrf.mxu0
  %v3892 = vadd.f32 %v3843, %v3891
  %3893 = vmatmul.bf16.gmra.mxu0 %v3670
  %v3894 = vpop.f32.mrf.mxu0
  %v3895 = vadd.f32 %v3846, %v3894
  %v3896 = vpop.f32.mrf.mxu0
  %v3897 = vadd.f32 %v3848, %v3896
  %3898 = vdwg.mxu0
  %v3899 = vpack.c.bf16 %v3862, %v3860
  %v3900 = vpack.c.bf16 %v3867, %v3865
  %v3901 = vpack.c.bf16 %v3872, %v3870
  %v3902 = vpack.c.bf16 %v3877, %v3875
  %v3903 = vpack.c.bf16 %v3882, %v3880
  %v3904 = vpack.c.bf16 %v3887, %v3885
  %v3905 = vpack.c.bf16 %v3892, %v3890
  %v3906 = vpack.c.bf16 %v3897, %v3895
  %s3907 = scalar_lea.vmem %s5, 256
  %v3908 = vld [vmem:[%s3907] sm:$0xf]
  %v3909 = vld [vmem:[%s3907 + $0x4] sm:$0xf]
  %v3910 = vld [vmem:[%s3907 + $0x8] sm:$0xf]
  %v3911 = vld [vmem:[%s3907 + $0xc] sm:$0xf]
  %v3912 = vld [vmem:[%s3907 + $0x10] sm:$0xf]
  %v3913 = vld [vmem:[%s3907 + $0x14] sm:$0xf]
  %v3914 = vld [vmem:[%s3907 + $0x18] sm:$0xf]
  %v3915 = vld [vmem:[%s3907 + $0x1c] sm:$0xf]
  %v3916 = vld [vmem:[%s3907 + $0x20] sm:$0xf]
  %v3917 = vld [vmem:[%s3907 + $0x24] sm:$0xf]
  %v3918 = vld [vmem:[%s3907 + $0x28] sm:$0xf]
  %v3919 = vld [vmem:[%s3907 + $0x2c] sm:$0xf]
  %v3920 = vld [vmem:[%s3907 + $0x30] sm:$0xf]
  %v3921 = vld [vmem:[%s3907 + $0x34] sm:$0xf]
  %v3922 = vld [vmem:[%s3907 + $0x38] sm:$0xf]
  %v3923 = vld [vmem:[%s3907 + $0x3c] sm:$0xf]
  %v3940 = vunpack.c.l.b16 %v3908
  %v3941 = vunpack.c.l.b16 %v3909
  %v3942 = vunpack.c.l.b16 %v3910
  %v3943 = vunpack.c.l.b16 %v3911
  %v3944 = vunpack.c.l.b16 %v3912
  %v3945 = vunpack.c.l.b16 %v3913
  %v3946 = vunpack.c.l.b16 %v3914
  %v3947 = vunpack.c.l.b16 %v3915
  %v3948 = vunpack.c.l.b16 %v3916
  %v3949 = vunpack.c.l.b16 %v3917
  %v3950 = vunpack.c.l.b16 %v3918
  %v3951 = vunpack.c.l.b16 %v3919
  %v3952 = vunpack.c.l.b16 %v3920
  %v3953 = vunpack.c.l.b16 %v3921
  %v3954 = vunpack.c.l.b16 %v3922
  %v3955 = vunpack.c.l.b16 %v3923
  %v3956 = vpack.c.b16 %v3941, %v3940
  %v3957 = vpack.c.b16 %v3943, %v3942
  %v3958 = vpack.c.b16 %v3945, %v3944
  %v3959 = vpack.c.b16 %v3947, %v3946
  %v3960 = vpack.c.b16 %v3949, %v3948
  %v3961 = vpack.c.b16 %v3951, %v3950
  %v3962 = vpack.c.b16 %v3953, %v3952
  %v3963 = vpack.c.b16 %v3955, %v3954
  %3972 = vmatpush.bf16.msra.mxu0 %v3963
  %3973 = vmatpush.bf16.msra.mxu0 %v3962
  %3974 = vmatpush.bf16.msra.mxu0 %v3961
  %3975 = vmatpush.bf16.msra.mxu0 %v3960
  %3976 = vmatpush.bf16.msra.mxu0 %v3959
  %3977 = vmatpush.bf16.msra.mxu0 %v3958
  %3978 = vmatpush.bf16.msra.mxu0 %v3957
  %3979 = vmatpush.bf16.msra.mxu0 %v3956
  %3980 = vmatmul.bf16.gmra.mxu0 %v3899
  %v3981 = vpop.f32.mrf.mxu0
  %v3982 = vadd.f32 0.0, %v3981
  %v3983 = vpop.f32.mrf.mxu0
  %v3984 = vadd.f32 0.0, %v3983
  %3985 = vmatmul.bf16.gmra.mxu0 %v3900
  %v3986 = vpop.f32.mrf.mxu0
  %v3987 = vadd.f32 0.0, %v3986
  %v3988 = vpop.f32.mrf.mxu0
  %v3989 = vadd.f32 0.0, %v3988
  %3990 = vmatmul.bf16.gmra.mxu0 %v3901
  %v3991 = vpop.f32.mrf.mxu0
  %v3992 = vadd.f32 0.0, %v3991
  %v3993 = vpop.f32.mrf.mxu0
  %v3994 = vadd.f32 0.0, %v3993
  %3995 = vmatmul.bf16.gmra.mxu0 %v3902
  %v3996 = vpop.f32.mrf.mxu0
  %v3997 = vadd.f32 0.0, %v3996
  %v3998 = vpop.f32.mrf.mxu0
  %v3999 = vadd.f32 0.0, %v3998
  %4000 = vmatmul.bf16.gmra.mxu0 %v3903
  %v4001 = vpop.f32.mrf.mxu0
  %v4002 = vadd.f32 0.0, %v4001
  %v4003 = vpop.f32.mrf.mxu0
  %v4004 = vadd.f32 0.0, %v4003
  %4005 = vmatmul.bf16.gmra.mxu0 %v3904
  %v4006 = vpop.f32.mrf.mxu0
  %v4007 = vadd.f32 0.0, %v4006
  %v4008 = vpop.f32.mrf.mxu0
  %v4009 = vadd.f32 0.0, %v4008
  %4010 = vmatmul.bf16.gmra.mxu0 %v3905
  %v4011 = vpop.f32.mrf.mxu0
  %v4012 = vadd.f32 0.0, %v4011
  %v4013 = vpop.f32.mrf.mxu0
  %v4014 = vadd.f32 0.0, %v4013
  %4015 = vmatmul.bf16.gmra.mxu0 %v3906
  %v4016 = vpop.f32.mrf.mxu0
  %v4017 = vadd.f32 0.0, %v4016
  %v4018 = vpop.f32.mrf.mxu0
  %v4019 = vadd.f32 0.0, %v4018
  %4020 = vdwg.mxu0
  %v4021 = vadd.f32 %v3494, %v3982
  %v4022 = vadd.f32 %v3495, %v3984
  %v4023 = vadd.f32 %v3496, %v3987
  %v4024 = vadd.f32 %v3497, %v3989
  %v4025 = vadd.f32 %v3498, %v3992
  %v4026 = vadd.f32 %v3499, %v3994
  %v4027 = vadd.f32 %v3500, %v3997
  %v4028 = vadd.f32 %v3501, %v3999
  %v4029 = vadd.f32 %v3502, %v4002
  %v4030 = vadd.f32 %v3503, %v4004
  %v4031 = vadd.f32 %v3504, %v4007
  %v4032 = vadd.f32 %v3505, %v4009
  %v4033 = vadd.f32 %v3506, %v4012
  %v4034 = vadd.f32 %v3507, %v4014
  %v4035 = vadd.f32 %v3508, %v4017
  %v4036 = vadd.f32 %v3509, %v4019
  %s4037 = scalar_lea.vmem %s4, 1280
  %v4038 = vld [vmem:[%s4037] sm:$0xff]
  %v4039 = vld [vmem:[%s4037 + $0x8] sm:$0xff]
  %v4040 = vld [vmem:[%s4037 + $0x10] sm:$0xff]
  %v4041 = vld [vmem:[%s4037 + $0x18] sm:$0xff]
  %v4042 = vld [vmem:[%s4037 + $0x20] sm:$0xff]
  %v4043 = vld [vmem:[%s4037 + $0x28] sm:$0xff]
  %v4044 = vld [vmem:[%s4037 + $0x30] sm:$0xff]
  %v4045 = vld [vmem:[%s4037 + $0x38] sm:$0xff]
  %v4046 = vld [vmem:[%s4037 + $0x40] sm:$0xff]
  %v4047 = vld [vmem:[%s4037 + $0x48] sm:$0xff]
  %v4048 = vld [vmem:[%s4037 + $0x50] sm:$0xff]
  %v4049 = vld [vmem:[%s4037 + $0x58] sm:$0xff]
  %v4050 = vld [vmem:[%s4037 + $0x60] sm:$0xff]
  %v4051 = vld [vmem:[%s4037 + $0x68] sm:$0xff]
  %v4052 = vld [vmem:[%s4037 + $0x70] sm:$0xff]
  %v4053 = vld [vmem:[%s4037 + $0x78] sm:$0xff]
  %v4054 = vld [vmem:[%s4037 + $0x80] sm:$0xff]
  %v4055 = vld [vmem:[%s4037 + $0x88] sm:$0xff]
  %v4056 = vld [vmem:[%s4037 + $0x90] sm:$0xff]
  %v4057 = vld [vmem:[%s4037 + $0x98] sm:$0xff]
  %v4058 = vld [vmem:[%s4037 + $0xa0] sm:$0xff]
  %v4059 = vld [vmem:[%s4037 + $0xa8] sm:$0xff]
  %v4060 = vld [vmem:[%s4037 + $0xb0] sm:$0xff]
  %v4061 = vld [vmem:[%s4037 + $0xb8] sm:$0xff]
  %v4062 = vld [vmem:[%s4037 + $0xc0] sm:$0xff]
  %v4063 = vld [vmem:[%s4037 + $0xc8] sm:$0xff]
  %v4064 = vld [vmem:[%s4037 + $0xd0] sm:$0xff]
  %v4065 = vld [vmem:[%s4037 + $0xd8] sm:$0xff]
  %v4066 = vld [vmem:[%s4037 + $0xe0] sm:$0xff]
  %v4067 = vld [vmem:[%s4037 + $0xe8] sm:$0xff]
  %v4068 = vld [vmem:[%s4037 + $0xf0] sm:$0xff]
  %v4069 = vld [vmem:[%s4037 + $0xf8] sm:$0xff]
  %v4102 = vunpack.c.l.b16 %v4038
  %v4103 = vunpack.c.h.b16 %v4038
  %v4104 = vunpack.c.l.b16 %v4039
  %v4105 = vunpack.c.h.b16 %v4039
  %v4106 = vunpack.c.l.b16 %v4040
  %v4107 = vunpack.c.h.b16 %v4040
  %v4108 = vunpack.c.l.b16 %v4041
  %v4109 = vunpack.c.h.b16 %v4041
  %v4110 = vunpack.c.l.b16 %v4042
  %v4111 = vunpack.c.h.b16 %v4042
  %v4112 = vunpack.c.l.b16 %v4043
  %v4113 = vunpack.c.h.b16 %v4043
  %v4114 = vunpack.c.l.b16 %v4044
  %v4115 = vunpack.c.h.b16 %v4044
  %v4116 = vunpack.c.l.b16 %v4045
  %v4117 = vunpack.c.h.b16 %v4045
  %v4118 = vunpack.c.l.b16 %v4046
  %v4119 = vunpack.c.h.b16 %v4046
  %v4120 = vunpack.c.l.b16 %v4047
  %v4121 = vunpack.c.h.b16 %v4047
  %v4122 = vunpack.c.l.b16 %v4048
  %v4123 = vunpack.c.h.b16 %v4048
  %v4124 = vunpack.c.l.b16 %v4049
  %v4125 = vunpack.c.h.b16 %v4049
  %v4126 = vunpack.c.l.b16 %v4050
  %v4127 = vunpack.c.h.b16 %v4050
  %v4128 = vunpack.c.l.b16 %v4051
  %v4129 = vunpack.c.h.b16 %v4051
  %v4130 = vunpack.c.l.b16 %v4052
  %v4131 = vunpack.c.h.b16 %v4052
  %v4132 = vunpack.c.l.b16 %v4053
  %v4133 = vunpack.c.h.b16 %v4053
  %v4134 = vunpack.c.l.b16 %v4054
  %v4135 = vunpack.c.h.b16 %v4054
  %v4136 = vunpack.c.l.b16 %v4055
  %v4137 = vunpack.c.h.b16 %v4055
  %v4138 = vunpack.c.l.b16 %v4056
  %v4139 = vunpack.c.h.b16 %v4056
  %v4140 = vunpack.c.l.b16 %v4057
  %v4141 = vunpack.c.h.b16 %v4057
  %v4142 = vunpack.c.l.b16 %v4058
  %v4143 = vunpack.c.h.b16 %v4058
  %v4144 = vunpack.c.l.b16 %v4059
  %v4145 = vunpack.c.h.b16 %v4059
  %v4146 = vunpack.c.l.b16 %v4060
  %v4147 = vunpack.c.h.b16 %v4060
  %v4148 = vunpack.c.l.b16 %v4061
  %v4149 = vunpack.c.h.b16 %v4061
  %v4150 = vunpack.c.l.b16 %v4062
  %v4151 = vunpack.c.h.b16 %v4062
  %v4152 = vunpack.c.l.b16 %v4063
  %v4153 = vunpack.c.h.b16 %v4063
  %v4154 = vunpack.c.l.b16 %v4064
  %v4155 = vunpack.c.h.b16 %v4064
  %v4156 = vunpack.c.l.b16 %v4065
  %v4157 = vunpack.c.h.b16 %v4065
  %v4158 = vunpack.c.l.b16 %v4066
  %v4159 = vunpack.c.h.b16 %v4066
  %v4160 = vunpack.c.l.b16 %v4067
  %v4161 = vunpack.c.h.b16 %v4067
  %v4162 = vunpack.c.l.b16 %v4068
  %v4163 = vunpack.c.h.b16 %v4068
  %v4164 = vunpack.c.l.b16 %v4069
  %v4165 = vunpack.c.h.b16 %v4069
  %v4166 = vpack.c.b16 %v4106, %v4102
  %v4167 = vpack.c.b16 %v4107, %v4103
  %v4168 = vpack.c.b16 %v4108, %v4104
  %v4169 = vpack.c.b16 %v4109, %v4105
  %v4170 = vpack.c.b16 %v4114, %v4110
  %v4171 = vpack.c.b16 %v4115, %v4111
  %v4172 = vpack.c.b16 %v4116, %v4112
  %v4173 = vpack.c.b16 %v4117, %v4113
  %v4174 = vpack.c.b16 %v4122, %v4118
  %v4175 = vpack.c.b16 %v4123, %v4119
  %v4176 = vpack.c.b16 %v4124, %v4120
  %v4177 = vpack.c.b16 %v4125, %v4121
  %v4178 = vpack.c.b16 %v4130, %v4126
  %v4179 = vpack.c.b16 %v4131, %v4127
  %v4180 = vpack.c.b16 %v4132, %v4128
  %v4181 = vpack.c.b16 %v4133, %v4129
  %v4182 = vpack.c.b16 %v4138, %v4134
  %v4183 = vpack.c.b16 %v4139, %v4135
  %v4184 = vpack.c.b16 %v4140, %v4136
  %v4185 = vpack.c.b16 %v4141, %v4137
  %v4186 = vpack.c.b16 %v4146, %v4142
  %v4187 = vpack.c.b16 %v4147, %v4143
  %v4188 = vpack.c.b16 %v4148, %v4144
  %v4189 = vpack.c.b16 %v4149, %v4145
  %v4190 = vpack.c.b16 %v4154, %v4150
  %v4191 = vpack.c.b16 %v4155, %v4151
  %v4192 = vpack.c.b16 %v4156, %v4152
  %v4193 = vpack.c.b16 %v4157, %v4153
  %v4194 = vpack.c.b16 %v4162, %v4158
  %v4195 = vpack.c.b16 %v4163, %v4159
  %v4196 = vpack.c.b16 %v4164, %v4160
  %v4197 = vpack.c.b16 %v4165, %v4161
  %4230 = vmatpush.bf16.msra.mxu0 %v1411
  %4231 = vmatpush.bf16.msra.mxu0 %v1410
  %4232 = vmatpush.bf16.msra.mxu0 %v1409
  %4233 = vmatpush.bf16.msra.mxu0 %v1408
  %4234 = vmatpush.bf16.msra.mxu0 %v1407
  %4235 = vmatpush.bf16.msra.mxu0 %v1406
  %4236 = vmatpush.bf16.msra.mxu0 %v1405
  %4237 = vmatpush.bf16.msra.mxu0 %v1404
  %4238 = vmatmul.bf16.gmra.mxu0 %v4166
  %v4239 = vpop.f32.mrf.mxu0
  %v4240 = vadd.f32 0.0, %v4239
  %v4241 = vpop.f32.mrf.mxu0
  %v4242 = vadd.f32 0.0, %v4241
  %4243 = vmatmul.bf16.gmra.mxu0 %v4170
  %v4244 = vpop.f32.mrf.mxu0
  %v4245 = vadd.f32 0.0, %v4244
  %v4246 = vpop.f32.mrf.mxu0
  %v4247 = vadd.f32 0.0, %v4246
  %4248 = vmatmul.bf16.gmra.mxu0 %v4174
  %v4249 = vpop.f32.mrf.mxu0
  %v4250 = vadd.f32 0.0, %v4249
  %v4251 = vpop.f32.mrf.mxu0
  %v4252 = vadd.f32 0.0, %v4251
  %4253 = vmatmul.bf16.gmra.mxu0 %v4178
  %v4254 = vpop.f32.mrf.mxu0
  %v4255 = vadd.f32 0.0, %v4254
  %v4256 = vpop.f32.mrf.mxu0
  %v4257 = vadd.f32 0.0, %v4256
  %4258 = vmatmul.bf16.gmra.mxu0 %v4182
  %v4259 = vpop.f32.mrf.mxu0
  %v4260 = vadd.f32 0.0, %v4259
  %v4261 = vpop.f32.mrf.mxu0
  %v4262 = vadd.f32 0.0, %v4261
  %4263 = vmatmul.bf16.gmra.mxu0 %v4186
  %v4264 = vpop.f32.mrf.mxu0
  %v4265 = vadd.f32 0.0, %v4264
  %v4266 = vpop.f32.mrf.mxu0
  %v4267 = vadd.f32 0.0, %v4266
  %4268 = vmatmul.bf16.gmra.mxu0 %v4190
  %v4269 = vpop.f32.mrf.mxu0
  %v4270 = vadd.f32 0.0, %v4269
  %v4271 = vpop.f32.mrf.mxu0
  %v4272 = vadd.f32 0.0, %v4271
  %4273 = vmatmul.bf16.gmra.mxu0 %v4194
  %v4274 = vpop.f32.mrf.mxu0
  %v4275 = vadd.f32 0.0, %v4274
  %v4276 = vpop.f32.mrf.mxu0
  %v4277 = vadd.f32 0.0, %v4276
  %4278 = vdwg.mxu0
  %4279 = vmatpush.bf16.msra.mxu0 %v1419
  %4280 = vmatpush.bf16.msra.mxu0 %v1418
  %4281 = vmatpush.bf16.msra.mxu0 %v1417
  %4282 = vmatpush.bf16.msra.mxu0 %v1416
  %4283 = vmatpush.bf16.msra.mxu0 %v1415
  %4284 = vmatpush.bf16.msra.mxu0 %v1414
  %4285 = vmatpush.bf16.msra.mxu0 %v1413
  %4286 = vmatpush.bf16.msra.mxu0 %v1412
  %4287 = vmatmul.bf16.gmra.mxu0 %v4167
  %v4288 = vpop.f32.mrf.mxu0
  %v4289 = vadd.f32 %v4240, %v4288
  %v4290 = vpop.f32.mrf.mxu0
  %v4291 = vadd.f32 %v4242, %v4290
  %4292 = vmatmul.bf16.gmra.mxu0 %v4171
  %v4293 = vpop.f32.mrf.mxu0
  %v4294 = vadd.f32 %v4245, %v4293
  %v4295 = vpop.f32.mrf.mxu0
  %v4296 = vadd.f32 %v4247, %v4295
  %4297 = vmatmul.bf16.gmra.mxu0 %v4175
  %v4298 = vpop.f32.mrf.mxu0
  %v4299 = vadd.f32 %v4250, %v4298
  %v4300 = vpop.f32.mrf.mxu0
  %v4301 = vadd.f32 %v4252, %v4300
  %4302 = vmatmul.bf16.gmra.mxu0 %v4179
  %v4303 = vpop.f32.mrf.mxu0
  %v4304 = vadd.f32 %v4255, %v4303
  %v4305 = vpop.f32.mrf.mxu0
  %v4306 = vadd.f32 %v4257, %v4305
  %4307 = vmatmul.bf16.gmra.mxu0 %v4183
  %v4308 = vpop.f32.mrf.mxu0
  %v4309 = vadd.f32 %v4260, %v4308
  %v4310 = vpop.f32.mrf.mxu0
  %v4311 = vadd.f32 %v4262, %v4310
  %4312 = vmatmul.bf16.gmra.mxu0 %v4187
  %v4313 = vpop.f32.mrf.mxu0
  %v4314 = vadd.f32 %v4265, %v4313
  %v4315 = vpop.f32.mrf.mxu0
  %v4316 = vadd.f32 %v4267, %v4315
  %4317 = vmatmul.bf16.gmra.mxu0 %v4191
  %v4318 = vpop.f32.mrf.mxu0
  %v4319 = vadd.f32 %v4270, %v4318
  %v4320 = vpop.f32.mrf.mxu0
  %v4321 = vadd.f32 %v4272, %v4320
  %4322 = vmatmul.bf16.gmra.mxu0 %v4195
  %v4323 = vpop.f32.mrf.mxu0
  %v4324 = vadd.f32 %v4275, %v4323
  %v4325 = vpop.f32.mrf.mxu0
  %v4326 = vadd.f32 %v4277, %v4325
  %4327 = vdwg.mxu0
  %4328 = vmatpush.bf16.msra.mxu0 %v1427
  %4329 = vmatpush.bf16.msra.mxu0 %v1426
  %4330 = vmatpush.bf16.msra.mxu0 %v1425
  %4331 = vmatpush.bf16.msra.mxu0 %v1424
  %4332 = vmatpush.bf16.msra.mxu0 %v1423
  %4333 = vmatpush.bf16.msra.mxu0 %v1422
  %4334 = vmatpush.bf16.msra.mxu0 %v1421
  %4335 = vmatpush.bf16.msra.mxu0 %v1420
  %4336 = vmatmul.bf16.gmra.mxu0 %v4168
  %v4337 = vpop.f32.mrf.mxu0
  %v4338 = vadd.f32 %v4289, %v4337
  %v4339 = vpop.f32.mrf.mxu0
  %v4340 = vadd.f32 %v4291, %v4339
  %4341 = vmatmul.bf16.gmra.mxu0 %v4172
  %v4342 = vpop.f32.mrf.mxu0
  %v4343 = vadd.f32 %v4294, %v4342
  %v4344 = vpop.f32.mrf.mxu0
  %v4345 = vadd.f32 %v4296, %v4344
  %4346 = vmatmul.bf16.gmra.mxu0 %v4176
  %v4347 = vpop.f32.mrf.mxu0
  %v4348 = vadd.f32 %v4299, %v4347
  %v4349 = vpop.f32.mrf.mxu0
  %v4350 = vadd.f32 %v4301, %v4349
  %4351 = vmatmul.bf16.gmra.mxu0 %v4180
  %v4352 = vpop.f32.mrf.mxu0
  %v4353 = vadd.f32 %v4304, %v4352
  %v4354 = vpop.f32.mrf.mxu0
  %v4355 = vadd.f32 %v4306, %v4354
  %4356 = vmatmul.bf16.gmra.mxu0 %v4184
  %v4357 = vpop.f32.mrf.mxu0
  %v4358 = vadd.f32 %v4309, %v4357
  %v4359 = vpop.f32.mrf.mxu0
  %v4360 = vadd.f32 %v4311, %v4359
  %4361 = vmatmul.bf16.gmra.mxu0 %v4188
  %v4362 = vpop.f32.mrf.mxu0
  %v4363 = vadd.f32 %v4314, %v4362
  %v4364 = vpop.f32.mrf.mxu0
  %v4365 = vadd.f32 %v4316, %v4364
  %4366 = vmatmul.bf16.gmra.mxu0 %v4192
  %v4367 = vpop.f32.mrf.mxu0
  %v4368 = vadd.f32 %v4319, %v4367
  %v4369 = vpop.f32.mrf.mxu0
  %v4370 = vadd.f32 %v4321, %v4369
  %4371 = vmatmul.bf16.gmra.mxu0 %v4196
  %v4372 = vpop.f32.mrf.mxu0
  %v4373 = vadd.f32 %v4324, %v4372
  %v4374 = vpop.f32.mrf.mxu0
  %v4375 = vadd.f32 %v4326, %v4374
  %4376 = vdwg.mxu0
  %4377 = vmatpush.bf16.msra.mxu0 %v1435
  %4378 = vmatpush.bf16.msra.mxu0 %v1434
  %4379 = vmatpush.bf16.msra.mxu0 %v1433
  %4380 = vmatpush.bf16.msra.mxu0 %v1432
  %4381 = vmatpush.bf16.msra.mxu0 %v1431
  %4382 = vmatpush.bf16.msra.mxu0 %v1430
  %4383 = vmatpush.bf16.msra.mxu0 %v1429
  %4384 = vmatpush.bf16.msra.mxu0 %v1428
  %4385 = vmatmul.bf16.gmra.mxu0 %v4169
  %v4386 = vpop.f32.mrf.mxu0
  %v4387 = vadd.f32 %v4338, %v4386
  %v4388 = vpop.f32.mrf.mxu0
  %v4389 = vadd.f32 %v4340, %v4388
  %4390 = vmatmul.bf16.gmra.mxu0 %v4173
  %v4391 = vpop.f32.mrf.mxu0
  %v4392 = vadd.f32 %v4343, %v4391
  %v4393 = vpop.f32.mrf.mxu0
  %v4394 = vadd.f32 %v4345, %v4393
  %4395 = vmatmul.bf16.gmra.mxu0 %v4177
  %v4396 = vpop.f32.mrf.mxu0
  %v4397 = vadd.f32 %v4348, %v4396
  %v4398 = vpop.f32.mrf.mxu0
  %v4399 = vadd.f32 %v4350, %v4398
  %4400 = vmatmul.bf16.gmra.mxu0 %v4181
  %v4401 = vpop.f32.mrf.mxu0
  %v4402 = vadd.f32 %v4353, %v4401
  %v4403 = vpop.f32.mrf.mxu0
  %v4404 = vadd.f32 %v4355, %v4403
  %4405 = vmatmul.bf16.gmra.mxu0 %v4185
  %v4406 = vpop.f32.mrf.mxu0
  %v4407 = vadd.f32 %v4358, %v4406
  %v4408 = vpop.f32.mrf.mxu0
  %v4409 = vadd.f32 %v4360, %v4408
  %4410 = vmatmul.bf16.gmra.mxu0 %v4189
  %v4411 = vpop.f32.mrf.mxu0
  %v4412 = vadd.f32 %v4363, %v4411
  %v4413 = vpop.f32.mrf.mxu0
  %v4414 = vadd.f32 %v4365, %v4413
  %4415 = vmatmul.bf16.gmra.mxu0 %v4193
  %v4416 = vpop.f32.mrf.mxu0
  %v4417 = vadd.f32 %v4368, %v4416
  %v4418 = vpop.f32.mrf.mxu0
  %v4419 = vadd.f32 %v4370, %v4418
  %4420 = vmatmul.bf16.gmra.mxu0 %v4197
  %v4421 = vpop.f32.mrf.mxu0
  %v4422 = vadd.f32 %v4373, %v4421
  %v4423 = vpop.f32.mrf.mxu0
  %v4424 = vadd.f32 %v4375, %v4423
  %4425 = vdwg.mxu0
  %v4426 = vpack.c.bf16 %v4389, %v4387
  %v4427 = vpack.c.bf16 %v4394, %v4392
  %v4428 = vpack.c.bf16 %v4399, %v4397
  %v4429 = vpack.c.bf16 %v4404, %v4402
  %v4430 = vpack.c.bf16 %v4409, %v4407
  %v4431 = vpack.c.bf16 %v4414, %v4412
  %v4432 = vpack.c.bf16 %v4419, %v4417
  %v4433 = vpack.c.bf16 %v4424, %v4422
  %s4434 = scalar_lea.vmem %s5, 320
  %v4435 = vld [vmem:[%s4434] sm:$0xf]
  %v4436 = vld [vmem:[%s4434 + $0x4] sm:$0xf]
  %v4437 = vld [vmem:[%s4434 + $0x8] sm:$0xf]
  %v4438 = vld [vmem:[%s4434 + $0xc] sm:$0xf]
  %v4439 = vld [vmem:[%s4434 + $0x10] sm:$0xf]
  %v4440 = vld [vmem:[%s4434 + $0x14] sm:$0xf]
  %v4441 = vld [vmem:[%s4434 + $0x18] sm:$0xf]
  %v4442 = vld [vmem:[%s4434 + $0x1c] sm:$0xf]
  %v4443 = vld [vmem:[%s4434 + $0x20] sm:$0xf]
  %v4444 = vld [vmem:[%s4434 + $0x24] sm:$0xf]
  %v4445 = vld [vmem:[%s4434 + $0x28] sm:$0xf]
  %v4446 = vld [vmem:[%s4434 + $0x2c] sm:$0xf]
  %v4447 = vld [vmem:[%s4434 + $0x30] sm:$0xf]
  %v4448 = vld [vmem:[%s4434 + $0x34] sm:$0xf]
  %v4449 = vld [vmem:[%s4434 + $0x38] sm:$0xf]
  %v4450 = vld [vmem:[%s4434 + $0x3c] sm:$0xf]
  %v4467 = vunpack.c.l.b16 %v4435
  %v4468 = vunpack.c.l.b16 %v4436
  %v4469 = vunpack.c.l.b16 %v4437
  %v4470 = vunpack.c.l.b16 %v4438
  %v4471 = vunpack.c.l.b16 %v4439
  %v4472 = vunpack.c.l.b16 %v4440
  %v4473 = vunpack.c.l.b16 %v4441
  %v4474 = vunpack.c.l.b16 %v4442
  %v4475 = vunpack.c.l.b16 %v4443
  %v4476 = vunpack.c.l.b16 %v4444
  %v4477 = vunpack.c.l.b16 %v4445
  %v4478 = vunpack.c.l.b16 %v4446
  %v4479 = vunpack.c.l.b16 %v4447
  %v4480 = vunpack.c.l.b16 %v4448
  %v4481 = vunpack.c.l.b16 %v4449
  %v4482 = vunpack.c.l.b16 %v4450
  %v4483 = vpack.c.b16 %v4468, %v4467
  %v4484 = vpack.c.b16 %v4470, %v4469
  %v4485 = vpack.c.b16 %v4472, %v4471
  %v4486 = vpack.c.b16 %v4474, %v4473
  %v4487 = vpack.c.b16 %v4476, %v4475
  %v4488 = vpack.c.b16 %v4478, %v4477
  %v4489 = vpack.c.b16 %v4480, %v4479
  %v4490 = vpack.c.b16 %v4482, %v4481
  %4499 = vmatpush.bf16.msra.mxu0 %v4490
  %4500 = vmatpush.bf16.msra.mxu0 %v4489
  %4501 = vmatpush.bf16.msra.mxu0 %v4488
  %4502 = vmatpush.bf16.msra.mxu0 %v4487
  %4503 = vmatpush.bf16.msra.mxu0 %v4486
  %4504 = vmatpush.bf16.msra.mxu0 %v4485
  %4505 = vmatpush.bf16.msra.mxu0 %v4484
  %4506 = vmatpush.bf16.msra.mxu0 %v4483
  %4507 = vmatmul.bf16.gmra.mxu0 %v4426
  %v4508 = vpop.f32.mrf.mxu0
  %v4509 = vadd.f32 0.0, %v4508
  %v4510 = vpop.f32.mrf.mxu0
  %v4511 = vadd.f32 0.0, %v4510
  %4512 = vmatmul.bf16.gmra.mxu0 %v4427
  %v4513 = vpop.f32.mrf.mxu0
  %v4514 = vadd.f32 0.0, %v4513
  %v4515 = vpop.f32.mrf.mxu0
  %v4516 = vadd.f32 0.0, %v4515
  %4517 = vmatmul.bf16.gmra.mxu0 %v4428
  %v4518 = vpop.f32.mrf.mxu0
  %v4519 = vadd.f32 0.0, %v4518
  %v4520 = vpop.f32.mrf.mxu0
  %v4521 = vadd.f32 0.0, %v4520
  %4522 = vmatmul.bf16.gmra.mxu0 %v4429
  %v4523 = vpop.f32.mrf.mxu0
  %v4524 = vadd.f32 0.0, %v4523
  %v4525 = vpop.f32.mrf.mxu0
  %v4526 = vadd.f32 0.0, %v4525
  %4527 = vmatmul.bf16.gmra.mxu0 %v4430
  %v4528 = vpop.f32.mrf.mxu0
  %v4529 = vadd.f32 0.0, %v4528
  %v4530 = vpop.f32.mrf.mxu0
  %v4531 = vadd.f32 0.0, %v4530
  %4532 = vmatmul.bf16.gmra.mxu0 %v4431
  %v4533 = vpop.f32.mrf.mxu0
  %v4534 = vadd.f32 0.0, %v4533
  %v4535 = vpop.f32.mrf.mxu0
  %v4536 = vadd.f32 0.0, %v4535
  %4537 = vmatmul.bf16.gmra.mxu0 %v4432
  %v4538 = vpop.f32.mrf.mxu0
  %v4539 = vadd.f32 0.0, %v4538
  %v4540 = vpop.f32.mrf.mxu0
  %v4541 = vadd.f32 0.0, %v4540
  %4542 = vmatmul.bf16.gmra.mxu0 %v4433
  %v4543 = vpop.f32.mrf.mxu0
  %v4544 = vadd.f32 0.0, %v4543
  %v4545 = vpop.f32.mrf.mxu0
  %v4546 = vadd.f32 0.0, %v4545
  %4547 = vdwg.mxu0
  %v4548 = vadd.f32 %v4021, %v4509
  %v4549 = vadd.f32 %v4022, %v4511
  %v4550 = vadd.f32 %v4023, %v4514
  %v4551 = vadd.f32 %v4024, %v4516
  %v4552 = vadd.f32 %v4025, %v4519
  %v4553 = vadd.f32 %v4026, %v4521
  %v4554 = vadd.f32 %v4027, %v4524
  %v4555 = vadd.f32 %v4028, %v4526
  %v4556 = vadd.f32 %v4029, %v4529
  %v4557 = vadd.f32 %v4030, %v4531
  %v4558 = vadd.f32 %v4031, %v4534
  %v4559 = vadd.f32 %v4032, %v4536
  %v4560 = vadd.f32 %v4033, %v4539
  %v4561 = vadd.f32 %v4034, %v4541
  %v4562 = vadd.f32 %v4035, %v4544
  %v4563 = vadd.f32 %v4036, %v4546
  %s4564 = scalar_lea.vmem %s4, 1536
  %v4565 = vld [vmem:[%s4564] sm:$0xff]
  %v4566 = vld [vmem:[%s4564 + $0x8] sm:$0xff]
  %v4567 = vld [vmem:[%s4564 + $0x10] sm:$0xff]
  %v4568 = vld [vmem:[%s4564 + $0x18] sm:$0xff]
  %v4569 = vld [vmem:[%s4564 + $0x20] sm:$0xff]
  %v4570 = vld [vmem:[%s4564 + $0x28] sm:$0xff]
  %v4571 = vld [vmem:[%s4564 + $0x30] sm:$0xff]
  %v4572 = vld [vmem:[%s4564 + $0x38] sm:$0xff]
  %v4573 = vld [vmem:[%s4564 + $0x40] sm:$0xff]
  %v4574 = vld [vmem:[%s4564 + $0x48] sm:$0xff]
  %v4575 = vld [vmem:[%s4564 + $0x50] sm:$0xff]
  %v4576 = vld [vmem:[%s4564 + $0x58] sm:$0xff]
  %v4577 = vld [vmem:[%s4564 + $0x60] sm:$0xff]
  %v4578 = vld [vmem:[%s4564 + $0x68] sm:$0xff]
  %v4579 = vld [vmem:[%s4564 + $0x70] sm:$0xff]
  %v4580 = vld [vmem:[%s4564 + $0x78] sm:$0xff]
  %v4581 = vld [vmem:[%s4564 + $0x80] sm:$0xff]
  %v4582 = vld [vmem:[%s4564 + $0x88] sm:$0xff]
  %v4583 = vld [vmem:[%s4564 + $0x90] sm:$0xff]
  %v4584 = vld [vmem:[%s4564 + $0x98] sm:$0xff]
  %v4585 = vld [vmem:[%s4564 + $0xa0] sm:$0xff]
  %v4586 = vld [vmem:[%s4564 + $0xa8] sm:$0xff]
  %v4587 = vld [vmem:[%s4564 + $0xb0] sm:$0xff]
  %v4588 = vld [vmem:[%s4564 + $0xb8] sm:$0xff]
  %v4589 = vld [vmem:[%s4564 + $0xc0] sm:$0xff]
  %v4590 = vld [vmem:[%s4564 + $0xc8] sm:$0xff]
  %v4591 = vld [vmem:[%s4564 + $0xd0] sm:$0xff]
  %v4592 = vld [vmem:[%s4564 + $0xd8] sm:$0xff]
  %v4593 = vld [vmem:[%s4564 + $0xe0] sm:$0xff]
  %v4594 = vld [vmem:[%s4564 + $0xe8] sm:$0xff]
  %v4595 = vld [vmem:[%s4564 + $0xf0] sm:$0xff]
  %v4596 = vld [vmem:[%s4564 + $0xf8] sm:$0xff]
  %v4629 = vunpack.c.l.b16 %v4565
  %v4630 = vunpack.c.h.b16 %v4565
  %v4631 = vunpack.c.l.b16 %v4566
  %v4632 = vunpack.c.h.b16 %v4566
  %v4633 = vunpack.c.l.b16 %v4567
  %v4634 = vunpack.c.h.b16 %v4567
  %v4635 = vunpack.c.l.b16 %v4568
  %v4636 = vunpack.c.h.b16 %v4568
  %v4637 = vunpack.c.l.b16 %v4569
  %v4638 = vunpack.c.h.b16 %v4569
  %v4639 = vunpack.c.l.b16 %v4570
  %v4640 = vunpack.c.h.b16 %v4570
  %v4641 = vunpack.c.l.b16 %v4571
  %v4642 = vunpack.c.h.b16 %v4571
  %v4643 = vunpack.c.l.b16 %v4572
  %v4644 = vunpack.c.h.b16 %v4572
  %v4645 = vunpack.c.l.b16 %v4573
  %v4646 = vunpack.c.h.b16 %v4573
  %v4647 = vunpack.c.l.b16 %v4574
  %v4648 = vunpack.c.h.b16 %v4574
  %v4649 = vunpack.c.l.b16 %v4575
  %v4650 = vunpack.c.h.b16 %v4575
  %v4651 = vunpack.c.l.b16 %v4576
  %v4652 = vunpack.c.h.b16 %v4576
  %v4653 = vunpack.c.l.b16 %v4577
  %v4654 = vunpack.c.h.b16 %v4577
  %v4655 = vunpack.c.l.b16 %v4578
  %v4656 = vunpack.c.h.b16 %v4578
  %v4657 = vunpack.c.l.b16 %v4579
  %v4658 = vunpack.c.h.b16 %v4579
  %v4659 = vunpack.c.l.b16 %v4580
  %v4660 = vunpack.c.h.b16 %v4580
  %v4661 = vunpack.c.l.b16 %v4581
  %v4662 = vunpack.c.h.b16 %v4581
  %v4663 = vunpack.c.l.b16 %v4582
  %v4664 = vunpack.c.h.b16 %v4582
  %v4665 = vunpack.c.l.b16 %v4583
  %v4666 = vunpack.c.h.b16 %v4583
  %v4667 = vunpack.c.l.b16 %v4584
  %v4668 = vunpack.c.h.b16 %v4584
  %v4669 = vunpack.c.l.b16 %v4585
  %v4670 = vunpack.c.h.b16 %v4585
  %v4671 = vunpack.c.l.b16 %v4586
  %v4672 = vunpack.c.h.b16 %v4586
  %v4673 = vunpack.c.l.b16 %v4587
  %v4674 = vunpack.c.h.b16 %v4587
  %v4675 = vunpack.c.l.b16 %v4588
  %v4676 = vunpack.c.h.b16 %v4588
  %v4677 = vunpack.c.l.b16 %v4589
  %v4678 = vunpack.c.h.b16 %v4589
  %v4679 = vunpack.c.l.b16 %v4590
  %v4680 = vunpack.c.h.b16 %v4590
  %v4681 = vunpack.c.l.b16 %v4591
  %v4682 = vunpack.c.h.b16 %v4591
  %v4683 = vunpack.c.l.b16 %v4592
  %v4684 = vunpack.c.h.b16 %v4592
  %v4685 = vunpack.c.l.b16 %v4593
  %v4686 = vunpack.c.h.b16 %v4593
  %v4687 = vunpack.c.l.b16 %v4594
  %v4688 = vunpack.c.h.b16 %v4594
  %v4689 = vunpack.c.l.b16 %v4595
  %v4690 = vunpack.c.h.b16 %v4595
  %v4691 = vunpack.c.l.b16 %v4596
  %v4692 = vunpack.c.h.b16 %v4596
  %v4693 = vpack.c.b16 %v4633, %v4629
  %v4694 = vpack.c.b16 %v4634, %v4630
  %v4695 = vpack.c.b16 %v4635, %v4631
  %v4696 = vpack.c.b16 %v4636, %v4632
  %v4697 = vpack.c.b16 %v4641, %v4637
  %v4698 = vpack.c.b16 %v4642, %v4638
  %v4699 = vpack.c.b16 %v4643, %v4639
  %v4700 = vpack.c.b16 %v4644, %v4640
  %v4701 = vpack.c.b16 %v4649, %v4645
  %v4702 = vpack.c.b16 %v4650, %v4646
  %v4703 = vpack.c.b16 %v4651, %v4647
  %v4704 = vpack.c.b16 %v4652, %v4648
  %v4705 = vpack.c.b16 %v4657, %v4653
  %v4706 = vpack.c.b16 %v4658, %v4654
  %v4707 = vpack.c.b16 %v4659, %v4655
  %v4708 = vpack.c.b16 %v4660, %v4656
  %v4709 = vpack.c.b16 %v4665, %v4661
  %v4710 = vpack.c.b16 %v4666, %v4662
  %v4711 = vpack.c.b16 %v4667, %v4663
  %v4712 = vpack.c.b16 %v4668, %v4664
  %v4713 = vpack.c.b16 %v4673, %v4669
  %v4714 = vpack.c.b16 %v4674, %v4670
  %v4715 = vpack.c.b16 %v4675, %v4671
  %v4716 = vpack.c.b16 %v4676, %v4672
  %v4717 = vpack.c.b16 %v4681, %v4677
  %v4718 = vpack.c.b16 %v4682, %v4678
  %v4719 = vpack.c.b16 %v4683, %v4679
  %v4720 = vpack.c.b16 %v4684, %v4680
  %v4721 = vpack.c.b16 %v4689, %v4685
  %v4722 = vpack.c.b16 %v4690, %v4686
  %v4723 = vpack.c.b16 %v4691, %v4687
  %v4724 = vpack.c.b16 %v4692, %v4688
  %4757 = vmatpush.bf16.msra.mxu0 %v1411
  %4758 = vmatpush.bf16.msra.mxu0 %v1410
  %4759 = vmatpush.bf16.msra.mxu0 %v1409
  %4760 = vmatpush.bf16.msra.mxu0 %v1408
  %4761 = vmatpush.bf16.msra.mxu0 %v1407
  %4762 = vmatpush.bf16.msra.mxu0 %v1406
  %4763 = vmatpush.bf16.msra.mxu0 %v1405
  %4764 = vmatpush.bf16.msra.mxu0 %v1404
  %4765 = vmatmul.bf16.gmra.mxu0 %v4693
  %v4766 = vpop.f32.mrf.mxu0
  %v4767 = vadd.f32 0.0, %v4766
  %v4768 = vpop.f32.mrf.mxu0
  %v4769 = vadd.f32 0.0, %v4768
  %4770 = vmatmul.bf16.gmra.mxu0 %v4697
  %v4771 = vpop.f32.mrf.mxu0
  %v4772 = vadd.f32 0.0, %v4771
  %v4773 = vpop.f32.mrf.mxu0
  %v4774 = vadd.f32 0.0, %v4773
  %4775 = vmatmul.bf16.gmra.mxu0 %v4701
  %v4776 = vpop.f32.mrf.mxu0
  %v4777 = vadd.f32 0.0, %v4776
  %v4778 = vpop.f32.mrf.mxu0
  %v4779 = vadd.f32 0.0, %v4778
  %4780 = vmatmul.bf16.gmra.mxu0 %v4705
  %v4781 = vpop.f32.mrf.mxu0
  %v4782 = vadd.f32 0.0, %v4781
  %v4783 = vpop.f32.mrf.mxu0
  %v4784 = vadd.f32 0.0, %v4783
  %4785 = vmatmul.bf16.gmra.mxu0 %v4709
  %v4786 = vpop.f32.mrf.mxu0
  %v4787 = vadd.f32 0.0, %v4786
  %v4788 = vpop.f32.mrf.mxu0
  %v4789 = vadd.f32 0.0, %v4788
  %4790 = vmatmul.bf16.gmra.mxu0 %v4713
  %v4791 = vpop.f32.mrf.mxu0
  %v4792 = vadd.f32 0.0, %v4791
  %v4793 = vpop.f32.mrf.mxu0
  %v4794 = vadd.f32 0.0, %v4793
  %4795 = vmatmul.bf16.gmra.mxu0 %v4717
  %v4796 = vpop.f32.mrf.mxu0
  %v4797 = vadd.f32 0.0, %v4796
  %v4798 = vpop.f32.mrf.mxu0
  %v4799 = vadd.f32 0.0, %v4798
  %4800 = vmatmul.bf16.gmra.mxu0 %v4721
  %v4801 = vpop.f32.mrf.mxu0
  %v4802 = vadd.f32 0.0, %v4801
  %v4803 = vpop.f32.mrf.mxu0
  %v4804 = vadd.f32 0.0, %v4803
  %4805 = vdwg.mxu0
  %4806 = vmatpush.bf16.msra.mxu0 %v1419
  %4807 = vmatpush.bf16.msra.mxu0 %v1418
  %4808 = vmatpush.bf16.msra.mxu0 %v1417
  %4809 = vmatpush.bf16.msra.mxu0 %v1416
  %4810 = vmatpush.bf16.msra.mxu0 %v1415
  %4811 = vmatpush.bf16.msra.mxu0 %v1414
  %4812 = vmatpush.bf16.msra.mxu0 %v1413
  %4813 = vmatpush.bf16.msra.mxu0 %v1412
  %4814 = vmatmul.bf16.gmra.mxu0 %v4694
  %v4815 = vpop.f32.mrf.mxu0
  %v4816 = vadd.f32 %v4767, %v4815
  %v4817 = vpop.f32.mrf.mxu0
  %v4818 = vadd.f32 %v4769, %v4817
  %4819 = vmatmul.bf16.gmra.mxu0 %v4698
  %v4820 = vpop.f32.mrf.mxu0
  %v4821 = vadd.f32 %v4772, %v4820
  %v4822 = vpop.f32.mrf.mxu0
  %v4823 = vadd.f32 %v4774, %v4822
  %4824 = vmatmul.bf16.gmra.mxu0 %v4702
  %v4825 = vpop.f32.mrf.mxu0
  %v4826 = vadd.f32 %v4777, %v4825
  %v4827 = vpop.f32.mrf.mxu0
  %v4828 = vadd.f32 %v4779, %v4827
  %4829 = vmatmul.bf16.gmra.mxu0 %v4706
  %v4830 = vpop.f32.mrf.mxu0
  %v4831 = vadd.f32 %v4782, %v4830
  %v4832 = vpop.f32.mrf.mxu0
  %v4833 = vadd.f32 %v4784, %v4832
  %4834 = vmatmul.bf16.gmra.mxu0 %v4710
  %v4835 = vpop.f32.mrf.mxu0
  %v4836 = vadd.f32 %v4787, %v4835
  %v4837 = vpop.f32.mrf.mxu0
  %v4838 = vadd.f32 %v4789, %v4837
  %4839 = vmatmul.bf16.gmra.mxu0 %v4714
  %v4840 = vpop.f32.mrf.mxu0
  %v4841 = vadd.f32 %v4792, %v4840
  %v4842 = vpop.f32.mrf.mxu0
  %v4843 = vadd.f32 %v4794, %v4842
  %4844 = vmatmul.bf16.gmra.mxu0 %v4718
  %v4845 = vpop.f32.mrf.mxu0
  %v4846 = vadd.f32 %v4797, %v4845
  %v4847 = vpop.f32.mrf.mxu0
  %v4848 = vadd.f32 %v4799, %v4847
  %4849 = vmatmul.bf16.gmra.mxu0 %v4722
  %v4850 = vpop.f32.mrf.mxu0
  %v4851 = vadd.f32 %v4802, %v4850
  %v4852 = vpop.f32.mrf.mxu0
  %v4853 = vadd.f32 %v4804, %v4852
  %4854 = vdwg.mxu0
  %4855 = vmatpush.bf16.msra.mxu0 %v1427
  %4856 = vmatpush.bf16.msra.mxu0 %v1426
  %4857 = vmatpush.bf16.msra.mxu0 %v1425
  %4858 = vmatpush.bf16.msra.mxu0 %v1424
  %4859 = vmatpush.bf16.msra.mxu0 %v1423
  %4860 = vmatpush.bf16.msra.mxu0 %v1422
  %4861 = vmatpush.bf16.msra.mxu0 %v1421
  %4862 = vmatpush.bf16.msra.mxu0 %v1420
  %4863 = vmatmul.bf16.gmra.mxu0 %v4695
  %v4864 = vpop.f32.mrf.mxu0
  %v4865 = vadd.f32 %v4816, %v4864
  %v4866 = vpop.f32.mrf.mxu0
  %v4867 = vadd.f32 %v4818, %v4866
  %4868 = vmatmul.bf16.gmra.mxu0 %v4699
  %v4869 = vpop.f32.mrf.mxu0
  %v4870 = vadd.f32 %v4821, %v4869
  %v4871 = vpop.f32.mrf.mxu0
  %v4872 = vadd.f32 %v4823, %v4871
  %4873 = vmatmul.bf16.gmra.mxu0 %v4703
  %v4874 = vpop.f32.mrf.mxu0
  %v4875 = vadd.f32 %v4826, %v4874
  %v4876 = vpop.f32.mrf.mxu0
  %v4877 = vadd.f32 %v4828, %v4876
  %4878 = vmatmul.bf16.gmra.mxu0 %v4707
  %v4879 = vpop.f32.mrf.mxu0
  %v4880 = vadd.f32 %v4831, %v4879
  %v4881 = vpop.f32.mrf.mxu0
  %v4882 = vadd.f32 %v4833, %v4881
  %4883 = vmatmul.bf16.gmra.mxu0 %v4711
  %v4884 = vpop.f32.mrf.mxu0
  %v4885 = vadd.f32 %v4836, %v4884
  %v4886 = vpop.f32.mrf.mxu0
  %v4887 = vadd.f32 %v4838, %v4886
  %4888 = vmatmul.bf16.gmra.mxu0 %v4715
  %v4889 = vpop.f32.mrf.mxu0
  %v4890 = vadd.f32 %v4841, %v4889
  %v4891 = vpop.f32.mrf.mxu0
  %v4892 = vadd.f32 %v4843, %v4891
  %4893 = vmatmul.bf16.gmra.mxu0 %v4719
  %v4894 = vpop.f32.mrf.mxu0
  %v4895 = vadd.f32 %v4846, %v4894
  %v4896 = vpop.f32.mrf.mxu0
  %v4897 = vadd.f32 %v4848, %v4896
  %4898 = vmatmul.bf16.gmra.mxu0 %v4723
  %v4899 = vpop.f32.mrf.mxu0
  %v4900 = vadd.f32 %v4851, %v4899
  %v4901 = vpop.f32.mrf.mxu0
  %v4902 = vadd.f32 %v4853, %v4901
  %4903 = vdwg.mxu0
  %4904 = vmatpush.bf16.msra.mxu0 %v1435
  %4905 = vmatpush.bf16.msra.mxu0 %v1434
  %4906 = vmatpush.bf16.msra.mxu0 %v1433
  %4907 = vmatpush.bf16.msra.mxu0 %v1432
  %4908 = vmatpush.bf16.msra.mxu0 %v1431
  %4909 = vmatpush.bf16.msra.mxu0 %v1430
  %4910 = vmatpush.bf16.msra.mxu0 %v1429
  %4911 = vmatpush.bf16.msra.mxu0 %v1428
  %4912 = vmatmul.bf16.gmra.mxu0 %v4696
  %v4913 = vpop.f32.mrf.mxu0
  %v4914 = vadd.f32 %v4865, %v4913
  %v4915 = vpop.f32.mrf.mxu0
  %v4916 = vadd.f32 %v4867, %v4915
  %4917 = vmatmul.bf16.gmra.mxu0 %v4700
  %v4918 = vpop.f32.mrf.mxu0
  %v4919 = vadd.f32 %v4870, %v4918
  %v4920 = vpop.f32.mrf.mxu0
  %v4921 = vadd.f32 %v4872, %v4920
  %4922 = vmatmul.bf16.gmra.mxu0 %v4704
  %v4923 = vpop.f32.mrf.mxu0
  %v4924 = vadd.f32 %v4875, %v4923
  %v4925 = vpop.f32.mrf.mxu0
  %v4926 = vadd.f32 %v4877, %v4925
  %4927 = vmatmul.bf16.gmra.mxu0 %v4708
  %v4928 = vpop.f32.mrf.mxu0
  %v4929 = vadd.f32 %v4880, %v4928
  %v4930 = vpop.f32.mrf.mxu0
  %v4931 = vadd.f32 %v4882, %v4930
  %4932 = vmatmul.bf16.gmra.mxu0 %v4712
  %v4933 = vpop.f32.mrf.mxu0
  %v4934 = vadd.f32 %v4885, %v4933
  %v4935 = vpop.f32.mrf.mxu0
  %v4936 = vadd.f32 %v4887, %v4935
  %4937 = vmatmul.bf16.gmra.mxu0 %v4716
  %v4938 = vpop.f32.mrf.mxu0
  %v4939 = vadd.f32 %v4890, %v4938
  %v4940 = vpop.f32.mrf.mxu0
  %v4941 = vadd.f32 %v4892, %v4940
  %4942 = vmatmul.bf16.gmra.mxu0 %v4720
  %v4943 = vpop.f32.mrf.mxu0
  %v4944 = vadd.f32 %v4895, %v4943
  %v4945 = vpop.f32.mrf.mxu0
  %v4946 = vadd.f32 %v4897, %v4945
  %4947 = vmatmul.bf16.gmra.mxu0 %v4724
  %v4948 = vpop.f32.mrf.mxu0
  %v4949 = vadd.f32 %v4900, %v4948
  %v4950 = vpop.f32.mrf.mxu0
  %v4951 = vadd.f32 %v4902, %v4950
  %4952 = vdwg.mxu0
  %v4953 = vpack.c.bf16 %v4916, %v4914
  %v4954 = vpack.c.bf16 %v4921, %v4919
  %v4955 = vpack.c.bf16 %v4926, %v4924
  %v4956 = vpack.c.bf16 %v4931, %v4929
  %v4957 = vpack.c.bf16 %v4936, %v4934
  %v4958 = vpack.c.bf16 %v4941, %v4939
  %v4959 = vpack.c.bf16 %v4946, %v4944
  %v4960 = vpack.c.bf16 %v4951, %v4949
  %s4961 = scalar_lea.vmem %s5, 384
  %v4962 = vld [vmem:[%s4961] sm:$0xf]
  %v4963 = vld [vmem:[%s4961 + $0x4] sm:$0xf]
  %v4964 = vld [vmem:[%s4961 + $0x8] sm:$0xf]
  %v4965 = vld [vmem:[%s4961 + $0xc] sm:$0xf]
  %v4966 = vld [vmem:[%s4961 + $0x10] sm:$0xf]
  %v4967 = vld [vmem:[%s4961 + $0x14] sm:$0xf]
  %v4968 = vld [vmem:[%s4961 + $0x18] sm:$0xf]
  %v4969 = vld [vmem:[%s4961 + $0x1c] sm:$0xf]
  %v4970 = vld [vmem:[%s4961 + $0x20] sm:$0xf]
  %v4971 = vld [vmem:[%s4961 + $0x24] sm:$0xf]
  %v4972 = vld [vmem:[%s4961 + $0x28] sm:$0xf]
  %v4973 = vld [vmem:[%s4961 + $0x2c] sm:$0xf]
  %v4974 = vld [vmem:[%s4961 + $0x30] sm:$0xf]
  %v4975 = vld [vmem:[%s4961 + $0x34] sm:$0xf]
  %v4976 = vld [vmem:[%s4961 + $0x38] sm:$0xf]
  %v4977 = vld [vmem:[%s4961 + $0x3c] sm:$0xf]
  %v4994 = vunpack.c.l.b16 %v4962
  %v4995 = vunpack.c.l.b16 %v4963
  %v4996 = vunpack.c.l.b16 %v4964
  %v4997 = vunpack.c.l.b16 %v4965
  %v4998 = vunpack.c.l.b16 %v4966
  %v4999 = vunpack.c.l.b16 %v4967
  %v5000 = vunpack.c.l.b16 %v4968
  %v5001 = vunpack.c.l.b16 %v4969
  %v5002 = vunpack.c.l.b16 %v4970
  %v5003 = vunpack.c.l.b16 %v4971
  %v5004 = vunpack.c.l.b16 %v4972
  %v5005 = vunpack.c.l.b16 %v4973
  %v5006 = vunpack.c.l.b16 %v4974
  %v5007 = vunpack.c.l.b16 %v4975
  %v5008 = vunpack.c.l.b16 %v4976
  %v5009 = vunpack.c.l.b16 %v4977
  %v5010 = vpack.c.b16 %v4995, %v4994
  %v5011 = vpack.c.b16 %v4997, %v4996
  %v5012 = vpack.c.b16 %v4999, %v4998
  %v5013 = vpack.c.b16 %v5001, %v5000
  %v5014 = vpack.c.b16 %v5003, %v5002
  %v5015 = vpack.c.b16 %v5005, %v5004
  %v5016 = vpack.c.b16 %v5007, %v5006
  %v5017 = vpack.c.b16 %v5009, %v5008
  %5026 = vmatpush.bf16.msra.mxu0 %v5017
  %5027 = vmatpush.bf16.msra.mxu0 %v5016
  %5028 = vmatpush.bf16.msra.mxu0 %v5015
  %5029 = vmatpush.bf16.msra.mxu0 %v5014
  %5030 = vmatpush.bf16.msra.mxu0 %v5013
  %5031 = vmatpush.bf16.msra.mxu0 %v5012
  %5032 = vmatpush.bf16.msra.mxu0 %v5011
  %5033 = vmatpush.bf16.msra.mxu0 %v5010
  %5034 = vmatmul.bf16.gmra.mxu0 %v4953
  %v5035 = vpop.f32.mrf.mxu0
  %v5036 = vadd.f32 0.0, %v5035
  %v5037 = vpop.f32.mrf.mxu0
  %v5038 = vadd.f32 0.0, %v5037
  %5039 = vmatmul.bf16.gmra.mxu0 %v4954
  %v5040 = vpop.f32.mrf.mxu0
  %v5041 = vadd.f32 0.0, %v5040
  %v5042 = vpop.f32.mrf.mxu0
  %v5043 = vadd.f32 0.0, %v5042
  %5044 = vmatmul.bf16.gmra.mxu0 %v4955
  %v5045 = vpop.f32.mrf.mxu0
  %v5046 = vadd.f32 0.0, %v5045
  %v5047 = vpop.f32.mrf.mxu0
  %v5048 = vadd.f32 0.0, %v5047
  %5049 = vmatmul.bf16.gmra.mxu0 %v4956
  %v5050 = vpop.f32.mrf.mxu0
  %v5051 = vadd.f32 0.0, %v5050
  %v5052 = vpop.f32.mrf.mxu0
  %v5053 = vadd.f32 0.0, %v5052
  %5054 = vmatmul.bf16.gmra.mxu0 %v4957
  %v5055 = vpop.f32.mrf.mxu0
  %v5056 = vadd.f32 0.0, %v5055
  %v5057 = vpop.f32.mrf.mxu0
  %v5058 = vadd.f32 0.0, %v5057
  %5059 = vmatmul.bf16.gmra.mxu0 %v4958
  %v5060 = vpop.f32.mrf.mxu0
  %v5061 = vadd.f32 0.0, %v5060
  %v5062 = vpop.f32.mrf.mxu0
  %v5063 = vadd.f32 0.0, %v5062
  %5064 = vmatmul.bf16.gmra.mxu0 %v4959
  %v5065 = vpop.f32.mrf.mxu0
  %v5066 = vadd.f32 0.0, %v5065
  %v5067 = vpop.f32.mrf.mxu0
  %v5068 = vadd.f32 0.0, %v5067
  %5069 = vmatmul.bf16.gmra.mxu0 %v4960
  %v5070 = vpop.f32.mrf.mxu0
  %v5071 = vadd.f32 0.0, %v5070
  %v5072 = vpop.f32.mrf.mxu0
  %v5073 = vadd.f32 0.0, %v5072
  %5074 = vdwg.mxu0
  %v5075 = vadd.f32 %v4548, %v5036
  %v5076 = vadd.f32 %v4549, %v5038
  %v5077 = vadd.f32 %v4550, %v5041
  %v5078 = vadd.f32 %v4551, %v5043
  %v5079 = vadd.f32 %v4552, %v5046
  %v5080 = vadd.f32 %v4553, %v5048
  %v5081 = vadd.f32 %v4554, %v5051
  %v5082 = vadd.f32 %v4555, %v5053
  %v5083 = vadd.f32 %v4556, %v5056
  %v5084 = vadd.f32 %v4557, %v5058
  %v5085 = vadd.f32 %v4558, %v5061
  %v5086 = vadd.f32 %v4559, %v5063
  %v5087 = vadd.f32 %v4560, %v5066
  %v5088 = vadd.f32 %v4561, %v5068
  %v5089 = vadd.f32 %v4562, %v5071
  %v5090 = vadd.f32 %v4563, %v5073
  %s5091 = scalar_lea.vmem %s4, 1792
  %v5092 = vld [vmem:[%s5091] sm:$0xff]
  %v5093 = vld [vmem:[%s5091 + $0x8] sm:$0xff]
  %v5094 = vld [vmem:[%s5091 + $0x10] sm:$0xff]
  %v5095 = vld [vmem:[%s5091 + $0x18] sm:$0xff]
  %v5096 = vld [vmem:[%s5091 + $0x20] sm:$0xff]
  %v5097 = vld [vmem:[%s5091 + $0x28] sm:$0xff]
  %v5098 = vld [vmem:[%s5091 + $0x30] sm:$0xff]
  %v5099 = vld [vmem:[%s5091 + $0x38] sm:$0xff]
  %v5100 = vld [vmem:[%s5091 + $0x40] sm:$0xff]
  %v5101 = vld [vmem:[%s5091 + $0x48] sm:$0xff]
  %v5102 = vld [vmem:[%s5091 + $0x50] sm:$0xff]
  %v5103 = vld [vmem:[%s5091 + $0x58] sm:$0xff]
  %v5104 = vld [vmem:[%s5091 + $0x60] sm:$0xff]
  %v5105 = vld [vmem:[%s5091 + $0x68] sm:$0xff]
  %v5106 = vld [vmem:[%s5091 + $0x70] sm:$0xff]
  %v5107 = vld [vmem:[%s5091 + $0x78] sm:$0xff]
  %v5108 = vld [vmem:[%s5091 + $0x80] sm:$0xff]
  %v5109 = vld [vmem:[%s5091 + $0x88] sm:$0xff]
  %v5110 = vld [vmem:[%s5091 + $0x90] sm:$0xff]
  %v5111 = vld [vmem:[%s5091 + $0x98] sm:$0xff]
  %v5112 = vld [vmem:[%s5091 + $0xa0] sm:$0xff]
  %v5113 = vld [vmem:[%s5091 + $0xa8] sm:$0xff]
  %v5114 = vld [vmem:[%s5091 + $0xb0] sm:$0xff]
  %v5115 = vld [vmem:[%s5091 + $0xb8] sm:$0xff]
  %v5116 = vld [vmem:[%s5091 + $0xc0] sm:$0xff]
  %v5117 = vld [vmem:[%s5091 + $0xc8] sm:$0xff]
  %v5118 = vld [vmem:[%s5091 + $0xd0] sm:$0xff]
  %v5119 = vld [vmem:[%s5091 + $0xd8] sm:$0xff]
  %v5120 = vld [vmem:[%s5091 + $0xe0] sm:$0xff]
  %v5121 = vld [vmem:[%s5091 + $0xe8] sm:$0xff]
  %v5122 = vld [vmem:[%s5091 + $0xf0] sm:$0xff]
  %v5123 = vld [vmem:[%s5091 + $0xf8] sm:$0xff]
  %v5156 = vunpack.c.l.b16 %v5092
  %v5157 = vunpack.c.h.b16 %v5092
  %v5158 = vunpack.c.l.b16 %v5093
  %v5159 = vunpack.c.h.b16 %v5093
  %v5160 = vunpack.c.l.b16 %v5094
  %v5161 = vunpack.c.h.b16 %v5094
  %v5162 = vunpack.c.l.b16 %v5095
  %v5163 = vunpack.c.h.b16 %v5095
  %v5164 = vunpack.c.l.b16 %v5096
  %v5165 = vunpack.c.h.b16 %v5096
  %v5166 = vunpack.c.l.b16 %v5097
  %v5167 = vunpack.c.h.b16 %v5097
  %v5168 = vunpack.c.l.b16 %v5098
  %v5169 = vunpack.c.h.b16 %v5098
  %v5170 = vunpack.c.l.b16 %v5099
  %v5171 = vunpack.c.h.b16 %v5099
  %v5172 = vunpack.c.l.b16 %v5100
  %v5173 = vunpack.c.h.b16 %v5100
  %v5174 = vunpack.c.l.b16 %v5101
  %v5175 = vunpack.c.h.b16 %v5101
  %v5176 = vunpack.c.l.b16 %v5102
  %v5177 = vunpack.c.h.b16 %v5102
  %v5178 = vunpack.c.l.b16 %v5103
  %v5179 = vunpack.c.h.b16 %v5103
  %v5180 = vunpack.c.l.b16 %v5104
  %v5181 = vunpack.c.h.b16 %v5104
  %v5182 = vunpack.c.l.b16 %v5105
  %v5183 = vunpack.c.h.b16 %v5105
  %v5184 = vunpack.c.l.b16 %v5106
  %v5185 = vunpack.c.h.b16 %v5106
  %v5186 = vunpack.c.l.b16 %v5107
  %v5187 = vunpack.c.h.b16 %v5107
  %v5188 = vunpack.c.l.b16 %v5108
  %v5189 = vunpack.c.h.b16 %v5108
  %v5190 = vunpack.c.l.b16 %v5109
  %v5191 = vunpack.c.h.b16 %v5109
  %v5192 = vunpack.c.l.b16 %v5110
  %v5193 = vunpack.c.h.b16 %v5110
  %v5194 = vunpack.c.l.b16 %v5111
  %v5195 = vunpack.c.h.b16 %v5111
  %v5196 = vunpack.c.l.b16 %v5112
  %v5197 = vunpack.c.h.b16 %v5112
  %v5198 = vunpack.c.l.b16 %v5113
  %v5199 = vunpack.c.h.b16 %v5113
  %v5200 = vunpack.c.l.b16 %v5114
  %v5201 = vunpack.c.h.b16 %v5114
  %v5202 = vunpack.c.l.b16 %v5115
  %v5203 = vunpack.c.h.b16 %v5115
  %v5204 = vunpack.c.l.b16 %v5116
  %v5205 = vunpack.c.h.b16 %v5116
  %v5206 = vunpack.c.l.b16 %v5117
  %v5207 = vunpack.c.h.b16 %v5117
  %v5208 = vunpack.c.l.b16 %v5118
  %v5209 = vunpack.c.h.b16 %v5118
  %v5210 = vunpack.c.l.b16 %v5119
  %v5211 = vunpack.c.h.b16 %v5119
  %v5212 = vunpack.c.l.b16 %v5120
  %v5213 = vunpack.c.h.b16 %v5120
  %v5214 = vunpack.c.l.b16 %v5121
  %v5215 = vunpack.c.h.b16 %v5121
  %v5216 = vunpack.c.l.b16 %v5122
  %v5217 = vunpack.c.h.b16 %v5122
  %v5218 = vunpack.c.l.b16 %v5123
  %v5219 = vunpack.c.h.b16 %v5123
  %v5220 = vpack.c.b16 %v5160, %v5156
  %v5221 = vpack.c.b16 %v5161, %v5157
  %v5222 = vpack.c.b16 %v5162, %v5158
  %v5223 = vpack.c.b16 %v5163, %v5159
  %v5224 = vpack.c.b16 %v5168, %v5164
  %v5225 = vpack.c.b16 %v5169, %v5165
  %v5226 = vpack.c.b16 %v5170, %v5166
  %v5227 = vpack.c.b16 %v5171, %v5167
  %v5228 = vpack.c.b16 %v5176, %v5172
  %v5229 = vpack.c.b16 %v5177, %v5173
  %v5230 = vpack.c.b16 %v5178, %v5174
  %v5231 = vpack.c.b16 %v5179, %v5175
  %v5232 = vpack.c.b16 %v5184, %v5180
  %v5233 = vpack.c.b16 %v5185, %v5181
  %v5234 = vpack.c.b16 %v5186, %v5182
  %v5235 = vpack.c.b16 %v5187, %v5183
  %v5236 = vpack.c.b16 %v5192, %v5188
  %v5237 = vpack.c.b16 %v5193, %v5189
  %v5238 = vpack.c.b16 %v5194, %v5190
  %v5239 = vpack.c.b16 %v5195, %v5191
  %v5240 = vpack.c.b16 %v5200, %v5196
  %v5241 = vpack.c.b16 %v5201, %v5197
  %v5242 = vpack.c.b16 %v5202, %v5198
  %v5243 = vpack.c.b16 %v5203, %v5199
  %v5244 = vpack.c.b16 %v5208, %v5204
  %v5245 = vpack.c.b16 %v5209, %v5205
  %v5246 = vpack.c.b16 %v5210, %v5206
  %v5247 = vpack.c.b16 %v5211, %v5207
  %v5248 = vpack.c.b16 %v5216, %v5212
  %v5249 = vpack.c.b16 %v5217, %v5213
  %v5250 = vpack.c.b16 %v5218, %v5214
  %v5251 = vpack.c.b16 %v5219, %v5215
  %5284 = vmatpush.bf16.msra.mxu0 %v1411
  %5285 = vmatpush.bf16.msra.mxu0 %v1410
  %5286 = vmatpush.bf16.msra.mxu0 %v1409
  %5287 = vmatpush.bf16.msra.mxu0 %v1408
  %5288 = vmatpush.bf16.msra.mxu0 %v1407
  %5289 = vmatpush.bf16.msra.mxu0 %v1406
  %5290 = vmatpush.bf16.msra.mxu0 %v1405
  %5291 = vmatpush.bf16.msra.mxu0 %v1404
  %5292 = vmatmul.bf16.gmra.mxu0 %v5220
  %v5293 = vpop.f32.mrf.mxu0
  %v5294 = vadd.f32 0.0, %v5293
  %v5295 = vpop.f32.mrf.mxu0
  %v5296 = vadd.f32 0.0, %v5295
  %5297 = vmatmul.bf16.gmra.mxu0 %v5224
  %v5298 = vpop.f32.mrf.mxu0
  %v5299 = vadd.f32 0.0, %v5298
  %v5300 = vpop.f32.mrf.mxu0
  %v5301 = vadd.f32 0.0, %v5300
  %5302 = vmatmul.bf16.gmra.mxu0 %v5228
  %v5303 = vpop.f32.mrf.mxu0
  %v5304 = vadd.f32 0.0, %v5303
  %v5305 = vpop.f32.mrf.mxu0
  %v5306 = vadd.f32 0.0, %v5305
  %5307 = vmatmul.bf16.gmra.mxu0 %v5232
  %v5308 = vpop.f32.mrf.mxu0
  %v5309 = vadd.f32 0.0, %v5308
  %v5310 = vpop.f32.mrf.mxu0
  %v5311 = vadd.f32 0.0, %v5310
  %5312 = vmatmul.bf16.gmra.mxu0 %v5236
  %v5313 = vpop.f32.mrf.mxu0
  %v5314 = vadd.f32 0.0, %v5313
  %v5315 = vpop.f32.mrf.mxu0
  %v5316 = vadd.f32 0.0, %v5315
  %5317 = vmatmul.bf16.gmra.mxu0 %v5240
  %v5318 = vpop.f32.mrf.mxu0
  %v5319 = vadd.f32 0.0, %v5318
  %v5320 = vpop.f32.mrf.mxu0
  %v5321 = vadd.f32 0.0, %v5320
  %5322 = vmatmul.bf16.gmra.mxu0 %v5244
  %v5323 = vpop.f32.mrf.mxu0
  %v5324 = vadd.f32 0.0, %v5323
  %v5325 = vpop.f32.mrf.mxu0
  %v5326 = vadd.f32 0.0, %v5325
  %5327 = vmatmul.bf16.gmra.mxu0 %v5248
  %v5328 = vpop.f32.mrf.mxu0
  %v5329 = vadd.f32 0.0, %v5328
  %v5330 = vpop.f32.mrf.mxu0
  %v5331 = vadd.f32 0.0, %v5330
  %5332 = vdwg.mxu0
  %5333 = vmatpush.bf16.msra.mxu0 %v1419
  %5334 = vmatpush.bf16.msra.mxu0 %v1418
  %5335 = vmatpush.bf16.msra.mxu0 %v1417
  %5336 = vmatpush.bf16.msra.mxu0 %v1416
  %5337 = vmatpush.bf16.msra.mxu0 %v1415
  %5338 = vmatpush.bf16.msra.mxu0 %v1414
  %5339 = vmatpush.bf16.msra.mxu0 %v1413
  %5340 = vmatpush.bf16.msra.mxu0 %v1412
  %5341 = vmatmul.bf16.gmra.mxu0 %v5221
  %v5342 = vpop.f32.mrf.mxu0
  %v5343 = vadd.f32 %v5294, %v5342
  %v5344 = vpop.f32.mrf.mxu0
  %v5345 = vadd.f32 %v5296, %v5344
  %5346 = vmatmul.bf16.gmra.mxu0 %v5225
  %v5347 = vpop.f32.mrf.mxu0
  %v5348 = vadd.f32 %v5299, %v5347
  %v5349 = vpop.f32.mrf.mxu0
  %v5350 = vadd.f32 %v5301, %v5349
  %5351 = vmatmul.bf16.gmra.mxu0 %v5229
  %v5352 = vpop.f32.mrf.mxu0
  %v5353 = vadd.f32 %v5304, %v5352
  %v5354 = vpop.f32.mrf.mxu0
  %v5355 = vadd.f32 %v5306, %v5354
  %5356 = vmatmul.bf16.gmra.mxu0 %v5233
  %v5357 = vpop.f32.mrf.mxu0
  %v5358 = vadd.f32 %v5309, %v5357
  %v5359 = vpop.f32.mrf.mxu0
  %v5360 = vadd.f32 %v5311, %v5359
  %5361 = vmatmul.bf16.gmra.mxu0 %v5237
  %v5362 = vpop.f32.mrf.mxu0
  %v5363 = vadd.f32 %v5314, %v5362
  %v5364 = vpop.f32.mrf.mxu0
  %v5365 = vadd.f32 %v5316, %v5364
  %5366 = vmatmul.bf16.gmra.mxu0 %v5241
  %v5367 = vpop.f32.mrf.mxu0
  %v5368 = vadd.f32 %v5319, %v5367
  %v5369 = vpop.f32.mrf.mxu0
  %v5370 = vadd.f32 %v5321, %v5369
  %5371 = vmatmul.bf16.gmra.mxu0 %v5245
  %v5372 = vpop.f32.mrf.mxu0
  %v5373 = vadd.f32 %v5324, %v5372
  %v5374 = vpop.f32.mrf.mxu0
  %v5375 = vadd.f32 %v5326, %v5374
  %5376 = vmatmul.bf16.gmra.mxu0 %v5249
  %v5377 = vpop.f32.mrf.mxu0
  %v5378 = vadd.f32 %v5329, %v5377
  %v5379 = vpop.f32.mrf.mxu0
  %v5380 = vadd.f32 %v5331, %v5379
  %5381 = vdwg.mxu0
  %5382 = vmatpush.bf16.msra.mxu0 %v1427
  %5383 = vmatpush.bf16.msra.mxu0 %v1426
  %5384 = vmatpush.bf16.msra.mxu0 %v1425
  %5385 = vmatpush.bf16.msra.mxu0 %v1424
  %5386 = vmatpush.bf16.msra.mxu0 %v1423
  %5387 = vmatpush.bf16.msra.mxu0 %v1422
  %5388 = vmatpush.bf16.msra.mxu0 %v1421
  %5389 = vmatpush.bf16.msra.mxu0 %v1420
  %5390 = vmatmul.bf16.gmra.mxu0 %v5222
  %v5391 = vpop.f32.mrf.mxu0
  %v5392 = vadd.f32 %v5343, %v5391
  %v5393 = vpop.f32.mrf.mxu0
  %v5394 = vadd.f32 %v5345, %v5393
  %5395 = vmatmul.bf16.gmra.mxu0 %v5226
  %v5396 = vpop.f32.mrf.mxu0
  %v5397 = vadd.f32 %v5348, %v5396
  %v5398 = vpop.f32.mrf.mxu0
  %v5399 = vadd.f32 %v5350, %v5398
  %5400 = vmatmul.bf16.gmra.mxu0 %v5230
  %v5401 = vpop.f32.mrf.mxu0
  %v5402 = vadd.f32 %v5353, %v5401
  %v5403 = vpop.f32.mrf.mxu0
  %v5404 = vadd.f32 %v5355, %v5403
  %5405 = vmatmul.bf16.gmra.mxu0 %v5234
  %v5406 = vpop.f32.mrf.mxu0
  %v5407 = vadd.f32 %v5358, %v5406
  %v5408 = vpop.f32.mrf.mxu0
  %v5409 = vadd.f32 %v5360, %v5408
  %5410 = vmatmul.bf16.gmra.mxu0 %v5238
  %v5411 = vpop.f32.mrf.mxu0
  %v5412 = vadd.f32 %v5363, %v5411
  %v5413 = vpop.f32.mrf.mxu0
  %v5414 = vadd.f32 %v5365, %v5413
  %5415 = vmatmul.bf16.gmra.mxu0 %v5242
  %v5416 = vpop.f32.mrf.mxu0
  %v5417 = vadd.f32 %v5368, %v5416
  %v5418 = vpop.f32.mrf.mxu0
  %v5419 = vadd.f32 %v5370, %v5418
  %5420 = vmatmul.bf16.gmra.mxu0 %v5246
  %v5421 = vpop.f32.mrf.mxu0
  %v5422 = vadd.f32 %v5373, %v5421
  %v5423 = vpop.f32.mrf.mxu0
  %v5424 = vadd.f32 %v5375, %v5423
  %5425 = vmatmul.bf16.gmra.mxu0 %v5250
  %v5426 = vpop.f32.mrf.mxu0
  %v5427 = vadd.f32 %v5378, %v5426
  %v5428 = vpop.f32.mrf.mxu0
  %v5429 = vadd.f32 %v5380, %v5428
  %5430 = vdwg.mxu0
  %5431 = vmatpush.bf16.msra.mxu0 %v1435
  %5432 = vmatpush.bf16.msra.mxu0 %v1434
  %5433 = vmatpush.bf16.msra.mxu0 %v1433
  %5434 = vmatpush.bf16.msra.mxu0 %v1432
  %5435 = vmatpush.bf16.msra.mxu0 %v1431
  %5436 = vmatpush.bf16.msra.mxu0 %v1430
  %5437 = vmatpush.bf16.msra.mxu0 %v1429
  %5438 = vmatpush.bf16.msra.mxu0 %v1428
  %5439 = vmatmul.bf16.gmra.mxu0 %v5223
  %v5440 = vpop.f32.mrf.mxu0
  %v5441 = vadd.f32 %v5392, %v5440
  %v5442 = vpop.f32.mrf.mxu0
  %v5443 = vadd.f32 %v5394, %v5442
  %5444 = vmatmul.bf16.gmra.mxu0 %v5227
  %v5445 = vpop.f32.mrf.mxu0
  %v5446 = vadd.f32 %v5397, %v5445
  %v5447 = vpop.f32.mrf.mxu0
  %v5448 = vadd.f32 %v5399, %v5447
  %5449 = vmatmul.bf16.gmra.mxu0 %v5231
  %v5450 = vpop.f32.mrf.mxu0
  %v5451 = vadd.f32 %v5402, %v5450
  %v5452 = vpop.f32.mrf.mxu0
  %v5453 = vadd.f32 %v5404, %v5452
  %5454 = vmatmul.bf16.gmra.mxu0 %v5235
  %v5455 = vpop.f32.mrf.mxu0
  %v5456 = vadd.f32 %v5407, %v5455
  %v5457 = vpop.f32.mrf.mxu0
  %v5458 = vadd.f32 %v5409, %v5457
  %5459 = vmatmul.bf16.gmra.mxu0 %v5239
  %v5460 = vpop.f32.mrf.mxu0
  %v5461 = vadd.f32 %v5412, %v5460
  %v5462 = vpop.f32.mrf.mxu0
  %v5463 = vadd.f32 %v5414, %v5462
  %5464 = vmatmul.bf16.gmra.mxu0 %v5243
  %v5465 = vpop.f32.mrf.mxu0
  %v5466 = vadd.f32 %v5417, %v5465
  %v5467 = vpop.f32.mrf.mxu0
  %v5468 = vadd.f32 %v5419, %v5467
  %5469 = vmatmul.bf16.gmra.mxu0 %v5247
  %v5470 = vpop.f32.mrf.mxu0
  %v5471 = vadd.f32 %v5422, %v5470
  %v5472 = vpop.f32.mrf.mxu0
  %v5473 = vadd.f32 %v5424, %v5472
  %5474 = vmatmul.bf16.gmra.mxu0 %v5251
  %v5475 = vpop.f32.mrf.mxu0
  %v5476 = vadd.f32 %v5427, %v5475
  %v5477 = vpop.f32.mrf.mxu0
  %v5478 = vadd.f32 %v5429, %v5477
  %5479 = vdwg.mxu0
  %v5480 = vpack.c.bf16 %v5443, %v5441
  %v5481 = vpack.c.bf16 %v5448, %v5446
  %v5482 = vpack.c.bf16 %v5453, %v5451
  %v5483 = vpack.c.bf16 %v5458, %v5456
  %v5484 = vpack.c.bf16 %v5463, %v5461
  %v5485 = vpack.c.bf16 %v5468, %v5466
  %v5486 = vpack.c.bf16 %v5473, %v5471
  %v5487 = vpack.c.bf16 %v5478, %v5476
  %s5488 = scalar_lea.vmem %s5, 448
  %v5489 = vld [vmem:[%s5488] sm:$0xf]
  %v5490 = vld [vmem:[%s5488 + $0x4] sm:$0xf]
  %v5491 = vld [vmem:[%s5488 + $0x8] sm:$0xf]
  %v5492 = vld [vmem:[%s5488 + $0xc] sm:$0xf]
  %v5493 = vld [vmem:[%s5488 + $0x10] sm:$0xf]
  %v5494 = vld [vmem:[%s5488 + $0x14] sm:$0xf]
  %v5495 = vld [vmem:[%s5488 + $0x18] sm:$0xf]
  %v5496 = vld [vmem:[%s5488 + $0x1c] sm:$0xf]
  %v5497 = vld [vmem:[%s5488 + $0x20] sm:$0xf]
  %v5498 = vld [vmem:[%s5488 + $0x24] sm:$0xf]
  %v5499 = vld [vmem:[%s5488 + $0x28] sm:$0xf]
  %v5500 = vld [vmem:[%s5488 + $0x2c] sm:$0xf]
  %v5501 = vld [vmem:[%s5488 + $0x30] sm:$0xf]
  %v5502 = vld [vmem:[%s5488 + $0x34] sm:$0xf]
  %v5503 = vld [vmem:[%s5488 + $0x38] sm:$0xf]
  %v5504 = vld [vmem:[%s5488 + $0x3c] sm:$0xf]
  %v5521 = vunpack.c.l.b16 %v5489
  %v5522 = vunpack.c.l.b16 %v5490
  %v5523 = vunpack.c.l.b16 %v5491
  %v5524 = vunpack.c.l.b16 %v5492
  %v5525 = vunpack.c.l.b16 %v5493
  %v5526 = vunpack.c.l.b16 %v5494
  %v5527 = vunpack.c.l.b16 %v5495
  %v5528 = vunpack.c.l.b16 %v5496
  %v5529 = vunpack.c.l.b16 %v5497
  %v5530 = vunpack.c.l.b16 %v5498
  %v5531 = vunpack.c.l.b16 %v5499
  %v5532 = vunpack.c.l.b16 %v5500
  %v5533 = vunpack.c.l.b16 %v5501
  %v5534 = vunpack.c.l.b16 %v5502
  %v5535 = vunpack.c.l.b16 %v5503
  %v5536 = vunpack.c.l.b16 %v5504
  %v5537 = vpack.c.b16 %v5522, %v5521
  %v5538 = vpack.c.b16 %v5524, %v5523
  %v5539 = vpack.c.b16 %v5526, %v5525
  %v5540 = vpack.c.b16 %v5528, %v5527
  %v5541 = vpack.c.b16 %v5530, %v5529
  %v5542 = vpack.c.b16 %v5532, %v5531
  %v5543 = vpack.c.b16 %v5534, %v5533
  %v5544 = vpack.c.b16 %v5536, %v5535
  %5553 = vmatpush.bf16.msra.mxu0 %v5544
  %5554 = vmatpush.bf16.msra.mxu0 %v5543
  %5555 = vmatpush.bf16.msra.mxu0 %v5542
  %5556 = vmatpush.bf16.msra.mxu0 %v5541
  %5557 = vmatpush.bf16.msra.mxu0 %v5540
  %5558 = vmatpush.bf16.msra.mxu0 %v5539
  %5559 = vmatpush.bf16.msra.mxu0 %v5538
  %5560 = vmatpush.bf16.msra.mxu0 %v5537
  %5561 = vmatmul.bf16.gmra.mxu0 %v5480
  %v5562 = vpop.f32.mrf.mxu0
  %v5563 = vadd.f32 0.0, %v5562
  %v5564 = vpop.f32.mrf.mxu0
  %v5565 = vadd.f32 0.0, %v5564
  %5566 = vmatmul.bf16.gmra.mxu0 %v5481
  %v5567 = vpop.f32.mrf.mxu0
  %v5568 = vadd.f32 0.0, %v5567
  %v5569 = vpop.f32.mrf.mxu0
  %v5570 = vadd.f32 0.0, %v5569
  %5571 = vmatmul.bf16.gmra.mxu0 %v5482
  %v5572 = vpop.f32.mrf.mxu0
  %v5573 = vadd.f32 0.0, %v5572
  %v5574 = vpop.f32.mrf.mxu0
  %v5575 = vadd.f32 0.0, %v5574
  %5576 = vmatmul.bf16.gmra.mxu0 %v5483
  %v5577 = vpop.f32.mrf.mxu0
  %v5578 = vadd.f32 0.0, %v5577
  %v5579 = vpop.f32.mrf.mxu0
  %v5580 = vadd.f32 0.0, %v5579
  %5581 = vmatmul.bf16.gmra.mxu0 %v5484
  %v5582 = vpop.f32.mrf.mxu0
  %v5583 = vadd.f32 0.0, %v5582
  %v5584 = vpop.f32.mrf.mxu0
  %v5585 = vadd.f32 0.0, %v5584
  %5586 = vmatmul.bf16.gmra.mxu0 %v5485
  %v5587 = vpop.f32.mrf.mxu0
  %v5588 = vadd.f32 0.0, %v5587
  %v5589 = vpop.f32.mrf.mxu0
  %v5590 = vadd.f32 0.0, %v5589
  %5591 = vmatmul.bf16.gmra.mxu0 %v5486
  %v5592 = vpop.f32.mrf.mxu0
  %v5593 = vadd.f32 0.0, %v5592
  %v5594 = vpop.f32.mrf.mxu0
  %v5595 = vadd.f32 0.0, %v5594
  %5596 = vmatmul.bf16.gmra.mxu0 %v5487
  %v5597 = vpop.f32.mrf.mxu0
  %v5598 = vadd.f32 0.0, %v5597
  %v5599 = vpop.f32.mrf.mxu0
  %v5600 = vadd.f32 0.0, %v5599
  %5601 = vdwg.mxu0
  %v5602 = vadd.f32 %v5075, %v5563
  %v5603 = vadd.f32 %v5076, %v5565
  %v5604 = vadd.f32 %v5077, %v5568
  %v5605 = vadd.f32 %v5078, %v5570
  %v5606 = vadd.f32 %v5079, %v5573
  %v5607 = vadd.f32 %v5080, %v5575
  %v5608 = vadd.f32 %v5081, %v5578
  %v5609 = vadd.f32 %v5082, %v5580
  %v5610 = vadd.f32 %v5083, %v5583
  %v5611 = vadd.f32 %v5084, %v5585
  %v5612 = vadd.f32 %v5085, %v5588
  %v5613 = vadd.f32 %v5086, %v5590
  %v5614 = vadd.f32 %v5087, %v5593
  %v5615 = vadd.f32 %v5088, %v5595
  %v5616 = vadd.f32 %v5089, %v5598
  %v5617 = vadd.f32 %v5090, %v5600
  %s5618 = scalar_lea.vmem %s4, 2048
  %v5619 = vld [vmem:[%s5618] sm:$0xff]
  %v5620 = vld [vmem:[%s5618 + $0x8] sm:$0xff]
  %v5621 = vld [vmem:[%s5618 + $0x10] sm:$0xff]
  %v5622 = vld [vmem:[%s5618 + $0x18] sm:$0xff]
  %v5623 = vld [vmem:[%s5618 + $0x20] sm:$0xff]
  %v5624 = vld [vmem:[%s5618 + $0x28] sm:$0xff]
  %v5625 = vld [vmem:[%s5618 + $0x30] sm:$0xff]
  %v5626 = vld [vmem:[%s5618 + $0x38] sm:$0xff]
  %v5627 = vld [vmem:[%s5618 + $0x40] sm:$0xff]
  %v5628 = vld [vmem:[%s5618 + $0x48] sm:$0xff]
  %v5629 = vld [vmem:[%s5618 + $0x50] sm:$0xff]
  %v5630 = vld [vmem:[%s5618 + $0x58] sm:$0xff]
  %v5631 = vld [vmem:[%s5618 + $0x60] sm:$0xff]
  %v5632 = vld [vmem:[%s5618 + $0x68] sm:$0xff]
  %v5633 = vld [vmem:[%s5618 + $0x70] sm:$0xff]
  %v5634 = vld [vmem:[%s5618 + $0x78] sm:$0xff]
  %v5635 = vld [vmem:[%s5618 + $0x80] sm:$0xff]
  %v5636 = vld [vmem:[%s5618 + $0x88] sm:$0xff]
  %v5637 = vld [vmem:[%s5618 + $0x90] sm:$0xff]
  %v5638 = vld [vmem:[%s5618 + $0x98] sm:$0xff]
  %v5639 = vld [vmem:[%s5618 + $0xa0] sm:$0xff]
  %v5640 = vld [vmem:[%s5618 + $0xa8] sm:$0xff]
  %v5641 = vld [vmem:[%s5618 + $0xb0] sm:$0xff]
  %v5642 = vld [vmem:[%s5618 + $0xb8] sm:$0xff]
  %v5643 = vld [vmem:[%s5618 + $0xc0] sm:$0xff]
  %v5644 = vld [vmem:[%s5618 + $0xc8] sm:$0xff]
  %v5645 = vld [vmem:[%s5618 + $0xd0] sm:$0xff]
  %v5646 = vld [vmem:[%s5618 + $0xd8] sm:$0xff]
  %v5647 = vld [vmem:[%s5618 + $0xe0] sm:$0xff]
  %v5648 = vld [vmem:[%s5618 + $0xe8] sm:$0xff]
  %v5649 = vld [vmem:[%s5618 + $0xf0] sm:$0xff]
  %v5650 = vld [vmem:[%s5618 + $0xf8] sm:$0xff]
  %v5683 = vunpack.c.l.b16 %v5619
  %v5684 = vunpack.c.h.b16 %v5619
  %v5685 = vunpack.c.l.b16 %v5620
  %v5686 = vunpack.c.h.b16 %v5620
  %v5687 = vunpack.c.l.b16 %v5621
  %v5688 = vunpack.c.h.b16 %v5621
  %v5689 = vunpack.c.l.b16 %v5622
  %v5690 = vunpack.c.h.b16 %v5622
  %v5691 = vunpack.c.l.b16 %v5623
  %v5692 = vunpack.c.h.b16 %v5623
  %v5693 = vunpack.c.l.b16 %v5624
  %v5694 = vunpack.c.h.b16 %v5624
  %v5695 = vunpack.c.l.b16 %v5625
  %v5696 = vunpack.c.h.b16 %v5625
  %v5697 = vunpack.c.l.b16 %v5626
  %v5698 = vunpack.c.h.b16 %v5626
  %v5699 = vunpack.c.l.b16 %v5627
  %v5700 = vunpack.c.h.b16 %v5627
  %v5701 = vunpack.c.l.b16 %v5628
  %v5702 = vunpack.c.h.b16 %v5628
  %v5703 = vunpack.c.l.b16 %v5629
  %v5704 = vunpack.c.h.b16 %v5629
  %v5705 = vunpack.c.l.b16 %v5630
  %v5706 = vunpack.c.h.b16 %v5630
  %v5707 = vunpack.c.l.b16 %v5631
  %v5708 = vunpack.c.h.b16 %v5631
  %v5709 = vunpack.c.l.b16 %v5632
  %v5710 = vunpack.c.h.b16 %v5632
  %v5711 = vunpack.c.l.b16 %v5633
  %v5712 = vunpack.c.h.b16 %v5633
  %v5713 = vunpack.c.l.b16 %v5634
  %v5714 = vunpack.c.h.b16 %v5634
  %v5715 = vunpack.c.l.b16 %v5635
  %v5716 = vunpack.c.h.b16 %v5635
  %v5717 = vunpack.c.l.b16 %v5636
  %v5718 = vunpack.c.h.b16 %v5636
  %v5719 = vunpack.c.l.b16 %v5637
  %v5720 = vunpack.c.h.b16 %v5637
  %v5721 = vunpack.c.l.b16 %v5638
  %v5722 = vunpack.c.h.b16 %v5638
  %v5723 = vunpack.c.l.b16 %v5639
  %v5724 = vunpack.c.h.b16 %v5639
  %v5725 = vunpack.c.l.b16 %v5640
  %v5726 = vunpack.c.h.b16 %v5640
  %v5727 = vunpack.c.l.b16 %v5641
  %v5728 = vunpack.c.h.b16 %v5641
  %v5729 = vunpack.c.l.b16 %v5642
  %v5730 = vunpack.c.h.b16 %v5642
  %v5731 = vunpack.c.l.b16 %v5643
  %v5732 = vunpack.c.h.b16 %v5643
  %v5733 = vunpack.c.l.b16 %v5644
  %v5734 = vunpack.c.h.b16 %v5644
  %v5735 = vunpack.c.l.b16 %v5645
  %v5736 = vunpack.c.h.b16 %v5645
  %v5737 = vunpack.c.l.b16 %v5646
  %v5738 = vunpack.c.h.b16 %v5646
  %v5739 = vunpack.c.l.b16 %v5647
  %v5740 = vunpack.c.h.b16 %v5647
  %v5741 = vunpack.c.l.b16 %v5648
  %v5742 = vunpack.c.h.b16 %v5648
  %v5743 = vunpack.c.l.b16 %v5649
  %v5744 = vunpack.c.h.b16 %v5649
  %v5745 = vunpack.c.l.b16 %v5650
  %v5746 = vunpack.c.h.b16 %v5650
  %v5747 = vpack.c.b16 %v5687, %v5683
  %v5748 = vpack.c.b16 %v5688, %v5684
  %v5749 = vpack.c.b16 %v5689, %v5685
  %v5750 = vpack.c.b16 %v5690, %v5686
  %v5751 = vpack.c.b16 %v5695, %v5691
  %v5752 = vpack.c.b16 %v5696, %v5692
  %v5753 = vpack.c.b16 %v5697, %v5693
  %v5754 = vpack.c.b16 %v5698, %v5694
  %v5755 = vpack.c.b16 %v5703, %v5699
  %v5756 = vpack.c.b16 %v5704, %v5700
  %v5757 = vpack.c.b16 %v5705, %v5701
  %v5758 = vpack.c.b16 %v5706, %v5702
  %v5759 = vpack.c.b16 %v5711, %v5707
  %v5760 = vpack.c.b16 %v5712, %v5708
  %v5761 = vpack.c.b16 %v5713, %v5709
  %v5762 = vpack.c.b16 %v5714, %v5710
  %v5763 = vpack.c.b16 %v5719, %v5715
  %v5764 = vpack.c.b16 %v5720, %v5716
  %v5765 = vpack.c.b16 %v5721, %v5717
  %v5766 = vpack.c.b16 %v5722, %v5718
  %v5767 = vpack.c.b16 %v5727, %v5723
  %v5768 = vpack.c.b16 %v5728, %v5724
  %v5769 = vpack.c.b16 %v5729, %v5725
  %v5770 = vpack.c.b16 %v5730, %v5726
  %v5771 = vpack.c.b16 %v5735, %v5731
  %v5772 = vpack.c.b16 %v5736, %v5732
  %v5773 = vpack.c.b16 %v5737, %v5733
  %v5774 = vpack.c.b16 %v5738, %v5734
  %v5775 = vpack.c.b16 %v5743, %v5739
  %v5776 = vpack.c.b16 %v5744, %v5740
  %v5777 = vpack.c.b16 %v5745, %v5741
  %v5778 = vpack.c.b16 %v5746, %v5742
  %5811 = vmatpush.bf16.msra.mxu0 %v1411
  %5812 = vmatpush.bf16.msra.mxu0 %v1410
  %5813 = vmatpush.bf16.msra.mxu0 %v1409
  %5814 = vmatpush.bf16.msra.mxu0 %v1408
  %5815 = vmatpush.bf16.msra.mxu0 %v1407
  %5816 = vmatpush.bf16.msra.mxu0 %v1406
  %5817 = vmatpush.bf16.msra.mxu0 %v1405
  %5818 = vmatpush.bf16.msra.mxu0 %v1404
  %5819 = vmatmul.bf16.gmra.mxu0 %v5747
  %v5820 = vpop.f32.mrf.mxu0
  %v5821 = vadd.f32 0.0, %v5820
  %v5822 = vpop.f32.mrf.mxu0
  %v5823 = vadd.f32 0.0, %v5822
  %5824 = vmatmul.bf16.gmra.mxu0 %v5751
  %v5825 = vpop.f32.mrf.mxu0
  %v5826 = vadd.f32 0.0, %v5825
  %v5827 = vpop.f32.mrf.mxu0
  %v5828 = vadd.f32 0.0, %v5827
  %5829 = vmatmul.bf16.gmra.mxu0 %v5755
  %v5830 = vpop.f32.mrf.mxu0
  %v5831 = vadd.f32 0.0, %v5830
  %v5832 = vpop.f32.mrf.mxu0
  %v5833 = vadd.f32 0.0, %v5832
  %5834 = vmatmul.bf16.gmra.mxu0 %v5759
  %v5835 = vpop.f32.mrf.mxu0
  %v5836 = vadd.f32 0.0, %v5835
  %v5837 = vpop.f32.mrf.mxu0
  %v5838 = vadd.f32 0.0, %v5837
  %5839 = vmatmul.bf16.gmra.mxu0 %v5763
  %v5840 = vpop.f32.mrf.mxu0
  %v5841 = vadd.f32 0.0, %v5840
  %v5842 = vpop.f32.mrf.mxu0
  %v5843 = vadd.f32 0.0, %v5842
  %5844 = vmatmul.bf16.gmra.mxu0 %v5767
  %v5845 = vpop.f32.mrf.mxu0
  %v5846 = vadd.f32 0.0, %v5845
  %v5847 = vpop.f32.mrf.mxu0
  %v5848 = vadd.f32 0.0, %v5847
  %5849 = vmatmul.bf16.gmra.mxu0 %v5771
  %v5850 = vpop.f32.mrf.mxu0
  %v5851 = vadd.f32 0.0, %v5850
  %v5852 = vpop.f32.mrf.mxu0
  %v5853 = vadd.f32 0.0, %v5852
  %5854 = vmatmul.bf16.gmra.mxu0 %v5775
  %v5855 = vpop.f32.mrf.mxu0
  %v5856 = vadd.f32 0.0, %v5855
  %v5857 = vpop.f32.mrf.mxu0
  %v5858 = vadd.f32 0.0, %v5857
  %5859 = vdwg.mxu0
  %5860 = vmatpush.bf16.msra.mxu0 %v1419
  %5861 = vmatpush.bf16.msra.mxu0 %v1418
  %5862 = vmatpush.bf16.msra.mxu0 %v1417
  %5863 = vmatpush.bf16.msra.mxu0 %v1416
  %5864 = vmatpush.bf16.msra.mxu0 %v1415
  %5865 = vmatpush.bf16.msra.mxu0 %v1414
  %5866 = vmatpush.bf16.msra.mxu0 %v1413
  %5867 = vmatpush.bf16.msra.mxu0 %v1412
  %5868 = vmatmul.bf16.gmra.mxu0 %v5748
  %v5869 = vpop.f32.mrf.mxu0
  %v5870 = vadd.f32 %v5821, %v5869
  %v5871 = vpop.f32.mrf.mxu0
  %v5872 = vadd.f32 %v5823, %v5871
  %5873 = vmatmul.bf16.gmra.mxu0 %v5752
  %v5874 = vpop.f32.mrf.mxu0
  %v5875 = vadd.f32 %v5826, %v5874
  %v5876 = vpop.f32.mrf.mxu0
  %v5877 = vadd.f32 %v5828, %v5876
  %5878 = vmatmul.bf16.gmra.mxu0 %v5756
  %v5879 = vpop.f32.mrf.mxu0
  %v5880 = vadd.f32 %v5831, %v5879
  %v5881 = vpop.f32.mrf.mxu0
  %v5882 = vadd.f32 %v5833, %v5881
  %5883 = vmatmul.bf16.gmra.mxu0 %v5760
  %v5884 = vpop.f32.mrf.mxu0
  %v5885 = vadd.f32 %v5836, %v5884
  %v5886 = vpop.f32.mrf.mxu0
  %v5887 = vadd.f32 %v5838, %v5886
  %5888 = vmatmul.bf16.gmra.mxu0 %v5764
  %v5889 = vpop.f32.mrf.mxu0
  %v5890 = vadd.f32 %v5841, %v5889
  %v5891 = vpop.f32.mrf.mxu0
  %v5892 = vadd.f32 %v5843, %v5891
  %5893 = vmatmul.bf16.gmra.mxu0 %v5768
  %v5894 = vpop.f32.mrf.mxu0
  %v5895 = vadd.f32 %v5846, %v5894
  %v5896 = vpop.f32.mrf.mxu0
  %v5897 = vadd.f32 %v5848, %v5896
  %5898 = vmatmul.bf16.gmra.mxu0 %v5772
  %v5899 = vpop.f32.mrf.mxu0
  %v5900 = vadd.f32 %v5851, %v5899
  %v5901 = vpop.f32.mrf.mxu0
  %v5902 = vadd.f32 %v5853, %v5901
  %5903 = vmatmul.bf16.gmra.mxu0 %v5776
  %v5904 = vpop.f32.mrf.mxu0
  %v5905 = vadd.f32 %v5856, %v5904
  %v5906 = vpop.f32.mrf.mxu0
  %v5907 = vadd.f32 %v5858, %v5906
  %5908 = vdwg.mxu0
  %5909 = vmatpush.bf16.msra.mxu0 %v1427
  %5910 = vmatpush.bf16.msra.mxu0 %v1426
  %5911 = vmatpush.bf16.msra.mxu0 %v1425
  %5912 = vmatpush.bf16.msra.mxu0 %v1424
  %5913 = vmatpush.bf16.msra.mxu0 %v1423
  %5914 = vmatpush.bf16.msra.mxu0 %v1422
  %5915 = vmatpush.bf16.msra.mxu0 %v1421
  %5916 = vmatpush.bf16.msra.mxu0 %v1420
  %5917 = vmatmul.bf16.gmra.mxu0 %v5749
  %v5918 = vpop.f32.mrf.mxu0
  %v5919 = vadd.f32 %v5870, %v5918
  %v5920 = vpop.f32.mrf.mxu0
  %v5921 = vadd.f32 %v5872, %v5920
  %5922 = vmatmul.bf16.gmra.mxu0 %v5753
  %v5923 = vpop.f32.mrf.mxu0
  %v5924 = vadd.f32 %v5875, %v5923
  %v5925 = vpop.f32.mrf.mxu0
  %v5926 = vadd.f32 %v5877, %v5925
  %5927 = vmatmul.bf16.gmra.mxu0 %v5757
  %v5928 = vpop.f32.mrf.mxu0
  %v5929 = vadd.f32 %v5880, %v5928
  %v5930 = vpop.f32.mrf.mxu0
  %v5931 = vadd.f32 %v5882, %v5930
  %5932 = vmatmul.bf16.gmra.mxu0 %v5761
  %v5933 = vpop.f32.mrf.mxu0
  %v5934 = vadd.f32 %v5885, %v5933
  %v5935 = vpop.f32.mrf.mxu0
  %v5936 = vadd.f32 %v5887, %v5935
  %5937 = vmatmul.bf16.gmra.mxu0 %v5765
  %v5938 = vpop.f32.mrf.mxu0
  %v5939 = vadd.f32 %v5890, %v5938
  %v5940 = vpop.f32.mrf.mxu0
  %v5941 = vadd.f32 %v5892, %v5940
  %5942 = vmatmul.bf16.gmra.mxu0 %v5769
  %v5943 = vpop.f32.mrf.mxu0
  %v5944 = vadd.f32 %v5895, %v5943
  %v5945 = vpop.f32.mrf.mxu0
  %v5946 = vadd.f32 %v5897, %v5945
  %5947 = vmatmul.bf16.gmra.mxu0 %v5773
  %v5948 = vpop.f32.mrf.mxu0
  %v5949 = vadd.f32 %v5900, %v5948
  %v5950 = vpop.f32.mrf.mxu0
  %v5951 = vadd.f32 %v5902, %v5950
  %5952 = vmatmul.bf16.gmra.mxu0 %v5777
  %v5953 = vpop.f32.mrf.mxu0
  %v5954 = vadd.f32 %v5905, %v5953
  %v5955 = vpop.f32.mrf.mxu0
  %v5956 = vadd.f32 %v5907, %v5955
  %5957 = vdwg.mxu0
  %5958 = vmatpush.bf16.msra.mxu0 %v1435
  %5959 = vmatpush.bf16.msra.mxu0 %v1434
  %5960 = vmatpush.bf16.msra.mxu0 %v1433
  %5961 = vmatpush.bf16.msra.mxu0 %v1432
  %5962 = vmatpush.bf16.msra.mxu0 %v1431
  %5963 = vmatpush.bf16.msra.mxu0 %v1430
  %5964 = vmatpush.bf16.msra.mxu0 %v1429
  %5965 = vmatpush.bf16.msra.mxu0 %v1428
  %5966 = vmatmul.bf16.gmra.mxu0 %v5750
  %v5967 = vpop.f32.mrf.mxu0
  %v5968 = vadd.f32 %v5919, %v5967
  %v5969 = vpop.f32.mrf.mxu0
  %v5970 = vadd.f32 %v5921, %v5969
  %5971 = vmatmul.bf16.gmra.mxu0 %v5754
  %v5972 = vpop.f32.mrf.mxu0
  %v5973 = vadd.f32 %v5924, %v5972
  %v5974 = vpop.f32.mrf.mxu0
  %v5975 = vadd.f32 %v5926, %v5974
  %5976 = vmatmul.bf16.gmra.mxu0 %v5758
  %v5977 = vpop.f32.mrf.mxu0
  %v5978 = vadd.f32 %v5929, %v5977
  %v5979 = vpop.f32.mrf.mxu0
  %v5980 = vadd.f32 %v5931, %v5979
  %5981 = vmatmul.bf16.gmra.mxu0 %v5762
  %v5982 = vpop.f32.mrf.mxu0
  %v5983 = vadd.f32 %v5934, %v5982
  %v5984 = vpop.f32.mrf.mxu0
  %v5985 = vadd.f32 %v5936, %v5984
  %5986 = vmatmul.bf16.gmra.mxu0 %v5766
  %v5987 = vpop.f32.mrf.mxu0
  %v5988 = vadd.f32 %v5939, %v5987
  %v5989 = vpop.f32.mrf.mxu0
  %v5990 = vadd.f32 %v5941, %v5989
  %5991 = vmatmul.bf16.gmra.mxu0 %v5770
  %v5992 = vpop.f32.mrf.mxu0
  %v5993 = vadd.f32 %v5944, %v5992
  %v5994 = vpop.f32.mrf.mxu0
  %v5995 = vadd.f32 %v5946, %v5994
  %5996 = vmatmul.bf16.gmra.mxu0 %v5774
  %v5997 = vpop.f32.mrf.mxu0
  %v5998 = vadd.f32 %v5949, %v5997
  %v5999 = vpop.f32.mrf.mxu0
  %v6000 = vadd.f32 %v5951, %v5999
  %6001 = vmatmul.bf16.gmra.mxu0 %v5778
  %v6002 = vpop.f32.mrf.mxu0
  %v6003 = vadd.f32 %v5954, %v6002
  %v6004 = vpop.f32.mrf.mxu0
  %v6005 = vadd.f32 %v5956, %v6004
  %6006 = vdwg.mxu0
  %v6007 = vpack.c.bf16 %v5970, %v5968
  %v6008 = vpack.c.bf16 %v5975, %v5973
  %v6009 = vpack.c.bf16 %v5980, %v5978
  %v6010 = vpack.c.bf16 %v5985, %v5983
  %v6011 = vpack.c.bf16 %v5990, %v5988
  %v6012 = vpack.c.bf16 %v5995, %v5993
  %v6013 = vpack.c.bf16 %v6000, %v5998
  %v6014 = vpack.c.bf16 %v6005, %v6003
  %s6015 = scalar_lea.vmem %s5, 512
  %v6016 = vld [vmem:[%s6015] sm:$0xf]
  %v6017 = vld [vmem:[%s6015 + $0x4] sm:$0xf]
  %v6018 = vld [vmem:[%s6015 + $0x8] sm:$0xf]
  %v6019 = vld [vmem:[%s6015 + $0xc] sm:$0xf]
  %v6020 = vld [vmem:[%s6015 + $0x10] sm:$0xf]
  %v6021 = vld [vmem:[%s6015 + $0x14] sm:$0xf]
  %v6022 = vld [vmem:[%s6015 + $0x18] sm:$0xf]
  %v6023 = vld [vmem:[%s6015 + $0x1c] sm:$0xf]
  %v6024 = vld [vmem:[%s6015 + $0x20] sm:$0xf]
  %v6025 = vld [vmem:[%s6015 + $0x24] sm:$0xf]
  %v6026 = vld [vmem:[%s6015 + $0x28] sm:$0xf]
  %v6027 = vld [vmem:[%s6015 + $0x2c] sm:$0xf]
  %v6028 = vld [vmem:[%s6015 + $0x30] sm:$0xf]
  %v6029 = vld [vmem:[%s6015 + $0x34] sm:$0xf]
  %v6030 = vld [vmem:[%s6015 + $0x38] sm:$0xf]
  %v6031 = vld [vmem:[%s6015 + $0x3c] sm:$0xf]
  %v6048 = vunpack.c.l.b16 %v6016
  %v6049 = vunpack.c.l.b16 %v6017
  %v6050 = vunpack.c.l.b16 %v6018
  %v6051 = vunpack.c.l.b16 %v6019
  %v6052 = vunpack.c.l.b16 %v6020
  %v6053 = vunpack.c.l.b16 %v6021
  %v6054 = vunpack.c.l.b16 %v6022
  %v6055 = vunpack.c.l.b16 %v6023
  %v6056 = vunpack.c.l.b16 %v6024
  %v6057 = vunpack.c.l.b16 %v6025
  %v6058 = vunpack.c.l.b16 %v6026
  %v6059 = vunpack.c.l.b16 %v6027
  %v6060 = vunpack.c.l.b16 %v6028
  %v6061 = vunpack.c.l.b16 %v6029
  %v6062 = vunpack.c.l.b16 %v6030
  %v6063 = vunpack.c.l.b16 %v6031
  %v6064 = vpack.c.b16 %v6049, %v6048
  %v6065 = vpack.c.b16 %v6051, %v6050
  %v6066 = vpack.c.b16 %v6053, %v6052
  %v6067 = vpack.c.b16 %v6055, %v6054
  %v6068 = vpack.c.b16 %v6057, %v6056
  %v6069 = vpack.c.b16 %v6059, %v6058
  %v6070 = vpack.c.b16 %v6061, %v6060
  %v6071 = vpack.c.b16 %v6063, %v6062
  %6080 = vmatpush.bf16.msra.mxu0 %v6071
  %6081 = vmatpush.bf16.msra.mxu0 %v6070
  %6082 = vmatpush.bf16.msra.mxu0 %v6069
  %6083 = vmatpush.bf16.msra.mxu0 %v6068
  %6084 = vmatpush.bf16.msra.mxu0 %v6067
  %6085 = vmatpush.bf16.msra.mxu0 %v6066
  %6086 = vmatpush.bf16.msra.mxu0 %v6065
  %6087 = vmatpush.bf16.msra.mxu0 %v6064
  %6088 = vmatmul.bf16.gmra.mxu0 %v6007
  %v6089 = vpop.f32.mrf.mxu0
  %v6090 = vadd.f32 0.0, %v6089
  %v6091 = vpop.f32.mrf.mxu0
  %v6092 = vadd.f32 0.0, %v6091
  %6093 = vmatmul.bf16.gmra.mxu0 %v6008
  %v6094 = vpop.f32.mrf.mxu0
  %v6095 = vadd.f32 0.0, %v6094
  %v6096 = vpop.f32.mrf.mxu0
  %v6097 = vadd.f32 0.0, %v6096
  %6098 = vmatmul.bf16.gmra.mxu0 %v6009
  %v6099 = vpop.f32.mrf.mxu0
  %v6100 = vadd.f32 0.0, %v6099
  %v6101 = vpop.f32.mrf.mxu0
  %v6102 = vadd.f32 0.0, %v6101
  %6103 = vmatmul.bf16.gmra.mxu0 %v6010
  %v6104 = vpop.f32.mrf.mxu0
  %v6105 = vadd.f32 0.0, %v6104
  %v6106 = vpop.f32.mrf.mxu0
  %v6107 = vadd.f32 0.0, %v6106
  %6108 = vmatmul.bf16.gmra.mxu0 %v6011
  %v6109 = vpop.f32.mrf.mxu0
  %v6110 = vadd.f32 0.0, %v6109
  %v6111 = vpop.f32.mrf.mxu0
  %v6112 = vadd.f32 0.0, %v6111
  %6113 = vmatmul.bf16.gmra.mxu0 %v6012
  %v6114 = vpop.f32.mrf.mxu0
  %v6115 = vadd.f32 0.0, %v6114
  %v6116 = vpop.f32.mrf.mxu0
  %v6117 = vadd.f32 0.0, %v6116
  %6118 = vmatmul.bf16.gmra.mxu0 %v6013
  %v6119 = vpop.f32.mrf.mxu0
  %v6120 = vadd.f32 0.0, %v6119
  %v6121 = vpop.f32.mrf.mxu0
  %v6122 = vadd.f32 0.0, %v6121
  %6123 = vmatmul.bf16.gmra.mxu0 %v6014
  %v6124 = vpop.f32.mrf.mxu0
  %v6125 = vadd.f32 0.0, %v6124
  %v6126 = vpop.f32.mrf.mxu0
  %v6127 = vadd.f32 0.0, %v6126
  %6128 = vdwg.mxu0
  %v6129 = vadd.f32 %v5602, %v6090
  %v6130 = vadd.f32 %v5603, %v6092
  %v6131 = vadd.f32 %v5604, %v6095
  %v6132 = vadd.f32 %v5605, %v6097
  %v6133 = vadd.f32 %v5606, %v6100
  %v6134 = vadd.f32 %v5607, %v6102
  %v6135 = vadd.f32 %v5608, %v6105
  %v6136 = vadd.f32 %v5609, %v6107
  %v6137 = vadd.f32 %v5610, %v6110
  %v6138 = vadd.f32 %v5611, %v6112
  %v6139 = vadd.f32 %v5612, %v6115
  %v6140 = vadd.f32 %v5613, %v6117
  %v6141 = vadd.f32 %v5614, %v6120
  %v6142 = vadd.f32 %v5615, %v6122
  %v6143 = vadd.f32 %v5616, %v6125
  %v6144 = vadd.f32 %v5617, %v6127
  %s6145 = scalar_lea.vmem %s4, 2304
  %v6146 = vld [vmem:[%s6145] sm:$0xff]
  %v6147 = vld [vmem:[%s6145 + $0x8] sm:$0xff]
  %v6148 = vld [vmem:[%s6145 + $0x10] sm:$0xff]
  %v6149 = vld [vmem:[%s6145 + $0x18] sm:$0xff]
  %v6150 = vld [vmem:[%s6145 + $0x20] sm:$0xff]
  %v6151 = vld [vmem:[%s6145 + $0x28] sm:$0xff]
  %v6152 = vld [vmem:[%s6145 + $0x30] sm:$0xff]
  %v6153 = vld [vmem:[%s6145 + $0x38] sm:$0xff]
  %v6154 = vld [vmem:[%s6145 + $0x40] sm:$0xff]
  %v6155 = vld [vmem:[%s6145 + $0x48] sm:$0xff]
  %v6156 = vld [vmem:[%s6145 + $0x50] sm:$0xff]
  %v6157 = vld [vmem:[%s6145 + $0x58] sm:$0xff]
  %v6158 = vld [vmem:[%s6145 + $0x60] sm:$0xff]
  %v6159 = vld [vmem:[%s6145 + $0x68] sm:$0xff]
  %v6160 = vld [vmem:[%s6145 + $0x70] sm:$0xff]
  %v6161 = vld [vmem:[%s6145 + $0x78] sm:$0xff]
  %v6162 = vld [vmem:[%s6145 + $0x80] sm:$0xff]
  %v6163 = vld [vmem:[%s6145 + $0x88] sm:$0xff]
  %v6164 = vld [vmem:[%s6145 + $0x90] sm:$0xff]
  %v6165 = vld [vmem:[%s6145 + $0x98] sm:$0xff]
  %v6166 = vld [vmem:[%s6145 + $0xa0] sm:$0xff]
  %v6167 = vld [vmem:[%s6145 + $0xa8] sm:$0xff]
  %v6168 = vld [vmem:[%s6145 + $0xb0] sm:$0xff]
  %v6169 = vld [vmem:[%s6145 + $0xb8] sm:$0xff]
  %v6170 = vld [vmem:[%s6145 + $0xc0] sm:$0xff]
  %v6171 = vld [vmem:[%s6145 + $0xc8] sm:$0xff]
  %v6172 = vld [vmem:[%s6145 + $0xd0] sm:$0xff]
  %v6173 = vld [vmem:[%s6145 + $0xd8] sm:$0xff]
  %v6174 = vld [vmem:[%s6145 + $0xe0] sm:$0xff]
  %v6175 = vld [vmem:[%s6145 + $0xe8] sm:$0xff]
  %v6176 = vld [vmem:[%s6145 + $0xf0] sm:$0xff]
  %v6177 = vld [vmem:[%s6145 + $0xf8] sm:$0xff]
  %v6210 = vunpack.c.l.b16 %v6146
  %v6211 = vunpack.c.h.b16 %v6146
  %v6212 = vunpack.c.l.b16 %v6147
  %v6213 = vunpack.c.h.b16 %v6147
  %v6214 = vunpack.c.l.b16 %v6148
  %v6215 = vunpack.c.h.b16 %v6148
  %v6216 = vunpack.c.l.b16 %v6149
  %v6217 = vunpack.c.h.b16 %v6149
  %v6218 = vunpack.c.l.b16 %v6150
  %v6219 = vunpack.c.h.b16 %v6150
  %v6220 = vunpack.c.l.b16 %v6151
  %v6221 = vunpack.c.h.b16 %v6151
  %v6222 = vunpack.c.l.b16 %v6152
  %v6223 = vunpack.c.h.b16 %v6152
  %v6224 = vunpack.c.l.b16 %v6153
  %v6225 = vunpack.c.h.b16 %v6153
  %v6226 = vunpack.c.l.b16 %v6154
  %v6227 = vunpack.c.h.b16 %v6154
  %v6228 = vunpack.c.l.b16 %v6155
  %v6229 = vunpack.c.h.b16 %v6155
  %v6230 = vunpack.c.l.b16 %v6156
  %v6231 = vunpack.c.h.b16 %v6156
  %v6232 = vunpack.c.l.b16 %v6157
  %v6233 = vunpack.c.h.b16 %v6157
  %v6234 = vunpack.c.l.b16 %v6158
  %v6235 = vunpack.c.h.b16 %v6158
  %v6236 = vunpack.c.l.b16 %v6159
  %v6237 = vunpack.c.h.b16 %v6159
  %v6238 = vunpack.c.l.b16 %v6160
  %v6239 = vunpack.c.h.b16 %v6160
  %v6240 = vunpack.c.l.b16 %v6161
  %v6241 = vunpack.c.h.b16 %v6161
  %v6242 = vunpack.c.l.b16 %v6162
  %v6243 = vunpack.c.h.b16 %v6162
  %v6244 = vunpack.c.l.b16 %v6163
  %v6245 = vunpack.c.h.b16 %v6163
  %v6246 = vunpack.c.l.b16 %v6164
  %v6247 = vunpack.c.h.b16 %v6164
  %v6248 = vunpack.c.l.b16 %v6165
  %v6249 = vunpack.c.h.b16 %v6165
  %v6250 = vunpack.c.l.b16 %v6166
  %v6251 = vunpack.c.h.b16 %v6166
  %v6252 = vunpack.c.l.b16 %v6167
  %v6253 = vunpack.c.h.b16 %v6167
  %v6254 = vunpack.c.l.b16 %v6168
  %v6255 = vunpack.c.h.b16 %v6168
  %v6256 = vunpack.c.l.b16 %v6169
  %v6257 = vunpack.c.h.b16 %v6169
  %v6258 = vunpack.c.l.b16 %v6170
  %v6259 = vunpack.c.h.b16 %v6170
  %v6260 = vunpack.c.l.b16 %v6171
  %v6261 = vunpack.c.h.b16 %v6171
  %v6262 = vunpack.c.l.b16 %v6172
  %v6263 = vunpack.c.h.b16 %v6172
  %v6264 = vunpack.c.l.b16 %v6173
  %v6265 = vunpack.c.h.b16 %v6173
  %v6266 = vunpack.c.l.b16 %v6174
  %v6267 = vunpack.c.h.b16 %v6174
  %v6268 = vunpack.c.l.b16 %v6175
  %v6269 = vunpack.c.h.b16 %v6175
  %v6270 = vunpack.c.l.b16 %v6176
  %v6271 = vunpack.c.h.b16 %v6176
  %v6272 = vunpack.c.l.b16 %v6177
  %v6273 = vunpack.c.h.b16 %v6177
  %v6274 = vpack.c.b16 %v6214, %v6210
  %v6275 = vpack.c.b16 %v6215, %v6211
  %v6276 = vpack.c.b16 %v6216, %v6212
  %v6277 = vpack.c.b16 %v6217, %v6213
  %v6278 = vpack.c.b16 %v6222, %v6218
  %v6279 = vpack.c.b16 %v6223, %v6219
  %v6280 = vpack.c.b16 %v6224, %v6220
  %v6281 = vpack.c.b16 %v6225, %v6221
  %v6282 = vpack.c.b16 %v6230, %v6226
  %v6283 = vpack.c.b16 %v6231, %v6227
  %v6284 = vpack.c.b16 %v6232, %v6228
  %v6285 = vpack.c.b16 %v6233, %v6229
  %v6286 = vpack.c.b16 %v6238, %v6234
  %v6287 = vpack.c.b16 %v6239, %v6235
  %v6288 = vpack.c.b16 %v6240, %v6236
  %v6289 = vpack.c.b16 %v6241, %v6237
  %v6290 = vpack.c.b16 %v6246, %v6242
  %v6291 = vpack.c.b16 %v6247, %v6243
  %v6292 = vpack.c.b16 %v6248, %v6244
  %v6293 = vpack.c.b16 %v6249, %v6245
  %v6294 = vpack.c.b16 %v6254, %v6250
  %v6295 = vpack.c.b16 %v6255, %v6251
  %v6296 = vpack.c.b16 %v6256, %v6252
  %v6297 = vpack.c.b16 %v6257, %v6253
  %v6298 = vpack.c.b16 %v6262, %v6258
  %v6299 = vpack.c.b16 %v6263, %v6259
  %v6300 = vpack.c.b16 %v6264, %v6260
  %v6301 = vpack.c.b16 %v6265, %v6261
  %v6302 = vpack.c.b16 %v6270, %v6266
  %v6303 = vpack.c.b16 %v6271, %v6267
  %v6304 = vpack.c.b16 %v6272, %v6268
  %v6305 = vpack.c.b16 %v6273, %v6269
  %6338 = vmatpush.bf16.msra.mxu0 %v1411
  %6339 = vmatpush.bf16.msra.mxu0 %v1410
  %6340 = vmatpush.bf16.msra.mxu0 %v1409
  %6341 = vmatpush.bf16.msra.mxu0 %v1408
  %6342 = vmatpush.bf16.msra.mxu0 %v1407
  %6343 = vmatpush.bf16.msra.mxu0 %v1406
  %6344 = vmatpush.bf16.msra.mxu0 %v1405
  %6345 = vmatpush.bf16.msra.mxu0 %v1404
  %6346 = vmatmul.bf16.gmra.mxu0 %v6274
  %v6347 = vpop.f32.mrf.mxu0
  %v6348 = vadd.f32 0.0, %v6347
  %v6349 = vpop.f32.mrf.mxu0
  %v6350 = vadd.f32 0.0, %v6349
  %6351 = vmatmul.bf16.gmra.mxu0 %v6278
  %v6352 = vpop.f32.mrf.mxu0
  %v6353 = vadd.f32 0.0, %v6352
  %v6354 = vpop.f32.mrf.mxu0
  %v6355 = vadd.f32 0.0, %v6354
  %6356 = vmatmul.bf16.gmra.mxu0 %v6282
  %v6357 = vpop.f32.mrf.mxu0
  %v6358 = vadd.f32 0.0, %v6357
  %v6359 = vpop.f32.mrf.mxu0
  %v6360 = vadd.f32 0.0, %v6359
  %6361 = vmatmul.bf16.gmra.mxu0 %v6286
  %v6362 = vpop.f32.mrf.mxu0
  %v6363 = vadd.f32 0.0, %v6362
  %v6364 = vpop.f32.mrf.mxu0
  %v6365 = vadd.f32 0.0, %v6364
  %6366 = vmatmul.bf16.gmra.mxu0 %v6290
  %v6367 = vpop.f32.mrf.mxu0
  %v6368 = vadd.f32 0.0, %v6367
  %v6369 = vpop.f32.mrf.mxu0
  %v6370 = vadd.f32 0.0, %v6369
  %6371 = vmatmul.bf16.gmra.mxu0 %v6294
  %v6372 = vpop.f32.mrf.mxu0
  %v6373 = vadd.f32 0.0, %v6372
  %v6374 = vpop.f32.mrf.mxu0
  %v6375 = vadd.f32 0.0, %v6374
  %6376 = vmatmul.bf16.gmra.mxu0 %v6298
  %v6377 = vpop.f32.mrf.mxu0
  %v6378 = vadd.f32 0.0, %v6377
  %v6379 = vpop.f32.mrf.mxu0
  %v6380 = vadd.f32 0.0, %v6379
  %6381 = vmatmul.bf16.gmra.mxu0 %v6302
  %v6382 = vpop.f32.mrf.mxu0
  %v6383 = vadd.f32 0.0, %v6382
  %v6384 = vpop.f32.mrf.mxu0
  %v6385 = vadd.f32 0.0, %v6384
  %6386 = vdwg.mxu0
  %6387 = vmatpush.bf16.msra.mxu0 %v1419
  %6388 = vmatpush.bf16.msra.mxu0 %v1418
  %6389 = vmatpush.bf16.msra.mxu0 %v1417
  %6390 = vmatpush.bf16.msra.mxu0 %v1416
  %6391 = vmatpush.bf16.msra.mxu0 %v1415
  %6392 = vmatpush.bf16.msra.mxu0 %v1414
  %6393 = vmatpush.bf16.msra.mxu0 %v1413
  %6394 = vmatpush.bf16.msra.mxu0 %v1412
  %6395 = vmatmul.bf16.gmra.mxu0 %v6275
  %v6396 = vpop.f32.mrf.mxu0
  %v6397 = vadd.f32 %v6348, %v6396
  %v6398 = vpop.f32.mrf.mxu0
  %v6399 = vadd.f32 %v6350, %v6398
  %6400 = vmatmul.bf16.gmra.mxu0 %v6279
  %v6401 = vpop.f32.mrf.mxu0
  %v6402 = vadd.f32 %v6353, %v6401
  %v6403 = vpop.f32.mrf.mxu0
  %v6404 = vadd.f32 %v6355, %v6403
  %6405 = vmatmul.bf16.gmra.mxu0 %v6283
  %v6406 = vpop.f32.mrf.mxu0
  %v6407 = vadd.f32 %v6358, %v6406
  %v6408 = vpop.f32.mrf.mxu0
  %v6409 = vadd.f32 %v6360, %v6408
  %6410 = vmatmul.bf16.gmra.mxu0 %v6287
  %v6411 = vpop.f32.mrf.mxu0
  %v6412 = vadd.f32 %v6363, %v6411
  %v6413 = vpop.f32.mrf.mxu0
  %v6414 = vadd.f32 %v6365, %v6413
  %6415 = vmatmul.bf16.gmra.mxu0 %v6291
  %v6416 = vpop.f32.mrf.mxu0
  %v6417 = vadd.f32 %v6368, %v6416
  %v6418 = vpop.f32.mrf.mxu0
  %v6419 = vadd.f32 %v6370, %v6418
  %6420 = vmatmul.bf16.gmra.mxu0 %v6295
  %v6421 = vpop.f32.mrf.mxu0
  %v6422 = vadd.f32 %v6373, %v6421
  %v6423 = vpop.f32.mrf.mxu0
  %v6424 = vadd.f32 %v6375, %v6423
  %6425 = vmatmul.bf16.gmra.mxu0 %v6299
  %v6426 = vpop.f32.mrf.mxu0
  %v6427 = vadd.f32 %v6378, %v6426
  %v6428 = vpop.f32.mrf.mxu0
  %v6429 = vadd.f32 %v6380, %v6428
  %6430 = vmatmul.bf16.gmra.mxu0 %v6303
  %v6431 = vpop.f32.mrf.mxu0
  %v6432 = vadd.f32 %v6383, %v6431
  %v6433 = vpop.f32.mrf.mxu0
  %v6434 = vadd.f32 %v6385, %v6433
  %6435 = vdwg.mxu0
  %6436 = vmatpush.bf16.msra.mxu0 %v1427
  %6437 = vmatpush.bf16.msra.mxu0 %v1426
  %6438 = vmatpush.bf16.msra.mxu0 %v1425
  %6439 = vmatpush.bf16.msra.mxu0 %v1424
  %6440 = vmatpush.bf16.msra.mxu0 %v1423
  %6441 = vmatpush.bf16.msra.mxu0 %v1422
  %6442 = vmatpush.bf16.msra.mxu0 %v1421
  %6443 = vmatpush.bf16.msra.mxu0 %v1420
  %6444 = vmatmul.bf16.gmra.mxu0 %v6276
  %v6445 = vpop.f32.mrf.mxu0
  %v6446 = vadd.f32 %v6397, %v6445
  %v6447 = vpop.f32.mrf.mxu0
  %v6448 = vadd.f32 %v6399, %v6447
  %6449 = vmatmul.bf16.gmra.mxu0 %v6280
  %v6450 = vpop.f32.mrf.mxu0
  %v6451 = vadd.f32 %v6402, %v6450
  %v6452 = vpop.f32.mrf.mxu0
  %v6453 = vadd.f32 %v6404, %v6452
  %6454 = vmatmul.bf16.gmra.mxu0 %v6284
  %v6455 = vpop.f32.mrf.mxu0
  %v6456 = vadd.f32 %v6407, %v6455
  %v6457 = vpop.f32.mrf.mxu0
  %v6458 = vadd.f32 %v6409, %v6457
  %6459 = vmatmul.bf16.gmra.mxu0 %v6288
  %v6460 = vpop.f32.mrf.mxu0
  %v6461 = vadd.f32 %v6412, %v6460
  %v6462 = vpop.f32.mrf.mxu0
  %v6463 = vadd.f32 %v6414, %v6462
  %6464 = vmatmul.bf16.gmra.mxu0 %v6292
  %v6465 = vpop.f32.mrf.mxu0
  %v6466 = vadd.f32 %v6417, %v6465
  %v6467 = vpop.f32.mrf.mxu0
  %v6468 = vadd.f32 %v6419, %v6467
  %6469 = vmatmul.bf16.gmra.mxu0 %v6296
  %v6470 = vpop.f32.mrf.mxu0
  %v6471 = vadd.f32 %v6422, %v6470
  %v6472 = vpop.f32.mrf.mxu0
  %v6473 = vadd.f32 %v6424, %v6472
  %6474 = vmatmul.bf16.gmra.mxu0 %v6300
  %v6475 = vpop.f32.mrf.mxu0
  %v6476 = vadd.f32 %v6427, %v6475
  %v6477 = vpop.f32.mrf.mxu0
  %v6478 = vadd.f32 %v6429, %v6477
  %6479 = vmatmul.bf16.gmra.mxu0 %v6304
  %v6480 = vpop.f32.mrf.mxu0
  %v6481 = vadd.f32 %v6432, %v6480
  %v6482 = vpop.f32.mrf.mxu0
  %v6483 = vadd.f32 %v6434, %v6482
  %6484 = vdwg.mxu0
  %6485 = vmatpush.bf16.msra.mxu0 %v1435
  %6486 = vmatpush.bf16.msra.mxu0 %v1434
  %6487 = vmatpush.bf16.msra.mxu0 %v1433
  %6488 = vmatpush.bf16.msra.mxu0 %v1432
  %6489 = vmatpush.bf16.msra.mxu0 %v1431
  %6490 = vmatpush.bf16.msra.mxu0 %v1430
  %6491 = vmatpush.bf16.msra.mxu0 %v1429
  %6492 = vmatpush.bf16.msra.mxu0 %v1428
  %6493 = vmatmul.bf16.gmra.mxu0 %v6277
  %v6494 = vpop.f32.mrf.mxu0
  %v6495 = vadd.f32 %v6446, %v6494
  %v6496 = vpop.f32.mrf.mxu0
  %v6497 = vadd.f32 %v6448, %v6496
  %6498 = vmatmul.bf16.gmra.mxu0 %v6281
  %v6499 = vpop.f32.mrf.mxu0
  %v6500 = vadd.f32 %v6451, %v6499
  %v6501 = vpop.f32.mrf.mxu0
  %v6502 = vadd.f32 %v6453, %v6501
  %6503 = vmatmul.bf16.gmra.mxu0 %v6285
  %v6504 = vpop.f32.mrf.mxu0
  %v6505 = vadd.f32 %v6456, %v6504
  %v6506 = vpop.f32.mrf.mxu0
  %v6507 = vadd.f32 %v6458, %v6506
  %6508 = vmatmul.bf16.gmra.mxu0 %v6289
  %v6509 = vpop.f32.mrf.mxu0
  %v6510 = vadd.f32 %v6461, %v6509
  %v6511 = vpop.f32.mrf.mxu0
  %v6512 = vadd.f32 %v6463, %v6511
  %6513 = vmatmul.bf16.gmra.mxu0 %v6293
  %v6514 = vpop.f32.mrf.mxu0
  %v6515 = vadd.f32 %v6466, %v6514
  %v6516 = vpop.f32.mrf.mxu0
  %v6517 = vadd.f32 %v6468, %v6516
  %6518 = vmatmul.bf16.gmra.mxu0 %v6297
  %v6519 = vpop.f32.mrf.mxu0
  %v6520 = vadd.f32 %v6471, %v6519
  %v6521 = vpop.f32.mrf.mxu0
  %v6522 = vadd.f32 %v6473, %v6521
  %6523 = vmatmul.bf16.gmra.mxu0 %v6301
  %v6524 = vpop.f32.mrf.mxu0
  %v6525 = vadd.f32 %v6476, %v6524
  %v6526 = vpop.f32.mrf.mxu0
  %v6527 = vadd.f32 %v6478, %v6526
  %6528 = vmatmul.bf16.gmra.mxu0 %v6305
  %v6529 = vpop.f32.mrf.mxu0
  %v6530 = vadd.f32 %v6481, %v6529
  %v6531 = vpop.f32.mrf.mxu0
  %v6532 = vadd.f32 %v6483, %v6531
  %6533 = vdwg.mxu0
  %v6534 = vpack.c.bf16 %v6497, %v6495
  %v6535 = vpack.c.bf16 %v6502, %v6500
  %v6536 = vpack.c.bf16 %v6507, %v6505
  %v6537 = vpack.c.bf16 %v6512, %v6510
  %v6538 = vpack.c.bf16 %v6517, %v6515
  %v6539 = vpack.c.bf16 %v6522, %v6520
  %v6540 = vpack.c.bf16 %v6527, %v6525
  %v6541 = vpack.c.bf16 %v6532, %v6530
  %s6542 = scalar_lea.vmem %s5, 576
  %v6543 = vld [vmem:[%s6542] sm:$0xf]
  %v6544 = vld [vmem:[%s6542 + $0x4] sm:$0xf]
  %v6545 = vld [vmem:[%s6542 + $0x8] sm:$0xf]
  %v6546 = vld [vmem:[%s6542 + $0xc] sm:$0xf]
  %v6547 = vld [vmem:[%s6542 + $0x10] sm:$0xf]
  %v6548 = vld [vmem:[%s6542 + $0x14] sm:$0xf]
  %v6549 = vld [vmem:[%s6542 + $0x18] sm:$0xf]
  %v6550 = vld [vmem:[%s6542 + $0x1c] sm:$0xf]
  %v6551 = vld [vmem:[%s6542 + $0x20] sm:$0xf]
  %v6552 = vld [vmem:[%s6542 + $0x24] sm:$0xf]
  %v6553 = vld [vmem:[%s6542 + $0x28] sm:$0xf]
  %v6554 = vld [vmem:[%s6542 + $0x2c] sm:$0xf]
  %v6555 = vld [vmem:[%s6542 + $0x30] sm:$0xf]
  %v6556 = vld [vmem:[%s6542 + $0x34] sm:$0xf]
  %v6557 = vld [vmem:[%s6542 + $0x38] sm:$0xf]
  %v6558 = vld [vmem:[%s6542 + $0x3c] sm:$0xf]
  %v6575 = vunpack.c.l.b16 %v6543
  %v6576 = vunpack.c.l.b16 %v6544
  %v6577 = vunpack.c.l.b16 %v6545
  %v6578 = vunpack.c.l.b16 %v6546
  %v6579 = vunpack.c.l.b16 %v6547
  %v6580 = vunpack.c.l.b16 %v6548
  %v6581 = vunpack.c.l.b16 %v6549
  %v6582 = vunpack.c.l.b16 %v6550
  %v6583 = vunpack.c.l.b16 %v6551
  %v6584 = vunpack.c.l.b16 %v6552
  %v6585 = vunpack.c.l.b16 %v6553
  %v6586 = vunpack.c.l.b16 %v6554
  %v6587 = vunpack.c.l.b16 %v6555
  %v6588 = vunpack.c.l.b16 %v6556
  %v6589 = vunpack.c.l.b16 %v6557
  %v6590 = vunpack.c.l.b16 %v6558
  %v6591 = vpack.c.b16 %v6576, %v6575
  %v6592 = vpack.c.b16 %v6578, %v6577
  %v6593 = vpack.c.b16 %v6580, %v6579
  %v6594 = vpack.c.b16 %v6582, %v6581
  %v6595 = vpack.c.b16 %v6584, %v6583
  %v6596 = vpack.c.b16 %v6586, %v6585
  %v6597 = vpack.c.b16 %v6588, %v6587
  %v6598 = vpack.c.b16 %v6590, %v6589
  %6607 = vmatpush.bf16.msra.mxu0 %v6598
  %6608 = vmatpush.bf16.msra.mxu0 %v6597
  %6609 = vmatpush.bf16.msra.mxu0 %v6596
  %6610 = vmatpush.bf16.msra.mxu0 %v6595
  %6611 = vmatpush.bf16.msra.mxu0 %v6594
  %6612 = vmatpush.bf16.msra.mxu0 %v6593
  %6613 = vmatpush.bf16.msra.mxu0 %v6592
  %6614 = vmatpush.bf16.msra.mxu0 %v6591
  %6615 = vmatmul.bf16.gmra.mxu0 %v6534
  %v6616 = vpop.f32.mrf.mxu0
  %v6617 = vadd.f32 0.0, %v6616
  %v6618 = vpop.f32.mrf.mxu0
  %v6619 = vadd.f32 0.0, %v6618
  %6620 = vmatmul.bf16.gmra.mxu0 %v6535
  %v6621 = vpop.f32.mrf.mxu0
  %v6622 = vadd.f32 0.0, %v6621
  %v6623 = vpop.f32.mrf.mxu0
  %v6624 = vadd.f32 0.0, %v6623
  %6625 = vmatmul.bf16.gmra.mxu0 %v6536
  %v6626 = vpop.f32.mrf.mxu0
  %v6627 = vadd.f32 0.0, %v6626
  %v6628 = vpop.f32.mrf.mxu0
  %v6629 = vadd.f32 0.0, %v6628
  %6630 = vmatmul.bf16.gmra.mxu0 %v6537
  %v6631 = vpop.f32.mrf.mxu0
  %v6632 = vadd.f32 0.0, %v6631
  %v6633 = vpop.f32.mrf.mxu0
  %v6634 = vadd.f32 0.0, %v6633
  %6635 = vmatmul.bf16.gmra.mxu0 %v6538
  %v6636 = vpop.f32.mrf.mxu0
  %v6637 = vadd.f32 0.0, %v6636
  %v6638 = vpop.f32.mrf.mxu0
  %v6639 = vadd.f32 0.0, %v6638
  %6640 = vmatmul.bf16.gmra.mxu0 %v6539
  %v6641 = vpop.f32.mrf.mxu0
  %v6642 = vadd.f32 0.0, %v6641
  %v6643 = vpop.f32.mrf.mxu0
  %v6644 = vadd.f32 0.0, %v6643
  %6645 = vmatmul.bf16.gmra.mxu0 %v6540
  %v6646 = vpop.f32.mrf.mxu0
  %v6647 = vadd.f32 0.0, %v6646
  %v6648 = vpop.f32.mrf.mxu0
  %v6649 = vadd.f32 0.0, %v6648
  %6650 = vmatmul.bf16.gmra.mxu0 %v6541
  %v6651 = vpop.f32.mrf.mxu0
  %v6652 = vadd.f32 0.0, %v6651
  %v6653 = vpop.f32.mrf.mxu0
  %v6654 = vadd.f32 0.0, %v6653
  %6655 = vdwg.mxu0
  %v6656 = vadd.f32 %v6129, %v6617
  %v6657 = vadd.f32 %v6130, %v6619
  %v6658 = vadd.f32 %v6131, %v6622
  %v6659 = vadd.f32 %v6132, %v6624
  %v6660 = vadd.f32 %v6133, %v6627
  %v6661 = vadd.f32 %v6134, %v6629
  %v6662 = vadd.f32 %v6135, %v6632
  %v6663 = vadd.f32 %v6136, %v6634
  %v6664 = vadd.f32 %v6137, %v6637
  %v6665 = vadd.f32 %v6138, %v6639
  %v6666 = vadd.f32 %v6139, %v6642
  %v6667 = vadd.f32 %v6140, %v6644
  %v6668 = vadd.f32 %v6141, %v6647
  %v6669 = vadd.f32 %v6142, %v6649
  %v6670 = vadd.f32 %v6143, %v6652
  %v6671 = vadd.f32 %v6144, %v6654
  %s6672 = scalar_lea.vmem %s4, 2560
  %v6673 = vld [vmem:[%s6672] sm:$0xff]
  %v6674 = vld [vmem:[%s6672 + $0x8] sm:$0xff]
  %v6675 = vld [vmem:[%s6672 + $0x10] sm:$0xff]
  %v6676 = vld [vmem:[%s6672 + $0x18] sm:$0xff]
  %v6677 = vld [vmem:[%s6672 + $0x20] sm:$0xff]
  %v6678 = vld [vmem:[%s6672 + $0x28] sm:$0xff]
  %v6679 = vld [vmem:[%s6672 + $0x30] sm:$0xff]
  %v6680 = vld [vmem:[%s6672 + $0x38] sm:$0xff]
  %v6681 = vld [vmem:[%s6672 + $0x40] sm:$0xff]
  %v6682 = vld [vmem:[%s6672 + $0x48] sm:$0xff]
  %v6683 = vld [vmem:[%s6672 + $0x50] sm:$0xff]
  %v6684 = vld [vmem:[%s6672 + $0x58] sm:$0xff]
  %v6685 = vld [vmem:[%s6672 + $0x60] sm:$0xff]
  %v6686 = vld [vmem:[%s6672 + $0x68] sm:$0xff]
  %v6687 = vld [vmem:[%s6672 + $0x70] sm:$0xff]
  %v6688 = vld [vmem:[%s6672 + $0x78] sm:$0xff]
  %v6689 = vld [vmem:[%s6672 + $0x80] sm:$0xff]
  %v6690 = vld [vmem:[%s6672 + $0x88] sm:$0xff]
  %v6691 = vld [vmem:[%s6672 + $0x90] sm:$0xff]
  %v6692 = vld [vmem:[%s6672 + $0x98] sm:$0xff]
  %v6693 = vld [vmem:[%s6672 + $0xa0] sm:$0xff]
  %v6694 = vld [vmem:[%s6672 + $0xa8] sm:$0xff]
  %v6695 = vld [vmem:[%s6672 + $0xb0] sm:$0xff]
  %v6696 = vld [vmem:[%s6672 + $0xb8] sm:$0xff]
  %v6697 = vld [vmem:[%s6672 + $0xc0] sm:$0xff]
  %v6698 = vld [vmem:[%s6672 + $0xc8] sm:$0xff]
  %v6699 = vld [vmem:[%s6672 + $0xd0] sm:$0xff]
  %v6700 = vld [vmem:[%s6672 + $0xd8] sm:$0xff]
  %v6701 = vld [vmem:[%s6672 + $0xe0] sm:$0xff]
  %v6702 = vld [vmem:[%s6672 + $0xe8] sm:$0xff]
  %v6703 = vld [vmem:[%s6672 + $0xf0] sm:$0xff]
  %v6704 = vld [vmem:[%s6672 + $0xf8] sm:$0xff]
  %v6737 = vunpack.c.l.b16 %v6673
  %v6738 = vunpack.c.h.b16 %v6673
  %v6739 = vunpack.c.l.b16 %v6674
  %v6740 = vunpack.c.h.b16 %v6674
  %v6741 = vunpack.c.l.b16 %v6675
  %v6742 = vunpack.c.h.b16 %v6675
  %v6743 = vunpack.c.l.b16 %v6676
  %v6744 = vunpack.c.h.b16 %v6676
  %v6745 = vunpack.c.l.b16 %v6677
  %v6746 = vunpack.c.h.b16 %v6677
  %v6747 = vunpack.c.l.b16 %v6678
  %v6748 = vunpack.c.h.b16 %v6678
  %v6749 = vunpack.c.l.b16 %v6679
  %v6750 = vunpack.c.h.b16 %v6679
  %v6751 = vunpack.c.l.b16 %v6680
  %v6752 = vunpack.c.h.b16 %v6680
  %v6753 = vunpack.c.l.b16 %v6681
  %v6754 = vunpack.c.h.b16 %v6681
  %v6755 = vunpack.c.l.b16 %v6682
  %v6756 = vunpack.c.h.b16 %v6682
  %v6757 = vunpack.c.l.b16 %v6683
  %v6758 = vunpack.c.h.b16 %v6683
  %v6759 = vunpack.c.l.b16 %v6684
  %v6760 = vunpack.c.h.b16 %v6684
  %v6761 = vunpack.c.l.b16 %v6685
  %v6762 = vunpack.c.h.b16 %v6685
  %v6763 = vunpack.c.l.b16 %v6686
  %v6764 = vunpack.c.h.b16 %v6686
  %v6765 = vunpack.c.l.b16 %v6687
  %v6766 = vunpack.c.h.b16 %v6687
  %v6767 = vunpack.c.l.b16 %v6688
  %v6768 = vunpack.c.h.b16 %v6688
  %v6769 = vunpack.c.l.b16 %v6689
  %v6770 = vunpack.c.h.b16 %v6689
  %v6771 = vunpack.c.l.b16 %v6690
  %v6772 = vunpack.c.h.b16 %v6690
  %v6773 = vunpack.c.l.b16 %v6691
  %v6774 = vunpack.c.h.b16 %v6691
  %v6775 = vunpack.c.l.b16 %v6692
  %v6776 = vunpack.c.h.b16 %v6692
  %v6777 = vunpack.c.l.b16 %v6693
  %v6778 = vunpack.c.h.b16 %v6693
  %v6779 = vunpack.c.l.b16 %v6694
  %v6780 = vunpack.c.h.b16 %v6694
  %v6781 = vunpack.c.l.b16 %v6695
  %v6782 = vunpack.c.h.b16 %v6695
  %v6783 = vunpack.c.l.b16 %v6696
  %v6784 = vunpack.c.h.b16 %v6696
  %v6785 = vunpack.c.l.b16 %v6697
  %v6786 = vunpack.c.h.b16 %v6697
  %v6787 = vunpack.c.l.b16 %v6698
  %v6788 = vunpack.c.h.b16 %v6698
  %v6789 = vunpack.c.l.b16 %v6699
  %v6790 = vunpack.c.h.b16 %v6699
  %v6791 = vunpack.c.l.b16 %v6700
  %v6792 = vunpack.c.h.b16 %v6700
  %v6793 = vunpack.c.l.b16 %v6701
  %v6794 = vunpack.c.h.b16 %v6701
  %v6795 = vunpack.c.l.b16 %v6702
  %v6796 = vunpack.c.h.b16 %v6702
  %v6797 = vunpack.c.l.b16 %v6703
  %v6798 = vunpack.c.h.b16 %v6703
  %v6799 = vunpack.c.l.b16 %v6704
  %v6800 = vunpack.c.h.b16 %v6704
  %v6801 = vpack.c.b16 %v6741, %v6737
  %v6802 = vpack.c.b16 %v6742, %v6738
  %v6803 = vpack.c.b16 %v6743, %v6739
  %v6804 = vpack.c.b16 %v6744, %v6740
  %v6805 = vpack.c.b16 %v6749, %v6745
  %v6806 = vpack.c.b16 %v6750, %v6746
  %v6807 = vpack.c.b16 %v6751, %v6747
  %v6808 = vpack.c.b16 %v6752, %v6748
  %v6809 = vpack.c.b16 %v6757, %v6753
  %v6810 = vpack.c.b16 %v6758, %v6754
  %v6811 = vpack.c.b16 %v6759, %v6755
  %v6812 = vpack.c.b16 %v6760, %v6756
  %v6813 = vpack.c.b16 %v6765, %v6761
  %v6814 = vpack.c.b16 %v6766, %v6762
  %v6815 = vpack.c.b16 %v6767, %v6763
  %v6816 = vpack.c.b16 %v6768, %v6764
  %v6817 = vpack.c.b16 %v6773, %v6769
  %v6818 = vpack.c.b16 %v6774, %v6770
  %v6819 = vpack.c.b16 %v6775, %v6771
  %v6820 = vpack.c.b16 %v6776, %v6772
  %v6821 = vpack.c.b16 %v6781, %v6777
  %v6822 = vpack.c.b16 %v6782, %v6778
  %v6823 = vpack.c.b16 %v6783, %v6779
  %v6824 = vpack.c.b16 %v6784, %v6780
  %v6825 = vpack.c.b16 %v6789, %v6785
  %v6826 = vpack.c.b16 %v6790, %v6786
  %v6827 = vpack.c.b16 %v6791, %v6787
  %v6828 = vpack.c.b16 %v6792, %v6788
  %v6829 = vpack.c.b16 %v6797, %v6793
  %v6830 = vpack.c.b16 %v6798, %v6794
  %v6831 = vpack.c.b16 %v6799, %v6795
  %v6832 = vpack.c.b16 %v6800, %v6796
  %6865 = vmatpush.bf16.msra.mxu0 %v1411
  %6866 = vmatpush.bf16.msra.mxu0 %v1410
  %6867 = vmatpush.bf16.msra.mxu0 %v1409
  %6868 = vmatpush.bf16.msra.mxu0 %v1408
  %6869 = vmatpush.bf16.msra.mxu0 %v1407
  %6870 = vmatpush.bf16.msra.mxu0 %v1406
  %6871 = vmatpush.bf16.msra.mxu0 %v1405
  %6872 = vmatpush.bf16.msra.mxu0 %v1404
  %6873 = vmatmul.bf16.gmra.mxu0 %v6801
  %v6874 = vpop.f32.mrf.mxu0
  %v6875 = vadd.f32 0.0, %v6874
  %v6876 = vpop.f32.mrf.mxu0
  %v6877 = vadd.f32 0.0, %v6876
  %6878 = vmatmul.bf16.gmra.mxu0 %v6805
  %v6879 = vpop.f32.mrf.mxu0
  %v6880 = vadd.f32 0.0, %v6879
  %v6881 = vpop.f32.mrf.mxu0
  %v6882 = vadd.f32 0.0, %v6881
  %6883 = vmatmul.bf16.gmra.mxu0 %v6809
  %v6884 = vpop.f32.mrf.mxu0
  %v6885 = vadd.f32 0.0, %v6884
  %v6886 = vpop.f32.mrf.mxu0
  %v6887 = vadd.f32 0.0, %v6886
  %6888 = vmatmul.bf16.gmra.mxu0 %v6813
  %v6889 = vpop.f32.mrf.mxu0
  %v6890 = vadd.f32 0.0, %v6889
  %v6891 = vpop.f32.mrf.mxu0
  %v6892 = vadd.f32 0.0, %v6891
  %6893 = vmatmul.bf16.gmra.mxu0 %v6817
  %v6894 = vpop.f32.mrf.mxu0
  %v6895 = vadd.f32 0.0, %v6894
  %v6896 = vpop.f32.mrf.mxu0
  %v6897 = vadd.f32 0.0, %v6896
  %6898 = vmatmul.bf16.gmra.mxu0 %v6821
  %v6899 = vpop.f32.mrf.mxu0
  %v6900 = vadd.f32 0.0, %v6899
  %v6901 = vpop.f32.mrf.mxu0
  %v6902 = vadd.f32 0.0, %v6901
  %6903 = vmatmul.bf16.gmra.mxu0 %v6825
  %v6904 = vpop.f32.mrf.mxu0
  %v6905 = vadd.f32 0.0, %v6904
  %v6906 = vpop.f32.mrf.mxu0
  %v6907 = vadd.f32 0.0, %v6906
  %6908 = vmatmul.bf16.gmra.mxu0 %v6829
  %v6909 = vpop.f32.mrf.mxu0
  %v6910 = vadd.f32 0.0, %v6909
  %v6911 = vpop.f32.mrf.mxu0
  %v6912 = vadd.f32 0.0, %v6911
  %6913 = vdwg.mxu0
  %6914 = vmatpush.bf16.msra.mxu0 %v1419
  %6915 = vmatpush.bf16.msra.mxu0 %v1418
  %6916 = vmatpush.bf16.msra.mxu0 %v1417
  %6917 = vmatpush.bf16.msra.mxu0 %v1416
  %6918 = vmatpush.bf16.msra.mxu0 %v1415
  %6919 = vmatpush.bf16.msra.mxu0 %v1414
  %6920 = vmatpush.bf16.msra.mxu0 %v1413
  %6921 = vmatpush.bf16.msra.mxu0 %v1412
  %6922 = vmatmul.bf16.gmra.mxu0 %v6802
  %v6923 = vpop.f32.mrf.mxu0
  %v6924 = vadd.f32 %v6875, %v6923
  %v6925 = vpop.f32.mrf.mxu0
  %v6926 = vadd.f32 %v6877, %v6925
  %6927 = vmatmul.bf16.gmra.mxu0 %v6806
  %v6928 = vpop.f32.mrf.mxu0
  %v6929 = vadd.f32 %v6880, %v6928
  %v6930 = vpop.f32.mrf.mxu0
  %v6931 = vadd.f32 %v6882, %v6930
  %6932 = vmatmul.bf16.gmra.mxu0 %v6810
  %v6933 = vpop.f32.mrf.mxu0
  %v6934 = vadd.f32 %v6885, %v6933
  %v6935 = vpop.f32.mrf.mxu0
  %v6936 = vadd.f32 %v6887, %v6935
  %6937 = vmatmul.bf16.gmra.mxu0 %v6814
  %v6938 = vpop.f32.mrf.mxu0
  %v6939 = vadd.f32 %v6890, %v6938
  %v6940 = vpop.f32.mrf.mxu0
  %v6941 = vadd.f32 %v6892, %v6940
  %6942 = vmatmul.bf16.gmra.mxu0 %v6818
  %v6943 = vpop.f32.mrf.mxu0
  %v6944 = vadd.f32 %v6895, %v6943
  %v6945 = vpop.f32.mrf.mxu0
  %v6946 = vadd.f32 %v6897, %v6945
  %6947 = vmatmul.bf16.gmra.mxu0 %v6822
  %v6948 = vpop.f32.mrf.mxu0
  %v6949 = vadd.f32 %v6900, %v6948
  %v6950 = vpop.f32.mrf.mxu0
  %v6951 = vadd.f32 %v6902, %v6950
  %6952 = vmatmul.bf16.gmra.mxu0 %v6826
  %v6953 = vpop.f32.mrf.mxu0
  %v6954 = vadd.f32 %v6905, %v6953
  %v6955 = vpop.f32.mrf.mxu0
  %v6956 = vadd.f32 %v6907, %v6955
  %6957 = vmatmul.bf16.gmra.mxu0 %v6830
  %v6958 = vpop.f32.mrf.mxu0
  %v6959 = vadd.f32 %v6910, %v6958
  %v6960 = vpop.f32.mrf.mxu0
  %v6961 = vadd.f32 %v6912, %v6960
  %6962 = vdwg.mxu0
  %6963 = vmatpush.bf16.msra.mxu0 %v1427
  %6964 = vmatpush.bf16.msra.mxu0 %v1426
  %6965 = vmatpush.bf16.msra.mxu0 %v1425
  %6966 = vmatpush.bf16.msra.mxu0 %v1424
  %6967 = vmatpush.bf16.msra.mxu0 %v1423
  %6968 = vmatpush.bf16.msra.mxu0 %v1422
  %6969 = vmatpush.bf16.msra.mxu0 %v1421
  %6970 = vmatpush.bf16.msra.mxu0 %v1420
  %6971 = vmatmul.bf16.gmra.mxu0 %v6803
  %v6972 = vpop.f32.mrf.mxu0
  %v6973 = vadd.f32 %v6924, %v6972
  %v6974 = vpop.f32.mrf.mxu0
  %v6975 = vadd.f32 %v6926, %v6974
  %6976 = vmatmul.bf16.gmra.mxu0 %v6807
  %v6977 = vpop.f32.mrf.mxu0
  %v6978 = vadd.f32 %v6929, %v6977
  %v6979 = vpop.f32.mrf.mxu0
  %v6980 = vadd.f32 %v6931, %v6979
  %6981 = vmatmul.bf16.gmra.mxu0 %v6811
  %v6982 = vpop.f32.mrf.mxu0
  %v6983 = vadd.f32 %v6934, %v6982
  %v6984 = vpop.f32.mrf.mxu0
  %v6985 = vadd.f32 %v6936, %v6984
  %6986 = vmatmul.bf16.gmra.mxu0 %v6815
  %v6987 = vpop.f32.mrf.mxu0
  %v6988 = vadd.f32 %v6939, %v6987
  %v6989 = vpop.f32.mrf.mxu0
  %v6990 = vadd.f32 %v6941, %v6989
  %6991 = vmatmul.bf16.gmra.mxu0 %v6819
  %v6992 = vpop.f32.mrf.mxu0
  %v6993 = vadd.f32 %v6944, %v6992
  %v6994 = vpop.f32.mrf.mxu0
  %v6995 = vadd.f32 %v6946, %v6994
  %6996 = vmatmul.bf16.gmra.mxu0 %v6823
  %v6997 = vpop.f32.mrf.mxu0
  %v6998 = vadd.f32 %v6949, %v6997
  %v6999 = vpop.f32.mrf.mxu0
  %v7000 = vadd.f32 %v6951, %v6999
  %7001 = vmatmul.bf16.gmra.mxu0 %v6827
  %v7002 = vpop.f32.mrf.mxu0
  %v7003 = vadd.f32 %v6954, %v7002
  %v7004 = vpop.f32.mrf.mxu0
  %v7005 = vadd.f32 %v6956, %v7004
  %7006 = vmatmul.bf16.gmra.mxu0 %v6831
  %v7007 = vpop.f32.mrf.mxu0
  %v7008 = vadd.f32 %v6959, %v7007
  %v7009 = vpop.f32.mrf.mxu0
  %v7010 = vadd.f32 %v6961, %v7009
  %7011 = vdwg.mxu0
  %7012 = vmatpush.bf16.msra.mxu0 %v1435
  %7013 = vmatpush.bf16.msra.mxu0 %v1434
  %7014 = vmatpush.bf16.msra.mxu0 %v1433
  %7015 = vmatpush.bf16.msra.mxu0 %v1432
  %7016 = vmatpush.bf16.msra.mxu0 %v1431
  %7017 = vmatpush.bf16.msra.mxu0 %v1430
  %7018 = vmatpush.bf16.msra.mxu0 %v1429
  %7019 = vmatpush.bf16.msra.mxu0 %v1428
  %7020 = vmatmul.bf16.gmra.mxu0 %v6804
  %v7021 = vpop.f32.mrf.mxu0
  %v7022 = vadd.f32 %v6973, %v7021
  %v7023 = vpop.f32.mrf.mxu0
  %v7024 = vadd.f32 %v6975, %v7023
  %7025 = vmatmul.bf16.gmra.mxu0 %v6808
  %v7026 = vpop.f32.mrf.mxu0
  %v7027 = vadd.f32 %v6978, %v7026
  %v7028 = vpop.f32.mrf.mxu0
  %v7029 = vadd.f32 %v6980, %v7028
  %7030 = vmatmul.bf16.gmra.mxu0 %v6812
  %v7031 = vpop.f32.mrf.mxu0
  %v7032 = vadd.f32 %v6983, %v7031
  %v7033 = vpop.f32.mrf.mxu0
  %v7034 = vadd.f32 %v6985, %v7033
  %7035 = vmatmul.bf16.gmra.mxu0 %v6816
  %v7036 = vpop.f32.mrf.mxu0
  %v7037 = vadd.f32 %v6988, %v7036
  %v7038 = vpop.f32.mrf.mxu0
  %v7039 = vadd.f32 %v6990, %v7038
  %7040 = vmatmul.bf16.gmra.mxu0 %v6820
  %v7041 = vpop.f32.mrf.mxu0
  %v7042 = vadd.f32 %v6993, %v7041
  %v7043 = vpop.f32.mrf.mxu0
  %v7044 = vadd.f32 %v6995, %v7043
  %7045 = vmatmul.bf16.gmra.mxu0 %v6824
  %v7046 = vpop.f32.mrf.mxu0
  %v7047 = vadd.f32 %v6998, %v7046
  %v7048 = vpop.f32.mrf.mxu0
  %v7049 = vadd.f32 %v7000, %v7048
  %7050 = vmatmul.bf16.gmra.mxu0 %v6828
  %v7051 = vpop.f32.mrf.mxu0
  %v7052 = vadd.f32 %v7003, %v7051
  %v7053 = vpop.f32.mrf.mxu0
  %v7054 = vadd.f32 %v7005, %v7053
  %7055 = vmatmul.bf16.gmra.mxu0 %v6832
  %v7056 = vpop.f32.mrf.mxu0
  %v7057 = vadd.f32 %v7008, %v7056
  %v7058 = vpop.f32.mrf.mxu0
  %v7059 = vadd.f32 %v7010, %v7058
  %7060 = vdwg.mxu0
  %v7061 = vpack.c.bf16 %v7024, %v7022
  %v7062 = vpack.c.bf16 %v7029, %v7027
  %v7063 = vpack.c.bf16 %v7034, %v7032
  %v7064 = vpack.c.bf16 %v7039, %v7037
  %v7065 = vpack.c.bf16 %v7044, %v7042
  %v7066 = vpack.c.bf16 %v7049, %v7047
  %v7067 = vpack.c.bf16 %v7054, %v7052
  %v7068 = vpack.c.bf16 %v7059, %v7057
  %s7069 = scalar_lea.vmem %s5, 640
  %v7070 = vld [vmem:[%s7069] sm:$0xf]
  %v7071 = vld [vmem:[%s7069 + $0x4] sm:$0xf]
  %v7072 = vld [vmem:[%s7069 + $0x8] sm:$0xf]
  %v7073 = vld [vmem:[%s7069 + $0xc] sm:$0xf]
  %v7074 = vld [vmem:[%s7069 + $0x10] sm:$0xf]
  %v7075 = vld [vmem:[%s7069 + $0x14] sm:$0xf]
  %v7076 = vld [vmem:[%s7069 + $0x18] sm:$0xf]
  %v7077 = vld [vmem:[%s7069 + $0x1c] sm:$0xf]
  %v7078 = vld [vmem:[%s7069 + $0x20] sm:$0xf]
  %v7079 = vld [vmem:[%s7069 + $0x24] sm:$0xf]
  %v7080 = vld [vmem:[%s7069 + $0x28] sm:$0xf]
  %v7081 = vld [vmem:[%s7069 + $0x2c] sm:$0xf]
  %v7082 = vld [vmem:[%s7069 + $0x30] sm:$0xf]
  %v7083 = vld [vmem:[%s7069 + $0x34] sm:$0xf]
  %v7084 = vld [vmem:[%s7069 + $0x38] sm:$0xf]
  %v7085 = vld [vmem:[%s7069 + $0x3c] sm:$0xf]
  %v7102 = vunpack.c.l.b16 %v7070
  %v7103 = vunpack.c.l.b16 %v7071
  %v7104 = vunpack.c.l.b16 %v7072
  %v7105 = vunpack.c.l.b16 %v7073
  %v7106 = vunpack.c.l.b16 %v7074
  %v7107 = vunpack.c.l.b16 %v7075
  %v7108 = vunpack.c.l.b16 %v7076
  %v7109 = vunpack.c.l.b16 %v7077
  %v7110 = vunpack.c.l.b16 %v7078
  %v7111 = vunpack.c.l.b16 %v7079
  %v7112 = vunpack.c.l.b16 %v7080
  %v7113 = vunpack.c.l.b16 %v7081
  %v7114 = vunpack.c.l.b16 %v7082
  %v7115 = vunpack.c.l.b16 %v7083
  %v7116 = vunpack.c.l.b16 %v7084
  %v7117 = vunpack.c.l.b16 %v7085
  %v7118 = vpack.c.b16 %v7103, %v7102
  %v7119 = vpack.c.b16 %v7105, %v7104
  %v7120 = vpack.c.b16 %v7107, %v7106
  %v7121 = vpack.c.b16 %v7109, %v7108
  %v7122 = vpack.c.b16 %v7111, %v7110
  %v7123 = vpack.c.b16 %v7113, %v7112
  %v7124 = vpack.c.b16 %v7115, %v7114
  %v7125 = vpack.c.b16 %v7117, %v7116
  %7134 = vmatpush.bf16.msra.mxu0 %v7125
  %7135 = vmatpush.bf16.msra.mxu0 %v7124
  %7136 = vmatpush.bf16.msra.mxu0 %v7123
  %7137 = vmatpush.bf16.msra.mxu0 %v7122
  %7138 = vmatpush.bf16.msra.mxu0 %v7121
  %7139 = vmatpush.bf16.msra.mxu0 %v7120
  %7140 = vmatpush.bf16.msra.mxu0 %v7119
  %7141 = vmatpush.bf16.msra.mxu0 %v7118
  %7142 = vmatmul.bf16.gmra.mxu0 %v7061
  %v7143 = vpop.f32.mrf.mxu0
  %v7144 = vadd.f32 0.0, %v7143
  %v7145 = vpop.f32.mrf.mxu0
  %v7146 = vadd.f32 0.0, %v7145
  %7147 = vmatmul.bf16.gmra.mxu0 %v7062
  %v7148 = vpop.f32.mrf.mxu0
  %v7149 = vadd.f32 0.0, %v7148
  %v7150 = vpop.f32.mrf.mxu0
  %v7151 = vadd.f32 0.0, %v7150
  %7152 = vmatmul.bf16.gmra.mxu0 %v7063
  %v7153 = vpop.f32.mrf.mxu0
  %v7154 = vadd.f32 0.0, %v7153
  %v7155 = vpop.f32.mrf.mxu0
  %v7156 = vadd.f32 0.0, %v7155
  %7157 = vmatmul.bf16.gmra.mxu0 %v7064
  %v7158 = vpop.f32.mrf.mxu0
  %v7159 = vadd.f32 0.0, %v7158
  %v7160 = vpop.f32.mrf.mxu0
  %v7161 = vadd.f32 0.0, %v7160
  %7162 = vmatmul.bf16.gmra.mxu0 %v7065
  %v7163 = vpop.f32.mrf.mxu0
  %v7164 = vadd.f32 0.0, %v7163
  %v7165 = vpop.f32.mrf.mxu0
  %v7166 = vadd.f32 0.0, %v7165
  %7167 = vmatmul.bf16.gmra.mxu0 %v7066
  %v7168 = vpop.f32.mrf.mxu0
  %v7169 = vadd.f32 0.0, %v7168
  %v7170 = vpop.f32.mrf.mxu0
  %v7171 = vadd.f32 0.0, %v7170
  %7172 = vmatmul.bf16.gmra.mxu0 %v7067
  %v7173 = vpop.f32.mrf.mxu0
  %v7174 = vadd.f32 0.0, %v7173
  %v7175 = vpop.f32.mrf.mxu0
  %v7176 = vadd.f32 0.0, %v7175
  %7177 = vmatmul.bf16.gmra.mxu0 %v7068
  %v7178 = vpop.f32.mrf.mxu0
  %v7179 = vadd.f32 0.0, %v7178
  %v7180 = vpop.f32.mrf.mxu0
  %v7181 = vadd.f32 0.0, %v7180
  %7182 = vdwg.mxu0
  %v7183 = vadd.f32 %v6656, %v7144
  %v7184 = vadd.f32 %v6657, %v7146
  %v7185 = vadd.f32 %v6658, %v7149
  %v7186 = vadd.f32 %v6659, %v7151
  %v7187 = vadd.f32 %v6660, %v7154
  %v7188 = vadd.f32 %v6661, %v7156
  %v7189 = vadd.f32 %v6662, %v7159
  %v7190 = vadd.f32 %v6663, %v7161
  %v7191 = vadd.f32 %v6664, %v7164
  %v7192 = vadd.f32 %v6665, %v7166
  %v7193 = vadd.f32 %v6666, %v7169
  %v7194 = vadd.f32 %v6667, %v7171
  %v7195 = vadd.f32 %v6668, %v7174
  %v7196 = vadd.f32 %v6669, %v7176
  %v7197 = vadd.f32 %v6670, %v7179
  %v7198 = vadd.f32 %v6671, %v7181
  %s7199 = scalar_lea.vmem %s4, 2816
  %v7200 = vld [vmem:[%s7199] sm:$0xff]
  %v7201 = vld [vmem:[%s7199 + $0x8] sm:$0xff]
  %v7202 = vld [vmem:[%s7199 + $0x10] sm:$0xff]
  %v7203 = vld [vmem:[%s7199 + $0x18] sm:$0xff]
  %v7204 = vld [vmem:[%s7199 + $0x20] sm:$0xff]
  %v7205 = vld [vmem:[%s7199 + $0x28] sm:$0xff]
  %v7206 = vld [vmem:[%s7199 + $0x30] sm:$0xff]
  %v7207 = vld [vmem:[%s7199 + $0x38] sm:$0xff]
  %v7208 = vld [vmem:[%s7199 + $0x40] sm:$0xff]
  %v7209 = vld [vmem:[%s7199 + $0x48] sm:$0xff]
  %v7210 = vld [vmem:[%s7199 + $0x50] sm:$0xff]
  %v7211 = vld [vmem:[%s7199 + $0x58] sm:$0xff]
  %v7212 = vld [vmem:[%s7199 + $0x60] sm:$0xff]
  %v7213 = vld [vmem:[%s7199 + $0x68] sm:$0xff]
  %v7214 = vld [vmem:[%s7199 + $0x70] sm:$0xff]
  %v7215 = vld [vmem:[%s7199 + $0x78] sm:$0xff]
  %v7216 = vld [vmem:[%s7199 + $0x80] sm:$0xff]
  %v7217 = vld [vmem:[%s7199 + $0x88] sm:$0xff]
  %v7218 = vld [vmem:[%s7199 + $0x90] sm:$0xff]
  %v7219 = vld [vmem:[%s7199 + $0x98] sm:$0xff]
  %v7220 = vld [vmem:[%s7199 + $0xa0] sm:$0xff]
  %v7221 = vld [vmem:[%s7199 + $0xa8] sm:$0xff]
  %v7222 = vld [vmem:[%s7199 + $0xb0] sm:$0xff]
  %v7223 = vld [vmem:[%s7199 + $0xb8] sm:$0xff]
  %v7224 = vld [vmem:[%s7199 + $0xc0] sm:$0xff]
  %v7225 = vld [vmem:[%s7199 + $0xc8] sm:$0xff]
  %v7226 = vld [vmem:[%s7199 + $0xd0] sm:$0xff]
  %v7227 = vld [vmem:[%s7199 + $0xd8] sm:$0xff]
  %v7228 = vld [vmem:[%s7199 + $0xe0] sm:$0xff]
  %v7229 = vld [vmem:[%s7199 + $0xe8] sm:$0xff]
  %v7230 = vld [vmem:[%s7199 + $0xf0] sm:$0xff]
  %v7231 = vld [vmem:[%s7199 + $0xf8] sm:$0xff]
  %v7264 = vunpack.c.l.b16 %v7200
  %v7265 = vunpack.c.h.b16 %v7200
  %v7266 = vunpack.c.l.b16 %v7201
  %v7267 = vunpack.c.h.b16 %v7201
  %v7268 = vunpack.c.l.b16 %v7202
  %v7269 = vunpack.c.h.b16 %v7202
  %v7270 = vunpack.c.l.b16 %v7203
  %v7271 = vunpack.c.h.b16 %v7203
  %v7272 = vunpack.c.l.b16 %v7204
  %v7273 = vunpack.c.h.b16 %v7204
  %v7274 = vunpack.c.l.b16 %v7205
  %v7275 = vunpack.c.h.b16 %v7205
  %v7276 = vunpack.c.l.b16 %v7206
  %v7277 = vunpack.c.h.b16 %v7206
  %v7278 = vunpack.c.l.b16 %v7207
  %v7279 = vunpack.c.h.b16 %v7207
  %v7280 = vunpack.c.l.b16 %v7208
  %v7281 = vunpack.c.h.b16 %v7208
  %v7282 = vunpack.c.l.b16 %v7209
  %v7283 = vunpack.c.h.b16 %v7209
  %v7284 = vunpack.c.l.b16 %v7210
  %v7285 = vunpack.c.h.b16 %v7210
  %v7286 = vunpack.c.l.b16 %v7211
  %v7287 = vunpack.c.h.b16 %v7211
  %v7288 = vunpack.c.l.b16 %v7212
  %v7289 = vunpack.c.h.b16 %v7212
  %v7290 = vunpack.c.l.b16 %v7213
  %v7291 = vunpack.c.h.b16 %v7213
  %v7292 = vunpack.c.l.b16 %v7214
  %v7293 = vunpack.c.h.b16 %v7214
  %v7294 = vunpack.c.l.b16 %v7215
  %v7295 = vunpack.c.h.b16 %v7215
  %v7296 = vunpack.c.l.b16 %v7216
  %v7297 = vunpack.c.h.b16 %v7216
  %v7298 = vunpack.c.l.b16 %v7217
  %v7299 = vunpack.c.h.b16 %v7217
  %v7300 = vunpack.c.l.b16 %v7218
  %v7301 = vunpack.c.h.b16 %v7218
  %v7302 = vunpack.c.l.b16 %v7219
  %v7303 = vunpack.c.h.b16 %v7219
  %v7304 = vunpack.c.l.b16 %v7220
  %v7305 = vunpack.c.h.b16 %v7220
  %v7306 = vunpack.c.l.b16 %v7221
  %v7307 = vunpack.c.h.b16 %v7221
  %v7308 = vunpack.c.l.b16 %v7222
  %v7309 = vunpack.c.h.b16 %v7222
  %v7310 = vunpack.c.l.b16 %v7223
  %v7311 = vunpack.c.h.b16 %v7223
  %v7312 = vunpack.c.l.b16 %v7224
  %v7313 = vunpack.c.h.b16 %v7224
  %v7314 = vunpack.c.l.b16 %v7225
  %v7315 = vunpack.c.h.b16 %v7225
  %v7316 = vunpack.c.l.b16 %v7226
  %v7317 = vunpack.c.h.b16 %v7226
  %v7318 = vunpack.c.l.b16 %v7227
  %v7319 = vunpack.c.h.b16 %v7227
  %v7320 = vunpack.c.l.b16 %v7228
  %v7321 = vunpack.c.h.b16 %v7228
  %v7322 = vunpack.c.l.b16 %v7229
  %v7323 = vunpack.c.h.b16 %v7229
  %v7324 = vunpack.c.l.b16 %v7230
  %v7325 = vunpack.c.h.b16 %v7230
  %v7326 = vunpack.c.l.b16 %v7231
  %v7327 = vunpack.c.h.b16 %v7231
  %v7328 = vpack.c.b16 %v7268, %v7264
  %v7329 = vpack.c.b16 %v7269, %v7265
  %v7330 = vpack.c.b16 %v7270, %v7266
  %v7331 = vpack.c.b16 %v7271, %v7267
  %v7332 = vpack.c.b16 %v7276, %v7272
  %v7333 = vpack.c.b16 %v7277, %v7273
  %v7334 = vpack.c.b16 %v7278, %v7274
  %v7335 = vpack.c.b16 %v7279, %v7275
  %v7336 = vpack.c.b16 %v7284, %v7280
  %v7337 = vpack.c.b16 %v7285, %v7281
  %v7338 = vpack.c.b16 %v7286, %v7282
  %v7339 = vpack.c.b16 %v7287, %v7283
  %v7340 = vpack.c.b16 %v7292, %v7288
  %v7341 = vpack.c.b16 %v7293, %v7289
  %v7342 = vpack.c.b16 %v7294, %v7290
  %v7343 = vpack.c.b16 %v7295, %v7291
  %v7344 = vpack.c.b16 %v7300, %v7296
  %v7345 = vpack.c.b16 %v7301, %v7297
  %v7346 = vpack.c.b16 %v7302, %v7298
  %v7347 = vpack.c.b16 %v7303, %v7299
  %v7348 = vpack.c.b16 %v7308, %v7304
  %v7349 = vpack.c.b16 %v7309, %v7305
  %v7350 = vpack.c.b16 %v7310, %v7306
  %v7351 = vpack.c.b16 %v7311, %v7307
  %v7352 = vpack.c.b16 %v7316, %v7312
  %v7353 = vpack.c.b16 %v7317, %v7313
  %v7354 = vpack.c.b16 %v7318, %v7314
  %v7355 = vpack.c.b16 %v7319, %v7315
  %v7356 = vpack.c.b16 %v7324, %v7320
  %v7357 = vpack.c.b16 %v7325, %v7321
  %v7358 = vpack.c.b16 %v7326, %v7322
  %v7359 = vpack.c.b16 %v7327, %v7323
  %7392 = vmatpush.bf16.msra.mxu0 %v1411
  %7393 = vmatpush.bf16.msra.mxu0 %v1410
  %7394 = vmatpush.bf16.msra.mxu0 %v1409
  %7395 = vmatpush.bf16.msra.mxu0 %v1408
  %7396 = vmatpush.bf16.msra.mxu0 %v1407
  %7397 = vmatpush.bf16.msra.mxu0 %v1406
  %7398 = vmatpush.bf16.msra.mxu0 %v1405
  %7399 = vmatpush.bf16.msra.mxu0 %v1404
  %7400 = vmatmul.bf16.gmra.mxu0 %v7328
  %v7401 = vpop.f32.mrf.mxu0
  %v7402 = vadd.f32 0.0, %v7401
  %v7403 = vpop.f32.mrf.mxu0
  %v7404 = vadd.f32 0.0, %v7403
  %7405 = vmatmul.bf16.gmra.mxu0 %v7332
  %v7406 = vpop.f32.mrf.mxu0
  %v7407 = vadd.f32 0.0, %v7406
  %v7408 = vpop.f32.mrf.mxu0
  %v7409 = vadd.f32 0.0, %v7408
  %7410 = vmatmul.bf16.gmra.mxu0 %v7336
  %v7411 = vpop.f32.mrf.mxu0
  %v7412 = vadd.f32 0.0, %v7411
  %v7413 = vpop.f32.mrf.mxu0
  %v7414 = vadd.f32 0.0, %v7413
  %7415 = vmatmul.bf16.gmra.mxu0 %v7340
  %v7416 = vpop.f32.mrf.mxu0
  %v7417 = vadd.f32 0.0, %v7416
  %v7418 = vpop.f32.mrf.mxu0
  %v7419 = vadd.f32 0.0, %v7418
  %7420 = vmatmul.bf16.gmra.mxu0 %v7344
  %v7421 = vpop.f32.mrf.mxu0
  %v7422 = vadd.f32 0.0, %v7421
  %v7423 = vpop.f32.mrf.mxu0
  %v7424 = vadd.f32 0.0, %v7423
  %7425 = vmatmul.bf16.gmra.mxu0 %v7348
  %v7426 = vpop.f32.mrf.mxu0
  %v7427 = vadd.f32 0.0, %v7426
  %v7428 = vpop.f32.mrf.mxu0
  %v7429 = vadd.f32 0.0, %v7428
  %7430 = vmatmul.bf16.gmra.mxu0 %v7352
  %v7431 = vpop.f32.mrf.mxu0
  %v7432 = vadd.f32 0.0, %v7431
  %v7433 = vpop.f32.mrf.mxu0
  %v7434 = vadd.f32 0.0, %v7433
  %7435 = vmatmul.bf16.gmra.mxu0 %v7356
  %v7436 = vpop.f32.mrf.mxu0
  %v7437 = vadd.f32 0.0, %v7436
  %v7438 = vpop.f32.mrf.mxu0
  %v7439 = vadd.f32 0.0, %v7438
  %7440 = vdwg.mxu0
  %7441 = vmatpush.bf16.msra.mxu0 %v1419
  %7442 = vmatpush.bf16.msra.mxu0 %v1418
  %7443 = vmatpush.bf16.msra.mxu0 %v1417
  %7444 = vmatpush.bf16.msra.mxu0 %v1416
  %7445 = vmatpush.bf16.msra.mxu0 %v1415
  %7446 = vmatpush.bf16.msra.mxu0 %v1414
  %7447 = vmatpush.bf16.msra.mxu0 %v1413
  %7448 = vmatpush.bf16.msra.mxu0 %v1412
  %7449 = vmatmul.bf16.gmra.mxu0 %v7329
  %v7450 = vpop.f32.mrf.mxu0
  %v7451 = vadd.f32 %v7402, %v7450
  %v7452 = vpop.f32.mrf.mxu0
  %v7453 = vadd.f32 %v7404, %v7452
  %7454 = vmatmul.bf16.gmra.mxu0 %v7333
  %v7455 = vpop.f32.mrf.mxu0
  %v7456 = vadd.f32 %v7407, %v7455
  %v7457 = vpop.f32.mrf.mxu0
  %v7458 = vadd.f32 %v7409, %v7457
  %7459 = vmatmul.bf16.gmra.mxu0 %v7337
  %v7460 = vpop.f32.mrf.mxu0
  %v7461 = vadd.f32 %v7412, %v7460
  %v7462 = vpop.f32.mrf.mxu0
  %v7463 = vadd.f32 %v7414, %v7462
  %7464 = vmatmul.bf16.gmra.mxu0 %v7341
  %v7465 = vpop.f32.mrf.mxu0
  %v7466 = vadd.f32 %v7417, %v7465
  %v7467 = vpop.f32.mrf.mxu0
  %v7468 = vadd.f32 %v7419, %v7467
  %7469 = vmatmul.bf16.gmra.mxu0 %v7345
  %v7470 = vpop.f32.mrf.mxu0
  %v7471 = vadd.f32 %v7422, %v7470
  %v7472 = vpop.f32.mrf.mxu0
  %v7473 = vadd.f32 %v7424, %v7472
  %7474 = vmatmul.bf16.gmra.mxu0 %v7349
  %v7475 = vpop.f32.mrf.mxu0
  %v7476 = vadd.f32 %v7427, %v7475
  %v7477 = vpop.f32.mrf.mxu0
  %v7478 = vadd.f32 %v7429, %v7477
  %7479 = vmatmul.bf16.gmra.mxu0 %v7353
  %v7480 = vpop.f32.mrf.mxu0
  %v7481 = vadd.f32 %v7432, %v7480
  %v7482 = vpop.f32.mrf.mxu0
  %v7483 = vadd.f32 %v7434, %v7482
  %7484 = vmatmul.bf16.gmra.mxu0 %v7357
  %v7485 = vpop.f32.mrf.mxu0
  %v7486 = vadd.f32 %v7437, %v7485
  %v7487 = vpop.f32.mrf.mxu0
  %v7488 = vadd.f32 %v7439, %v7487
  %7489 = vdwg.mxu0
  %7490 = vmatpush.bf16.msra.mxu0 %v1427
  %7491 = vmatpush.bf16.msra.mxu0 %v1426
  %7492 = vmatpush.bf16.msra.mxu0 %v1425
  %7493 = vmatpush.bf16.msra.mxu0 %v1424
  %7494 = vmatpush.bf16.msra.mxu0 %v1423
  %7495 = vmatpush.bf16.msra.mxu0 %v1422
  %7496 = vmatpush.bf16.msra.mxu0 %v1421
  %7497 = vmatpush.bf16.msra.mxu0 %v1420
  %7498 = vmatmul.bf16.gmra.mxu0 %v7330
  %v7499 = vpop.f32.mrf.mxu0
  %v7500 = vadd.f32 %v7451, %v7499
  %v7501 = vpop.f32.mrf.mxu0
  %v7502 = vadd.f32 %v7453, %v7501
  %7503 = vmatmul.bf16.gmra.mxu0 %v7334
  %v7504 = vpop.f32.mrf.mxu0
  %v7505 = vadd.f32 %v7456, %v7504
  %v7506 = vpop.f32.mrf.mxu0
  %v7507 = vadd.f32 %v7458, %v7506
  %7508 = vmatmul.bf16.gmra.mxu0 %v7338
  %v7509 = vpop.f32.mrf.mxu0
  %v7510 = vadd.f32 %v7461, %v7509
  %v7511 = vpop.f32.mrf.mxu0
  %v7512 = vadd.f32 %v7463, %v7511
  %7513 = vmatmul.bf16.gmra.mxu0 %v7342
  %v7514 = vpop.f32.mrf.mxu0
  %v7515 = vadd.f32 %v7466, %v7514
  %v7516 = vpop.f32.mrf.mxu0
  %v7517 = vadd.f32 %v7468, %v7516
  %7518 = vmatmul.bf16.gmra.mxu0 %v7346
  %v7519 = vpop.f32.mrf.mxu0
  %v7520 = vadd.f32 %v7471, %v7519
  %v7521 = vpop.f32.mrf.mxu0
  %v7522 = vadd.f32 %v7473, %v7521
  %7523 = vmatmul.bf16.gmra.mxu0 %v7350
  %v7524 = vpop.f32.mrf.mxu0
  %v7525 = vadd.f32 %v7476, %v7524
  %v7526 = vpop.f32.mrf.mxu0
  %v7527 = vadd.f32 %v7478, %v7526
  %7528 = vmatmul.bf16.gmra.mxu0 %v7354
  %v7529 = vpop.f32.mrf.mxu0
  %v7530 = vadd.f32 %v7481, %v7529
  %v7531 = vpop.f32.mrf.mxu0
  %v7532 = vadd.f32 %v7483, %v7531
  %7533 = vmatmul.bf16.gmra.mxu0 %v7358
  %v7534 = vpop.f32.mrf.mxu0
  %v7535 = vadd.f32 %v7486, %v7534
  %v7536 = vpop.f32.mrf.mxu0
  %v7537 = vadd.f32 %v7488, %v7536
  %7538 = vdwg.mxu0
  %7539 = vmatpush.bf16.msra.mxu0 %v1435
  %7540 = vmatpush.bf16.msra.mxu0 %v1434
  %7541 = vmatpush.bf16.msra.mxu0 %v1433
  %7542 = vmatpush.bf16.msra.mxu0 %v1432
  %7543 = vmatpush.bf16.msra.mxu0 %v1431
  %7544 = vmatpush.bf16.msra.mxu0 %v1430
  %7545 = vmatpush.bf16.msra.mxu0 %v1429
  %7546 = vmatpush.bf16.msra.mxu0 %v1428
  %7547 = vmatmul.bf16.gmra.mxu0 %v7331
  %v7548 = vpop.f32.mrf.mxu0
  %v7549 = vadd.f32 %v7500, %v7548
  %v7550 = vpop.f32.mrf.mxu0
  %v7551 = vadd.f32 %v7502, %v7550
  %7552 = vmatmul.bf16.gmra.mxu0 %v7335
  %v7553 = vpop.f32.mrf.mxu0
  %v7554 = vadd.f32 %v7505, %v7553
  %v7555 = vpop.f32.mrf.mxu0
  %v7556 = vadd.f32 %v7507, %v7555
  %7557 = vmatmul.bf16.gmra.mxu0 %v7339
  %v7558 = vpop.f32.mrf.mxu0
  %v7559 = vadd.f32 %v7510, %v7558
  %v7560 = vpop.f32.mrf.mxu0
  %v7561 = vadd.f32 %v7512, %v7560
  %7562 = vmatmul.bf16.gmra.mxu0 %v7343
  %v7563 = vpop.f32.mrf.mxu0
  %v7564 = vadd.f32 %v7515, %v7563
  %v7565 = vpop.f32.mrf.mxu0
  %v7566 = vadd.f32 %v7517, %v7565
  %7567 = vmatmul.bf16.gmra.mxu0 %v7347
  %v7568 = vpop.f32.mrf.mxu0
  %v7569 = vadd.f32 %v7520, %v7568
  %v7570 = vpop.f32.mrf.mxu0
  %v7571 = vadd.f32 %v7522, %v7570
  %7572 = vmatmul.bf16.gmra.mxu0 %v7351
  %v7573 = vpop.f32.mrf.mxu0
  %v7574 = vadd.f32 %v7525, %v7573
  %v7575 = vpop.f32.mrf.mxu0
  %v7576 = vadd.f32 %v7527, %v7575
  %7577 = vmatmul.bf16.gmra.mxu0 %v7355
  %v7578 = vpop.f32.mrf.mxu0
  %v7579 = vadd.f32 %v7530, %v7578
  %v7580 = vpop.f32.mrf.mxu0
  %v7581 = vadd.f32 %v7532, %v7580
  %7582 = vmatmul.bf16.gmra.mxu0 %v7359
  %v7583 = vpop.f32.mrf.mxu0
  %v7584 = vadd.f32 %v7535, %v7583
  %v7585 = vpop.f32.mrf.mxu0
  %v7586 = vadd.f32 %v7537, %v7585
  %7587 = vdwg.mxu0
  %v7588 = vpack.c.bf16 %v7551, %v7549
  %v7589 = vpack.c.bf16 %v7556, %v7554
  %v7590 = vpack.c.bf16 %v7561, %v7559
  %v7591 = vpack.c.bf16 %v7566, %v7564
  %v7592 = vpack.c.bf16 %v7571, %v7569
  %v7593 = vpack.c.bf16 %v7576, %v7574
  %v7594 = vpack.c.bf16 %v7581, %v7579
  %v7595 = vpack.c.bf16 %v7586, %v7584
  %s7596 = scalar_lea.vmem %s5, 704
  %v7597 = vld [vmem:[%s7596] sm:$0xf]
  %v7598 = vld [vmem:[%s7596 + $0x4] sm:$0xf]
  %v7599 = vld [vmem:[%s7596 + $0x8] sm:$0xf]
  %v7600 = vld [vmem:[%s7596 + $0xc] sm:$0xf]
  %v7601 = vld [vmem:[%s7596 + $0x10] sm:$0xf]
  %v7602 = vld [vmem:[%s7596 + $0x14] sm:$0xf]
  %v7603 = vld [vmem:[%s7596 + $0x18] sm:$0xf]
  %v7604 = vld [vmem:[%s7596 + $0x1c] sm:$0xf]
  %v7605 = vld [vmem:[%s7596 + $0x20] sm:$0xf]
  %v7606 = vld [vmem:[%s7596 + $0x24] sm:$0xf]
  %v7607 = vld [vmem:[%s7596 + $0x28] sm:$0xf]
  %v7608 = vld [vmem:[%s7596 + $0x2c] sm:$0xf]
  %v7609 = vld [vmem:[%s7596 + $0x30] sm:$0xf]
  %v7610 = vld [vmem:[%s7596 + $0x34] sm:$0xf]
  %v7611 = vld [vmem:[%s7596 + $0x38] sm:$0xf]
  %v7612 = vld [vmem:[%s7596 + $0x3c] sm:$0xf]
  %v7629 = vunpack.c.l.b16 %v7597
  %v7630 = vunpack.c.l.b16 %v7598
  %v7631 = vunpack.c.l.b16 %v7599
  %v7632 = vunpack.c.l.b16 %v7600
  %v7633 = vunpack.c.l.b16 %v7601
  %v7634 = vunpack.c.l.b16 %v7602
  %v7635 = vunpack.c.l.b16 %v7603
  %v7636 = vunpack.c.l.b16 %v7604
  %v7637 = vunpack.c.l.b16 %v7605
  %v7638 = vunpack.c.l.b16 %v7606
  %v7639 = vunpack.c.l.b16 %v7607
  %v7640 = vunpack.c.l.b16 %v7608
  %v7641 = vunpack.c.l.b16 %v7609
  %v7642 = vunpack.c.l.b16 %v7610
  %v7643 = vunpack.c.l.b16 %v7611
  %v7644 = vunpack.c.l.b16 %v7612
  %v7645 = vpack.c.b16 %v7630, %v7629
  %v7646 = vpack.c.b16 %v7632, %v7631
  %v7647 = vpack.c.b16 %v7634, %v7633
  %v7648 = vpack.c.b16 %v7636, %v7635
  %v7649 = vpack.c.b16 %v7638, %v7637
  %v7650 = vpack.c.b16 %v7640, %v7639
  %v7651 = vpack.c.b16 %v7642, %v7641
  %v7652 = vpack.c.b16 %v7644, %v7643
  %7661 = vmatpush.bf16.msra.mxu0 %v7652
  %7662 = vmatpush.bf16.msra.mxu0 %v7651
  %7663 = vmatpush.bf16.msra.mxu0 %v7650
  %7664 = vmatpush.bf16.msra.mxu0 %v7649
  %7665 = vmatpush.bf16.msra.mxu0 %v7648
  %7666 = vmatpush.bf16.msra.mxu0 %v7647
  %7667 = vmatpush.bf16.msra.mxu0 %v7646
  %7668 = vmatpush.bf16.msra.mxu0 %v7645
  %7669 = vmatmul.bf16.gmra.mxu0 %v7588
  %v7670 = vpop.f32.mrf.mxu0
  %v7671 = vadd.f32 0.0, %v7670
  %v7672 = vpop.f32.mrf.mxu0
  %v7673 = vadd.f32 0.0, %v7672
  %7674 = vmatmul.bf16.gmra.mxu0 %v7589
  %v7675 = vpop.f32.mrf.mxu0
  %v7676 = vadd.f32 0.0, %v7675
  %v7677 = vpop.f32.mrf.mxu0
  %v7678 = vadd.f32 0.0, %v7677
  %7679 = vmatmul.bf16.gmra.mxu0 %v7590
  %v7680 = vpop.f32.mrf.mxu0
  %v7681 = vadd.f32 0.0, %v7680
  %v7682 = vpop.f32.mrf.mxu0
  %v7683 = vadd.f32 0.0, %v7682
  %7684 = vmatmul.bf16.gmra.mxu0 %v7591
  %v7685 = vpop.f32.mrf.mxu0
  %v7686 = vadd.f32 0.0, %v7685
  %v7687 = vpop.f32.mrf.mxu0
  %v7688 = vadd.f32 0.0, %v7687
  %7689 = vmatmul.bf16.gmra.mxu0 %v7592
  %v7690 = vpop.f32.mrf.mxu0
  %v7691 = vadd.f32 0.0, %v7690
  %v7692 = vpop.f32.mrf.mxu0
  %v7693 = vadd.f32 0.0, %v7692
  %7694 = vmatmul.bf16.gmra.mxu0 %v7593
  %v7695 = vpop.f32.mrf.mxu0
  %v7696 = vadd.f32 0.0, %v7695
  %v7697 = vpop.f32.mrf.mxu0
  %v7698 = vadd.f32 0.0, %v7697
  %7699 = vmatmul.bf16.gmra.mxu0 %v7594
  %v7700 = vpop.f32.mrf.mxu0
  %v7701 = vadd.f32 0.0, %v7700
  %v7702 = vpop.f32.mrf.mxu0
  %v7703 = vadd.f32 0.0, %v7702
  %7704 = vmatmul.bf16.gmra.mxu0 %v7595
  %v7705 = vpop.f32.mrf.mxu0
  %v7706 = vadd.f32 0.0, %v7705
  %v7707 = vpop.f32.mrf.mxu0
  %v7708 = vadd.f32 0.0, %v7707
  %7709 = vdwg.mxu0
  %v7710 = vadd.f32 %v7183, %v7671
  %v7711 = vadd.f32 %v7184, %v7673
  %v7712 = vadd.f32 %v7185, %v7676
  %v7713 = vadd.f32 %v7186, %v7678
  %v7714 = vadd.f32 %v7187, %v7681
  %v7715 = vadd.f32 %v7188, %v7683
  %v7716 = vadd.f32 %v7189, %v7686
  %v7717 = vadd.f32 %v7190, %v7688
  %v7718 = vadd.f32 %v7191, %v7691
  %v7719 = vadd.f32 %v7192, %v7693
  %v7720 = vadd.f32 %v7193, %v7696
  %v7721 = vadd.f32 %v7194, %v7698
  %v7722 = vadd.f32 %v7195, %v7701
  %v7723 = vadd.f32 %v7196, %v7703
  %v7724 = vadd.f32 %v7197, %v7706
  %v7725 = vadd.f32 %v7198, %v7708
  %s7726 = scalar_lea.vmem %s4, 3072
  %v7727 = vld [vmem:[%s7726] sm:$0xff]
  %v7728 = vld [vmem:[%s7726 + $0x8] sm:$0xff]
  %v7729 = vld [vmem:[%s7726 + $0x10] sm:$0xff]
  %v7730 = vld [vmem:[%s7726 + $0x18] sm:$0xff]
  %v7731 = vld [vmem:[%s7726 + $0x20] sm:$0xff]
  %v7732 = vld [vmem:[%s7726 + $0x28] sm:$0xff]
  %v7733 = vld [vmem:[%s7726 + $0x30] sm:$0xff]
  %v7734 = vld [vmem:[%s7726 + $0x38] sm:$0xff]
  %v7735 = vld [vmem:[%s7726 + $0x40] sm:$0xff]
  %v7736 = vld [vmem:[%s7726 + $0x48] sm:$0xff]
  %v7737 = vld [vmem:[%s7726 + $0x50] sm:$0xff]
  %v7738 = vld [vmem:[%s7726 + $0x58] sm:$0xff]
  %v7739 = vld [vmem:[%s7726 + $0x60] sm:$0xff]
  %v7740 = vld [vmem:[%s7726 + $0x68] sm:$0xff]
  %v7741 = vld [vmem:[%s7726 + $0x70] sm:$0xff]
  %v7742 = vld [vmem:[%s7726 + $0x78] sm:$0xff]
  %v7743 = vld [vmem:[%s7726 + $0x80] sm:$0xff]
  %v7744 = vld [vmem:[%s7726 + $0x88] sm:$0xff]
  %v7745 = vld [vmem:[%s7726 + $0x90] sm:$0xff]
  %v7746 = vld [vmem:[%s7726 + $0x98] sm:$0xff]
  %v7747 = vld [vmem:[%s7726 + $0xa0] sm:$0xff]
  %v7748 = vld [vmem:[%s7726 + $0xa8] sm:$0xff]
  %v7749 = vld [vmem:[%s7726 + $0xb0] sm:$0xff]
  %v7750 = vld [vmem:[%s7726 + $0xb8] sm:$0xff]
  %v7751 = vld [vmem:[%s7726 + $0xc0] sm:$0xff]
  %v7752 = vld [vmem:[%s7726 + $0xc8] sm:$0xff]
  %v7753 = vld [vmem:[%s7726 + $0xd0] sm:$0xff]
  %v7754 = vld [vmem:[%s7726 + $0xd8] sm:$0xff]
  %v7755 = vld [vmem:[%s7726 + $0xe0] sm:$0xff]
  %v7756 = vld [vmem:[%s7726 + $0xe8] sm:$0xff]
  %v7757 = vld [vmem:[%s7726 + $0xf0] sm:$0xff]
  %v7758 = vld [vmem:[%s7726 + $0xf8] sm:$0xff]
  %v7791 = vunpack.c.l.b16 %v7727
  %v7792 = vunpack.c.h.b16 %v7727
  %v7793 = vunpack.c.l.b16 %v7728
  %v7794 = vunpack.c.h.b16 %v7728
  %v7795 = vunpack.c.l.b16 %v7729
  %v7796 = vunpack.c.h.b16 %v7729
  %v7797 = vunpack.c.l.b16 %v7730
  %v7798 = vunpack.c.h.b16 %v7730
  %v7799 = vunpack.c.l.b16 %v7731
  %v7800 = vunpack.c.h.b16 %v7731
  %v7801 = vunpack.c.l.b16 %v7732
  %v7802 = vunpack.c.h.b16 %v7732
  %v7803 = vunpack.c.l.b16 %v7733
  %v7804 = vunpack.c.h.b16 %v7733
  %v7805 = vunpack.c.l.b16 %v7734
  %v7806 = vunpack.c.h.b16 %v7734
  %v7807 = vunpack.c.l.b16 %v7735
  %v7808 = vunpack.c.h.b16 %v7735
  %v7809 = vunpack.c.l.b16 %v7736
  %v7810 = vunpack.c.h.b16 %v7736
  %v7811 = vunpack.c.l.b16 %v7737
  %v7812 = vunpack.c.h.b16 %v7737
  %v7813 = vunpack.c.l.b16 %v7738
  %v7814 = vunpack.c.h.b16 %v7738
  %v7815 = vunpack.c.l.b16 %v7739
  %v7816 = vunpack.c.h.b16 %v7739
  %v7817 = vunpack.c.l.b16 %v7740
  %v7818 = vunpack.c.h.b16 %v7740
  %v7819 = vunpack.c.l.b16 %v7741
  %v7820 = vunpack.c.h.b16 %v7741
  %v7821 = vunpack.c.l.b16 %v7742
  %v7822 = vunpack.c.h.b16 %v7742
  %v7823 = vunpack.c.l.b16 %v7743
  %v7824 = vunpack.c.h.b16 %v7743
  %v7825 = vunpack.c.l.b16 %v7744
  %v7826 = vunpack.c.h.b16 %v7744
  %v7827 = vunpack.c.l.b16 %v7745
  %v7828 = vunpack.c.h.b16 %v7745
  %v7829 = vunpack.c.l.b16 %v7746
  %v7830 = vunpack.c.h.b16 %v7746
  %v7831 = vunpack.c.l.b16 %v7747
  %v7832 = vunpack.c.h.b16 %v7747
  %v7833 = vunpack.c.l.b16 %v7748
  %v7834 = vunpack.c.h.b16 %v7748
  %v7835 = vunpack.c.l.b16 %v7749
  %v7836 = vunpack.c.h.b16 %v7749
  %v7837 = vunpack.c.l.b16 %v7750
  %v7838 = vunpack.c.h.b16 %v7750
  %v7839 = vunpack.c.l.b16 %v7751
  %v7840 = vunpack.c.h.b16 %v7751
  %v7841 = vunpack.c.l.b16 %v7752
  %v7842 = vunpack.c.h.b16 %v7752
  %v7843 = vunpack.c.l.b16 %v7753
  %v7844 = vunpack.c.h.b16 %v7753
  %v7845 = vunpack.c.l.b16 %v7754
  %v7846 = vunpack.c.h.b16 %v7754
  %v7847 = vunpack.c.l.b16 %v7755
  %v7848 = vunpack.c.h.b16 %v7755
  %v7849 = vunpack.c.l.b16 %v7756
  %v7850 = vunpack.c.h.b16 %v7756
  %v7851 = vunpack.c.l.b16 %v7757
  %v7852 = vunpack.c.h.b16 %v7757
  %v7853 = vunpack.c.l.b16 %v7758
  %v7854 = vunpack.c.h.b16 %v7758
  %v7855 = vpack.c.b16 %v7795, %v7791
  %v7856 = vpack.c.b16 %v7796, %v7792
  %v7857 = vpack.c.b16 %v7797, %v7793
  %v7858 = vpack.c.b16 %v7798, %v7794
  %v7859 = vpack.c.b16 %v7803, %v7799
  %v7860 = vpack.c.b16 %v7804, %v7800
  %v7861 = vpack.c.b16 %v7805, %v7801
  %v7862 = vpack.c.b16 %v7806, %v7802
  %v7863 = vpack.c.b16 %v7811, %v7807
  %v7864 = vpack.c.b16 %v7812, %v7808
  %v7865 = vpack.c.b16 %v7813, %v7809
  %v7866 = vpack.c.b16 %v7814, %v7810
  %v7867 = vpack.c.b16 %v7819, %v7815
  %v7868 = vpack.c.b16 %v7820, %v7816
  %v7869 = vpack.c.b16 %v7821, %v7817
  %v7870 = vpack.c.b16 %v7822, %v7818
  %v7871 = vpack.c.b16 %v7827, %v7823
  %v7872 = vpack.c.b16 %v7828, %v7824
  %v7873 = vpack.c.b16 %v7829, %v7825
  %v7874 = vpack.c.b16 %v7830, %v7826
  %v7875 = vpack.c.b16 %v7835, %v7831
  %v7876 = vpack.c.b16 %v7836, %v7832
  %v7877 = vpack.c.b16 %v7837, %v7833
  %v7878 = vpack.c.b16 %v7838, %v7834
  %v7879 = vpack.c.b16 %v7843, %v7839
  %v7880 = vpack.c.b16 %v7844, %v7840
  %v7881 = vpack.c.b16 %v7845, %v7841
  %v7882 = vpack.c.b16 %v7846, %v7842
  %v7883 = vpack.c.b16 %v7851, %v7847
  %v7884 = vpack.c.b16 %v7852, %v7848
  %v7885 = vpack.c.b16 %v7853, %v7849
  %v7886 = vpack.c.b16 %v7854, %v7850
  %7919 = vmatpush.bf16.msra.mxu0 %v1411
  %7920 = vmatpush.bf16.msra.mxu0 %v1410
  %7921 = vmatpush.bf16.msra.mxu0 %v1409
  %7922 = vmatpush.bf16.msra.mxu0 %v1408
  %7923 = vmatpush.bf16.msra.mxu0 %v1407
  %7924 = vmatpush.bf16.msra.mxu0 %v1406
  %7925 = vmatpush.bf16.msra.mxu0 %v1405
  %7926 = vmatpush.bf16.msra.mxu0 %v1404
  %7927 = vmatmul.bf16.gmra.mxu0 %v7855
  %v7928 = vpop.f32.mrf.mxu0
  %v7929 = vadd.f32 0.0, %v7928
  %v7930 = vpop.f32.mrf.mxu0
  %v7931 = vadd.f32 0.0, %v7930
  %7932 = vmatmul.bf16.gmra.mxu0 %v7859
  %v7933 = vpop.f32.mrf.mxu0
  %v7934 = vadd.f32 0.0, %v7933
  %v7935 = vpop.f32.mrf.mxu0
  %v7936 = vadd.f32 0.0, %v7935
  %7937 = vmatmul.bf16.gmra.mxu0 %v7863
  %v7938 = vpop.f32.mrf.mxu0
  %v7939 = vadd.f32 0.0, %v7938
  %v7940 = vpop.f32.mrf.mxu0
  %v7941 = vadd.f32 0.0, %v7940
  %7942 = vmatmul.bf16.gmra.mxu0 %v7867
  %v7943 = vpop.f32.mrf.mxu0
  %v7944 = vadd.f32 0.0, %v7943
  %v7945 = vpop.f32.mrf.mxu0
  %v7946 = vadd.f32 0.0, %v7945
  %7947 = vmatmul.bf16.gmra.mxu0 %v7871
  %v7948 = vpop.f32.mrf.mxu0
  %v7949 = vadd.f32 0.0, %v7948
  %v7950 = vpop.f32.mrf.mxu0
  %v7951 = vadd.f32 0.0, %v7950
  %7952 = vmatmul.bf16.gmra.mxu0 %v7875
  %v7953 = vpop.f32.mrf.mxu0
  %v7954 = vadd.f32 0.0, %v7953
  %v7955 = vpop.f32.mrf.mxu0
  %v7956 = vadd.f32 0.0, %v7955
  %7957 = vmatmul.bf16.gmra.mxu0 %v7879
  %v7958 = vpop.f32.mrf.mxu0
  %v7959 = vadd.f32 0.0, %v7958
  %v7960 = vpop.f32.mrf.mxu0
  %v7961 = vadd.f32 0.0, %v7960
  %7962 = vmatmul.bf16.gmra.mxu0 %v7883
  %v7963 = vpop.f32.mrf.mxu0
  %v7964 = vadd.f32 0.0, %v7963
  %v7965 = vpop.f32.mrf.mxu0
  %v7966 = vadd.f32 0.0, %v7965
  %7967 = vdwg.mxu0
  %7968 = vmatpush.bf16.msra.mxu0 %v1419
  %7969 = vmatpush.bf16.msra.mxu0 %v1418
  %7970 = vmatpush.bf16.msra.mxu0 %v1417
  %7971 = vmatpush.bf16.msra.mxu0 %v1416
  %7972 = vmatpush.bf16.msra.mxu0 %v1415
  %7973 = vmatpush.bf16.msra.mxu0 %v1414
  %7974 = vmatpush.bf16.msra.mxu0 %v1413
  %7975 = vmatpush.bf16.msra.mxu0 %v1412
  %7976 = vmatmul.bf16.gmra.mxu0 %v7856
  %v7977 = vpop.f32.mrf.mxu0
  %v7978 = vadd.f32 %v7929, %v7977
  %v7979 = vpop.f32.mrf.mxu0
  %v7980 = vadd.f32 %v7931, %v7979
  %7981 = vmatmul.bf16.gmra.mxu0 %v7860
  %v7982 = vpop.f32.mrf.mxu0
  %v7983 = vadd.f32 %v7934, %v7982
  %v7984 = vpop.f32.mrf.mxu0
  %v7985 = vadd.f32 %v7936, %v7984
  %7986 = vmatmul.bf16.gmra.mxu0 %v7864
  %v7987 = vpop.f32.mrf.mxu0
  %v7988 = vadd.f32 %v7939, %v7987
  %v7989 = vpop.f32.mrf.mxu0
  %v7990 = vadd.f32 %v7941, %v7989
  %7991 = vmatmul.bf16.gmra.mxu0 %v7868
  %v7992 = vpop.f32.mrf.mxu0
  %v7993 = vadd.f32 %v7944, %v7992
  %v7994 = vpop.f32.mrf.mxu0
  %v7995 = vadd.f32 %v7946, %v7994
  %7996 = vmatmul.bf16.gmra.mxu0 %v7872
  %v7997 = vpop.f32.mrf.mxu0
  %v7998 = vadd.f32 %v7949, %v7997
  %v7999 = vpop.f32.mrf.mxu0
  %v8000 = vadd.f32 %v7951, %v7999
  %8001 = vmatmul.bf16.gmra.mxu0 %v7876
  %v8002 = vpop.f32.mrf.mxu0
  %v8003 = vadd.f32 %v7954, %v8002
  %v8004 = vpop.f32.mrf.mxu0
  %v8005 = vadd.f32 %v7956, %v8004
  %8006 = vmatmul.bf16.gmra.mxu0 %v7880
  %v8007 = vpop.f32.mrf.mxu0
  %v8008 = vadd.f32 %v7959, %v8007
  %v8009 = vpop.f32.mrf.mxu0
  %v8010 = vadd.f32 %v7961, %v8009
  %8011 = vmatmul.bf16.gmra.mxu0 %v7884
  %v8012 = vpop.f32.mrf.mxu0
  %v8013 = vadd.f32 %v7964, %v8012
  %v8014 = vpop.f32.mrf.mxu0
  %v8015 = vadd.f32 %v7966, %v8014
  %8016 = vdwg.mxu0
  %8017 = vmatpush.bf16.msra.mxu0 %v1427
  %8018 = vmatpush.bf16.msra.mxu0 %v1426
  %8019 = vmatpush.bf16.msra.mxu0 %v1425
  %8020 = vmatpush.bf16.msra.mxu0 %v1424
  %8021 = vmatpush.bf16.msra.mxu0 %v1423
  %8022 = vmatpush.bf16.msra.mxu0 %v1422
  %8023 = vmatpush.bf16.msra.mxu0 %v1421
  %8024 = vmatpush.bf16.msra.mxu0 %v1420
  %8025 = vmatmul.bf16.gmra.mxu0 %v7857
  %v8026 = vpop.f32.mrf.mxu0
  %v8027 = vadd.f32 %v7978, %v8026
  %v8028 = vpop.f32.mrf.mxu0
  %v8029 = vadd.f32 %v7980, %v8028
  %8030 = vmatmul.bf16.gmra.mxu0 %v7861
  %v8031 = vpop.f32.mrf.mxu0
  %v8032 = vadd.f32 %v7983, %v8031
  %v8033 = vpop.f32.mrf.mxu0
  %v8034 = vadd.f32 %v7985, %v8033
  %8035 = vmatmul.bf16.gmra.mxu0 %v7865
  %v8036 = vpop.f32.mrf.mxu0
  %v8037 = vadd.f32 %v7988, %v8036
  %v8038 = vpop.f32.mrf.mxu0
  %v8039 = vadd.f32 %v7990, %v8038
  %8040 = vmatmul.bf16.gmra.mxu0 %v7869
  %v8041 = vpop.f32.mrf.mxu0
  %v8042 = vadd.f32 %v7993, %v8041
  %v8043 = vpop.f32.mrf.mxu0
  %v8044 = vadd.f32 %v7995, %v8043
  %8045 = vmatmul.bf16.gmra.mxu0 %v7873
  %v8046 = vpop.f32.mrf.mxu0
  %v8047 = vadd.f32 %v7998, %v8046
  %v8048 = vpop.f32.mrf.mxu0
  %v8049 = vadd.f32 %v8000, %v8048
  %8050 = vmatmul.bf16.gmra.mxu0 %v7877
  %v8051 = vpop.f32.mrf.mxu0
  %v8052 = vadd.f32 %v8003, %v8051
  %v8053 = vpop.f32.mrf.mxu0
  %v8054 = vadd.f32 %v8005, %v8053
  %8055 = vmatmul.bf16.gmra.mxu0 %v7881
  %v8056 = vpop.f32.mrf.mxu0
  %v8057 = vadd.f32 %v8008, %v8056
  %v8058 = vpop.f32.mrf.mxu0
  %v8059 = vadd.f32 %v8010, %v8058
  %8060 = vmatmul.bf16.gmra.mxu0 %v7885
  %v8061 = vpop.f32.mrf.mxu0
  %v8062 = vadd.f32 %v8013, %v8061
  %v8063 = vpop.f32.mrf.mxu0
  %v8064 = vadd.f32 %v8015, %v8063
  %8065 = vdwg.mxu0
  %8066 = vmatpush.bf16.msra.mxu0 %v1435
  %8067 = vmatpush.bf16.msra.mxu0 %v1434
  %8068 = vmatpush.bf16.msra.mxu0 %v1433
  %8069 = vmatpush.bf16.msra.mxu0 %v1432
  %8070 = vmatpush.bf16.msra.mxu0 %v1431
  %8071 = vmatpush.bf16.msra.mxu0 %v1430
  %8072 = vmatpush.bf16.msra.mxu0 %v1429
  %8073 = vmatpush.bf16.msra.mxu0 %v1428
  %8074 = vmatmul.bf16.gmra.mxu0 %v7858
  %v8075 = vpop.f32.mrf.mxu0
  %v8076 = vadd.f32 %v8027, %v8075
  %v8077 = vpop.f32.mrf.mxu0
  %v8078 = vadd.f32 %v8029, %v8077
  %8079 = vmatmul.bf16.gmra.mxu0 %v7862
  %v8080 = vpop.f32.mrf.mxu0
  %v8081 = vadd.f32 %v8032, %v8080
  %v8082 = vpop.f32.mrf.mxu0
  %v8083 = vadd.f32 %v8034, %v8082
  %8084 = vmatmul.bf16.gmra.mxu0 %v7866
  %v8085 = vpop.f32.mrf.mxu0
  %v8086 = vadd.f32 %v8037, %v8085
  %v8087 = vpop.f32.mrf.mxu0
  %v8088 = vadd.f32 %v8039, %v8087
  %8089 = vmatmul.bf16.gmra.mxu0 %v7870
  %v8090 = vpop.f32.mrf.mxu0
  %v8091 = vadd.f32 %v8042, %v8090
  %v8092 = vpop.f32.mrf.mxu0
  %v8093 = vadd.f32 %v8044, %v8092
  %8094 = vmatmul.bf16.gmra.mxu0 %v7874
  %v8095 = vpop.f32.mrf.mxu0
  %v8096 = vadd.f32 %v8047, %v8095
  %v8097 = vpop.f32.mrf.mxu0
  %v8098 = vadd.f32 %v8049, %v8097
  %8099 = vmatmul.bf16.gmra.mxu0 %v7878
  %v8100 = vpop.f32.mrf.mxu0
  %v8101 = vadd.f32 %v8052, %v8100
  %v8102 = vpop.f32.mrf.mxu0
  %v8103 = vadd.f32 %v8054, %v8102
  %8104 = vmatmul.bf16.gmra.mxu0 %v7882
  %v8105 = vpop.f32.mrf.mxu0
  %v8106 = vadd.f32 %v8057, %v8105
  %v8107 = vpop.f32.mrf.mxu0
  %v8108 = vadd.f32 %v8059, %v8107
  %8109 = vmatmul.bf16.gmra.mxu0 %v7886
  %v8110 = vpop.f32.mrf.mxu0
  %v8111 = vadd.f32 %v8062, %v8110
  %v8112 = vpop.f32.mrf.mxu0
  %v8113 = vadd.f32 %v8064, %v8112
  %8114 = vdwg.mxu0
  %v8115 = vpack.c.bf16 %v8078, %v8076
  %v8116 = vpack.c.bf16 %v8083, %v8081
  %v8117 = vpack.c.bf16 %v8088, %v8086
  %v8118 = vpack.c.bf16 %v8093, %v8091
  %v8119 = vpack.c.bf16 %v8098, %v8096
  %v8120 = vpack.c.bf16 %v8103, %v8101
  %v8121 = vpack.c.bf16 %v8108, %v8106
  %v8122 = vpack.c.bf16 %v8113, %v8111
  %s8123 = scalar_lea.vmem %s5, 768
  %v8124 = vld [vmem:[%s8123] sm:$0xf]
  %v8125 = vld [vmem:[%s8123 + $0x4] sm:$0xf]
  %v8126 = vld [vmem:[%s8123 + $0x8] sm:$0xf]
  %v8127 = vld [vmem:[%s8123 + $0xc] sm:$0xf]
  %v8128 = vld [vmem:[%s8123 + $0x10] sm:$0xf]
  %v8129 = vld [vmem:[%s8123 + $0x14] sm:$0xf]
  %v8130 = vld [vmem:[%s8123 + $0x18] sm:$0xf]
  %v8131 = vld [vmem:[%s8123 + $0x1c] sm:$0xf]
  %v8132 = vld [vmem:[%s8123 + $0x20] sm:$0xf]
  %v8133 = vld [vmem:[%s8123 + $0x24] sm:$0xf]
  %v8134 = vld [vmem:[%s8123 + $0x28] sm:$0xf]
  %v8135 = vld [vmem:[%s8123 + $0x2c] sm:$0xf]
  %v8136 = vld [vmem:[%s8123 + $0x30] sm:$0xf]
  %v8137 = vld [vmem:[%s8123 + $0x34] sm:$0xf]
  %v8138 = vld [vmem:[%s8123 + $0x38] sm:$0xf]
  %v8139 = vld [vmem:[%s8123 + $0x3c] sm:$0xf]
  %v8156 = vunpack.c.l.b16 %v8124
  %v8157 = vunpack.c.l.b16 %v8125
  %v8158 = vunpack.c.l.b16 %v8126
  %v8159 = vunpack.c.l.b16 %v8127
  %v8160 = vunpack.c.l.b16 %v8128
  %v8161 = vunpack.c.l.b16 %v8129
  %v8162 = vunpack.c.l.b16 %v8130
  %v8163 = vunpack.c.l.b16 %v8131
  %v8164 = vunpack.c.l.b16 %v8132
  %v8165 = vunpack.c.l.b16 %v8133
  %v8166 = vunpack.c.l.b16 %v8134
  %v8167 = vunpack.c.l.b16 %v8135
  %v8168 = vunpack.c.l.b16 %v8136
  %v8169 = vunpack.c.l.b16 %v8137
  %v8170 = vunpack.c.l.b16 %v8138
  %v8171 = vunpack.c.l.b16 %v8139
  %v8172 = vpack.c.b16 %v8157, %v8156
  %v8173 = vpack.c.b16 %v8159, %v8158
  %v8174 = vpack.c.b16 %v8161, %v8160
  %v8175 = vpack.c.b16 %v8163, %v8162
  %v8176 = vpack.c.b16 %v8165, %v8164
  %v8177 = vpack.c.b16 %v8167, %v8166
  %v8178 = vpack.c.b16 %v8169, %v8168
  %v8179 = vpack.c.b16 %v8171, %v8170
  %8188 = vmatpush.bf16.msra.mxu0 %v8179
  %8189 = vmatpush.bf16.msra.mxu0 %v8178
  %8190 = vmatpush.bf16.msra.mxu0 %v8177
  %8191 = vmatpush.bf16.msra.mxu0 %v8176
  %8192 = vmatpush.bf16.msra.mxu0 %v8175
  %8193 = vmatpush.bf16.msra.mxu0 %v8174
  %8194 = vmatpush.bf16.msra.mxu0 %v8173
  %8195 = vmatpush.bf16.msra.mxu0 %v8172
  %8196 = vmatmul.bf16.gmra.mxu0 %v8115
  %v8197 = vpop.f32.mrf.mxu0
  %v8198 = vadd.f32 0.0, %v8197
  %v8199 = vpop.f32.mrf.mxu0
  %v8200 = vadd.f32 0.0, %v8199
  %8201 = vmatmul.bf16.gmra.mxu0 %v8116
  %v8202 = vpop.f32.mrf.mxu0
  %v8203 = vadd.f32 0.0, %v8202
  %v8204 = vpop.f32.mrf.mxu0
  %v8205 = vadd.f32 0.0, %v8204
  %8206 = vmatmul.bf16.gmra.mxu0 %v8117
  %v8207 = vpop.f32.mrf.mxu0
  %v8208 = vadd.f32 0.0, %v8207
  %v8209 = vpop.f32.mrf.mxu0
  %v8210 = vadd.f32 0.0, %v8209
  %8211 = vmatmul.bf16.gmra.mxu0 %v8118
  %v8212 = vpop.f32.mrf.mxu0
  %v8213 = vadd.f32 0.0, %v8212
  %v8214 = vpop.f32.mrf.mxu0
  %v8215 = vadd.f32 0.0, %v8214
  %8216 = vmatmul.bf16.gmra.mxu0 %v8119
  %v8217 = vpop.f32.mrf.mxu0
  %v8218 = vadd.f32 0.0, %v8217
  %v8219 = vpop.f32.mrf.mxu0
  %v8220 = vadd.f32 0.0, %v8219
  %8221 = vmatmul.bf16.gmra.mxu0 %v8120
  %v8222 = vpop.f32.mrf.mxu0
  %v8223 = vadd.f32 0.0, %v8222
  %v8224 = vpop.f32.mrf.mxu0
  %v8225 = vadd.f32 0.0, %v8224
  %8226 = vmatmul.bf16.gmra.mxu0 %v8121
  %v8227 = vpop.f32.mrf.mxu0
  %v8228 = vadd.f32 0.0, %v8227
  %v8229 = vpop.f32.mrf.mxu0
  %v8230 = vadd.f32 0.0, %v8229
  %8231 = vmatmul.bf16.gmra.mxu0 %v8122
  %v8232 = vpop.f32.mrf.mxu0
  %v8233 = vadd.f32 0.0, %v8232
  %v8234 = vpop.f32.mrf.mxu0
  %v8235 = vadd.f32 0.0, %v8234
  %8236 = vdwg.mxu0
  %v8237 = vadd.f32 %v7710, %v8198
  %v8238 = vadd.f32 %v7711, %v8200
  %v8239 = vadd.f32 %v7712, %v8203
  %v8240 = vadd.f32 %v7713, %v8205
  %v8241 = vadd.f32 %v7714, %v8208
  %v8242 = vadd.f32 %v7715, %v8210
  %v8243 = vadd.f32 %v7716, %v8213
  %v8244 = vadd.f32 %v7717, %v8215
  %v8245 = vadd.f32 %v7718, %v8218
  %v8246 = vadd.f32 %v7719, %v8220
  %v8247 = vadd.f32 %v7720, %v8223
  %v8248 = vadd.f32 %v7721, %v8225
  %v8249 = vadd.f32 %v7722, %v8228
  %v8250 = vadd.f32 %v7723, %v8230
  %v8251 = vadd.f32 %v7724, %v8233
  %v8252 = vadd.f32 %v7725, %v8235
  %s8253 = scalar_lea.vmem %s4, 3328
  %v8254 = vld [vmem:[%s8253] sm:$0xff]
  %v8255 = vld [vmem:[%s8253 + $0x8] sm:$0xff]
  %v8256 = vld [vmem:[%s8253 + $0x10] sm:$0xff]
  %v8257 = vld [vmem:[%s8253 + $0x18] sm:$0xff]
  %v8258 = vld [vmem:[%s8253 + $0x20] sm:$0xff]
  %v8259 = vld [vmem:[%s8253 + $0x28] sm:$0xff]
  %v8260 = vld [vmem:[%s8253 + $0x30] sm:$0xff]
  %v8261 = vld [vmem:[%s8253 + $0x38] sm:$0xff]
  %v8262 = vld [vmem:[%s8253 + $0x40] sm:$0xff]
  %v8263 = vld [vmem:[%s8253 + $0x48] sm:$0xff]
  %v8264 = vld [vmem:[%s8253 + $0x50] sm:$0xff]
  %v8265 = vld [vmem:[%s8253 + $0x58] sm:$0xff]
  %v8266 = vld [vmem:[%s8253 + $0x60] sm:$0xff]
  %v8267 = vld [vmem:[%s8253 + $0x68] sm:$0xff]
  %v8268 = vld [vmem:[%s8253 + $0x70] sm:$0xff]
  %v8269 = vld [vmem:[%s8253 + $0x78] sm:$0xff]
  %v8270 = vld [vmem:[%s8253 + $0x80] sm:$0xff]
  %v8271 = vld [vmem:[%s8253 + $0x88] sm:$0xff]
  %v8272 = vld [vmem:[%s8253 + $0x90] sm:$0xff]
  %v8273 = vld [vmem:[%s8253 + $0x98] sm:$0xff]
  %v8274 = vld [vmem:[%s8253 + $0xa0] sm:$0xff]
  %v8275 = vld [vmem:[%s8253 + $0xa8] sm:$0xff]
  %v8276 = vld [vmem:[%s8253 + $0xb0] sm:$0xff]
  %v8277 = vld [vmem:[%s8253 + $0xb8] sm:$0xff]
  %v8278 = vld [vmem:[%s8253 + $0xc0] sm:$0xff]
  %v8279 = vld [vmem:[%s8253 + $0xc8] sm:$0xff]
  %v8280 = vld [vmem:[%s8253 + $0xd0] sm:$0xff]
  %v8281 = vld [vmem:[%s8253 + $0xd8] sm:$0xff]
  %v8282 = vld [vmem:[%s8253 + $0xe0] sm:$0xff]
  %v8283 = vld [vmem:[%s8253 + $0xe8] sm:$0xff]
  %v8284 = vld [vmem:[%s8253 + $0xf0] sm:$0xff]
  %v8285 = vld [vmem:[%s8253 + $0xf8] sm:$0xff]
  %v8318 = vunpack.c.l.b16 %v8254
  %v8319 = vunpack.c.h.b16 %v8254
  %v8320 = vunpack.c.l.b16 %v8255
  %v8321 = vunpack.c.h.b16 %v8255
  %v8322 = vunpack.c.l.b16 %v8256
  %v8323 = vunpack.c.h.b16 %v8256
  %v8324 = vunpack.c.l.b16 %v8257
  %v8325 = vunpack.c.h.b16 %v8257
  %v8326 = vunpack.c.l.b16 %v8258
  %v8327 = vunpack.c.h.b16 %v8258
  %v8328 = vunpack.c.l.b16 %v8259
  %v8329 = vunpack.c.h.b16 %v8259
  %v8330 = vunpack.c.l.b16 %v8260
  %v8331 = vunpack.c.h.b16 %v8260
  %v8332 = vunpack.c.l.b16 %v8261
  %v8333 = vunpack.c.h.b16 %v8261
  %v8334 = vunpack.c.l.b16 %v8262
  %v8335 = vunpack.c.h.b16 %v8262
  %v8336 = vunpack.c.l.b16 %v8263
  %v8337 = vunpack.c.h.b16 %v8263
  %v8338 = vunpack.c.l.b16 %v8264
  %v8339 = vunpack.c.h.b16 %v8264
  %v8340 = vunpack.c.l.b16 %v8265
  %v8341 = vunpack.c.h.b16 %v8265
  %v8342 = vunpack.c.l.b16 %v8266
  %v8343 = vunpack.c.h.b16 %v8266
  %v8344 = vunpack.c.l.b16 %v8267
  %v8345 = vunpack.c.h.b16 %v8267
  %v8346 = vunpack.c.l.b16 %v8268
  %v8347 = vunpack.c.h.b16 %v8268
  %v8348 = vunpack.c.l.b16 %v8269
  %v8349 = vunpack.c.h.b16 %v8269
  %v8350 = vunpack.c.l.b16 %v8270
  %v8351 = vunpack.c.h.b16 %v8270
  %v8352 = vunpack.c.l.b16 %v8271
  %v8353 = vunpack.c.h.b16 %v8271
  %v8354 = vunpack.c.l.b16 %v8272
  %v8355 = vunpack.c.h.b16 %v8272
  %v8356 = vunpack.c.l.b16 %v8273
  %v8357 = vunpack.c.h.b16 %v8273
  %v8358 = vunpack.c.l.b16 %v8274
  %v8359 = vunpack.c.h.b16 %v8274
  %v8360 = vunpack.c.l.b16 %v8275
  %v8361 = vunpack.c.h.b16 %v8275
  %v8362 = vunpack.c.l.b16 %v8276
  %v8363 = vunpack.c.h.b16 %v8276
  %v8364 = vunpack.c.l.b16 %v8277
  %v8365 = vunpack.c.h.b16 %v8277
  %v8366 = vunpack.c.l.b16 %v8278
  %v8367 = vunpack.c.h.b16 %v8278
  %v8368 = vunpack.c.l.b16 %v8279
  %v8369 = vunpack.c.h.b16 %v8279
  %v8370 = vunpack.c.l.b16 %v8280
  %v8371 = vunpack.c.h.b16 %v8280
  %v8372 = vunpack.c.l.b16 %v8281
  %v8373 = vunpack.c.h.b16 %v8281
  %v8374 = vunpack.c.l.b16 %v8282
  %v8375 = vunpack.c.h.b16 %v8282
  %v8376 = vunpack.c.l.b16 %v8283
  %v8377 = vunpack.c.h.b16 %v8283
  %v8378 = vunpack.c.l.b16 %v8284
  %v8379 = vunpack.c.h.b16 %v8284
  %v8380 = vunpack.c.l.b16 %v8285
  %v8381 = vunpack.c.h.b16 %v8285
  %v8382 = vpack.c.b16 %v8322, %v8318
  %v8383 = vpack.c.b16 %v8323, %v8319
  %v8384 = vpack.c.b16 %v8324, %v8320
  %v8385 = vpack.c.b16 %v8325, %v8321
  %v8386 = vpack.c.b16 %v8330, %v8326
  %v8387 = vpack.c.b16 %v8331, %v8327
  %v8388 = vpack.c.b16 %v8332, %v8328
  %v8389 = vpack.c.b16 %v8333, %v8329
  %v8390 = vpack.c.b16 %v8338, %v8334
  %v8391 = vpack.c.b16 %v8339, %v8335
  %v8392 = vpack.c.b16 %v8340, %v8336
  %v8393 = vpack.c.b16 %v8341, %v8337
  %v8394 = vpack.c.b16 %v8346, %v8342
  %v8395 = vpack.c.b16 %v8347, %v8343
  %v8396 = vpack.c.b16 %v8348, %v8344
  %v8397 = vpack.c.b16 %v8349, %v8345
  %v8398 = vpack.c.b16 %v8354, %v8350
  %v8399 = vpack.c.b16 %v8355, %v8351
  %v8400 = vpack.c.b16 %v8356, %v8352
  %v8401 = vpack.c.b16 %v8357, %v8353
  %v8402 = vpack.c.b16 %v8362, %v8358
  %v8403 = vpack.c.b16 %v8363, %v8359
  %v8404 = vpack.c.b16 %v8364, %v8360
  %v8405 = vpack.c.b16 %v8365, %v8361
  %v8406 = vpack.c.b16 %v8370, %v8366
  %v8407 = vpack.c.b16 %v8371, %v8367
  %v8408 = vpack.c.b16 %v8372, %v8368
  %v8409 = vpack.c.b16 %v8373, %v8369
  %v8410 = vpack.c.b16 %v8378, %v8374
  %v8411 = vpack.c.b16 %v8379, %v8375
  %v8412 = vpack.c.b16 %v8380, %v8376
  %v8413 = vpack.c.b16 %v8381, %v8377
  %8446 = vmatpush.bf16.msra.mxu0 %v1411
  %8447 = vmatpush.bf16.msra.mxu0 %v1410
  %8448 = vmatpush.bf16.msra.mxu0 %v1409
  %8449 = vmatpush.bf16.msra.mxu0 %v1408
  %8450 = vmatpush.bf16.msra.mxu0 %v1407
  %8451 = vmatpush.bf16.msra.mxu0 %v1406
  %8452 = vmatpush.bf16.msra.mxu0 %v1405
  %8453 = vmatpush.bf16.msra.mxu0 %v1404
  %8454 = vmatmul.bf16.gmra.mxu0 %v8382
  %v8455 = vpop.f32.mrf.mxu0
  %v8456 = vadd.f32 0.0, %v8455
  %v8457 = vpop.f32.mrf.mxu0
  %v8458 = vadd.f32 0.0, %v8457
  %8459 = vmatmul.bf16.gmra.mxu0 %v8386
  %v8460 = vpop.f32.mrf.mxu0
  %v8461 = vadd.f32 0.0, %v8460
  %v8462 = vpop.f32.mrf.mxu0
  %v8463 = vadd.f32 0.0, %v8462
  %8464 = vmatmul.bf16.gmra.mxu0 %v8390
  %v8465 = vpop.f32.mrf.mxu0
  %v8466 = vadd.f32 0.0, %v8465
  %v8467 = vpop.f32.mrf.mxu0
  %v8468 = vadd.f32 0.0, %v8467
  %8469 = vmatmul.bf16.gmra.mxu0 %v8394
  %v8470 = vpop.f32.mrf.mxu0
  %v8471 = vadd.f32 0.0, %v8470
  %v8472 = vpop.f32.mrf.mxu0
  %v8473 = vadd.f32 0.0, %v8472
  %8474 = vmatmul.bf16.gmra.mxu0 %v8398
  %v8475 = vpop.f32.mrf.mxu0
  %v8476 = vadd.f32 0.0, %v8475
  %v8477 = vpop.f32.mrf.mxu0
  %v8478 = vadd.f32 0.0, %v8477
  %8479 = vmatmul.bf16.gmra.mxu0 %v8402
  %v8480 = vpop.f32.mrf.mxu0
  %v8481 = vadd.f32 0.0, %v8480
  %v8482 = vpop.f32.mrf.mxu0
  %v8483 = vadd.f32 0.0, %v8482
  %8484 = vmatmul.bf16.gmra.mxu0 %v8406
  %v8485 = vpop.f32.mrf.mxu0
  %v8486 = vadd.f32 0.0, %v8485
  %v8487 = vpop.f32.mrf.mxu0
  %v8488 = vadd.f32 0.0, %v8487
  %8489 = vmatmul.bf16.gmra.mxu0 %v8410
  %v8490 = vpop.f32.mrf.mxu0
  %v8491 = vadd.f32 0.0, %v8490
  %v8492 = vpop.f32.mrf.mxu0
  %v8493 = vadd.f32 0.0, %v8492
  %8494 = vdwg.mxu0
  %8495 = vmatpush.bf16.msra.mxu0 %v1419
  %8496 = vmatpush.bf16.msra.mxu0 %v1418
  %8497 = vmatpush.bf16.msra.mxu0 %v1417
  %8498 = vmatpush.bf16.msra.mxu0 %v1416
  %8499 = vmatpush.bf16.msra.mxu0 %v1415
  %8500 = vmatpush.bf16.msra.mxu0 %v1414
  %8501 = vmatpush.bf16.msra.mxu0 %v1413
  %8502 = vmatpush.bf16.msra.mxu0 %v1412
  %8503 = vmatmul.bf16.gmra.mxu0 %v8383
  %v8504 = vpop.f32.mrf.mxu0
  %v8505 = vadd.f32 %v8456, %v8504
  %v8506 = vpop.f32.mrf.mxu0
  %v8507 = vadd.f32 %v8458, %v8506
  %8508 = vmatmul.bf16.gmra.mxu0 %v8387
  %v8509 = vpop.f32.mrf.mxu0
  %v8510 = vadd.f32 %v8461, %v8509
  %v8511 = vpop.f32.mrf.mxu0
  %v8512 = vadd.f32 %v8463, %v8511
  %8513 = vmatmul.bf16.gmra.mxu0 %v8391
  %v8514 = vpop.f32.mrf.mxu0
  %v8515 = vadd.f32 %v8466, %v8514
  %v8516 = vpop.f32.mrf.mxu0
  %v8517 = vadd.f32 %v8468, %v8516
  %8518 = vmatmul.bf16.gmra.mxu0 %v8395
  %v8519 = vpop.f32.mrf.mxu0
  %v8520 = vadd.f32 %v8471, %v8519
  %v8521 = vpop.f32.mrf.mxu0
  %v8522 = vadd.f32 %v8473, %v8521
  %8523 = vmatmul.bf16.gmra.mxu0 %v8399
  %v8524 = vpop.f32.mrf.mxu0
  %v8525 = vadd.f32 %v8476, %v8524
  %v8526 = vpop.f32.mrf.mxu0
  %v8527 = vadd.f32 %v8478, %v8526
  %8528 = vmatmul.bf16.gmra.mxu0 %v8403
  %v8529 = vpop.f32.mrf.mxu0
  %v8530 = vadd.f32 %v8481, %v8529
  %v8531 = vpop.f32.mrf.mxu0
  %v8532 = vadd.f32 %v8483, %v8531
  %8533 = vmatmul.bf16.gmra.mxu0 %v8407
  %v8534 = vpop.f32.mrf.mxu0
  %v8535 = vadd.f32 %v8486, %v8534
  %v8536 = vpop.f32.mrf.mxu0
  %v8537 = vadd.f32 %v8488, %v8536
  %8538 = vmatmul.bf16.gmra.mxu0 %v8411
  %v8539 = vpop.f32.mrf.mxu0
  %v8540 = vadd.f32 %v8491, %v8539
  %v8541 = vpop.f32.mrf.mxu0
  %v8542 = vadd.f32 %v8493, %v8541
  %8543 = vdwg.mxu0
  %8544 = vmatpush.bf16.msra.mxu0 %v1427
  %8545 = vmatpush.bf16.msra.mxu0 %v1426
  %8546 = vmatpush.bf16.msra.mxu0 %v1425
  %8547 = vmatpush.bf16.msra.mxu0 %v1424
  %8548 = vmatpush.bf16.msra.mxu0 %v1423
  %8549 = vmatpush.bf16.msra.mxu0 %v1422
  %8550 = vmatpush.bf16.msra.mxu0 %v1421
  %8551 = vmatpush.bf16.msra.mxu0 %v1420
  %8552 = vmatmul.bf16.gmra.mxu0 %v8384
  %v8553 = vpop.f32.mrf.mxu0
  %v8554 = vadd.f32 %v8505, %v8553
  %v8555 = vpop.f32.mrf.mxu0
  %v8556 = vadd.f32 %v8507, %v8555
  %8557 = vmatmul.bf16.gmra.mxu0 %v8388
  %v8558 = vpop.f32.mrf.mxu0
  %v8559 = vadd.f32 %v8510, %v8558
  %v8560 = vpop.f32.mrf.mxu0
  %v8561 = vadd.f32 %v8512, %v8560
  %8562 = vmatmul.bf16.gmra.mxu0 %v8392
  %v8563 = vpop.f32.mrf.mxu0
  %v8564 = vadd.f32 %v8515, %v8563
  %v8565 = vpop.f32.mrf.mxu0
  %v8566 = vadd.f32 %v8517, %v8565
  %8567 = vmatmul.bf16.gmra.mxu0 %v8396
  %v8568 = vpop.f32.mrf.mxu0
  %v8569 = vadd.f32 %v8520, %v8568
  %v8570 = vpop.f32.mrf.mxu0
  %v8571 = vadd.f32 %v8522, %v8570
  %8572 = vmatmul.bf16.gmra.mxu0 %v8400
  %v8573 = vpop.f32.mrf.mxu0
  %v8574 = vadd.f32 %v8525, %v8573
  %v8575 = vpop.f32.mrf.mxu0
  %v8576 = vadd.f32 %v8527, %v8575
  %8577 = vmatmul.bf16.gmra.mxu0 %v8404
  %v8578 = vpop.f32.mrf.mxu0
  %v8579 = vadd.f32 %v8530, %v8578
  %v8580 = vpop.f32.mrf.mxu0
  %v8581 = vadd.f32 %v8532, %v8580
  %8582 = vmatmul.bf16.gmra.mxu0 %v8408
  %v8583 = vpop.f32.mrf.mxu0
  %v8584 = vadd.f32 %v8535, %v8583
  %v8585 = vpop.f32.mrf.mxu0
  %v8586 = vadd.f32 %v8537, %v8585
  %8587 = vmatmul.bf16.gmra.mxu0 %v8412
  %v8588 = vpop.f32.mrf.mxu0
  %v8589 = vadd.f32 %v8540, %v8588
  %v8590 = vpop.f32.mrf.mxu0
  %v8591 = vadd.f32 %v8542, %v8590
  %8592 = vdwg.mxu0
  %8593 = vmatpush.bf16.msra.mxu0 %v1435
  %8594 = vmatpush.bf16.msra.mxu0 %v1434
  %8595 = vmatpush.bf16.msra.mxu0 %v1433
  %8596 = vmatpush.bf16.msra.mxu0 %v1432
  %8597 = vmatpush.bf16.msra.mxu0 %v1431
  %8598 = vmatpush.bf16.msra.mxu0 %v1430
  %8599 = vmatpush.bf16.msra.mxu0 %v1429
  %8600 = vmatpush.bf16.msra.mxu0 %v1428
  %8601 = vmatmul.bf16.gmra.mxu0 %v8385
  %v8602 = vpop.f32.mrf.mxu0
  %v8603 = vadd.f32 %v8554, %v8602
  %v8604 = vpop.f32.mrf.mxu0
  %v8605 = vadd.f32 %v8556, %v8604
  %8606 = vmatmul.bf16.gmra.mxu0 %v8389
  %v8607 = vpop.f32.mrf.mxu0
  %v8608 = vadd.f32 %v8559, %v8607
  %v8609 = vpop.f32.mrf.mxu0
  %v8610 = vadd.f32 %v8561, %v8609
  %8611 = vmatmul.bf16.gmra.mxu0 %v8393
  %v8612 = vpop.f32.mrf.mxu0
  %v8613 = vadd.f32 %v8564, %v8612
  %v8614 = vpop.f32.mrf.mxu0
  %v8615 = vadd.f32 %v8566, %v8614
  %8616 = vmatmul.bf16.gmra.mxu0 %v8397
  %v8617 = vpop.f32.mrf.mxu0
  %v8618 = vadd.f32 %v8569, %v8617
  %v8619 = vpop.f32.mrf.mxu0
  %v8620 = vadd.f32 %v8571, %v8619
  %8621 = vmatmul.bf16.gmra.mxu0 %v8401
  %v8622 = vpop.f32.mrf.mxu0
  %v8623 = vadd.f32 %v8574, %v8622
  %v8624 = vpop.f32.mrf.mxu0
  %v8625 = vadd.f32 %v8576, %v8624
  %8626 = vmatmul.bf16.gmra.mxu0 %v8405
  %v8627 = vpop.f32.mrf.mxu0
  %v8628 = vadd.f32 %v8579, %v8627
  %v8629 = vpop.f32.mrf.mxu0
  %v8630 = vadd.f32 %v8581, %v8629
  %8631 = vmatmul.bf16.gmra.mxu0 %v8409
  %v8632 = vpop.f32.mrf.mxu0
  %v8633 = vadd.f32 %v8584, %v8632
  %v8634 = vpop.f32.mrf.mxu0
  %v8635 = vadd.f32 %v8586, %v8634
  %8636 = vmatmul.bf16.gmra.mxu0 %v8413
  %v8637 = vpop.f32.mrf.mxu0
  %v8638 = vadd.f32 %v8589, %v8637
  %v8639 = vpop.f32.mrf.mxu0
  %v8640 = vadd.f32 %v8591, %v8639
  %8641 = vdwg.mxu0
  %v8642 = vpack.c.bf16 %v8605, %v8603
  %v8643 = vpack.c.bf16 %v8610, %v8608
  %v8644 = vpack.c.bf16 %v8615, %v8613
  %v8645 = vpack.c.bf16 %v8620, %v8618
  %v8646 = vpack.c.bf16 %v8625, %v8623
  %v8647 = vpack.c.bf16 %v8630, %v8628
  %v8648 = vpack.c.bf16 %v8635, %v8633
  %v8649 = vpack.c.bf16 %v8640, %v8638
  %s8650 = scalar_lea.vmem %s5, 832
  %v8651 = vld [vmem:[%s8650] sm:$0xf]
  %v8652 = vld [vmem:[%s8650 + $0x4] sm:$0xf]
  %v8653 = vld [vmem:[%s8650 + $0x8] sm:$0xf]
  %v8654 = vld [vmem:[%s8650 + $0xc] sm:$0xf]
  %v8655 = vld [vmem:[%s8650 + $0x10] sm:$0xf]
  %v8656 = vld [vmem:[%s8650 + $0x14] sm:$0xf]
  %v8657 = vld [vmem:[%s8650 + $0x18] sm:$0xf]
  %v8658 = vld [vmem:[%s8650 + $0x1c] sm:$0xf]
  %v8659 = vld [vmem:[%s8650 + $0x20] sm:$0xf]
  %v8660 = vld [vmem:[%s8650 + $0x24] sm:$0xf]
  %v8661 = vld [vmem:[%s8650 + $0x28] sm:$0xf]
  %v8662 = vld [vmem:[%s8650 + $0x2c] sm:$0xf]
  %v8663 = vld [vmem:[%s8650 + $0x30] sm:$0xf]
  %v8664 = vld [vmem:[%s8650 + $0x34] sm:$0xf]
  %v8665 = vld [vmem:[%s8650 + $0x38] sm:$0xf]
  %v8666 = vld [vmem:[%s8650 + $0x3c] sm:$0xf]
  %v8683 = vunpack.c.l.b16 %v8651
  %v8684 = vunpack.c.l.b16 %v8652
  %v8685 = vunpack.c.l.b16 %v8653
  %v8686 = vunpack.c.l.b16 %v8654
  %v8687 = vunpack.c.l.b16 %v8655
  %v8688 = vunpack.c.l.b16 %v8656
  %v8689 = vunpack.c.l.b16 %v8657
  %v8690 = vunpack.c.l.b16 %v8658
  %v8691 = vunpack.c.l.b16 %v8659
  %v8692 = vunpack.c.l.b16 %v8660
  %v8693 = vunpack.c.l.b16 %v8661
  %v8694 = vunpack.c.l.b16 %v8662
  %v8695 = vunpack.c.l.b16 %v8663
  %v8696 = vunpack.c.l.b16 %v8664
  %v8697 = vunpack.c.l.b16 %v8665
  %v8698 = vunpack.c.l.b16 %v8666
  %v8699 = vpack.c.b16 %v8684, %v8683
  %v8700 = vpack.c.b16 %v8686, %v8685
  %v8701 = vpack.c.b16 %v8688, %v8687
  %v8702 = vpack.c.b16 %v8690, %v8689
  %v8703 = vpack.c.b16 %v8692, %v8691
  %v8704 = vpack.c.b16 %v8694, %v8693
  %v8705 = vpack.c.b16 %v8696, %v8695
  %v8706 = vpack.c.b16 %v8698, %v8697
  %8715 = vmatpush.bf16.msra.mxu0 %v8706
  %8716 = vmatpush.bf16.msra.mxu0 %v8705
  %8717 = vmatpush.bf16.msra.mxu0 %v8704
  %8718 = vmatpush.bf16.msra.mxu0 %v8703
  %8719 = vmatpush.bf16.msra.mxu0 %v8702
  %8720 = vmatpush.bf16.msra.mxu0 %v8701
  %8721 = vmatpush.bf16.msra.mxu0 %v8700
  %8722 = vmatpush.bf16.msra.mxu0 %v8699
  %8723 = vmatmul.bf16.gmra.mxu0 %v8642
  %v8724 = vpop.f32.mrf.mxu0
  %v8725 = vadd.f32 0.0, %v8724
  %v8726 = vpop.f32.mrf.mxu0
  %v8727 = vadd.f32 0.0, %v8726
  %8728 = vmatmul.bf16.gmra.mxu0 %v8643
  %v8729 = vpop.f32.mrf.mxu0
  %v8730 = vadd.f32 0.0, %v8729
  %v8731 = vpop.f32.mrf.mxu0
  %v8732 = vadd.f32 0.0, %v8731
  %8733 = vmatmul.bf16.gmra.mxu0 %v8644
  %v8734 = vpop.f32.mrf.mxu0
  %v8735 = vadd.f32 0.0, %v8734
  %v8736 = vpop.f32.mrf.mxu0
  %v8737 = vadd.f32 0.0, %v8736
  %8738 = vmatmul.bf16.gmra.mxu0 %v8645
  %v8739 = vpop.f32.mrf.mxu0
  %v8740 = vadd.f32 0.0, %v8739
  %v8741 = vpop.f32.mrf.mxu0
  %v8742 = vadd.f32 0.0, %v8741
  %8743 = vmatmul.bf16.gmra.mxu0 %v8646
  %v8744 = vpop.f32.mrf.mxu0
  %v8745 = vadd.f32 0.0, %v8744
  %v8746 = vpop.f32.mrf.mxu0
  %v8747 = vadd.f32 0.0, %v8746
  %8748 = vmatmul.bf16.gmra.mxu0 %v8647
  %v8749 = vpop.f32.mrf.mxu0
  %v8750 = vadd.f32 0.0, %v8749
  %v8751 = vpop.f32.mrf.mxu0
  %v8752 = vadd.f32 0.0, %v8751
  %8753 = vmatmul.bf16.gmra.mxu0 %v8648
  %v8754 = vpop.f32.mrf.mxu0
  %v8755 = vadd.f32 0.0, %v8754
  %v8756 = vpop.f32.mrf.mxu0
  %v8757 = vadd.f32 0.0, %v8756
  %8758 = vmatmul.bf16.gmra.mxu0 %v8649
  %v8759 = vpop.f32.mrf.mxu0
  %v8760 = vadd.f32 0.0, %v8759
  %v8761 = vpop.f32.mrf.mxu0
  %v8762 = vadd.f32 0.0, %v8761
  %8763 = vdwg.mxu0
  %v8764 = vadd.f32 %v8237, %v8725
  %v8765 = vadd.f32 %v8238, %v8727
  %v8766 = vadd.f32 %v8239, %v8730
  %v8767 = vadd.f32 %v8240, %v8732
  %v8768 = vadd.f32 %v8241, %v8735
  %v8769 = vadd.f32 %v8242, %v8737
  %v8770 = vadd.f32 %v8243, %v8740
  %v8771 = vadd.f32 %v8244, %v8742
  %v8772 = vadd.f32 %v8245, %v8745
  %v8773 = vadd.f32 %v8246, %v8747
  %v8774 = vadd.f32 %v8247, %v8750
  %v8775 = vadd.f32 %v8248, %v8752
  %v8776 = vadd.f32 %v8249, %v8755
  %v8777 = vadd.f32 %v8250, %v8757
  %v8778 = vadd.f32 %v8251, %v8760
  %v8779 = vadd.f32 %v8252, %v8762
  %s8780 = scalar_lea.vmem %s4, 3584
  %v8781 = vld [vmem:[%s8780] sm:$0xff]
  %v8782 = vld [vmem:[%s8780 + $0x8] sm:$0xff]
  %v8783 = vld [vmem:[%s8780 + $0x10] sm:$0xff]
  %v8784 = vld [vmem:[%s8780 + $0x18] sm:$0xff]
  %v8785 = vld [vmem:[%s8780 + $0x20] sm:$0xff]
  %v8786 = vld [vmem:[%s8780 + $0x28] sm:$0xff]
  %v8787 = vld [vmem:[%s8780 + $0x30] sm:$0xff]
  %v8788 = vld [vmem:[%s8780 + $0x38] sm:$0xff]
  %v8789 = vld [vmem:[%s8780 + $0x40] sm:$0xff]
  %v8790 = vld [vmem:[%s8780 + $0x48] sm:$0xff]
  %v8791 = vld [vmem:[%s8780 + $0x50] sm:$0xff]
  %v8792 = vld [vmem:[%s8780 + $0x58] sm:$0xff]
  %v8793 = vld [vmem:[%s8780 + $0x60] sm:$0xff]
  %v8794 = vld [vmem:[%s8780 + $0x68] sm:$0xff]
  %v8795 = vld [vmem:[%s8780 + $0x70] sm:$0xff]
  %v8796 = vld [vmem:[%s8780 + $0x78] sm:$0xff]
  %v8797 = vld [vmem:[%s8780 + $0x80] sm:$0xff]
  %v8798 = vld [vmem:[%s8780 + $0x88] sm:$0xff]
  %v8799 = vld [vmem:[%s8780 + $0x90] sm:$0xff]
  %v8800 = vld [vmem:[%s8780 + $0x98] sm:$0xff]
  %v8801 = vld [vmem:[%s8780 + $0xa0] sm:$0xff]
  %v8802 = vld [vmem:[%s8780 + $0xa8] sm:$0xff]
  %v8803 = vld [vmem:[%s8780 + $0xb0] sm:$0xff]
  %v8804 = vld [vmem:[%s8780 + $0xb8] sm:$0xff]
  %v8805 = vld [vmem:[%s8780 + $0xc0] sm:$0xff]
  %v8806 = vld [vmem:[%s8780 + $0xc8] sm:$0xff]
  %v8807 = vld [vmem:[%s8780 + $0xd0] sm:$0xff]
  %v8808 = vld [vmem:[%s8780 + $0xd8] sm:$0xff]
  %v8809 = vld [vmem:[%s8780 + $0xe0] sm:$0xff]
  %v8810 = vld [vmem:[%s8780 + $0xe8] sm:$0xff]
  %v8811 = vld [vmem:[%s8780 + $0xf0] sm:$0xff]
  %v8812 = vld [vmem:[%s8780 + $0xf8] sm:$0xff]
  %v8845 = vunpack.c.l.b16 %v8781
  %v8846 = vunpack.c.h.b16 %v8781
  %v8847 = vunpack.c.l.b16 %v8782
  %v8848 = vunpack.c.h.b16 %v8782
  %v8849 = vunpack.c.l.b16 %v8783
  %v8850 = vunpack.c.h.b16 %v8783
  %v8851 = vunpack.c.l.b16 %v8784
  %v8852 = vunpack.c.h.b16 %v8784
  %v8853 = vunpack.c.l.b16 %v8785
  %v8854 = vunpack.c.h.b16 %v8785
  %v8855 = vunpack.c.l.b16 %v8786
  %v8856 = vunpack.c.h.b16 %v8786
  %v8857 = vunpack.c.l.b16 %v8787
  %v8858 = vunpack.c.h.b16 %v8787
  %v8859 = vunpack.c.l.b16 %v8788
  %v8860 = vunpack.c.h.b16 %v8788
  %v8861 = vunpack.c.l.b16 %v8789
  %v8862 = vunpack.c.h.b16 %v8789
  %v8863 = vunpack.c.l.b16 %v8790
  %v8864 = vunpack.c.h.b16 %v8790
  %v8865 = vunpack.c.l.b16 %v8791
  %v8866 = vunpack.c.h.b16 %v8791
  %v8867 = vunpack.c.l.b16 %v8792
  %v8868 = vunpack.c.h.b16 %v8792
  %v8869 = vunpack.c.l.b16 %v8793
  %v8870 = vunpack.c.h.b16 %v8793
  %v8871 = vunpack.c.l.b16 %v8794
  %v8872 = vunpack.c.h.b16 %v8794
  %v8873 = vunpack.c.l.b16 %v8795
  %v8874 = vunpack.c.h.b16 %v8795
  %v8875 = vunpack.c.l.b16 %v8796
  %v8876 = vunpack.c.h.b16 %v8796
  %v8877 = vunpack.c.l.b16 %v8797
  %v8878 = vunpack.c.h.b16 %v8797
  %v8879 = vunpack.c.l.b16 %v8798
  %v8880 = vunpack.c.h.b16 %v8798
  %v8881 = vunpack.c.l.b16 %v8799
  %v8882 = vunpack.c.h.b16 %v8799
  %v8883 = vunpack.c.l.b16 %v8800
  %v8884 = vunpack.c.h.b16 %v8800
  %v8885 = vunpack.c.l.b16 %v8801
  %v8886 = vunpack.c.h.b16 %v8801
  %v8887 = vunpack.c.l.b16 %v8802
  %v8888 = vunpack.c.h.b16 %v8802
  %v8889 = vunpack.c.l.b16 %v8803
  %v8890 = vunpack.c.h.b16 %v8803
  %v8891 = vunpack.c.l.b16 %v8804
  %v8892 = vunpack.c.h.b16 %v8804
  %v8893 = vunpack.c.l.b16 %v8805
  %v8894 = vunpack.c.h.b16 %v8805
  %v8895 = vunpack.c.l.b16 %v8806
  %v8896 = vunpack.c.h.b16 %v8806
  %v8897 = vunpack.c.l.b16 %v8807
  %v8898 = vunpack.c.h.b16 %v8807
  %v8899 = vunpack.c.l.b16 %v8808
  %v8900 = vunpack.c.h.b16 %v8808
  %v8901 = vunpack.c.l.b16 %v8809
  %v8902 = vunpack.c.h.b16 %v8809
  %v8903 = vunpack.c.l.b16 %v8810
  %v8904 = vunpack.c.h.b16 %v8810
  %v8905 = vunpack.c.l.b16 %v8811
  %v8906 = vunpack.c.h.b16 %v8811
  %v8907 = vunpack.c.l.b16 %v8812
  %v8908 = vunpack.c.h.b16 %v8812
  %v8909 = vpack.c.b16 %v8849, %v8845
  %v8910 = vpack.c.b16 %v8850, %v8846
  %v8911 = vpack.c.b16 %v8851, %v8847
  %v8912 = vpack.c.b16 %v8852, %v8848
  %v8913 = vpack.c.b16 %v8857, %v8853
  %v8914 = vpack.c.b16 %v8858, %v8854
  %v8915 = vpack.c.b16 %v8859, %v8855
  %v8916 = vpack.c.b16 %v8860, %v8856
  %v8917 = vpack.c.b16 %v8865, %v8861
  %v8918 = vpack.c.b16 %v8866, %v8862
  %v8919 = vpack.c.b16 %v8867, %v8863
  %v8920 = vpack.c.b16 %v8868, %v8864
  %v8921 = vpack.c.b16 %v8873, %v8869
  %v8922 = vpack.c.b16 %v8874, %v8870
  %v8923 = vpack.c.b16 %v8875, %v8871
  %v8924 = vpack.c.b16 %v8876, %v8872
  %v8925 = vpack.c.b16 %v8881, %v8877
  %v8926 = vpack.c.b16 %v8882, %v8878
  %v8927 = vpack.c.b16 %v8883, %v8879
  %v8928 = vpack.c.b16 %v8884, %v8880
  %v8929 = vpack.c.b16 %v8889, %v8885
  %v8930 = vpack.c.b16 %v8890, %v8886
  %v8931 = vpack.c.b16 %v8891, %v8887
  %v8932 = vpack.c.b16 %v8892, %v8888
  %v8933 = vpack.c.b16 %v8897, %v8893
  %v8934 = vpack.c.b16 %v8898, %v8894
  %v8935 = vpack.c.b16 %v8899, %v8895
  %v8936 = vpack.c.b16 %v8900, %v8896
  %v8937 = vpack.c.b16 %v8905, %v8901
  %v8938 = vpack.c.b16 %v8906, %v8902
  %v8939 = vpack.c.b16 %v8907, %v8903
  %v8940 = vpack.c.b16 %v8908, %v8904
  %8973 = vmatpush.bf16.msra.mxu0 %v1411
  %8974 = vmatpush.bf16.msra.mxu0 %v1410
  %8975 = vmatpush.bf16.msra.mxu0 %v1409
  %8976 = vmatpush.bf16.msra.mxu0 %v1408
  %8977 = vmatpush.bf16.msra.mxu0 %v1407
  %8978 = vmatpush.bf16.msra.mxu0 %v1406
  %8979 = vmatpush.bf16.msra.mxu0 %v1405
  %8980 = vmatpush.bf16.msra.mxu0 %v1404
  %8981 = vmatmul.bf16.gmra.mxu0 %v8909
  %v8982 = vpop.f32.mrf.mxu0
  %v8983 = vadd.f32 0.0, %v8982
  %v8984 = vpop.f32.mrf.mxu0
  %v8985 = vadd.f32 0.0, %v8984
  %8986 = vmatmul.bf16.gmra.mxu0 %v8913
  %v8987 = vpop.f32.mrf.mxu0
  %v8988 = vadd.f32 0.0, %v8987
  %v8989 = vpop.f32.mrf.mxu0
  %v8990 = vadd.f32 0.0, %v8989
  %8991 = vmatmul.bf16.gmra.mxu0 %v8917
  %v8992 = vpop.f32.mrf.mxu0
  %v8993 = vadd.f32 0.0, %v8992
  %v8994 = vpop.f32.mrf.mxu0
  %v8995 = vadd.f32 0.0, %v8994
  %8996 = vmatmul.bf16.gmra.mxu0 %v8921
  %v8997 = vpop.f32.mrf.mxu0
  %v8998 = vadd.f32 0.0, %v8997
  %v8999 = vpop.f32.mrf.mxu0
  %v9000 = vadd.f32 0.0, %v8999
  %9001 = vmatmul.bf16.gmra.mxu0 %v8925
  %v9002 = vpop.f32.mrf.mxu0
  %v9003 = vadd.f32 0.0, %v9002
  %v9004 = vpop.f32.mrf.mxu0
  %v9005 = vadd.f32 0.0, %v9004
  %9006 = vmatmul.bf16.gmra.mxu0 %v8929
  %v9007 = vpop.f32.mrf.mxu0
  %v9008 = vadd.f32 0.0, %v9007
  %v9009 = vpop.f32.mrf.mxu0
  %v9010 = vadd.f32 0.0, %v9009
  %9011 = vmatmul.bf16.gmra.mxu0 %v8933
  %v9012 = vpop.f32.mrf.mxu0
  %v9013 = vadd.f32 0.0, %v9012
  %v9014 = vpop.f32.mrf.mxu0
  %v9015 = vadd.f32 0.0, %v9014
  %9016 = vmatmul.bf16.gmra.mxu0 %v8937
  %v9017 = vpop.f32.mrf.mxu0
  %v9018 = vadd.f32 0.0, %v9017
  %v9019 = vpop.f32.mrf.mxu0
  %v9020 = vadd.f32 0.0, %v9019
  %9021 = vdwg.mxu0
  %9022 = vmatpush.bf16.msra.mxu0 %v1419
  %9023 = vmatpush.bf16.msra.mxu0 %v1418
  %9024 = vmatpush.bf16.msra.mxu0 %v1417
  %9025 = vmatpush.bf16.msra.mxu0 %v1416
  %9026 = vmatpush.bf16.msra.mxu0 %v1415
  %9027 = vmatpush.bf16.msra.mxu0 %v1414
  %9028 = vmatpush.bf16.msra.mxu0 %v1413
  %9029 = vmatpush.bf16.msra.mxu0 %v1412
  %9030 = vmatmul.bf16.gmra.mxu0 %v8910
  %v9031 = vpop.f32.mrf.mxu0
  %v9032 = vadd.f32 %v8983, %v9031
  %v9033 = vpop.f32.mrf.mxu0
  %v9034 = vadd.f32 %v8985, %v9033
  %9035 = vmatmul.bf16.gmra.mxu0 %v8914
  %v9036 = vpop.f32.mrf.mxu0
  %v9037 = vadd.f32 %v8988, %v9036
  %v9038 = vpop.f32.mrf.mxu0
  %v9039 = vadd.f32 %v8990, %v9038
  %9040 = vmatmul.bf16.gmra.mxu0 %v8918
  %v9041 = vpop.f32.mrf.mxu0
  %v9042 = vadd.f32 %v8993, %v9041
  %v9043 = vpop.f32.mrf.mxu0
  %v9044 = vadd.f32 %v8995, %v9043
  %9045 = vmatmul.bf16.gmra.mxu0 %v8922
  %v9046 = vpop.f32.mrf.mxu0
  %v9047 = vadd.f32 %v8998, %v9046
  %v9048 = vpop.f32.mrf.mxu0
  %v9049 = vadd.f32 %v9000, %v9048
  %9050 = vmatmul.bf16.gmra.mxu0 %v8926
  %v9051 = vpop.f32.mrf.mxu0
  %v9052 = vadd.f32 %v9003, %v9051
  %v9053 = vpop.f32.mrf.mxu0
  %v9054 = vadd.f32 %v9005, %v9053
  %9055 = vmatmul.bf16.gmra.mxu0 %v8930
  %v9056 = vpop.f32.mrf.mxu0
  %v9057 = vadd.f32 %v9008, %v9056
  %v9058 = vpop.f32.mrf.mxu0
  %v9059 = vadd.f32 %v9010, %v9058
  %9060 = vmatmul.bf16.gmra.mxu0 %v8934
  %v9061 = vpop.f32.mrf.mxu0
  %v9062 = vadd.f32 %v9013, %v9061
  %v9063 = vpop.f32.mrf.mxu0
  %v9064 = vadd.f32 %v9015, %v9063
  %9065 = vmatmul.bf16.gmra.mxu0 %v8938
  %v9066 = vpop.f32.mrf.mxu0
  %v9067 = vadd.f32 %v9018, %v9066
  %v9068 = vpop.f32.mrf.mxu0
  %v9069 = vadd.f32 %v9020, %v9068
  %9070 = vdwg.mxu0
  %9071 = vmatpush.bf16.msra.mxu0 %v1427
  %9072 = vmatpush.bf16.msra.mxu0 %v1426
  %9073 = vmatpush.bf16.msra.mxu0 %v1425
  %9074 = vmatpush.bf16.msra.mxu0 %v1424
  %9075 = vmatpush.bf16.msra.mxu0 %v1423
  %9076 = vmatpush.bf16.msra.mxu0 %v1422
  %9077 = vmatpush.bf16.msra.mxu0 %v1421
  %9078 = vmatpush.bf16.msra.mxu0 %v1420
  %9079 = vmatmul.bf16.gmra.mxu0 %v8911
  %v9080 = vpop.f32.mrf.mxu0
  %v9081 = vadd.f32 %v9032, %v9080
  %v9082 = vpop.f32.mrf.mxu0
  %v9083 = vadd.f32 %v9034, %v9082
  %9084 = vmatmul.bf16.gmra.mxu0 %v8915
  %v9085 = vpop.f32.mrf.mxu0
  %v9086 = vadd.f32 %v9037, %v9085
  %v9087 = vpop.f32.mrf.mxu0
  %v9088 = vadd.f32 %v9039, %v9087
  %9089 = vmatmul.bf16.gmra.mxu0 %v8919
  %v9090 = vpop.f32.mrf.mxu0
  %v9091 = vadd.f32 %v9042, %v9090
  %v9092 = vpop.f32.mrf.mxu0
  %v9093 = vadd.f32 %v9044, %v9092
  %9094 = vmatmul.bf16.gmra.mxu0 %v8923
  %v9095 = vpop.f32.mrf.mxu0
  %v9096 = vadd.f32 %v9047, %v9095
  %v9097 = vpop.f32.mrf.mxu0
  %v9098 = vadd.f32 %v9049, %v9097
  %9099 = vmatmul.bf16.gmra.mxu0 %v8927
  %v9100 = vpop.f32.mrf.mxu0
  %v9101 = vadd.f32 %v9052, %v9100
  %v9102 = vpop.f32.mrf.mxu0
  %v9103 = vadd.f32 %v9054, %v9102
  %9104 = vmatmul.bf16.gmra.mxu0 %v8931
  %v9105 = vpop.f32.mrf.mxu0
  %v9106 = vadd.f32 %v9057, %v9105
  %v9107 = vpop.f32.mrf.mxu0
  %v9108 = vadd.f32 %v9059, %v9107
  %9109 = vmatmul.bf16.gmra.mxu0 %v8935
  %v9110 = vpop.f32.mrf.mxu0
  %v9111 = vadd.f32 %v9062, %v9110
  %v9112 = vpop.f32.mrf.mxu0
  %v9113 = vadd.f32 %v9064, %v9112
  %9114 = vmatmul.bf16.gmra.mxu0 %v8939
  %v9115 = vpop.f32.mrf.mxu0
  %v9116 = vadd.f32 %v9067, %v9115
  %v9117 = vpop.f32.mrf.mxu0
  %v9118 = vadd.f32 %v9069, %v9117
  %9119 = vdwg.mxu0
  %9120 = vmatpush.bf16.msra.mxu0 %v1435
  %9121 = vmatpush.bf16.msra.mxu0 %v1434
  %9122 = vmatpush.bf16.msra.mxu0 %v1433
  %9123 = vmatpush.bf16.msra.mxu0 %v1432
  %9124 = vmatpush.bf16.msra.mxu0 %v1431
  %9125 = vmatpush.bf16.msra.mxu0 %v1430
  %9126 = vmatpush.bf16.msra.mxu0 %v1429
  %9127 = vmatpush.bf16.msra.mxu0 %v1428
  %9128 = vmatmul.bf16.gmra.mxu0 %v8912
  %v9129 = vpop.f32.mrf.mxu0
  %v9130 = vadd.f32 %v9081, %v9129
  %v9131 = vpop.f32.mrf.mxu0
  %v9132 = vadd.f32 %v9083, %v9131
  %9133 = vmatmul.bf16.gmra.mxu0 %v8916
  %v9134 = vpop.f32.mrf.mxu0
  %v9135 = vadd.f32 %v9086, %v9134
  %v9136 = vpop.f32.mrf.mxu0
  %v9137 = vadd.f32 %v9088, %v9136
  %9138 = vmatmul.bf16.gmra.mxu0 %v8920
  %v9139 = vpop.f32.mrf.mxu0
  %v9140 = vadd.f32 %v9091, %v9139
  %v9141 = vpop.f32.mrf.mxu0
  %v9142 = vadd.f32 %v9093, %v9141
  %9143 = vmatmul.bf16.gmra.mxu0 %v8924
  %v9144 = vpop.f32.mrf.mxu0
  %v9145 = vadd.f32 %v9096, %v9144
  %v9146 = vpop.f32.mrf.mxu0
  %v9147 = vadd.f32 %v9098, %v9146
  %9148 = vmatmul.bf16.gmra.mxu0 %v8928
  %v9149 = vpop.f32.mrf.mxu0
  %v9150 = vadd.f32 %v9101, %v9149
  %v9151 = vpop.f32.mrf.mxu0
  %v9152 = vadd.f32 %v9103, %v9151
  %9153 = vmatmul.bf16.gmra.mxu0 %v8932
  %v9154 = vpop.f32.mrf.mxu0
  %v9155 = vadd.f32 %v9106, %v9154
  %v9156 = vpop.f32.mrf.mxu0
  %v9157 = vadd.f32 %v9108, %v9156
  %9158 = vmatmul.bf16.gmra.mxu0 %v8936
  %v9159 = vpop.f32.mrf.mxu0
  %v9160 = vadd.f32 %v9111, %v9159
  %v9161 = vpop.f32.mrf.mxu0
  %v9162 = vadd.f32 %v9113, %v9161
  %9163 = vmatmul.bf16.gmra.mxu0 %v8940
  %v9164 = vpop.f32.mrf.mxu0
  %v9165 = vadd.f32 %v9116, %v9164
  %v9166 = vpop.f32.mrf.mxu0
  %v9167 = vadd.f32 %v9118, %v9166
  %9168 = vdwg.mxu0
  %v9169 = vpack.c.bf16 %v9132, %v9130
  %v9170 = vpack.c.bf16 %v9137, %v9135
  %v9171 = vpack.c.bf16 %v9142, %v9140
  %v9172 = vpack.c.bf16 %v9147, %v9145
  %v9173 = vpack.c.bf16 %v9152, %v9150
  %v9174 = vpack.c.bf16 %v9157, %v9155
  %v9175 = vpack.c.bf16 %v9162, %v9160
  %v9176 = vpack.c.bf16 %v9167, %v9165
  %s9177 = scalar_lea.vmem %s5, 896
  %v9178 = vld [vmem:[%s9177] sm:$0xf]
  %v9179 = vld [vmem:[%s9177 + $0x4] sm:$0xf]
  %v9180 = vld [vmem:[%s9177 + $0x8] sm:$0xf]
  %v9181 = vld [vmem:[%s9177 + $0xc] sm:$0xf]
  %v9182 = vld [vmem:[%s9177 + $0x10] sm:$0xf]
  %v9183 = vld [vmem:[%s9177 + $0x14] sm:$0xf]
  %v9184 = vld [vmem:[%s9177 + $0x18] sm:$0xf]
  %v9185 = vld [vmem:[%s9177 + $0x1c] sm:$0xf]
  %v9186 = vld [vmem:[%s9177 + $0x20] sm:$0xf]
  %v9187 = vld [vmem:[%s9177 + $0x24] sm:$0xf]
  %v9188 = vld [vmem:[%s9177 + $0x28] sm:$0xf]
  %v9189 = vld [vmem:[%s9177 + $0x2c] sm:$0xf]
  %v9190 = vld [vmem:[%s9177 + $0x30] sm:$0xf]
  %v9191 = vld [vmem:[%s9177 + $0x34] sm:$0xf]
  %v9192 = vld [vmem:[%s9177 + $0x38] sm:$0xf]
  %v9193 = vld [vmem:[%s9177 + $0x3c] sm:$0xf]
  %v9210 = vunpack.c.l.b16 %v9178
  %v9211 = vunpack.c.l.b16 %v9179
  %v9212 = vunpack.c.l.b16 %v9180
  %v9213 = vunpack.c.l.b16 %v9181
  %v9214 = vunpack.c.l.b16 %v9182
  %v9215 = vunpack.c.l.b16 %v9183
  %v9216 = vunpack.c.l.b16 %v9184
  %v9217 = vunpack.c.l.b16 %v9185
  %v9218 = vunpack.c.l.b16 %v9186
  %v9219 = vunpack.c.l.b16 %v9187
  %v9220 = vunpack.c.l.b16 %v9188
  %v9221 = vunpack.c.l.b16 %v9189
  %v9222 = vunpack.c.l.b16 %v9190
  %v9223 = vunpack.c.l.b16 %v9191
  %v9224 = vunpack.c.l.b16 %v9192
  %v9225 = vunpack.c.l.b16 %v9193
  %v9226 = vpack.c.b16 %v9211, %v9210
  %v9227 = vpack.c.b16 %v9213, %v9212
  %v9228 = vpack.c.b16 %v9215, %v9214
  %v9229 = vpack.c.b16 %v9217, %v9216
  %v9230 = vpack.c.b16 %v9219, %v9218
  %v9231 = vpack.c.b16 %v9221, %v9220
  %v9232 = vpack.c.b16 %v9223, %v9222
  %v9233 = vpack.c.b16 %v9225, %v9224
  %9242 = vmatpush.bf16.msra.mxu0 %v9233
  %9243 = vmatpush.bf16.msra.mxu0 %v9232
  %9244 = vmatpush.bf16.msra.mxu0 %v9231
  %9245 = vmatpush.bf16.msra.mxu0 %v9230
  %9246 = vmatpush.bf16.msra.mxu0 %v9229
  %9247 = vmatpush.bf16.msra.mxu0 %v9228
  %9248 = vmatpush.bf16.msra.mxu0 %v9227
  %9249 = vmatpush.bf16.msra.mxu0 %v9226
  %9250 = vmatmul.bf16.gmra.mxu0 %v9169
  %v9251 = vpop.f32.mrf.mxu0
  %v9252 = vadd.f32 0.0, %v9251
  %v9253 = vpop.f32.mrf.mxu0
  %v9254 = vadd.f32 0.0, %v9253
  %9255 = vmatmul.bf16.gmra.mxu0 %v9170
  %v9256 = vpop.f32.mrf.mxu0
  %v9257 = vadd.f32 0.0, %v9256
  %v9258 = vpop.f32.mrf.mxu0
  %v9259 = vadd.f32 0.0, %v9258
  %9260 = vmatmul.bf16.gmra.mxu0 %v9171
  %v9261 = vpop.f32.mrf.mxu0
  %v9262 = vadd.f32 0.0, %v9261
  %v9263 = vpop.f32.mrf.mxu0
  %v9264 = vadd.f32 0.0, %v9263
  %9265 = vmatmul.bf16.gmra.mxu0 %v9172
  %v9266 = vpop.f32.mrf.mxu0
  %v9267 = vadd.f32 0.0, %v9266
  %v9268 = vpop.f32.mrf.mxu0
  %v9269 = vadd.f32 0.0, %v9268
  %9270 = vmatmul.bf16.gmra.mxu0 %v9173
  %v9271 = vpop.f32.mrf.mxu0
  %v9272 = vadd.f32 0.0, %v9271
  %v9273 = vpop.f32.mrf.mxu0
  %v9274 = vadd.f32 0.0, %v9273
  %9275 = vmatmul.bf16.gmra.mxu0 %v9174
  %v9276 = vpop.f32.mrf.mxu0
  %v9277 = vadd.f32 0.0, %v9276
  %v9278 = vpop.f32.mrf.mxu0
  %v9279 = vadd.f32 0.0, %v9278
  %9280 = vmatmul.bf16.gmra.mxu0 %v9175
  %v9281 = vpop.f32.mrf.mxu0
  %v9282 = vadd.f32 0.0, %v9281
  %v9283 = vpop.f32.mrf.mxu0
  %v9284 = vadd.f32 0.0, %v9283
  %9285 = vmatmul.bf16.gmra.mxu0 %v9176
  %v9286 = vpop.f32.mrf.mxu0
  %v9287 = vadd.f32 0.0, %v9286
  %v9288 = vpop.f32.mrf.mxu0
  %v9289 = vadd.f32 0.0, %v9288
  %9290 = vdwg.mxu0
  %v9291 = vadd.f32 %v8764, %v9252
  %v9292 = vadd.f32 %v8765, %v9254
  %v9293 = vadd.f32 %v8766, %v9257
  %v9294 = vadd.f32 %v8767, %v9259
  %v9295 = vadd.f32 %v8768, %v9262
  %v9296 = vadd.f32 %v8769, %v9264
  %v9297 = vadd.f32 %v8770, %v9267
  %v9298 = vadd.f32 %v8771, %v9269
  %v9299 = vadd.f32 %v8772, %v9272
  %v9300 = vadd.f32 %v8773, %v9274
  %v9301 = vadd.f32 %v8774, %v9277
  %v9302 = vadd.f32 %v8775, %v9279
  %v9303 = vadd.f32 %v8776, %v9282
  %v9304 = vadd.f32 %v8777, %v9284
  %v9305 = vadd.f32 %v8778, %v9287
  %v9306 = vadd.f32 %v8779, %v9289
  %s9307 = scalar_lea.vmem %s4, 3840
  %v9308 = vld [vmem:[%s9307] sm:$0xff]
  %v9309 = vld [vmem:[%s9307 + $0x8] sm:$0xff]
  %v9310 = vld [vmem:[%s9307 + $0x10] sm:$0xff]
  %v9311 = vld [vmem:[%s9307 + $0x18] sm:$0xff]
  %v9312 = vld [vmem:[%s9307 + $0x20] sm:$0xff]
  %v9313 = vld [vmem:[%s9307 + $0x28] sm:$0xff]
  %v9314 = vld [vmem:[%s9307 + $0x30] sm:$0xff]
  %v9315 = vld [vmem:[%s9307 + $0x38] sm:$0xff]
  %v9316 = vld [vmem:[%s9307 + $0x40] sm:$0xff]
  %v9317 = vld [vmem:[%s9307 + $0x48] sm:$0xff]
  %v9318 = vld [vmem:[%s9307 + $0x50] sm:$0xff]
  %v9319 = vld [vmem:[%s9307 + $0x58] sm:$0xff]
  %v9320 = vld [vmem:[%s9307 + $0x60] sm:$0xff]
  %v9321 = vld [vmem:[%s9307 + $0x68] sm:$0xff]
  %v9322 = vld [vmem:[%s9307 + $0x70] sm:$0xff]
  %v9323 = vld [vmem:[%s9307 + $0x78] sm:$0xff]
  %v9324 = vld [vmem:[%s9307 + $0x80] sm:$0xff]
  %v9325 = vld [vmem:[%s9307 + $0x88] sm:$0xff]
  %v9326 = vld [vmem:[%s9307 + $0x90] sm:$0xff]
  %v9327 = vld [vmem:[%s9307 + $0x98] sm:$0xff]
  %v9328 = vld [vmem:[%s9307 + $0xa0] sm:$0xff]
  %v9329 = vld [vmem:[%s9307 + $0xa8] sm:$0xff]
  %v9330 = vld [vmem:[%s9307 + $0xb0] sm:$0xff]
  %v9331 = vld [vmem:[%s9307 + $0xb8] sm:$0xff]
  %v9332 = vld [vmem:[%s9307 + $0xc0] sm:$0xff]
  %v9333 = vld [vmem:[%s9307 + $0xc8] sm:$0xff]
  %v9334 = vld [vmem:[%s9307 + $0xd0] sm:$0xff]
  %v9335 = vld [vmem:[%s9307 + $0xd8] sm:$0xff]
  %v9336 = vld [vmem:[%s9307 + $0xe0] sm:$0xff]
  %v9337 = vld [vmem:[%s9307 + $0xe8] sm:$0xff]
  %v9338 = vld [vmem:[%s9307 + $0xf0] sm:$0xff]
  %v9339 = vld [vmem:[%s9307 + $0xf8] sm:$0xff]
  %v9372 = vunpack.c.l.b16 %v9308
  %v9373 = vunpack.c.h.b16 %v9308
  %v9374 = vunpack.c.l.b16 %v9309
  %v9375 = vunpack.c.h.b16 %v9309
  %v9376 = vunpack.c.l.b16 %v9310
  %v9377 = vunpack.c.h.b16 %v9310
  %v9378 = vunpack.c.l.b16 %v9311
  %v9379 = vunpack.c.h.b16 %v9311
  %v9380 = vunpack.c.l.b16 %v9312
  %v9381 = vunpack.c.h.b16 %v9312
  %v9382 = vunpack.c.l.b16 %v9313
  %v9383 = vunpack.c.h.b16 %v9313
  %v9384 = vunpack.c.l.b16 %v9314
  %v9385 = vunpack.c.h.b16 %v9314
  %v9386 = vunpack.c.l.b16 %v9315
  %v9387 = vunpack.c.h.b16 %v9315
  %v9388 = vunpack.c.l.b16 %v9316
  %v9389 = vunpack.c.h.b16 %v9316
  %v9390 = vunpack.c.l.b16 %v9317
  %v9391 = vunpack.c.h.b16 %v9317
  %v9392 = vunpack.c.l.b16 %v9318
  %v9393 = vunpack.c.h.b16 %v9318
  %v9394 = vunpack.c.l.b16 %v9319
  %v9395 = vunpack.c.h.b16 %v9319
  %v9396 = vunpack.c.l.b16 %v9320
  %v9397 = vunpack.c.h.b16 %v9320
  %v9398 = vunpack.c.l.b16 %v9321
  %v9399 = vunpack.c.h.b16 %v9321
  %v9400 = vunpack.c.l.b16 %v9322
  %v9401 = vunpack.c.h.b16 %v9322
  %v9402 = vunpack.c.l.b16 %v9323
  %v9403 = vunpack.c.h.b16 %v9323
  %v9404 = vunpack.c.l.b16 %v9324
  %v9405 = vunpack.c.h.b16 %v9324
  %v9406 = vunpack.c.l.b16 %v9325
  %v9407 = vunpack.c.h.b16 %v9325
  %v9408 = vunpack.c.l.b16 %v9326
  %v9409 = vunpack.c.h.b16 %v9326
  %v9410 = vunpack.c.l.b16 %v9327
  %v9411 = vunpack.c.h.b16 %v9327
  %v9412 = vunpack.c.l.b16 %v9328
  %v9413 = vunpack.c.h.b16 %v9328
  %v9414 = vunpack.c.l.b16 %v9329
  %v9415 = vunpack.c.h.b16 %v9329
  %v9416 = vunpack.c.l.b16 %v9330
  %v9417 = vunpack.c.h.b16 %v9330
  %v9418 = vunpack.c.l.b16 %v9331
  %v9419 = vunpack.c.h.b16 %v9331
  %v9420 = vunpack.c.l.b16 %v9332
  %v9421 = vunpack.c.h.b16 %v9332
  %v9422 = vunpack.c.l.b16 %v9333
  %v9423 = vunpack.c.h.b16 %v9333
  %v9424 = vunpack.c.l.b16 %v9334
  %v9425 = vunpack.c.h.b16 %v9334
  %v9426 = vunpack.c.l.b16 %v9335
  %v9427 = vunpack.c.h.b16 %v9335
  %v9428 = vunpack.c.l.b16 %v9336
  %v9429 = vunpack.c.h.b16 %v9336
  %v9430 = vunpack.c.l.b16 %v9337
  %v9431 = vunpack.c.h.b16 %v9337
  %v9432 = vunpack.c.l.b16 %v9338
  %v9433 = vunpack.c.h.b16 %v9338
  %v9434 = vunpack.c.l.b16 %v9339
  %v9435 = vunpack.c.h.b16 %v9339
  %v9436 = vpack.c.b16 %v9376, %v9372
  %v9437 = vpack.c.b16 %v9377, %v9373
  %v9438 = vpack.c.b16 %v9378, %v9374
  %v9439 = vpack.c.b16 %v9379, %v9375
  %v9440 = vpack.c.b16 %v9384, %v9380
  %v9441 = vpack.c.b16 %v9385, %v9381
  %v9442 = vpack.c.b16 %v9386, %v9382
  %v9443 = vpack.c.b16 %v9387, %v9383
  %v9444 = vpack.c.b16 %v9392, %v9388
  %v9445 = vpack.c.b16 %v9393, %v9389
  %v9446 = vpack.c.b16 %v9394, %v9390
  %v9447 = vpack.c.b16 %v9395, %v9391
  %v9448 = vpack.c.b16 %v9400, %v9396
  %v9449 = vpack.c.b16 %v9401, %v9397
  %v9450 = vpack.c.b16 %v9402, %v9398
  %v9451 = vpack.c.b16 %v9403, %v9399
  %v9452 = vpack.c.b16 %v9408, %v9404
  %v9453 = vpack.c.b16 %v9409, %v9405
  %v9454 = vpack.c.b16 %v9410, %v9406
  %v9455 = vpack.c.b16 %v9411, %v9407
  %v9456 = vpack.c.b16 %v9416, %v9412
  %v9457 = vpack.c.b16 %v9417, %v9413
  %v9458 = vpack.c.b16 %v9418, %v9414
  %v9459 = vpack.c.b16 %v9419, %v9415
  %v9460 = vpack.c.b16 %v9424, %v9420
  %v9461 = vpack.c.b16 %v9425, %v9421
  %v9462 = vpack.c.b16 %v9426, %v9422
  %v9463 = vpack.c.b16 %v9427, %v9423
  %v9464 = vpack.c.b16 %v9432, %v9428
  %v9465 = vpack.c.b16 %v9433, %v9429
  %v9466 = vpack.c.b16 %v9434, %v9430
  %v9467 = vpack.c.b16 %v9435, %v9431
  %9500 = vmatpush.bf16.msra.mxu0 %v1411
  %9501 = vmatpush.bf16.msra.mxu0 %v1410
  %9502 = vmatpush.bf16.msra.mxu0 %v1409
  %9503 = vmatpush.bf16.msra.mxu0 %v1408
  %9504 = vmatpush.bf16.msra.mxu0 %v1407
  %9505 = vmatpush.bf16.msra.mxu0 %v1406
  %9506 = vmatpush.bf16.msra.mxu0 %v1405
  %9507 = vmatpush.bf16.msra.mxu0 %v1404
  %9508 = vmatmul.bf16.gmra.mxu0 %v9436
  %v9509 = vpop.f32.mrf.mxu0
  %v9510 = vadd.f32 0.0, %v9509
  %v9511 = vpop.f32.mrf.mxu0
  %v9512 = vadd.f32 0.0, %v9511
  %9513 = vmatmul.bf16.gmra.mxu0 %v9440
  %v9514 = vpop.f32.mrf.mxu0
  %v9515 = vadd.f32 0.0, %v9514
  %v9516 = vpop.f32.mrf.mxu0
  %v9517 = vadd.f32 0.0, %v9516
  %9518 = vmatmul.bf16.gmra.mxu0 %v9444
  %v9519 = vpop.f32.mrf.mxu0
  %v9520 = vadd.f32 0.0, %v9519
  %v9521 = vpop.f32.mrf.mxu0
  %v9522 = vadd.f32 0.0, %v9521
  %9523 = vmatmul.bf16.gmra.mxu0 %v9448
  %v9524 = vpop.f32.mrf.mxu0
  %v9525 = vadd.f32 0.0, %v9524
  %v9526 = vpop.f32.mrf.mxu0
  %v9527 = vadd.f32 0.0, %v9526
  %9528 = vmatmul.bf16.gmra.mxu0 %v9452
  %v9529 = vpop.f32.mrf.mxu0
  %v9530 = vadd.f32 0.0, %v9529
  %v9531 = vpop.f32.mrf.mxu0
  %v9532 = vadd.f32 0.0, %v9531
  %9533 = vmatmul.bf16.gmra.mxu0 %v9456
  %v9534 = vpop.f32.mrf.mxu0
  %v9535 = vadd.f32 0.0, %v9534
  %v9536 = vpop.f32.mrf.mxu0
  %v9537 = vadd.f32 0.0, %v9536
  %9538 = vmatmul.bf16.gmra.mxu0 %v9460
  %v9539 = vpop.f32.mrf.mxu0
  %v9540 = vadd.f32 0.0, %v9539
  %v9541 = vpop.f32.mrf.mxu0
  %v9542 = vadd.f32 0.0, %v9541
  %9543 = vmatmul.bf16.gmra.mxu0 %v9464
  %v9544 = vpop.f32.mrf.mxu0
  %v9545 = vadd.f32 0.0, %v9544
  %v9546 = vpop.f32.mrf.mxu0
  %v9547 = vadd.f32 0.0, %v9546
  %9548 = vdwg.mxu0
  %9549 = vmatpush.bf16.msra.mxu0 %v1419
  %9550 = vmatpush.bf16.msra.mxu0 %v1418
  %9551 = vmatpush.bf16.msra.mxu0 %v1417
  %9552 = vmatpush.bf16.msra.mxu0 %v1416
  %9553 = vmatpush.bf16.msra.mxu0 %v1415
  %9554 = vmatpush.bf16.msra.mxu0 %v1414
  %9555 = vmatpush.bf16.msra.mxu0 %v1413
  %9556 = vmatpush.bf16.msra.mxu0 %v1412
  %9557 = vmatmul.bf16.gmra.mxu0 %v9437
  %v9558 = vpop.f32.mrf.mxu0
  %v9559 = vadd.f32 %v9510, %v9558
  %v9560 = vpop.f32.mrf.mxu0
  %v9561 = vadd.f32 %v9512, %v9560
  %9562 = vmatmul.bf16.gmra.mxu0 %v9441
  %v9563 = vpop.f32.mrf.mxu0
  %v9564 = vadd.f32 %v9515, %v9563
  %v9565 = vpop.f32.mrf.mxu0
  %v9566 = vadd.f32 %v9517, %v9565
  %9567 = vmatmul.bf16.gmra.mxu0 %v9445
  %v9568 = vpop.f32.mrf.mxu0
  %v9569 = vadd.f32 %v9520, %v9568
  %v9570 = vpop.f32.mrf.mxu0
  %v9571 = vadd.f32 %v9522, %v9570
  %9572 = vmatmul.bf16.gmra.mxu0 %v9449
  %v9573 = vpop.f32.mrf.mxu0
  %v9574 = vadd.f32 %v9525, %v9573
  %v9575 = vpop.f32.mrf.mxu0
  %v9576 = vadd.f32 %v9527, %v9575
  %9577 = vmatmul.bf16.gmra.mxu0 %v9453
  %v9578 = vpop.f32.mrf.mxu0
  %v9579 = vadd.f32 %v9530, %v9578
  %v9580 = vpop.f32.mrf.mxu0
  %v9581 = vadd.f32 %v9532, %v9580
  %9582 = vmatmul.bf16.gmra.mxu0 %v9457
  %v9583 = vpop.f32.mrf.mxu0
  %v9584 = vadd.f32 %v9535, %v9583
  %v9585 = vpop.f32.mrf.mxu0
  %v9586 = vadd.f32 %v9537, %v9585
  %9587 = vmatmul.bf16.gmra.mxu0 %v9461
  %v9588 = vpop.f32.mrf.mxu0
  %v9589 = vadd.f32 %v9540, %v9588
  %v9590 = vpop.f32.mrf.mxu0
  %v9591 = vadd.f32 %v9542, %v9590
  %9592 = vmatmul.bf16.gmra.mxu0 %v9465
  %v9593 = vpop.f32.mrf.mxu0
  %v9594 = vadd.f32 %v9545, %v9593
  %v9595 = vpop.f32.mrf.mxu0
  %v9596 = vadd.f32 %v9547, %v9595
  %9597 = vdwg.mxu0
  %9598 = vmatpush.bf16.msra.mxu0 %v1427
  %9599 = vmatpush.bf16.msra.mxu0 %v1426
  %9600 = vmatpush.bf16.msra.mxu0 %v1425
  %9601 = vmatpush.bf16.msra.mxu0 %v1424
  %9602 = vmatpush.bf16.msra.mxu0 %v1423
  %9603 = vmatpush.bf16.msra.mxu0 %v1422
  %9604 = vmatpush.bf16.msra.mxu0 %v1421
  %9605 = vmatpush.bf16.msra.mxu0 %v1420
  %9606 = vmatmul.bf16.gmra.mxu0 %v9438
  %v9607 = vpop.f32.mrf.mxu0
  %v9608 = vadd.f32 %v9559, %v9607
  %v9609 = vpop.f32.mrf.mxu0
  %v9610 = vadd.f32 %v9561, %v9609
  %9611 = vmatmul.bf16.gmra.mxu0 %v9442
  %v9612 = vpop.f32.mrf.mxu0
  %v9613 = vadd.f32 %v9564, %v9612
  %v9614 = vpop.f32.mrf.mxu0
  %v9615 = vadd.f32 %v9566, %v9614
  %9616 = vmatmul.bf16.gmra.mxu0 %v9446
  %v9617 = vpop.f32.mrf.mxu0
  %v9618 = vadd.f32 %v9569, %v9617
  %v9619 = vpop.f32.mrf.mxu0
  %v9620 = vadd.f32 %v9571, %v9619
  %9621 = vmatmul.bf16.gmra.mxu0 %v9450
  %v9622 = vpop.f32.mrf.mxu0
  %v9623 = vadd.f32 %v9574, %v9622
  %v9624 = vpop.f32.mrf.mxu0
  %v9625 = vadd.f32 %v9576, %v9624
  %9626 = vmatmul.bf16.gmra.mxu0 %v9454
  %v9627 = vpop.f32.mrf.mxu0
  %v9628 = vadd.f32 %v9579, %v9627
  %v9629 = vpop.f32.mrf.mxu0
  %v9630 = vadd.f32 %v9581, %v9629
  %9631 = vmatmul.bf16.gmra.mxu0 %v9458
  %v9632 = vpop.f32.mrf.mxu0
  %v9633 = vadd.f32 %v9584, %v9632
  %v9634 = vpop.f32.mrf.mxu0
  %v9635 = vadd.f32 %v9586, %v9634
  %9636 = vmatmul.bf16.gmra.mxu0 %v9462
  %v9637 = vpop.f32.mrf.mxu0
  %v9638 = vadd.f32 %v9589, %v9637
  %v9639 = vpop.f32.mrf.mxu0
  %v9640 = vadd.f32 %v9591, %v9639
  %9641 = vmatmul.bf16.gmra.mxu0 %v9466
  %v9642 = vpop.f32.mrf.mxu0
  %v9643 = vadd.f32 %v9594, %v9642
  %v9644 = vpop.f32.mrf.mxu0
  %v9645 = vadd.f32 %v9596, %v9644
  %9646 = vdwg.mxu0
  %9647 = vmatpush.bf16.msra.mxu0 %v1435
  %9648 = vmatpush.bf16.msra.mxu0 %v1434
  %9649 = vmatpush.bf16.msra.mxu0 %v1433
  %9650 = vmatpush.bf16.msra.mxu0 %v1432
  %9651 = vmatpush.bf16.msra.mxu0 %v1431
  %9652 = vmatpush.bf16.msra.mxu0 %v1430
  %9653 = vmatpush.bf16.msra.mxu0 %v1429
  %9654 = vmatpush.bf16.msra.mxu0 %v1428
  %9655 = vmatmul.bf16.gmra.mxu0 %v9439
  %v9656 = vpop.f32.mrf.mxu0
  %v9657 = vadd.f32 %v9608, %v9656
  %v9658 = vpop.f32.mrf.mxu0
  %v9659 = vadd.f32 %v9610, %v9658
  %9660 = vmatmul.bf16.gmra.mxu0 %v9443
  %v9661 = vpop.f32.mrf.mxu0
  %v9662 = vadd.f32 %v9613, %v9661
  %v9663 = vpop.f32.mrf.mxu0
  %v9664 = vadd.f32 %v9615, %v9663
  %9665 = vmatmul.bf16.gmra.mxu0 %v9447
  %v9666 = vpop.f32.mrf.mxu0
  %v9667 = vadd.f32 %v9618, %v9666
  %v9668 = vpop.f32.mrf.mxu0
  %v9669 = vadd.f32 %v9620, %v9668
  %9670 = vmatmul.bf16.gmra.mxu0 %v9451
  %v9671 = vpop.f32.mrf.mxu0
  %v9672 = vadd.f32 %v9623, %v9671
  %v9673 = vpop.f32.mrf.mxu0
  %v9674 = vadd.f32 %v9625, %v9673
  %9675 = vmatmul.bf16.gmra.mxu0 %v9455
  %v9676 = vpop.f32.mrf.mxu0
  %v9677 = vadd.f32 %v9628, %v9676
  %v9678 = vpop.f32.mrf.mxu0
  %v9679 = vadd.f32 %v9630, %v9678
  %9680 = vmatmul.bf16.gmra.mxu0 %v9459
  %v9681 = vpop.f32.mrf.mxu0
  %v9682 = vadd.f32 %v9633, %v9681
  %v9683 = vpop.f32.mrf.mxu0
  %v9684 = vadd.f32 %v9635, %v9683
  %9685 = vmatmul.bf16.gmra.mxu0 %v9463
  %v9686 = vpop.f32.mrf.mxu0
  %v9687 = vadd.f32 %v9638, %v9686
  %v9688 = vpop.f32.mrf.mxu0
  %v9689 = vadd.f32 %v9640, %v9688
  %9690 = vmatmul.bf16.gmra.mxu0 %v9467
  %v9691 = vpop.f32.mrf.mxu0
  %v9692 = vadd.f32 %v9643, %v9691
  %v9693 = vpop.f32.mrf.mxu0
  %v9694 = vadd.f32 %v9645, %v9693
  %9695 = vdwg.mxu0
  %v9696 = vpack.c.bf16 %v9659, %v9657
  %v9697 = vpack.c.bf16 %v9664, %v9662
  %v9698 = vpack.c.bf16 %v9669, %v9667
  %v9699 = vpack.c.bf16 %v9674, %v9672
  %v9700 = vpack.c.bf16 %v9679, %v9677
  %v9701 = vpack.c.bf16 %v9684, %v9682
  %v9702 = vpack.c.bf16 %v9689, %v9687
  %v9703 = vpack.c.bf16 %v9694, %v9692
  %s9704 = scalar_lea.vmem %s5, 960
  %v9705 = vld [vmem:[%s9704] sm:$0xf]
  %v9706 = vld [vmem:[%s9704 + $0x4] sm:$0xf]
  %v9707 = vld [vmem:[%s9704 + $0x8] sm:$0xf]
  %v9708 = vld [vmem:[%s9704 + $0xc] sm:$0xf]
  %v9709 = vld [vmem:[%s9704 + $0x10] sm:$0xf]
  %v9710 = vld [vmem:[%s9704 + $0x14] sm:$0xf]
  %v9711 = vld [vmem:[%s9704 + $0x18] sm:$0xf]
  %v9712 = vld [vmem:[%s9704 + $0x1c] sm:$0xf]
  %v9713 = vld [vmem:[%s9704 + $0x20] sm:$0xf]
  %v9714 = vld [vmem:[%s9704 + $0x24] sm:$0xf]
  %v9715 = vld [vmem:[%s9704 + $0x28] sm:$0xf]
  %v9716 = vld [vmem:[%s9704 + $0x2c] sm:$0xf]
  %v9717 = vld [vmem:[%s9704 + $0x30] sm:$0xf]
  %v9718 = vld [vmem:[%s9704 + $0x34] sm:$0xf]
  %v9719 = vld [vmem:[%s9704 + $0x38] sm:$0xf]
  %v9720 = vld [vmem:[%s9704 + $0x3c] sm:$0xf]
  %v9737 = vunpack.c.l.b16 %v9705
  %v9738 = vunpack.c.l.b16 %v9706
  %v9739 = vunpack.c.l.b16 %v9707
  %v9740 = vunpack.c.l.b16 %v9708
  %v9741 = vunpack.c.l.b16 %v9709
  %v9742 = vunpack.c.l.b16 %v9710
  %v9743 = vunpack.c.l.b16 %v9711
  %v9744 = vunpack.c.l.b16 %v9712
  %v9745 = vunpack.c.l.b16 %v9713
  %v9746 = vunpack.c.l.b16 %v9714
  %v9747 = vunpack.c.l.b16 %v9715
  %v9748 = vunpack.c.l.b16 %v9716
  %v9749 = vunpack.c.l.b16 %v9717
  %v9750 = vunpack.c.l.b16 %v9718
  %v9751 = vunpack.c.l.b16 %v9719
  %v9752 = vunpack.c.l.b16 %v9720
  %v9753 = vpack.c.b16 %v9738, %v9737
  %v9754 = vpack.c.b16 %v9740, %v9739
  %v9755 = vpack.c.b16 %v9742, %v9741
  %v9756 = vpack.c.b16 %v9744, %v9743
  %v9757 = vpack.c.b16 %v9746, %v9745
  %v9758 = vpack.c.b16 %v9748, %v9747
  %v9759 = vpack.c.b16 %v9750, %v9749
  %v9760 = vpack.c.b16 %v9752, %v9751
  %9769 = vmatpush.bf16.msra.mxu0 %v9760
  %9770 = vmatpush.bf16.msra.mxu0 %v9759
  %9771 = vmatpush.bf16.msra.mxu0 %v9758
  %9772 = vmatpush.bf16.msra.mxu0 %v9757
  %9773 = vmatpush.bf16.msra.mxu0 %v9756
  %9774 = vmatpush.bf16.msra.mxu0 %v9755
  %9775 = vmatpush.bf16.msra.mxu0 %v9754
  %9776 = vmatpush.bf16.msra.mxu0 %v9753
  %9777 = vmatmul.bf16.gmra.mxu0 %v9696
  %v9778 = vpop.f32.mrf.mxu0
  %v9779 = vadd.f32 0.0, %v9778
  %v9780 = vpop.f32.mrf.mxu0
  %v9781 = vadd.f32 0.0, %v9780
  %9782 = vmatmul.bf16.gmra.mxu0 %v9697
  %v9783 = vpop.f32.mrf.mxu0
  %v9784 = vadd.f32 0.0, %v9783
  %v9785 = vpop.f32.mrf.mxu0
  %v9786 = vadd.f32 0.0, %v9785
  %9787 = vmatmul.bf16.gmra.mxu0 %v9698
  %v9788 = vpop.f32.mrf.mxu0
  %v9789 = vadd.f32 0.0, %v9788
  %v9790 = vpop.f32.mrf.mxu0
  %v9791 = vadd.f32 0.0, %v9790
  %9792 = vmatmul.bf16.gmra.mxu0 %v9699
  %v9793 = vpop.f32.mrf.mxu0
  %v9794 = vadd.f32 0.0, %v9793
  %v9795 = vpop.f32.mrf.mxu0
  %v9796 = vadd.f32 0.0, %v9795
  %9797 = vmatmul.bf16.gmra.mxu0 %v9700
  %v9798 = vpop.f32.mrf.mxu0
  %v9799 = vadd.f32 0.0, %v9798
  %v9800 = vpop.f32.mrf.mxu0
  %v9801 = vadd.f32 0.0, %v9800
  %9802 = vmatmul.bf16.gmra.mxu0 %v9701
  %v9803 = vpop.f32.mrf.mxu0
  %v9804 = vadd.f32 0.0, %v9803
  %v9805 = vpop.f32.mrf.mxu0
  %v9806 = vadd.f32 0.0, %v9805
  %9807 = vmatmul.bf16.gmra.mxu0 %v9702
  %v9808 = vpop.f32.mrf.mxu0
  %v9809 = vadd.f32 0.0, %v9808
  %v9810 = vpop.f32.mrf.mxu0
  %v9811 = vadd.f32 0.0, %v9810
  %9812 = vmatmul.bf16.gmra.mxu0 %v9703
  %v9813 = vpop.f32.mrf.mxu0
  %v9814 = vadd.f32 0.0, %v9813
  %v9815 = vpop.f32.mrf.mxu0
  %v9816 = vadd.f32 0.0, %v9815
  %9817 = vdwg.mxu0
  %v9818 = vadd.f32 %v9291, %v9779
  %v9819 = vadd.f32 %v9292, %v9781
  %v9820 = vadd.f32 %v9293, %v9784
  %v9821 = vadd.f32 %v9294, %v9786
  %v9822 = vadd.f32 %v9295, %v9789
  %v9823 = vadd.f32 %v9296, %v9791
  %v9824 = vadd.f32 %v9297, %v9794
  %v9825 = vadd.f32 %v9298, %v9796
  %v9826 = vadd.f32 %v9299, %v9799
  %v9827 = vadd.f32 %v9300, %v9801
  %v9828 = vadd.f32 %v9301, %v9804
  %v9829 = vadd.f32 %v9302, %v9806
  %v9830 = vadd.f32 %v9303, %v9809
  %v9831 = vadd.f32 %v9304, %v9811
  %v9832 = vadd.f32 %v9305, %v9814
  %v9833 = vadd.f32 %v9306, %v9816
  %v9834 = vld [vmem:[%s6] sm:$0x1]
  %v9835 = vld [vmem:[%s7] sm:$0x1]
  %v9836 = vadd.f32 %v9818, %v9819
  %v9837 = vadd.f32 %v9836, %v9820
  %v9838 = vadd.f32 %v9837, %v9821
  %v9839 = vadd.f32 %v9838, %v9822
  %v9840 = vadd.f32 %v9839, %v9823
  %v9841 = vadd.f32 %v9840, %v9824
  %v9842 = vadd.f32 %v9841, %v9825
  %v9843 = vadd.f32 %v9842, %v9826
  %v9844 = vadd.f32 %v9843, %v9827
  %v9845 = vadd.f32 %v9844, %v9828
  %v9846 = vadd.f32 %v9845, %v9829
  %v9847 = vadd.f32 %v9846, %v9830
  %v9848 = vadd.f32 %v9847, %v9831
  %v9849 = vadd.f32 %v9848, %v9832
  %v9850 = vadd.f32 %v9849, %v9833
  %v9851 = vrot.slane %v9850, 4
  %v9852 = vadd.f32 %v9850, %v9851
  %v9853 = vrot.slane %v9852, 2
  %v9854 = vadd.f32 %v9852, %v9853
  %v9855 = vrot.slane %v9854, 1
  %v9856 = vadd.f32 %v9854, %v9855
  %v9857 = vmul.f32 %v9856, 0.010204081
  %v9858 = vsub.f32 %v9818, %v9857
  %v9859 = vsub.f32 %v9819, %v9857
  %v9860 = vsub.f32 %v9820, %v9857
  %v9861 = vsub.f32 %v9821, %v9857
  %v9862 = vsub.f32 %v9822, %v9857
  %v9863 = vsub.f32 %v9823, %v9857
  %v9864 = vsub.f32 %v9824, %v9857
  %v9865 = vsub.f32 %v9825, %v9857
  %v9866 = vsub.f32 %v9826, %v9857
  %v9867 = vsub.f32 %v9827, %v9857
  %v9868 = vsub.f32 %v9828, %v9857
  %v9869 = vsub.f32 %v9829, %v9857
  %v9870 = vsub.f32 %v9830, %v9857
  %v9871 = vsub.f32 %v9831, %v9857
  %v9872 = vsub.f32 %v9832, %v9857
  %v9873 = vsub.f32 %v9833, %v9857
  %vm9874 = vcmp.lt.s32.totalorder %v676, 98
  %vm9875 = vcmp.lt.s32.totalorder %v677, 98
  %vm9876 = vcmp.lt.s32.totalorder %v678, 98
  %vm9877 = vcmp.lt.s32.totalorder %v679, 98
  %vm9878 = vcmp.lt.s32.totalorder %v680, 98
  %vm9879 = vcmp.lt.s32.totalorder %v681, 98
  %vm9880 = vcmp.lt.s32.totalorder %v682, 98
  %vm9881 = vcmp.lt.s32.totalorder %v683, 98
  %vm9882 = vcmp.lt.s32.totalorder %v684, 98
  %vm9883 = vcmp.lt.s32.totalorder %v685, 98
  %vm9884 = vcmp.lt.s32.totalorder %v686, 98
  %vm9885 = vcmp.lt.s32.totalorder %v687, 98
  %vm9886 = vcmp.lt.s32.totalorder %v688, 98
  %vm9887 = vcmp.lt.s32.totalorder %v689, 98
  %vm9888 = vcmp.lt.s32.totalorder %v690, 98
  %vm9889 = vcmp.lt.s32.totalorder %v691, 98
  %v9890 = vsel %vm9874, 1, 0
  %v9891 = vsel %vm9875, 1, 0
  %v9892 = vsel %vm9876, 1, 0
  %v9893 = vsel %vm9877, 1, 0
  %v9894 = vsel %vm9878, 1, 0
  %v9895 = vsel %vm9879, 1, 0
  %v9896 = vsel %vm9880, 1, 0
  %v9897 = vsel %vm9881, 1, 0
  %v9898 = vsel %vm9882, 1, 0
  %v9899 = vsel %vm9883, 1, 0
  %v9900 = vsel %vm9884, 1, 0
  %v9901 = vsel %vm9885, 1, 0
  %v9902 = vsel %vm9886, 1, 0
  %v9903 = vsel %vm9887, 1, 0
  %v9904 = vsel %vm9888, 1, 0
  %v9905 = vsel %vm9889, 1, 0
  %v9906 = vcvt.s32.f32 %v9890
  %v9907 = vcvt.s32.f32 %v9891
  %v9908 = vcvt.s32.f32 %v9892
  %v9909 = vcvt.s32.f32 %v9893
  %v9910 = vcvt.s32.f32 %v9894
  %v9911 = vcvt.s32.f32 %v9895
  %v9912 = vcvt.s32.f32 %v9896
  %v9913 = vcvt.s32.f32 %v9897
  %v9914 = vcvt.s32.f32 %v9898
  %v9915 = vcvt.s32.f32 %v9899
  %v9916 = vcvt.s32.f32 %v9900
  %v9917 = vcvt.s32.f32 %v9901
  %v9918 = vcvt.s32.f32 %v9902
  %v9919 = vcvt.s32.f32 %v9903
  %v9920 = vcvt.s32.f32 %v9904
  %v9921 = vcvt.s32.f32 %v9905
  %v9922 = vmul.f32 %v9858, %v9906
  %v9923 = vmul.f32 %v9859, %v9907
  %v9924 = vmul.f32 %v9860, %v9908
  %v9925 = vmul.f32 %v9861, %v9909
  %v9926 = vmul.f32 %v9862, %v9910
  %v9927 = vmul.f32 %v9863, %v9911
  %v9928 = vmul.f32 %v9864, %v9912
  %v9929 = vmul.f32 %v9865, %v9913
  %v9930 = vmul.f32 %v9866, %v9914
  %v9931 = vmul.f32 %v9867, %v9915
  %v9932 = vmul.f32 %v9868, %v9916
  %v9933 = vmul.f32 %v9869, %v9917
  %v9934 = vmul.f32 %v9870, %v9918
  %v9935 = vmul.f32 %v9871, %v9919
  %v9936 = vmul.f32 %v9872, %v9920
  %v9937 = vmul.f32 %v9873, %v9921
  %v9938 = vmul.f32 %v9922, %v9922
  %v9939 = vmul.f32 %v9923, %v9923
  %v9940 = vmul.f32 %v9924, %v9924
  %v9941 = vmul.f32 %v9925, %v9925
  %v9942 = vmul.f32 %v9926, %v9926
  %v9943 = vmul.f32 %v9927, %v9927
  %v9944 = vmul.f32 %v9928, %v9928
  %v9945 = vmul.f32 %v9929, %v9929
  %v9946 = vmul.f32 %v9930, %v9930
  %v9947 = vmul.f32 %v9931, %v9931
  %v9948 = vmul.f32 %v9932, %v9932
  %v9949 = vmul.f32 %v9933, %v9933
  %v9950 = vmul.f32 %v9934, %v9934
  %v9951 = vmul.f32 %v9935, %v9935
  %v9952 = vmul.f32 %v9936, %v9936
  %v9953 = vmul.f32 %v9937, %v9937
  %v9954 = vadd.f32 %v9938, %v9939
  %v9955 = vadd.f32 %v9954, %v9940
  %v9956 = vadd.f32 %v9955, %v9941
  %v9957 = vadd.f32 %v9956, %v9942
  %v9958 = vadd.f32 %v9957, %v9943
  %v9959 = vadd.f32 %v9958, %v9944
  %v9960 = vadd.f32 %v9959, %v9945
  %v9961 = vadd.f32 %v9960, %v9946
  %v9962 = vadd.f32 %v9961, %v9947
  %v9963 = vadd.f32 %v9962, %v9948
  %v9964 = vadd.f32 %v9963, %v9949
  %v9965 = vadd.f32 %v9964, %v9950
  %v9966 = vadd.f32 %v9965, %v9951
  %v9967 = vadd.f32 %v9966, %v9952
  %v9968 = vadd.f32 %v9967, %v9953
  %v9969 = vrot.slane %v9968, 4
  %v9970 = vadd.f32 %v9968, %v9969
  %v9971 = vrot.slane %v9970, 2
  %v9972 = vadd.f32 %v9970, %v9971
  %v9973 = vrot.slane %v9972, 1
  %v9974 = vadd.f32 %v9972, %v9973
  %v9975 = vmul.f32 %v9974, 0.010204081
  %v9976 = vadd.f32 %v9975, 1e-05
  %v9977 = vrsqrt.pop %v9976
  %v9978 = vmul.f32 %v9977, %v9976
  %v9979 = vmul.f32 %v9978, %v9977
  %v9980 = vmul.f32 0.5, %v9979
  %v9981 = vsub.f32 1.5, %v9980
  %v9982 = vmul.f32 %v9977, %v9981
  %vm9983 = vweird.f32 %v9976
  %vm9984 = vweird.f32 %v9977
  %vm9985 = vmor %vm9983, %vm9984
  %v9986 = vsel %vm9985, %v9977, %v9982
  %v9987 = vmul.f32 %v9834, %v9986
  %v9989 = vperm.slane %v9987, 0
  %v9991 = vmul.f32 %v9858, %v9989
  %v9992 = vmul.f32 %v9859, %v9989
  %v9993 = vmul.f32 %v9860, %v9989
  %v9994 = vmul.f32 %v9861, %v9989
  %v9995 = vmul.f32 %v9862, %v9989
  %v9996 = vmul.f32 %v9863, %v9989
  %v9997 = vmul.f32 %v9864, %v9989
  %v9998 = vmul.f32 %v9865, %v9989
  %v9999 = vmul.f32 %v9866, %v9989
  %v10000 = vmul.f32 %v9867, %v9989
  %v10001 = vmul.f32 %v9868, %v9989
  %v10002 = vmul.f32 %v9869, %v9989
  %v10003 = vmul.f32 %v9870, %v9989
  %v10004 = vmul.f32 %v9871, %v9989
  %v10005 = vmul.f32 %v9872, %v9989
  %v10006 = vmul.f32 %v9873, %v9989
  %v10008 = vperm.slane %v9835, 0
  %v10010 = vadd.f32 %v9991, %v10008
  %v10011 = vadd.f32 %v9992, %v10008
  %v10012 = vadd.f32 %v9993, %v10008
  %v10013 = vadd.f32 %v9994, %v10008
  %v10014 = vadd.f32 %v9995, %v10008
  %v10015 = vadd.f32 %v9996, %v10008
  %v10016 = vadd.f32 %v9997, %v10008
  %v10017 = vadd.f32 %v9998, %v10008
  %v10018 = vadd.f32 %v9999, %v10008
  %v10019 = vadd.f32 %v10000, %v10008
  %v10020 = vadd.f32 %v10001, %v10008
  %v10021 = vadd.f32 %v10002, %v10008
  %v10022 = vadd.f32 %v10003, %v10008
  %v10023 = vadd.f32 %v10004, %v10008
  %v10024 = vadd.f32 %v10005, %v10008
  %v10025 = vadd.f32 %v10006, %v10008
  %v10026 = vmul.f32 %v10010, 0.2
  %v10027 = vmul.f32 %v10011, 0.2
  %v10028 = vmul.f32 %v10012, 0.2
  %v10029 = vmul.f32 %v10013, 0.2
  %v10030 = vmul.f32 %v10014, 0.2
  %v10031 = vmul.f32 %v10015, 0.2
  %v10032 = vmul.f32 %v10016, 0.2
  %v10033 = vmul.f32 %v10017, 0.2
  %v10034 = vmul.f32 %v10018, 0.2
  %v10035 = vmul.f32 %v10019, 0.2
  %v10036 = vmul.f32 %v10020, 0.2
  %v10037 = vmul.f32 %v10021, 0.2
  %v10038 = vmul.f32 %v10022, 0.2
  %v10039 = vmul.f32 %v10023, 0.2
  %v10040 = vmul.f32 %v10024, 0.2
  %v10041 = vmul.f32 %v10025, 0.2
  %v10042 = vmax.f32 %v10010, %v10026
  %v10043 = vmax.f32 %v10011, %v10027
  %v10044 = vmax.f32 %v10012, %v10028
  %v10045 = vmax.f32 %v10013, %v10029
  %v10046 = vmax.f32 %v10014, %v10030
  %v10047 = vmax.f32 %v10015, %v10031
  %v10048 = vmax.f32 %v10016, %v10032
  %v10049 = vmax.f32 %v10017, %v10033
  %v10050 = vmax.f32 %v10018, %v10034
  %v10051 = vmax.f32 %v10019, %v10035
  %v10052 = vmax.f32 %v10020, %v10036
  %v10053 = vmax.f32 %v10021, %v10037
  %v10054 = vmax.f32 %v10022, %v10038
  %v10055 = vmax.f32 %v10023, %v10039
  %v10056 = vmax.f32 %v10024, %v10040
  %v10057 = vmax.f32 %v10025, %v10041
  %v10058 = vpack.c.bf16 %v10043, %v10042
  %v10059 = vpack.c.bf16 %v10045, %v10044
  %v10060 = vpack.c.bf16 %v10047, %v10046
  %v10061 = vpack.c.bf16 %v10049, %v10048
  %v10062 = vpack.c.bf16 %v10051, %v10050
  %v10063 = vpack.c.bf16 %v10053, %v10052
  %v10064 = vpack.c.bf16 %v10055, %v10054
  %v10065 = vpack.c.bf16 %v10057, %v10056
  %v10066 = vld [vmem:[%s8] sm:$0xf]
  %v10067 = vld [vmem:[%s8 + $0x4] sm:$0xf]
  %v10068 = vld [vmem:[%s8 + $0x8] sm:$0xf]
  %v10069 = vld [vmem:[%s8 + $0xc] sm:$0xf]
  %v10070 = vld [vmem:[%s8 + $0x10] sm:$0xf]
  %v10071 = vld [vmem:[%s8 + $0x14] sm:$0xf]
  %v10072 = vld [vmem:[%s8 + $0x18] sm:$0xf]
  %v10073 = vld [vmem:[%s8 + $0x1c] sm:$0xf]
  %v10074 = vld [vmem:[%s8 + $0x20] sm:$0xf]
  %v10075 = vld [vmem:[%s8 + $0x24] sm:$0xf]
  %v10076 = vld [vmem:[%s8 + $0x28] sm:$0xf]
  %v10077 = vld [vmem:[%s8 + $0x2c] sm:$0xf]
  %v10078 = vld [vmem:[%s8 + $0x30] sm:$0xf]
  %v10079 = vld [vmem:[%s8 + $0x34] sm:$0xf]
  %v10080 = vld [vmem:[%s8 + $0x38] sm:$0xf]
  %v10081 = vld [vmem:[%s8 + $0x3c] sm:$0xf]
  %v10098 = vunpack.c.l.b16 %v10066
  %v10099 = vunpack.c.l.b16 %v10067
  %v10100 = vunpack.c.l.b16 %v10068
  %v10101 = vunpack.c.l.b16 %v10069
  %v10102 = vunpack.c.l.b16 %v10070
  %v10103 = vunpack.c.l.b16 %v10071
  %v10104 = vunpack.c.l.b16 %v10072
  %v10105 = vunpack.c.l.b16 %v10073
  %v10106 = vunpack.c.l.b16 %v10074
  %v10107 = vunpack.c.l.b16 %v10075
  %v10108 = vunpack.c.l.b16 %v10076
  %v10109 = vunpack.c.l.b16 %v10077
  %v10110 = vunpack.c.l.b16 %v10078
  %v10111 = vunpack.c.l.b16 %v10079
  %v10112 = vunpack.c.l.b16 %v10080
  %v10113 = vunpack.c.l.b16 %v10081
  %v10114 = vpack.c.b16 %v10099, %v10098
  %v10115 = vpack.c.b16 %v10101, %v10100
  %v10116 = vpack.c.b16 %v10103, %v10102
  %v10117 = vpack.c.b16 %v10105, %v10104
  %v10118 = vpack.c.b16 %v10107, %v10106
  %v10119 = vpack.c.b16 %v10109, %v10108
  %v10120 = vpack.c.b16 %v10111, %v10110
  %v10121 = vpack.c.b16 %v10113, %v10112
  %10130 = vmatpush.bf16.msra.mxu0 %v10065
  %10131 = vmatpush.bf16.msra.mxu0 %v10064
  %10132 = vmatpush.bf16.msra.mxu0 %v10063
  %10133 = vmatpush.bf16.msra.mxu0 %v10062
  %10134 = vmatpush.bf16.msra.mxu0 %v10061
  %10135 = vmatpush.bf16.msra.mxu0 %v10060
  %10136 = vmatpush.bf16.msra.mxu0 %v10059
  %10137 = vmatpush.bf16.msra.mxu0 %v10058
  %10138 = vmatmul.bf16.gmra.mxu0 %v10114
  %v10139 = vpop.f32.mrf.mxu0
  %v10140 = vadd.f32 0.0, %v10139
  %v10141 = vpop.f32.mrf.mxu0
  %v10142 = vadd.f32 0.0, %v10141
  %10143 = vmatmul.bf16.gmra.mxu0 %v10115
  %v10144 = vpop.f32.mrf.mxu0
  %v10145 = vadd.f32 0.0, %v10144
  %v10146 = vpop.f32.mrf.mxu0
  %v10147 = vadd.f32 0.0, %v10146
  %10148 = vmatmul.bf16.gmra.mxu0 %v10116
  %v10149 = vpop.f32.mrf.mxu0
  %v10150 = vadd.f32 0.0, %v10149
  %v10151 = vpop.f32.mrf.mxu0
  %v10152 = vadd.f32 0.0, %v10151
  %10153 = vmatmul.bf16.gmra.mxu0 %v10117
  %v10154 = vpop.f32.mrf.mxu0
  %v10155 = vadd.f32 0.0, %v10154
  %v10156 = vpop.f32.mrf.mxu0
  %v10157 = vadd.f32 0.0, %v10156
  %10158 = vmatmul.bf16.gmra.mxu0 %v10118
  %v10159 = vpop.f32.mrf.mxu0
  %v10160 = vadd.f32 0.0, %v10159
  %v10161 = vpop.f32.mrf.mxu0
  %v10162 = vadd.f32 0.0, %v10161
  %10163 = vmatmul.bf16.gmra.mxu0 %v10119
  %v10164 = vpop.f32.mrf.mxu0
  %v10165 = vadd.f32 0.0, %v10164
  %v10166 = vpop.f32.mrf.mxu0
  %v10167 = vadd.f32 0.0, %v10166
  %10168 = vmatmul.bf16.gmra.mxu0 %v10120
  %v10169 = vpop.f32.mrf.mxu0
  %v10170 = vadd.f32 0.0, %v10169
  %v10171 = vpop.f32.mrf.mxu0
  %v10172 = vadd.f32 0.0, %v10171
  %10173 = vmatmul.bf16.gmra.mxu0 %v10121
  %v10174 = vpop.f32.mrf.mxu0
  %v10175 = vadd.f32 0.0, %v10174
  %v10176 = vpop.f32.mrf.mxu0
  %v10177 = vadd.f32 0.0, %v10176
  %10178 = vdwg.mxu0
  %v10179 = vpack.c.bf16 %v10142, %v10140
  %v10180 = vpack.c.bf16 %v10147, %v10145
  %v10181 = vpack.c.bf16 %v10152, %v10150
  %v10182 = vpack.c.bf16 %v10157, %v10155
  %v10183 = vpack.c.bf16 %v10162, %v10160
  %v10184 = vpack.c.bf16 %v10167, %v10165
  %v10185 = vpack.c.bf16 %v10172, %v10170
  %v10186 = vpack.c.bf16 %v10177, %v10175
  %v10187 = vld [vmem:[%s9] sm:$0xf]
  %v10188 = vld [vmem:[%s9 + $0x4] sm:$0xf]
  %v10189 = vld [vmem:[%s9 + $0x8] sm:$0xf]
  %v10190 = vld [vmem:[%s9 + $0xc] sm:$0xf]
  %v10191 = vld [vmem:[%s9 + $0x10] sm:$0xf]
  %v10192 = vld [vmem:[%s9 + $0x14] sm:$0xf]
  %v10193 = vld [vmem:[%s9 + $0x18] sm:$0xf]
  %v10194 = vld [vmem:[%s9 + $0x1c] sm:$0xf]
  %v10195 = vld [vmem:[%s9 + $0x20] sm:$0xf]
  %v10196 = vld [vmem:[%s9 + $0x24] sm:$0xf]
  %v10197 = vld [vmem:[%s9 + $0x28] sm:$0xf]
  %v10198 = vld [vmem:[%s9 + $0x2c] sm:$0xf]
  %v10199 = vld [vmem:[%s9 + $0x30] sm:$0xf]
  %v10200 = vld [vmem:[%s9 + $0x34] sm:$0xf]
  %v10201 = vld [vmem:[%s9 + $0x38] sm:$0xf]
  %v10202 = vld [vmem:[%s9 + $0x3c] sm:$0xf]
  %s10203 = scalar_lea.vmem %s8, 64
  %v10204 = vld [vmem:[%s10203] sm:$0xf]
  %v10205 = vld [vmem:[%s10203 + $0x4] sm:$0xf]
  %v10206 = vld [vmem:[%s10203 + $0x8] sm:$0xf]
  %v10207 = vld [vmem:[%s10203 + $0xc] sm:$0xf]
  %v10208 = vld [vmem:[%s10203 + $0x10] sm:$0xf]
  %v10209 = vld [vmem:[%s10203 + $0x14] sm:$0xf]
  %v10210 = vld [vmem:[%s10203 + $0x18] sm:$0xf]
  %v10211 = vld [vmem:[%s10203 + $0x1c] sm:$0xf]
  %v10212 = vld [vmem:[%s10203 + $0x20] sm:$0xf]
  %v10213 = vld [vmem:[%s10203 + $0x24] sm:$0xf]
  %v10214 = vld [vmem:[%s10203 + $0x28] sm:$0xf]
  %v10215 = vld [vmem:[%s10203 + $0x2c] sm:$0xf]
  %v10216 = vld [vmem:[%s10203 + $0x30] sm:$0xf]
  %v10217 = vld [vmem:[%s10203 + $0x34] sm:$0xf]
  %v10218 = vld [vmem:[%s10203 + $0x38] sm:$0xf]
  %v10219 = vld [vmem:[%s10203 + $0x3c] sm:$0xf]
  %v10236 = vunpack.c.l.b16 %v10204
  %v10237 = vunpack.c.l.b16 %v10205
  %v10238 = vunpack.c.l.b16 %v10206
  %v10239 = vunpack.c.l.b16 %v10207
  %v10240 = vunpack.c.l.b16 %v10208
  %v10241 = vunpack.c.l.b16 %v10209
  %v10242 = vunpack.c.l.b16 %v10210
  %v10243 = vunpack.c.l.b16 %v10211
  %v10244 = vunpack.c.l.b16 %v10212
  %v10245 = vunpack.c.l.b16 %v10213
  %v10246 = vunpack.c.l.b16 %v10214
  %v10247 = vunpack.c.l.b16 %v10215
  %v10248 = vunpack.c.l.b16 %v10216
  %v10249 = vunpack.c.l.b16 %v10217
  %v10250 = vunpack.c.l.b16 %v10218
  %v10251 = vunpack.c.l.b16 %v10219
  %v10252 = vpack.c.b16 %v10237, %v10236
  %v10253 = vpack.c.b16 %v10239, %v10238
  %v10254 = vpack.c.b16 %v10241, %v10240
  %v10255 = vpack.c.b16 %v10243, %v10242
  %v10256 = vpack.c.b16 %v10245, %v10244
  %v10257 = vpack.c.b16 %v10247, %v10246
  %v10258 = vpack.c.b16 %v10249, %v10248
  %v10259 = vpack.c.b16 %v10251, %v10250
  %10268 = vmatpush.bf16.msra.mxu0 %v10065
  %10269 = vmatpush.bf16.msra.mxu0 %v10064
  %10270 = vmatpush.bf16.msra.mxu0 %v10063
  %10271 = vmatpush.bf16.msra.mxu0 %v10062
  %10272 = vmatpush.bf16.msra.mxu0 %v10061
  %10273 = vmatpush.bf16.msra.mxu0 %v10060
  %10274 = vmatpush.bf16.msra.mxu0 %v10059
  %10275 = vmatpush.bf16.msra.mxu0 %v10058
  %10276 = vmatmul.bf16.gmra.mxu0 %v10252
  %v10277 = vpop.f32.mrf.mxu0
  %v10278 = vadd.f32 0.0, %v10277
  %v10279 = vpop.f32.mrf.mxu0
  %v10280 = vadd.f32 0.0, %v10279
  %10281 = vmatmul.bf16.gmra.mxu0 %v10253
  %v10282 = vpop.f32.mrf.mxu0
  %v10283 = vadd.f32 0.0, %v10282
  %v10284 = vpop.f32.mrf.mxu0
  %v10285 = vadd.f32 0.0, %v10284
  %10286 = vmatmul.bf16.gmra.mxu0 %v10254
  %v10287 = vpop.f32.mrf.mxu0
  %v10288 = vadd.f32 0.0, %v10287
  %v10289 = vpop.f32.mrf.mxu0
  %v10290 = vadd.f32 0.0, %v10289
  %10291 = vmatmul.bf16.gmra.mxu0 %v10255
  %v10292 = vpop.f32.mrf.mxu0
  %v10293 = vadd.f32 0.0, %v10292
  %v10294 = vpop.f32.mrf.mxu0
  %v10295 = vadd.f32 0.0, %v10294
  %10296 = vmatmul.bf16.gmra.mxu0 %v10256
  %v10297 = vpop.f32.mrf.mxu0
  %v10298 = vadd.f32 0.0, %v10297
  %v10299 = vpop.f32.mrf.mxu0
  %v10300 = vadd.f32 0.0, %v10299
  %10301 = vmatmul.bf16.gmra.mxu0 %v10257
  %v10302 = vpop.f32.mrf.mxu0
  %v10303 = vadd.f32 0.0, %v10302
  %v10304 = vpop.f32.mrf.mxu0
  %v10305 = vadd.f32 0.0, %v10304
  %10306 = vmatmul.bf16.gmra.mxu0 %v10258
  %v10307 = vpop.f32.mrf.mxu0
  %v10308 = vadd.f32 0.0, %v10307
  %v10309 = vpop.f32.mrf.mxu0
  %v10310 = vadd.f32 0.0, %v10309
  %10311 = vmatmul.bf16.gmra.mxu0 %v10259
  %v10312 = vpop.f32.mrf.mxu0
  %v10313 = vadd.f32 0.0, %v10312
  %v10314 = vpop.f32.mrf.mxu0
  %v10315 = vadd.f32 0.0, %v10314
  %10316 = vdwg.mxu0
  %v10317 = vpack.c.bf16 %v10280, %v10278
  %v10318 = vpack.c.bf16 %v10285, %v10283
  %v10319 = vpack.c.bf16 %v10290, %v10288
  %v10320 = vpack.c.bf16 %v10295, %v10293
  %v10321 = vpack.c.bf16 %v10300, %v10298
  %v10322 = vpack.c.bf16 %v10305, %v10303
  %v10323 = vpack.c.bf16 %v10310, %v10308
  %v10324 = vpack.c.bf16 %v10315, %v10313
  %s10325 = scalar_lea.vmem %s9, 64
  %v10326 = vld [vmem:[%s10325] sm:$0xf]
  %v10327 = vld [vmem:[%s10325 + $0x4] sm:$0xf]
  %v10328 = vld [vmem:[%s10325 + $0x8] sm:$0xf]
  %v10329 = vld [vmem:[%s10325 + $0xc] sm:$0xf]
  %v10330 = vld [vmem:[%s10325 + $0x10] sm:$0xf]
  %v10331 = vld [vmem:[%s10325 + $0x14] sm:$0xf]
  %v10332 = vld [vmem:[%s10325 + $0x18] sm:$0xf]
  %v10333 = vld [vmem:[%s10325 + $0x1c] sm:$0xf]
  %v10334 = vld [vmem:[%s10325 + $0x20] sm:$0xf]
  %v10335 = vld [vmem:[%s10325 + $0x24] sm:$0xf]
  %v10336 = vld [vmem:[%s10325 + $0x28] sm:$0xf]
  %v10337 = vld [vmem:[%s10325 + $0x2c] sm:$0xf]
  %v10338 = vld [vmem:[%s10325 + $0x30] sm:$0xf]
  %v10339 = vld [vmem:[%s10325 + $0x34] sm:$0xf]
  %v10340 = vld [vmem:[%s10325 + $0x38] sm:$0xf]
  %v10341 = vld [vmem:[%s10325 + $0x3c] sm:$0xf]
  %v10358 = vunpack.c.l.b16 %v10326
  %v10359 = vunpack.c.l.b16 %v10327
  %v10360 = vunpack.c.l.b16 %v10328
  %v10361 = vunpack.c.l.b16 %v10329
  %v10362 = vunpack.c.l.b16 %v10330
  %v10363 = vunpack.c.l.b16 %v10331
  %v10364 = vunpack.c.l.b16 %v10332
  %v10365 = vunpack.c.l.b16 %v10333
  %v10366 = vunpack.c.l.b16 %v10334
  %v10367 = vunpack.c.l.b16 %v10335
  %v10368 = vunpack.c.l.b16 %v10336
  %v10369 = vunpack.c.l.b16 %v10337
  %v10370 = vunpack.c.l.b16 %v10338
  %v10371 = vunpack.c.l.b16 %v10339
  %v10372 = vunpack.c.l.b16 %v10340
  %v10373 = vunpack.c.l.b16 %v10341
  %v10374 = vpack.c.b16 %v10359, %v10358
  %v10375 = vpack.c.b16 %v10361, %v10360
  %v10376 = vpack.c.b16 %v10363, %v10362
  %v10377 = vpack.c.b16 %v10365, %v10364
  %v10378 = vpack.c.b16 %v10367, %v10366
  %v10379 = vpack.c.b16 %v10369, %v10368
  %v10380 = vpack.c.b16 %v10371, %v10370
  %v10381 = vpack.c.b16 %v10373, %v10372
  %10390 = vmatpush.bf16.msra.mxu0 %v10381
  %10391 = vmatpush.bf16.msra.mxu0 %v10380
  %10392 = vmatpush.bf16.msra.mxu0 %v10379
  %10393 = vmatpush.bf16.msra.mxu0 %v10378
  %10394 = vmatpush.bf16.msra.mxu0 %v10377
  %10395 = vmatpush.bf16.msra.mxu0 %v10376
  %10396 = vmatpush.bf16.msra.mxu0 %v10375
  %10397 = vmatpush.bf16.msra.mxu0 %v10374
  %10398 = vmatmul.bf16.gmra.mxu0 %v10317
  %v10399 = vpop.f32.mrf.mxu0
  %v10400 = vadd.f32 0.0, %v10399
  %v10401 = vpop.f32.mrf.mxu0
  %v10402 = vadd.f32 0.0, %v10401
  %10403 = vmatmul.bf16.gmra.mxu0 %v10318
  %v10404 = vpop.f32.mrf.mxu0
  %v10405 = vadd.f32 0.0, %v10404
  %v10406 = vpop.f32.mrf.mxu0
  %v10407 = vadd.f32 0.0, %v10406
  %10408 = vmatmul.bf16.gmra.mxu0 %v10319
  %v10409 = vpop.f32.mrf.mxu0
  %v10410 = vadd.f32 0.0, %v10409
  %v10411 = vpop.f32.mrf.mxu0
  %v10412 = vadd.f32 0.0, %v10411
  %10413 = vmatmul.bf16.gmra.mxu0 %v10320
  %v10414 = vpop.f32.mrf.mxu0
  %v10415 = vadd.f32 0.0, %v10414
  %v10416 = vpop.f32.mrf.mxu0
  %v10417 = vadd.f32 0.0, %v10416
  %10418 = vmatmul.bf16.gmra.mxu0 %v10321
  %v10419 = vpop.f32.mrf.mxu0
  %v10420 = vadd.f32 0.0, %v10419
  %v10421 = vpop.f32.mrf.mxu0
  %v10422 = vadd.f32 0.0, %v10421
  %10423 = vmatmul.bf16.gmra.mxu0 %v10322
  %v10424 = vpop.f32.mrf.mxu0
  %v10425 = vadd.f32 0.0, %v10424
  %v10426 = vpop.f32.mrf.mxu0
  %v10427 = vadd.f32 0.0, %v10426
  %10428 = vmatmul.bf16.gmra.mxu0 %v10323
  %v10429 = vpop.f32.mrf.mxu0
  %v10430 = vadd.f32 0.0, %v10429
  %v10431 = vpop.f32.mrf.mxu0
  %v10432 = vadd.f32 0.0, %v10431
  %10433 = vmatmul.bf16.gmra.mxu0 %v10324
  %v10434 = vpop.f32.mrf.mxu0
  %v10435 = vadd.f32 0.0, %v10434
  %v10436 = vpop.f32.mrf.mxu0
  %v10437 = vadd.f32 0.0, %v10436
  %10438 = vdwg.mxu0
  %v10455 = vunpack.c.l.b16 %v10187
  %v10456 = vunpack.c.l.b16 %v10188
  %v10457 = vunpack.c.l.b16 %v10189
  %v10458 = vunpack.c.l.b16 %v10190
  %v10459 = vunpack.c.l.b16 %v10191
  %v10460 = vunpack.c.l.b16 %v10192
  %v10461 = vunpack.c.l.b16 %v10193
  %v10462 = vunpack.c.l.b16 %v10194
  %v10463 = vunpack.c.l.b16 %v10195
  %v10464 = vunpack.c.l.b16 %v10196
  %v10465 = vunpack.c.l.b16 %v10197
  %v10466 = vunpack.c.l.b16 %v10198
  %v10467 = vunpack.c.l.b16 %v10199
  %v10468 = vunpack.c.l.b16 %v10200
  %v10469 = vunpack.c.l.b16 %v10201
  %v10470 = vunpack.c.l.b16 %v10202
  %v10471 = vpack.c.b16 %v10456, %v10455
  %v10472 = vpack.c.b16 %v10458, %v10457
  %v10473 = vpack.c.b16 %v10460, %v10459
  %v10474 = vpack.c.b16 %v10462, %v10461
  %v10475 = vpack.c.b16 %v10464, %v10463
  %v10476 = vpack.c.b16 %v10466, %v10465
  %v10477 = vpack.c.b16 %v10468, %v10467
  %v10478 = vpack.c.b16 %v10470, %v10469
  %10487 = vmatpush.bf16.msra.mxu0 %v10478
  %10488 = vmatpush.bf16.msra.mxu0 %v10477
  %10489 = vmatpush.bf16.msra.mxu0 %v10476
  %10490 = vmatpush.bf16.msra.mxu0 %v10475
  %10491 = vmatpush.bf16.msra.mxu0 %v10474
  %10492 = vmatpush.bf16.msra.mxu0 %v10473
  %10493 = vmatpush.bf16.msra.mxu0 %v10472
  %10494 = vmatpush.bf16.msra.mxu0 %v10471
  %10495 = vmatmul.bf16.gmra.mxu0 %v10179
  %v10496 = vpop.f32.mrf.mxu0
  %v10497 = vadd.f32 %v10400, %v10496
  %v10498 = vpop.f32.mrf.mxu0
  %v10499 = vadd.f32 %v10402, %v10498
  %10500 = vmatmul.bf16.gmra.mxu0 %v10180
  %v10501 = vpop.f32.mrf.mxu0
  %v10502 = vadd.f32 %v10405, %v10501
  %v10503 = vpop.f32.mrf.mxu0
  %v10504 = vadd.f32 %v10407, %v10503
  %10505 = vmatmul.bf16.gmra.mxu0 %v10181
  %v10506 = vpop.f32.mrf.mxu0
  %v10507 = vadd.f32 %v10410, %v10506
  %v10508 = vpop.f32.mrf.mxu0
  %v10509 = vadd.f32 %v10412, %v10508
  %10510 = vmatmul.bf16.gmra.mxu0 %v10182
  %v10511 = vpop.f32.mrf.mxu0
  %v10512 = vadd.f32 %v10415, %v10511
  %v10513 = vpop.f32.mrf.mxu0
  %v10514 = vadd.f32 %v10417, %v10513
  %10515 = vmatmul.bf16.gmra.mxu0 %v10183
  %v10516 = vpop.f32.mrf.mxu0
  %v10517 = vadd.f32 %v10420, %v10516
  %v10518 = vpop.f32.mrf.mxu0
  %v10519 = vadd.f32 %v10422, %v10518
  %10520 = vmatmul.bf16.gmra.mxu0 %v10184
  %v10521 = vpop.f32.mrf.mxu0
  %v10522 = vadd.f32 %v10425, %v10521
  %v10523 = vpop.f32.mrf.mxu0
  %v10524 = vadd.f32 %v10427, %v10523
  %10525 = vmatmul.bf16.gmra.mxu0 %v10185
  %v10526 = vpop.f32.mrf.mxu0
  %v10527 = vadd.f32 %v10430, %v10526
  %v10528 = vpop.f32.mrf.mxu0
  %v10529 = vadd.f32 %v10432, %v10528
  %10530 = vmatmul.bf16.gmra.mxu0 %v10186
  %v10531 = vpop.f32.mrf.mxu0
  %v10532 = vadd.f32 %v10435, %v10531
  %v10533 = vpop.f32.mrf.mxu0
  %v10534 = vadd.f32 %v10437, %v10533
  %10535 = vdwg.mxu0
  %s10536 = scalar_lea.vmem %s8, 128
  %v10537 = vld [vmem:[%s10536] sm:$0xf]
  %v10538 = vld [vmem:[%s10536 + $0x4] sm:$0xf]
  %v10539 = vld [vmem:[%s10536 + $0x8] sm:$0xf]
  %v10540 = vld [vmem:[%s10536 + $0xc] sm:$0xf]
  %v10541 = vld [vmem:[%s10536 + $0x10] sm:$0xf]
  %v10542 = vld [vmem:[%s10536 + $0x14] sm:$0xf]
  %v10543 = vld [vmem:[%s10536 + $0x18] sm:$0xf]
  %v10544 = vld [vmem:[%s10536 + $0x1c] sm:$0xf]
  %v10545 = vld [vmem:[%s10536 + $0x20] sm:$0xf]
  %v10546 = vld [vmem:[%s10536 + $0x24] sm:$0xf]
  %v10547 = vld [vmem:[%s10536 + $0x28] sm:$0xf]
  %v10548 = vld [vmem:[%s10536 + $0x2c] sm:$0xf]
  %v10549 = vld [vmem:[%s10536 + $0x30] sm:$0xf]
  %v10550 = vld [vmem:[%s10536 + $0x34] sm:$0xf]
  %v10551 = vld [vmem:[%s10536 + $0x38] sm:$0xf]
  %v10552 = vld [vmem:[%s10536 + $0x3c] sm:$0xf]
  %v10569 = vunpack.c.l.b16 %v10537
  %v10570 = vunpack.c.l.b16 %v10538
  %v10571 = vunpack.c.l.b16 %v10539
  %v10572 = vunpack.c.l.b16 %v10540
  %v10573 = vunpack.c.l.b16 %v10541
  %v10574 = vunpack.c.l.b16 %v10542
  %v10575 = vunpack.c.l.b16 %v10543
  %v10576 = vunpack.c.l.b16 %v10544
  %v10577 = vunpack.c.l.b16 %v10545
  %v10578 = vunpack.c.l.b16 %v10546
  %v10579 = vunpack.c.l.b16 %v10547
  %v10580 = vunpack.c.l.b16 %v10548
  %v10581 = vunpack.c.l.b16 %v10549
  %v10582 = vunpack.c.l.b16 %v10550
  %v10583 = vunpack.c.l.b16 %v10551
  %v10584 = vunpack.c.l.b16 %v10552
  %v10585 = vpack.c.b16 %v10570, %v10569
  %v10586 = vpack.c.b16 %v10572, %v10571
  %v10587 = vpack.c.b16 %v10574, %v10573
  %v10588 = vpack.c.b16 %v10576, %v10575
  %v10589 = vpack.c.b16 %v10578, %v10577
  %v10590 = vpack.c.b16 %v10580, %v10579
  %v10591 = vpack.c.b16 %v10582, %v10581
  %v10592 = vpack.c.b16 %v10584, %v10583
  %10601 = vmatpush.bf16.msra.mxu0 %v10065
  %10602 = vmatpush.bf16.msra.mxu0 %v10064
  %10603 = vmatpush.bf16.msra.mxu0 %v10063
  %10604 = vmatpush.bf16.msra.mxu0 %v10062
  %10605 = vmatpush.bf16.msra.mxu0 %v10061
  %10606 = vmatpush.bf16.msra.mxu0 %v10060
  %10607 = vmatpush.bf16.msra.mxu0 %v10059
  %10608 = vmatpush.bf16.msra.mxu0 %v10058
  %10609 = vmatmul.bf16.gmra.mxu0 %v10585
  %v10610 = vpop.f32.mrf.mxu0
  %v10611 = vadd.f32 0.0, %v10610
  %v10612 = vpop.f32.mrf.mxu0
  %v10613 = vadd.f32 0.0, %v10612
  %10614 = vmatmul.bf16.gmra.mxu0 %v10586
  %v10615 = vpop.f32.mrf.mxu0
  %v10616 = vadd.f32 0.0, %v10615
  %v10617 = vpop.f32.mrf.mxu0
  %v10618 = vadd.f32 0.0, %v10617
  %10619 = vmatmul.bf16.gmra.mxu0 %v10587
  %v10620 = vpop.f32.mrf.mxu0
  %v10621 = vadd.f32 0.0, %v10620
  %v10622 = vpop.f32.mrf.mxu0
  %v10623 = vadd.f32 0.0, %v10622
  %10624 = vmatmul.bf16.gmra.mxu0 %v10588
  %v10625 = vpop.f32.mrf.mxu0
  %v10626 = vadd.f32 0.0, %v10625
  %v10627 = vpop.f32.mrf.mxu0
  %v10628 = vadd.f32 0.0, %v10627
  %10629 = vmatmul.bf16.gmra.mxu0 %v10589
  %v10630 = vpop.f32.mrf.mxu0
  %v10631 = vadd.f32 0.0, %v10630
  %v10632 = vpop.f32.mrf.mxu0
  %v10633 = vadd.f32 0.0, %v10632
  %10634 = vmatmul.bf16.gmra.mxu0 %v10590
  %v10635 = vpop.f32.mrf.mxu0
  %v10636 = vadd.f32 0.0, %v10635
  %v10637 = vpop.f32.mrf.mxu0
  %v10638 = vadd.f32 0.0, %v10637
  %10639 = vmatmul.bf16.gmra.mxu0 %v10591
  %v10640 = vpop.f32.mrf.mxu0
  %v10641 = vadd.f32 0.0, %v10640
  %v10642 = vpop.f32.mrf.mxu0
  %v10643 = vadd.f32 0.0, %v10642
  %10644 = vmatmul.bf16.gmra.mxu0 %v10592
  %v10645 = vpop.f32.mrf.mxu0
  %v10646 = vadd.f32 0.0, %v10645
  %v10647 = vpop.f32.mrf.mxu0
  %v10648 = vadd.f32 0.0, %v10647
  %10649 = vdwg.mxu0
  %v10650 = vpack.c.bf16 %v10613, %v10611
  %v10651 = vpack.c.bf16 %v10618, %v10616
  %v10652 = vpack.c.bf16 %v10623, %v10621
  %v10653 = vpack.c.bf16 %v10628, %v10626
  %v10654 = vpack.c.bf16 %v10633, %v10631
  %v10655 = vpack.c.bf16 %v10638, %v10636
  %v10656 = vpack.c.bf16 %v10643, %v10641
  %v10657 = vpack.c.bf16 %v10648, %v10646
  %s10658 = scalar_lea.vmem %s9, 128
  %v10659 = vld [vmem:[%s10658] sm:$0xf]
  %v10660 = vld [vmem:[%s10658 + $0x4] sm:$0xf]
  %v10661 = vld [vmem:[%s10658 + $0x8] sm:$0xf]
  %v10662 = vld [vmem:[%s10658 + $0xc] sm:$0xf]
  %v10663 = vld [vmem:[%s10658 + $0x10] sm:$0xf]
  %v10664 = vld [vmem:[%s10658 + $0x14] sm:$0xf]
  %v10665 = vld [vmem:[%s10658 + $0x18] sm:$0xf]
  %v10666 = vld [vmem:[%s10658 + $0x1c] sm:$0xf]
  %v10667 = vld [vmem:[%s10658 + $0x20] sm:$0xf]
  %v10668 = vld [vmem:[%s10658 + $0x24] sm:$0xf]
  %v10669 = vld [vmem:[%s10658 + $0x28] sm:$0xf]
  %v10670 = vld [vmem:[%s10658 + $0x2c] sm:$0xf]
  %v10671 = vld [vmem:[%s10658 + $0x30] sm:$0xf]
  %v10672 = vld [vmem:[%s10658 + $0x34] sm:$0xf]
  %v10673 = vld [vmem:[%s10658 + $0x38] sm:$0xf]
  %v10674 = vld [vmem:[%s10658 + $0x3c] sm:$0xf]
  %v10691 = vunpack.c.l.b16 %v10659
  %v10692 = vunpack.c.l.b16 %v10660
  %v10693 = vunpack.c.l.b16 %v10661
  %v10694 = vunpack.c.l.b16 %v10662
  %v10695 = vunpack.c.l.b16 %v10663
  %v10696 = vunpack.c.l.b16 %v10664
  %v10697 = vunpack.c.l.b16 %v10665
  %v10698 = vunpack.c.l.b16 %v10666
  %v10699 = vunpack.c.l.b16 %v10667
  %v10700 = vunpack.c.l.b16 %v10668
  %v10701 = vunpack.c.l.b16 %v10669
  %v10702 = vunpack.c.l.b16 %v10670
  %v10703 = vunpack.c.l.b16 %v10671
  %v10704 = vunpack.c.l.b16 %v10672
  %v10705 = vunpack.c.l.b16 %v10673
  %v10706 = vunpack.c.l.b16 %v10674
  %v10707 = vpack.c.b16 %v10692, %v10691
  %v10708 = vpack.c.b16 %v10694, %v10693
  %v10709 = vpack.c.b16 %v10696, %v10695
  %v10710 = vpack.c.b16 %v10698, %v10697
  %v10711 = vpack.c.b16 %v10700, %v10699
  %v10712 = vpack.c.b16 %v10702, %v10701
  %v10713 = vpack.c.b16 %v10704, %v10703
  %v10714 = vpack.c.b16 %v10706, %v10705
  %10723 = vmatpush.bf16.msra.mxu0 %v10714
  %10724 = vmatpush.bf16.msra.mxu0 %v10713
  %10725 = vmatpush.bf16.msra.mxu0 %v10712
  %10726 = vmatpush.bf16.msra.mxu0 %v10711
  %10727 = vmatpush.bf16.msra.mxu0 %v10710
  %10728 = vmatpush.bf16.msra.mxu0 %v10709
  %10729 = vmatpush.bf16.msra.mxu0 %v10708
  %10730 = vmatpush.bf16.msra.mxu0 %v10707
  %10731 = vmatmul.bf16.gmra.mxu0 %v10650
  %v10732 = vpop.f32.mrf.mxu0
  %v10733 = vadd.f32 0.0, %v10732
  %v10734 = vpop.f32.mrf.mxu0
  %v10735 = vadd.f32 0.0, %v10734
  %10736 = vmatmul.bf16.gmra.mxu0 %v10651
  %v10737 = vpop.f32.mrf.mxu0
  %v10738 = vadd.f32 0.0, %v10737
  %v10739 = vpop.f32.mrf.mxu0
  %v10740 = vadd.f32 0.0, %v10739
  %10741 = vmatmul.bf16.gmra.mxu0 %v10652
  %v10742 = vpop.f32.mrf.mxu0
  %v10743 = vadd.f32 0.0, %v10742
  %v10744 = vpop.f32.mrf.mxu0
  %v10745 = vadd.f32 0.0, %v10744
  %10746 = vmatmul.bf16.gmra.mxu0 %v10653
  %v10747 = vpop.f32.mrf.mxu0
  %v10748 = vadd.f32 0.0, %v10747
  %v10749 = vpop.f32.mrf.mxu0
  %v10750 = vadd.f32 0.0, %v10749
  %10751 = vmatmul.bf16.gmra.mxu0 %v10654
  %v10752 = vpop.f32.mrf.mxu0
  %v10753 = vadd.f32 0.0, %v10752
  %v10754 = vpop.f32.mrf.mxu0
  %v10755 = vadd.f32 0.0, %v10754
  %10756 = vmatmul.bf16.gmra.mxu0 %v10655
  %v10757 = vpop.f32.mrf.mxu0
  %v10758 = vadd.f32 0.0, %v10757
  %v10759 = vpop.f32.mrf.mxu0
  %v10760 = vadd.f32 0.0, %v10759
  %10761 = vmatmul.bf16.gmra.mxu0 %v10656
  %v10762 = vpop.f32.mrf.mxu0
  %v10763 = vadd.f32 0.0, %v10762
  %v10764 = vpop.f32.mrf.mxu0
  %v10765 = vadd.f32 0.0, %v10764
  %10766 = vmatmul.bf16.gmra.mxu0 %v10657
  %v10767 = vpop.f32.mrf.mxu0
  %v10768 = vadd.f32 0.0, %v10767
  %v10769 = vpop.f32.mrf.mxu0
  %v10770 = vadd.f32 0.0, %v10769
  %10771 = vdwg.mxu0
  %v10772 = vadd.f32 %v10497, %v10733
  %v10773 = vadd.f32 %v10499, %v10735
  %v10774 = vadd.f32 %v10502, %v10738
  %v10775 = vadd.f32 %v10504, %v10740
  %v10776 = vadd.f32 %v10507, %v10743
  %v10777 = vadd.f32 %v10509, %v10745
  %v10778 = vadd.f32 %v10512, %v10748
  %v10779 = vadd.f32 %v10514, %v10750
  %v10780 = vadd.f32 %v10517, %v10753
  %v10781 = vadd.f32 %v10519, %v10755
  %v10782 = vadd.f32 %v10522, %v10758
  %v10783 = vadd.f32 %v10524, %v10760
  %v10784 = vadd.f32 %v10527, %v10763
  %v10785 = vadd.f32 %v10529, %v10765
  %v10786 = vadd.f32 %v10532, %v10768
  %v10787 = vadd.f32 %v10534, %v10770
  %s10788 = scalar_lea.vmem %s8, 192
  %v10789 = vld [vmem:[%s10788] sm:$0xf]
  %v10790 = vld [vmem:[%s10788 + $0x4] sm:$0xf]
  %v10791 = vld [vmem:[%s10788 + $0x8] sm:$0xf]
  %v10792 = vld [vmem:[%s10788 + $0xc] sm:$0xf]
  %v10793 = vld [vmem:[%s10788 + $0x10] sm:$0xf]
  %v10794 = vld [vmem:[%s10788 + $0x14] sm:$0xf]
  %v10795 = vld [vmem:[%s10788 + $0x18] sm:$0xf]
  %v10796 = vld [vmem:[%s10788 + $0x1c] sm:$0xf]
  %v10797 = vld [vmem:[%s10788 + $0x20] sm:$0xf]
  %v10798 = vld [vmem:[%s10788 + $0x24] sm:$0xf]
  %v10799 = vld [vmem:[%s10788 + $0x28] sm:$0xf]
  %v10800 = vld [vmem:[%s10788 + $0x2c] sm:$0xf]
  %v10801 = vld [vmem:[%s10788 + $0x30] sm:$0xf]
  %v10802 = vld [vmem:[%s10788 + $0x34] sm:$0xf]
  %v10803 = vld [vmem:[%s10788 + $0x38] sm:$0xf]
  %v10804 = vld [vmem:[%s10788 + $0x3c] sm:$0xf]
  %v10821 = vunpack.c.l.b16 %v10789
  %v10822 = vunpack.c.l.b16 %v10790
  %v10823 = vunpack.c.l.b16 %v10791
  %v10824 = vunpack.c.l.b16 %v10792
  %v10825 = vunpack.c.l.b16 %v10793
  %v10826 = vunpack.c.l.b16 %v10794
  %v10827 = vunpack.c.l.b16 %v10795
  %v10828 = vunpack.c.l.b16 %v10796
  %v10829 = vunpack.c.l.b16 %v10797
  %v10830 = vunpack.c.l.b16 %v10798
  %v10831 = vunpack.c.l.b16 %v10799
  %v10832 = vunpack.c.l.b16 %v10800
  %v10833 = vunpack.c.l.b16 %v10801
  %v10834 = vunpack.c.l.b16 %v10802
  %v10835 = vunpack.c.l.b16 %v10803
  %v10836 = vunpack.c.l.b16 %v10804
  %v10837 = vpack.c.b16 %v10822, %v10821
  %v10838 = vpack.c.b16 %v10824, %v10823
  %v10839 = vpack.c.b16 %v10826, %v10825
  %v10840 = vpack.c.b16 %v10828, %v10827
  %v10841 = vpack.c.b16 %v10830, %v10829
  %v10842 = vpack.c.b16 %v10832, %v10831
  %v10843 = vpack.c.b16 %v10834, %v10833
  %v10844 = vpack.c.b16 %v10836, %v10835
  %10853 = vmatpush.bf16.msra.mxu0 %v10065
  %10854 = vmatpush.bf16.msra.mxu0 %v10064
  %10855 = vmatpush.bf16.msra.mxu0 %v10063
  %10856 = vmatpush.bf16.msra.mxu0 %v10062
  %10857 = vmatpush.bf16.msra.mxu0 %v10061
  %10858 = vmatpush.bf16.msra.mxu0 %v10060
  %10859 = vmatpush.bf16.msra.mxu0 %v10059
  %10860 = vmatpush.bf16.msra.mxu0 %v10058
  %10861 = vmatmul.bf16.gmra.mxu0 %v10837
  %v10862 = vpop.f32.mrf.mxu0
  %v10863 = vadd.f32 0.0, %v10862
  %v10864 = vpop.f32.mrf.mxu0
  %v10865 = vadd.f32 0.0, %v10864
  %10866 = vmatmul.bf16.gmra.mxu0 %v10838
  %v10867 = vpop.f32.mrf.mxu0
  %v10868 = vadd.f32 0.0, %v10867
  %v10869 = vpop.f32.mrf.mxu0
  %v10870 = vadd.f32 0.0, %v10869
  %10871 = vmatmul.bf16.gmra.mxu0 %v10839
  %v10872 = vpop.f32.mrf.mxu0
  %v10873 = vadd.f32 0.0, %v10872
  %v10874 = vpop.f32.mrf.mxu0
  %v10875 = vadd.f32 0.0, %v10874
  %10876 = vmatmul.bf16.gmra.mxu0 %v10840
  %v10877 = vpop.f32.mrf.mxu0
  %v10878 = vadd.f32 0.0, %v10877
  %v10879 = vpop.f32.mrf.mxu0
  %v10880 = vadd.f32 0.0, %v10879
  %10881 = vmatmul.bf16.gmra.mxu0 %v10841
  %v10882 = vpop.f32.mrf.mxu0
  %v10883 = vadd.f32 0.0, %v10882
  %v10884 = vpop.f32.mrf.mxu0
  %v10885 = vadd.f32 0.0, %v10884
  %10886 = vmatmul.bf16.gmra.mxu0 %v10842
  %v10887 = vpop.f32.mrf.mxu0
  %v10888 = vadd.f32 0.0, %v10887
  %v10889 = vpop.f32.mrf.mxu0
  %v10890 = vadd.f32 0.0, %v10889
  %10891 = vmatmul.bf16.gmra.mxu0 %v10843
  %v10892 = vpop.f32.mrf.mxu0
  %v10893 = vadd.f32 0.0, %v10892
  %v10894 = vpop.f32.mrf.mxu0
  %v10895 = vadd.f32 0.0, %v10894
  %10896 = vmatmul.bf16.gmra.mxu0 %v10844
  %v10897 = vpop.f32.mrf.mxu0
  %v10898 = vadd.f32 0.0, %v10897
  %v10899 = vpop.f32.mrf.mxu0
  %v10900 = vadd.f32 0.0, %v10899
  %10901 = vdwg.mxu0
  %v10902 = vpack.c.bf16 %v10865, %v10863
  %v10903 = vpack.c.bf16 %v10870, %v10868
  %v10904 = vpack.c.bf16 %v10875, %v10873
  %v10905 = vpack.c.bf16 %v10880, %v10878
  %v10906 = vpack.c.bf16 %v10885, %v10883
  %v10907 = vpack.c.bf16 %v10890, %v10888
  %v10908 = vpack.c.bf16 %v10895, %v10893
  %v10909 = vpack.c.bf16 %v10900, %v10898
  %s10910 = scalar_lea.vmem %s9, 192
  %v10911 = vld [vmem:[%s10910] sm:$0xf]
  %v10912 = vld [vmem:[%s10910 + $0x4] sm:$0xf]
  %v10913 = vld [vmem:[%s10910 + $0x8] sm:$0xf]
  %v10914 = vld [vmem:[%s10910 + $0xc] sm:$0xf]
  %v10915 = vld [vmem:[%s10910 + $0x10] sm:$0xf]
  %v10916 = vld [vmem:[%s10910 + $0x14] sm:$0xf]
  %v10917 = vld [vmem:[%s10910 + $0x18] sm:$0xf]
  %v10918 = vld [vmem:[%s10910 + $0x1c] sm:$0xf]
  %v10919 = vld [vmem:[%s10910 + $0x20] sm:$0xf]
  %v10920 = vld [vmem:[%s10910 + $0x24] sm:$0xf]
  %v10921 = vld [vmem:[%s10910 + $0x28] sm:$0xf]
  %v10922 = vld [vmem:[%s10910 + $0x2c] sm:$0xf]
  %v10923 = vld [vmem:[%s10910 + $0x30] sm:$0xf]
  %v10924 = vld [vmem:[%s10910 + $0x34] sm:$0xf]
  %v10925 = vld [vmem:[%s10910 + $0x38] sm:$0xf]
  %v10926 = vld [vmem:[%s10910 + $0x3c] sm:$0xf]
  %v10943 = vunpack.c.l.b16 %v10911
  %v10944 = vunpack.c.l.b16 %v10912
  %v10945 = vunpack.c.l.b16 %v10913
  %v10946 = vunpack.c.l.b16 %v10914
  %v10947 = vunpack.c.l.b16 %v10915
  %v10948 = vunpack.c.l.b16 %v10916
  %v10949 = vunpack.c.l.b16 %v10917
  %v10950 = vunpack.c.l.b16 %v10918
  %v10951 = vunpack.c.l.b16 %v10919
  %v10952 = vunpack.c.l.b16 %v10920
  %v10953 = vunpack.c.l.b16 %v10921
  %v10954 = vunpack.c.l.b16 %v10922
  %v10955 = vunpack.c.l.b16 %v10923
  %v10956 = vunpack.c.l.b16 %v10924
  %v10957 = vunpack.c.l.b16 %v10925
  %v10958 = vunpack.c.l.b16 %v10926
  %v10959 = vpack.c.b16 %v10944, %v10943
  %v10960 = vpack.c.b16 %v10946, %v10945
  %v10961 = vpack.c.b16 %v10948, %v10947
  %v10962 = vpack.c.b16 %v10950, %v10949
  %v10963 = vpack.c.b16 %v10952, %v10951
  %v10964 = vpack.c.b16 %v10954, %v10953
  %v10965 = vpack.c.b16 %v10956, %v10955
  %v10966 = vpack.c.b16 %v10958, %v10957
  %10975 = vmatpush.bf16.msra.mxu0 %v10966
  %10976 = vmatpush.bf16.msra.mxu0 %v10965
  %10977 = vmatpush.bf16.msra.mxu0 %v10964
  %10978 = vmatpush.bf16.msra.mxu0 %v10963
  %10979 = vmatpush.bf16.msra.mxu0 %v10962
  %10980 = vmatpush.bf16.msra.mxu0 %v10961
  %10981 = vmatpush.bf16.msra.mxu0 %v10960
  %10982 = vmatpush.bf16.msra.mxu0 %v10959
  %10983 = vmatmul.bf16.gmra.mxu0 %v10902
  %v10984 = vpop.f32.mrf.mxu0
  %v10985 = vadd.f32 0.0, %v10984
  %v10986 = vpop.f32.mrf.mxu0
  %v10987 = vadd.f32 0.0, %v10986
  %10988 = vmatmul.bf16.gmra.mxu0 %v10903
  %v10989 = vpop.f32.mrf.mxu0
  %v10990 = vadd.f32 0.0, %v10989
  %v10991 = vpop.f32.mrf.mxu0
  %v10992 = vadd.f32 0.0, %v10991
  %10993 = vmatmul.bf16.gmra.mxu0 %v10904
  %v10994 = vpop.f32.mrf.mxu0
  %v10995 = vadd.f32 0.0, %v10994
  %v10996 = vpop.f32.mrf.mxu0
  %v10997 = vadd.f32 0.0, %v10996
  %10998 = vmatmul.bf16.gmra.mxu0 %v10905
  %v10999 = vpop.f32.mrf.mxu0
  %v11000 = vadd.f32 0.0, %v10999
  %v11001 = vpop.f32.mrf.mxu0
  %v11002 = vadd.f32 0.0, %v11001
  %11003 = vmatmul.bf16.gmra.mxu0 %v10906
  %v11004 = vpop.f32.mrf.mxu0
  %v11005 = vadd.f32 0.0, %v11004
  %v11006 = vpop.f32.mrf.mxu0
  %v11007 = vadd.f32 0.0, %v11006
  %11008 = vmatmul.bf16.gmra.mxu0 %v10907
  %v11009 = vpop.f32.mrf.mxu0
  %v11010 = vadd.f32 0.0, %v11009
  %v11011 = vpop.f32.mrf.mxu0
  %v11012 = vadd.f32 0.0, %v11011
  %11013 = vmatmul.bf16.gmra.mxu0 %v10908
  %v11014 = vpop.f32.mrf.mxu0
  %v11015 = vadd.f32 0.0, %v11014
  %v11016 = vpop.f32.mrf.mxu0
  %v11017 = vadd.f32 0.0, %v11016
  %11018 = vmatmul.bf16.gmra.mxu0 %v10909
  %v11019 = vpop.f32.mrf.mxu0
  %v11020 = vadd.f32 0.0, %v11019
  %v11021 = vpop.f32.mrf.mxu0
  %v11022 = vadd.f32 0.0, %v11021
  %11023 = vdwg.mxu0
  %v11024 = vadd.f32 %v10772, %v10985
  %v11025 = vadd.f32 %v10773, %v10987
  %v11026 = vadd.f32 %v10774, %v10990
  %v11027 = vadd.f32 %v10775, %v10992
  %v11028 = vadd.f32 %v10776, %v10995
  %v11029 = vadd.f32 %v10777, %v10997
  %v11030 = vadd.f32 %v10778, %v11000
  %v11031 = vadd.f32 %v10779, %v11002
  %v11032 = vadd.f32 %v10780, %v11005
  %v11033 = vadd.f32 %v10781, %v11007
  %v11034 = vadd.f32 %v10782, %v11010
  %v11035 = vadd.f32 %v10783, %v11012
  %v11036 = vadd.f32 %v10784, %v11015
  %v11037 = vadd.f32 %v10785, %v11017
  %v11038 = vadd.f32 %v10786, %v11020
  %v11039 = vadd.f32 %v10787, %v11022
  %s11040 = scalar_lea.vmem %s8, 256
  %v11041 = vld [vmem:[%s11040] sm:$0xf]
  %v11042 = vld [vmem:[%s11040 + $0x4] sm:$0xf]
  %v11043 = vld [vmem:[%s11040 + $0x8] sm:$0xf]
  %v11044 = vld [vmem:[%s11040 + $0xc] sm:$0xf]
  %v11045 = vld [vmem:[%s11040 + $0x10] sm:$0xf]
  %v11046 = vld [vmem:[%s11040 + $0x14] sm:$0xf]
  %v11047 = vld [vmem:[%s11040 + $0x18] sm:$0xf]
  %v11048 = vld [vmem:[%s11040 + $0x1c] sm:$0xf]
  %v11049 = vld [vmem:[%s11040 + $0x20] sm:$0xf]
  %v11050 = vld [vmem:[%s11040 + $0x24] sm:$0xf]
  %v11051 = vld [vmem:[%s11040 + $0x28] sm:$0xf]
  %v11052 = vld [vmem:[%s11040 + $0x2c] sm:$0xf]
  %v11053 = vld [vmem:[%s11040 + $0x30] sm:$0xf]
  %v11054 = vld [vmem:[%s11040 + $0x34] sm:$0xf]
  %v11055 = vld [vmem:[%s11040 + $0x38] sm:$0xf]
  %v11056 = vld [vmem:[%s11040 + $0x3c] sm:$0xf]
  %v11073 = vunpack.c.l.b16 %v11041
  %v11074 = vunpack.c.l.b16 %v11042
  %v11075 = vunpack.c.l.b16 %v11043
  %v11076 = vunpack.c.l.b16 %v11044
  %v11077 = vunpack.c.l.b16 %v11045
  %v11078 = vunpack.c.l.b16 %v11046
  %v11079 = vunpack.c.l.b16 %v11047
  %v11080 = vunpack.c.l.b16 %v11048
  %v11081 = vunpack.c.l.b16 %v11049
  %v11082 = vunpack.c.l.b16 %v11050
  %v11083 = vunpack.c.l.b16 %v11051
  %v11084 = vunpack.c.l.b16 %v11052
  %v11085 = vunpack.c.l.b16 %v11053
  %v11086 = vunpack.c.l.b16 %v11054
  %v11087 = vunpack.c.l.b16 %v11055
  %v11088 = vunpack.c.l.b16 %v11056
  %v11089 = vpack.c.b16 %v11074, %v11073
  %v11090 = vpack.c.b16 %v11076, %v11075
  %v11091 = vpack.c.b16 %v11078, %v11077
  %v11092 = vpack.c.b16 %v11080, %v11079
  %v11093 = vpack.c.b16 %v11082, %v11081
  %v11094 = vpack.c.b16 %v11084, %v11083
  %v11095 = vpack.c.b16 %v11086, %v11085
  %v11096 = vpack.c.b16 %v11088, %v11087
  %11105 = vmatpush.bf16.msra.mxu0 %v10065
  %11106 = vmatpush.bf16.msra.mxu0 %v10064
  %11107 = vmatpush.bf16.msra.mxu0 %v10063
  %11108 = vmatpush.bf16.msra.mxu0 %v10062
  %11109 = vmatpush.bf16.msra.mxu0 %v10061
  %11110 = vmatpush.bf16.msra.mxu0 %v10060
  %11111 = vmatpush.bf16.msra.mxu0 %v10059
  %11112 = vmatpush.bf16.msra.mxu0 %v10058
  %11113 = vmatmul.bf16.gmra.mxu0 %v11089
  %v11114 = vpop.f32.mrf.mxu0
  %v11115 = vadd.f32 0.0, %v11114
  %v11116 = vpop.f32.mrf.mxu0
  %v11117 = vadd.f32 0.0, %v11116
  %11118 = vmatmul.bf16.gmra.mxu0 %v11090
  %v11119 = vpop.f32.mrf.mxu0
  %v11120 = vadd.f32 0.0, %v11119
  %v11121 = vpop.f32.mrf.mxu0
  %v11122 = vadd.f32 0.0, %v11121
  %11123 = vmatmul.bf16.gmra.mxu0 %v11091
  %v11124 = vpop.f32.mrf.mxu0
  %v11125 = vadd.f32 0.0, %v11124
  %v11126 = vpop.f32.mrf.mxu0
  %v11127 = vadd.f32 0.0, %v11126
  %11128 = vmatmul.bf16.gmra.mxu0 %v11092
  %v11129 = vpop.f32.mrf.mxu0
  %v11130 = vadd.f32 0.0, %v11129
  %v11131 = vpop.f32.mrf.mxu0
  %v11132 = vadd.f32 0.0, %v11131
  %11133 = vmatmul.bf16.gmra.mxu0 %v11093
  %v11134 = vpop.f32.mrf.mxu0
  %v11135 = vadd.f32 0.0, %v11134
  %v11136 = vpop.f32.mrf.mxu0
  %v11137 = vadd.f32 0.0, %v11136
  %11138 = vmatmul.bf16.gmra.mxu0 %v11094
  %v11139 = vpop.f32.mrf.mxu0
  %v11140 = vadd.f32 0.0, %v11139
  %v11141 = vpop.f32.mrf.mxu0
  %v11142 = vadd.f32 0.0, %v11141
  %11143 = vmatmul.bf16.gmra.mxu0 %v11095
  %v11144 = vpop.f32.mrf.mxu0
  %v11145 = vadd.f32 0.0, %v11144
  %v11146 = vpop.f32.mrf.mxu0
  %v11147 = vadd.f32 0.0, %v11146
  %11148 = vmatmul.bf16.gmra.mxu0 %v11096
  %v11149 = vpop.f32.mrf.mxu0
  %v11150 = vadd.f32 0.0, %v11149
  %v11151 = vpop.f32.mrf.mxu0
  %v11152 = vadd.f32 0.0, %v11151
  %11153 = vdwg.mxu0
  %v11154 = vpack.c.bf16 %v11117, %v11115
  %v11155 = vpack.c.bf16 %v11122, %v11120
  %v11156 = vpack.c.bf16 %v11127, %v11125
  %v11157 = vpack.c.bf16 %v11132, %v11130
  %v11158 = vpack.c.bf16 %v11137, %v11135
  %v11159 = vpack.c.bf16 %v11142, %v11140
  %v11160 = vpack.c.bf16 %v11147, %v11145
  %v11161 = vpack.c.bf16 %v11152, %v11150
  %s11162 = scalar_lea.vmem %s9, 256
  %v11163 = vld [vmem:[%s11162] sm:$0xf]
  %v11164 = vld [vmem:[%s11162 + $0x4] sm:$0xf]
  %v11165 = vld [vmem:[%s11162 + $0x8] sm:$0xf]
  %v11166 = vld [vmem:[%s11162 + $0xc] sm:$0xf]
  %v11167 = vld [vmem:[%s11162 + $0x10] sm:$0xf]
  %v11168 = vld [vmem:[%s11162 + $0x14] sm:$0xf]
  %v11169 = vld [vmem:[%s11162 + $0x18] sm:$0xf]
  %v11170 = vld [vmem:[%s11162 + $0x1c] sm:$0xf]
  %v11171 = vld [vmem:[%s11162 + $0x20] sm:$0xf]
  %v11172 = vld [vmem:[%s11162 + $0x24] sm:$0xf]
  %v11173 = vld [vmem:[%s11162 + $0x28] sm:$0xf]
  %v11174 = vld [vmem:[%s11162 + $0x2c] sm:$0xf]
  %v11175 = vld [vmem:[%s11162 + $0x30] sm:$0xf]
  %v11176 = vld [vmem:[%s11162 + $0x34] sm:$0xf]
  %v11177 = vld [vmem:[%s11162 + $0x38] sm:$0xf]
  %v11178 = vld [vmem:[%s11162 + $0x3c] sm:$0xf]
  %v11195 = vunpack.c.l.b16 %v11163
  %v11196 = vunpack.c.l.b16 %v11164
  %v11197 = vunpack.c.l.b16 %v11165
  %v11198 = vunpack.c.l.b16 %v11166
  %v11199 = vunpack.c.l.b16 %v11167
  %v11200 = vunpack.c.l.b16 %v11168
  %v11201 = vunpack.c.l.b16 %v11169
  %v11202 = vunpack.c.l.b16 %v11170
  %v11203 = vunpack.c.l.b16 %v11171
  %v11204 = vunpack.c.l.b16 %v11172
  %v11205 = vunpack.c.l.b16 %v11173
  %v11206 = vunpack.c.l.b16 %v11174
  %v11207 = vunpack.c.l.b16 %v11175
  %v11208 = vunpack.c.l.b16 %v11176
  %v11209 = vunpack.c.l.b16 %v11177
  %v11210 = vunpack.c.l.b16 %v11178
  %v11211 = vpack.c.b16 %v11196, %v11195
  %v11212 = vpack.c.b16 %v11198, %v11197
  %v11213 = vpack.c.b16 %v11200, %v11199
  %v11214 = vpack.c.b16 %v11202, %v11201
  %v11215 = vpack.c.b16 %v11204, %v11203
  %v11216 = vpack.c.b16 %v11206, %v11205
  %v11217 = vpack.c.b16 %v11208, %v11207
  %v11218 = vpack.c.b16 %v11210, %v11209
  %11227 = vmatpush.bf16.msra.mxu0 %v11218
  %11228 = vmatpush.bf16.msra.mxu0 %v11217
  %11229 = vmatpush.bf16.msra.mxu0 %v11216
  %11230 = vmatpush.bf16.msra.mxu0 %v11215
  %11231 = vmatpush.bf16.msra.mxu0 %v11214
  %11232 = vmatpush.bf16.msra.mxu0 %v11213
  %11233 = vmatpush.bf16.msra.mxu0 %v11212
  %11234 = vmatpush.bf16.msra.mxu0 %v11211
  %11235 = vmatmul.bf16.gmra.mxu0 %v11154
  %v11236 = vpop.f32.mrf.mxu0
  %v11237 = vadd.f32 0.0, %v11236
  %v11238 = vpop.f32.mrf.mxu0
  %v11239 = vadd.f32 0.0, %v11238
  %11240 = vmatmul.bf16.gmra.mxu0 %v11155
  %v11241 = vpop.f32.mrf.mxu0
  %v11242 = vadd.f32 0.0, %v11241
  %v11243 = vpop.f32.mrf.mxu0
  %v11244 = vadd.f32 0.0, %v11243
  %11245 = vmatmul.bf16.gmra.mxu0 %v11156
  %v11246 = vpop.f32.mrf.mxu0
  %v11247 = vadd.f32 0.0, %v11246
  %v11248 = vpop.f32.mrf.mxu0
  %v11249 = vadd.f32 0.0, %v11248
  %11250 = vmatmul.bf16.gmra.mxu0 %v11157
  %v11251 = vpop.f32.mrf.mxu0
  %v11252 = vadd.f32 0.0, %v11251
  %v11253 = vpop.f32.mrf.mxu0
  %v11254 = vadd.f32 0.0, %v11253
  %11255 = vmatmul.bf16.gmra.mxu0 %v11158
  %v11256 = vpop.f32.mrf.mxu0
  %v11257 = vadd.f32 0.0, %v11256
  %v11258 = vpop.f32.mrf.mxu0
  %v11259 = vadd.f32 0.0, %v11258
  %11260 = vmatmul.bf16.gmra.mxu0 %v11159
  %v11261 = vpop.f32.mrf.mxu0
  %v11262 = vadd.f32 0.0, %v11261
  %v11263 = vpop.f32.mrf.mxu0
  %v11264 = vadd.f32 0.0, %v11263
  %11265 = vmatmul.bf16.gmra.mxu0 %v11160
  %v11266 = vpop.f32.mrf.mxu0
  %v11267 = vadd.f32 0.0, %v11266
  %v11268 = vpop.f32.mrf.mxu0
  %v11269 = vadd.f32 0.0, %v11268
  %11270 = vmatmul.bf16.gmra.mxu0 %v11161
  %v11271 = vpop.f32.mrf.mxu0
  %v11272 = vadd.f32 0.0, %v11271
  %v11273 = vpop.f32.mrf.mxu0
  %v11274 = vadd.f32 0.0, %v11273
  %11275 = vdwg.mxu0
  %v11276 = vadd.f32 %v11024, %v11237
  %v11277 = vadd.f32 %v11025, %v11239
  %v11278 = vadd.f32 %v11026, %v11242
  %v11279 = vadd.f32 %v11027, %v11244
  %v11280 = vadd.f32 %v11028, %v11247
  %v11281 = vadd.f32 %v11029, %v11249
  %v11282 = vadd.f32 %v11030, %v11252
  %v11283 = vadd.f32 %v11031, %v11254
  %v11284 = vadd.f32 %v11032, %v11257
  %v11285 = vadd.f32 %v11033, %v11259
  %v11286 = vadd.f32 %v11034, %v11262
  %v11287 = vadd.f32 %v11035, %v11264
  %v11288 = vadd.f32 %v11036, %v11267
  %v11289 = vadd.f32 %v11037, %v11269
  %v11290 = vadd.f32 %v11038, %v11272
  %v11291 = vadd.f32 %v11039, %v11274
  %s11292 = scalar_lea.vmem %s8, 320
  %v11293 = vld [vmem:[%s11292] sm:$0xf]
  %v11294 = vld [vmem:[%s11292 + $0x4] sm:$0xf]
  %v11295 = vld [vmem:[%s11292 + $0x8] sm:$0xf]
  %v11296 = vld [vmem:[%s11292 + $0xc] sm:$0xf]
  %v11297 = vld [vmem:[%s11292 + $0x10] sm:$0xf]
  %v11298 = vld [vmem:[%s11292 + $0x14] sm:$0xf]
  %v11299 = vld [vmem:[%s11292 + $0x18] sm:$0xf]
  %v11300 = vld [vmem:[%s11292 + $0x1c] sm:$0xf]
  %v11301 = vld [vmem:[%s11292 + $0x20] sm:$0xf]
  %v11302 = vld [vmem:[%s11292 + $0x24] sm:$0xf]
  %v11303 = vld [vmem:[%s11292 + $0x28] sm:$0xf]
  %v11304 = vld [vmem:[%s11292 + $0x2c] sm:$0xf]
  %v11305 = vld [vmem:[%s11292 + $0x30] sm:$0xf]
  %v11306 = vld [vmem:[%s11292 + $0x34] sm:$0xf]
  %v11307 = vld [vmem:[%s11292 + $0x38] sm:$0xf]
  %v11308 = vld [vmem:[%s11292 + $0x3c] sm:$0xf]
  %v11325 = vunpack.c.l.b16 %v11293
  %v11326 = vunpack.c.l.b16 %v11294
  %v11327 = vunpack.c.l.b16 %v11295
  %v11328 = vunpack.c.l.b16 %v11296
  %v11329 = vunpack.c.l.b16 %v11297
  %v11330 = vunpack.c.l.b16 %v11298
  %v11331 = vunpack.c.l.b16 %v11299
  %v11332 = vunpack.c.l.b16 %v11300
  %v11333 = vunpack.c.l.b16 %v11301
  %v11334 = vunpack.c.l.b16 %v11302
  %v11335 = vunpack.c.l.b16 %v11303
  %v11336 = vunpack.c.l.b16 %v11304
  %v11337 = vunpack.c.l.b16 %v11305
  %v11338 = vunpack.c.l.b16 %v11306
  %v11339 = vunpack.c.l.b16 %v11307
  %v11340 = vunpack.c.l.b16 %v11308
  %v11341 = vpack.c.b16 %v11326, %v11325
  %v11342 = vpack.c.b16 %v11328, %v11327
  %v11343 = vpack.c.b16 %v11330, %v11329
  %v11344 = vpack.c.b16 %v11332, %v11331
  %v11345 = vpack.c.b16 %v11334, %v11333
  %v11346 = vpack.c.b16 %v11336, %v11335
  %v11347 = vpack.c.b16 %v11338, %v11337
  %v11348 = vpack.c.b16 %v11340, %v11339
  %11357 = vmatpush.bf16.msra.mxu0 %v10065
  %11358 = vmatpush.bf16.msra.mxu0 %v10064
  %11359 = vmatpush.bf16.msra.mxu0 %v10063
  %11360 = vmatpush.bf16.msra.mxu0 %v10062
  %11361 = vmatpush.bf16.msra.mxu0 %v10061
  %11362 = vmatpush.bf16.msra.mxu0 %v10060
  %11363 = vmatpush.bf16.msra.mxu0 %v10059
  %11364 = vmatpush.bf16.msra.mxu0 %v10058
  %11365 = vmatmul.bf16.gmra.mxu0 %v11341
  %v11366 = vpop.f32.mrf.mxu0
  %v11367 = vadd.f32 0.0, %v11366
  %v11368 = vpop.f32.mrf.mxu0
  %v11369 = vadd.f32 0.0, %v11368
  %11370 = vmatmul.bf16.gmra.mxu0 %v11342
  %v11371 = vpop.f32.mrf.mxu0
  %v11372 = vadd.f32 0.0, %v11371
  %v11373 = vpop.f32.mrf.mxu0
  %v11374 = vadd.f32 0.0, %v11373
  %11375 = vmatmul.bf16.gmra.mxu0 %v11343
  %v11376 = vpop.f32.mrf.mxu0
  %v11377 = vadd.f32 0.0, %v11376
  %v11378 = vpop.f32.mrf.mxu0
  %v11379 = vadd.f32 0.0, %v11378
  %11380 = vmatmul.bf16.gmra.mxu0 %v11344
  %v11381 = vpop.f32.mrf.mxu0
  %v11382 = vadd.f32 0.0, %v11381
  %v11383 = vpop.f32.mrf.mxu0
  %v11384 = vadd.f32 0.0, %v11383
  %11385 = vmatmul.bf16.gmra.mxu0 %v11345
  %v11386 = vpop.f32.mrf.mxu0
  %v11387 = vadd.f32 0.0, %v11386
  %v11388 = vpop.f32.mrf.mxu0
  %v11389 = vadd.f32 0.0, %v11388
  %11390 = vmatmul.bf16.gmra.mxu0 %v11346
  %v11391 = vpop.f32.mrf.mxu0
  %v11392 = vadd.f32 0.0, %v11391
  %v11393 = vpop.f32.mrf.mxu0
  %v11394 = vadd.f32 0.0, %v11393
  %11395 = vmatmul.bf16.gmra.mxu0 %v11347
  %v11396 = vpop.f32.mrf.mxu0
  %v11397 = vadd.f32 0.0, %v11396
  %v11398 = vpop.f32.mrf.mxu0
  %v11399 = vadd.f32 0.0, %v11398
  %11400 = vmatmul.bf16.gmra.mxu0 %v11348
  %v11401 = vpop.f32.mrf.mxu0
  %v11402 = vadd.f32 0.0, %v11401
  %v11403 = vpop.f32.mrf.mxu0
  %v11404 = vadd.f32 0.0, %v11403
  %11405 = vdwg.mxu0
  %v11406 = vpack.c.bf16 %v11369, %v11367
  %v11407 = vpack.c.bf16 %v11374, %v11372
  %v11408 = vpack.c.bf16 %v11379, %v11377
  %v11409 = vpack.c.bf16 %v11384, %v11382
  %v11410 = vpack.c.bf16 %v11389, %v11387
  %v11411 = vpack.c.bf16 %v11394, %v11392
  %v11412 = vpack.c.bf16 %v11399, %v11397
  %v11413 = vpack.c.bf16 %v11404, %v11402
  %s11414 = scalar_lea.vmem %s9, 320
  %v11415 = vld [vmem:[%s11414] sm:$0xf]
  %v11416 = vld [vmem:[%s11414 + $0x4] sm:$0xf]
  %v11417 = vld [vmem:[%s11414 + $0x8] sm:$0xf]
  %v11418 = vld [vmem:[%s11414 + $0xc] sm:$0xf]
  %v11419 = vld [vmem:[%s11414 + $0x10] sm:$0xf]
  %v11420 = vld [vmem:[%s11414 + $0x14] sm:$0xf]
  %v11421 = vld [vmem:[%s11414 + $0x18] sm:$0xf]
  %v11422 = vld [vmem:[%s11414 + $0x1c] sm:$0xf]
  %v11423 = vld [vmem:[%s11414 + $0x20] sm:$0xf]
  %v11424 = vld [vmem:[%s11414 + $0x24] sm:$0xf]
  %v11425 = vld [vmem:[%s11414 + $0x28] sm:$0xf]
  %v11426 = vld [vmem:[%s11414 + $0x2c] sm:$0xf]
  %v11427 = vld [vmem:[%s11414 + $0x30] sm:$0xf]
  %v11428 = vld [vmem:[%s11414 + $0x34] sm:$0xf]
  %v11429 = vld [vmem:[%s11414 + $0x38] sm:$0xf]
  %v11430 = vld [vmem:[%s11414 + $0x3c] sm:$0xf]
  %v11447 = vunpack.c.l.b16 %v11415
  %v11448 = vunpack.c.l.b16 %v11416
  %v11449 = vunpack.c.l.b16 %v11417
  %v11450 = vunpack.c.l.b16 %v11418
  %v11451 = vunpack.c.l.b16 %v11419
  %v11452 = vunpack.c.l.b16 %v11420
  %v11453 = vunpack.c.l.b16 %v11421
  %v11454 = vunpack.c.l.b16 %v11422
  %v11455 = vunpack.c.l.b16 %v11423
  %v11456 = vunpack.c.l.b16 %v11424
  %v11457 = vunpack.c.l.b16 %v11425
  %v11458 = vunpack.c.l.b16 %v11426
  %v11459 = vunpack.c.l.b16 %v11427
  %v11460 = vunpack.c.l.b16 %v11428
  %v11461 = vunpack.c.l.b16 %v11429
  %v11462 = vunpack.c.l.b16 %v11430
  %v11463 = vpack.c.b16 %v11448, %v11447
  %v11464 = vpack.c.b16 %v11450, %v11449
  %v11465 = vpack.c.b16 %v11452, %v11451
  %v11466 = vpack.c.b16 %v11454, %v11453
  %v11467 = vpack.c.b16 %v11456, %v11455
  %v11468 = vpack.c.b16 %v11458, %v11457
  %v11469 = vpack.c.b16 %v11460, %v11459
  %v11470 = vpack.c.b16 %v11462, %v11461
  %11479 = vmatpush.bf16.msra.mxu0 %v11470
  %11480 = vmatpush.bf16.msra.mxu0 %v11469
  %11481 = vmatpush.bf16.msra.mxu0 %v11468
  %11482 = vmatpush.bf16.msra.mxu0 %v11467
  %11483 = vmatpush.bf16.msra.mxu0 %v11466
  %11484 = vmatpush.bf16.msra.mxu0 %v11465
  %11485 = vmatpush.bf16.msra.mxu0 %v11464
  %11486 = vmatpush.bf16.msra.mxu0 %v11463
  %11487 = vmatmul.bf16.gmra.mxu0 %v11406
  %v11488 = vpop.f32.mrf.mxu0
  %v11489 = vadd.f32 0.0, %v11488
  %v11490 = vpop.f32.mrf.mxu0
  %v11491 = vadd.f32 0.0, %v11490
  %11492 = vmatmul.bf16.gmra.mxu0 %v11407
  %v11493 = vpop.f32.mrf.mxu0
  %v11494 = vadd.f32 0.0, %v11493
  %v11495 = vpop.f32.mrf.mxu0
  %v11496 = vadd.f32 0.0, %v11495
  %11497 = vmatmul.bf16.gmra.mxu0 %v11408
  %v11498 = vpop.f32.mrf.mxu0
  %v11499 = vadd.f32 0.0, %v11498
  %v11500 = vpop.f32.mrf.mxu0
  %v11501 = vadd.f32 0.0, %v11500
  %11502 = vmatmul.bf16.gmra.mxu0 %v11409
  %v11503 = vpop.f32.mrf.mxu0
  %v11504 = vadd.f32 0.0, %v11503
  %v11505 = vpop.f32.mrf.mxu0
  %v11506 = vadd.f32 0.0, %v11505
  %11507 = vmatmul.bf16.gmra.mxu0 %v11410
  %v11508 = vpop.f32.mrf.mxu0
  %v11509 = vadd.f32 0.0, %v11508
  %v11510 = vpop.f32.mrf.mxu0
  %v11511 = vadd.f32 0.0, %v11510
  %11512 = vmatmul.bf16.gmra.mxu0 %v11411
  %v11513 = vpop.f32.mrf.mxu0
  %v11514 = vadd.f32 0.0, %v11513
  %v11515 = vpop.f32.mrf.mxu0
  %v11516 = vadd.f32 0.0, %v11515
  %11517 = vmatmul.bf16.gmra.mxu0 %v11412
  %v11518 = vpop.f32.mrf.mxu0
  %v11519 = vadd.f32 0.0, %v11518
  %v11520 = vpop.f32.mrf.mxu0
  %v11521 = vadd.f32 0.0, %v11520
  %11522 = vmatmul.bf16.gmra.mxu0 %v11413
  %v11523 = vpop.f32.mrf.mxu0
  %v11524 = vadd.f32 0.0, %v11523
  %v11525 = vpop.f32.mrf.mxu0
  %v11526 = vadd.f32 0.0, %v11525
  %11527 = vdwg.mxu0
  %v11528 = vadd.f32 %v11276, %v11489
  %v11529 = vadd.f32 %v11277, %v11491
  %v11530 = vadd.f32 %v11278, %v11494
  %v11531 = vadd.f32 %v11279, %v11496
  %v11532 = vadd.f32 %v11280, %v11499
  %v11533 = vadd.f32 %v11281, %v11501
  %v11534 = vadd.f32 %v11282, %v11504
  %v11535 = vadd.f32 %v11283, %v11506
  %v11536 = vadd.f32 %v11284, %v11509
  %v11537 = vadd.f32 %v11285, %v11511
  %v11538 = vadd.f32 %v11286, %v11514
  %v11539 = vadd.f32 %v11287, %v11516
  %v11540 = vadd.f32 %v11288, %v11519
  %v11541 = vadd.f32 %v11289, %v11521
  %v11542 = vadd.f32 %v11290, %v11524
  %v11543 = vadd.f32 %v11291, %v11526
  %s11544 = scalar_lea.vmem %s8, 384
  %v11545 = vld [vmem:[%s11544] sm:$0xf]
  %v11546 = vld [vmem:[%s11544 + $0x4] sm:$0xf]
  %v11547 = vld [vmem:[%s11544 + $0x8] sm:$0xf]
  %v11548 = vld [vmem:[%s11544 + $0xc] sm:$0xf]
  %v11549 = vld [vmem:[%s11544 + $0x10] sm:$0xf]
  %v11550 = vld [vmem:[%s11544 + $0x14] sm:$0xf]
  %v11551 = vld [vmem:[%s11544 + $0x18] sm:$0xf]
  %v11552 = vld [vmem:[%s11544 + $0x1c] sm:$0xf]
  %v11553 = vld [vmem:[%s11544 + $0x20] sm:$0xf]
  %v11554 = vld [vmem:[%s11544 + $0x24] sm:$0xf]
  %v11555 = vld [vmem:[%s11544 + $0x28] sm:$0xf]
  %v11556 = vld [vmem:[%s11544 + $0x2c] sm:$0xf]
  %v11557 = vld [vmem:[%s11544 + $0x30] sm:$0xf]
  %v11558 = vld [vmem:[%s11544 + $0x34] sm:$0xf]
  %v11559 = vld [vmem:[%s11544 + $0x38] sm:$0xf]
  %v11560 = vld [vmem:[%s11544 + $0x3c] sm:$0xf]
  %v11577 = vunpack.c.l.b16 %v11545
  %v11578 = vunpack.c.l.b16 %v11546
  %v11579 = vunpack.c.l.b16 %v11547
  %v11580 = vunpack.c.l.b16 %v11548
  %v11581 = vunpack.c.l.b16 %v11549
  %v11582 = vunpack.c.l.b16 %v11550
  %v11583 = vunpack.c.l.b16 %v11551
  %v11584 = vunpack.c.l.b16 %v11552
  %v11585 = vunpack.c.l.b16 %v11553
  %v11586 = vunpack.c.l.b16 %v11554
  %v11587 = vunpack.c.l.b16 %v11555
  %v11588 = vunpack.c.l.b16 %v11556
  %v11589 = vunpack.c.l.b16 %v11557
  %v11590 = vunpack.c.l.b16 %v11558
  %v11591 = vunpack.c.l.b16 %v11559
  %v11592 = vunpack.c.l.b16 %v11560
  %v11593 = vpack.c.b16 %v11578, %v11577
  %v11594 = vpack.c.b16 %v11580, %v11579
  %v11595 = vpack.c.b16 %v11582, %v11581
  %v11596 = vpack.c.b16 %v11584, %v11583
  %v11597 = vpack.c.b16 %v11586, %v11585
  %v11598 = vpack.c.b16 %v11588, %v11587
  %v11599 = vpack.c.b16 %v11590, %v11589
  %v11600 = vpack.c.b16 %v11592, %v11591
  %11609 = vmatpush.bf16.msra.mxu0 %v10065
  %11610 = vmatpush.bf16.msra.mxu0 %v10064
  %11611 = vmatpush.bf16.msra.mxu0 %v10063
  %11612 = vmatpush.bf16.msra.mxu0 %v10062
  %11613 = vmatpush.bf16.msra.mxu0 %v10061
  %11614 = vmatpush.bf16.msra.mxu0 %v10060
  %11615 = vmatpush.bf16.msra.mxu0 %v10059
  %11616 = vmatpush.bf16.msra.mxu0 %v10058
  %11617 = vmatmul.bf16.gmra.mxu0 %v11593
  %v11618 = vpop.f32.mrf.mxu0
  %v11619 = vadd.f32 0.0, %v11618
  %v11620 = vpop.f32.mrf.mxu0
  %v11621 = vadd.f32 0.0, %v11620
  %11622 = vmatmul.bf16.gmra.mxu0 %v11594
  %v11623 = vpop.f32.mrf.mxu0
  %v11624 = vadd.f32 0.0, %v11623
  %v11625 = vpop.f32.mrf.mxu0
  %v11626 = vadd.f32 0.0, %v11625
  %11627 = vmatmul.bf16.gmra.mxu0 %v11595
  %v11628 = vpop.f32.mrf.mxu0
  %v11629 = vadd.f32 0.0, %v11628
  %v11630 = vpop.f32.mrf.mxu0
  %v11631 = vadd.f32 0.0, %v11630
  %11632 = vmatmul.bf16.gmra.mxu0 %v11596
  %v11633 = vpop.f32.mrf.mxu0
  %v11634 = vadd.f32 0.0, %v11633
  %v11635 = vpop.f32.mrf.mxu0
  %v11636 = vadd.f32 0.0, %v11635
  %11637 = vmatmul.bf16.gmra.mxu0 %v11597
  %v11638 = vpop.f32.mrf.mxu0
  %v11639 = vadd.f32 0.0, %v11638
  %v11640 = vpop.f32.mrf.mxu0
  %v11641 = vadd.f32 0.0, %v11640
  %11642 = vmatmul.bf16.gmra.mxu0 %v11598
  %v11643 = vpop.f32.mrf.mxu0
  %v11644 = vadd.f32 0.0, %v11643
  %v11645 = vpop.f32.mrf.mxu0
  %v11646 = vadd.f32 0.0, %v11645
  %11647 = vmatmul.bf16.gmra.mxu0 %v11599
  %v11648 = vpop.f32.mrf.mxu0
  %v11649 = vadd.f32 0.0, %v11648
  %v11650 = vpop.f32.mrf.mxu0
  %v11651 = vadd.f32 0.0, %v11650
  %11652 = vmatmul.bf16.gmra.mxu0 %v11600
  %v11653 = vpop.f32.mrf.mxu0
  %v11654 = vadd.f32 0.0, %v11653
  %v11655 = vpop.f32.mrf.mxu0
  %v11656 = vadd.f32 0.0, %v11655
  %11657 = vdwg.mxu0
  %v11658 = vpack.c.bf16 %v11621, %v11619
  %v11659 = vpack.c.bf16 %v11626, %v11624
  %v11660 = vpack.c.bf16 %v11631, %v11629
  %v11661 = vpack.c.bf16 %v11636, %v11634
  %v11662 = vpack.c.bf16 %v11641, %v11639
  %v11663 = vpack.c.bf16 %v11646, %v11644
  %v11664 = vpack.c.bf16 %v11651, %v11649
  %v11665 = vpack.c.bf16 %v11656, %v11654
  %s11666 = scalar_lea.vmem %s9, 384
  %v11667 = vld [vmem:[%s11666] sm:$0xf]
  %v11668 = vld [vmem:[%s11666 + $0x4] sm:$0xf]
  %v11669 = vld [vmem:[%s11666 + $0x8] sm:$0xf]
  %v11670 = vld [vmem:[%s11666 + $0xc] sm:$0xf]
  %v11671 = vld [vmem:[%s11666 + $0x10] sm:$0xf]
  %v11672 = vld [vmem:[%s11666 + $0x14] sm:$0xf]
  %v11673 = vld [vmem:[%s11666 + $0x18] sm:$0xf]
  %v11674 = vld [vmem:[%s11666 + $0x1c] sm:$0xf]
  %v11675 = vld [vmem:[%s11666 + $0x20] sm:$0xf]
  %v11676 = vld [vmem:[%s11666 + $0x24] sm:$0xf]
  %v11677 = vld [vmem:[%s11666 + $0x28] sm:$0xf]
  %v11678 = vld [vmem:[%s11666 + $0x2c] sm:$0xf]
  %v11679 = vld [vmem:[%s11666 + $0x30] sm:$0xf]
  %v11680 = vld [vmem:[%s11666 + $0x34] sm:$0xf]
  %v11681 = vld [vmem:[%s11666 + $0x38] sm:$0xf]
  %v11682 = vld [vmem:[%s11666 + $0x3c] sm:$0xf]
  %v11699 = vunpack.c.l.b16 %v11667
  %v11700 = vunpack.c.l.b16 %v11668
  %v11701 = vunpack.c.l.b16 %v11669
  %v11702 = vunpack.c.l.b16 %v11670
  %v11703 = vunpack.c.l.b16 %v11671
  %v11704 = vunpack.c.l.b16 %v11672
  %v11705 = vunpack.c.l.b16 %v11673
  %v11706 = vunpack.c.l.b16 %v11674
  %v11707 = vunpack.c.l.b16 %v11675
  %v11708 = vunpack.c.l.b16 %v11676
  %v11709 = vunpack.c.l.b16 %v11677
  %v11710 = vunpack.c.l.b16 %v11678
  %v11711 = vunpack.c.l.b16 %v11679
  %v11712 = vunpack.c.l.b16 %v11680
  %v11713 = vunpack.c.l.b16 %v11681
  %v11714 = vunpack.c.l.b16 %v11682
  %v11715 = vpack.c.b16 %v11700, %v11699
  %v11716 = vpack.c.b16 %v11702, %v11701
  %v11717 = vpack.c.b16 %v11704, %v11703
  %v11718 = vpack.c.b16 %v11706, %v11705
  %v11719 = vpack.c.b16 %v11708, %v11707
  %v11720 = vpack.c.b16 %v11710, %v11709
  %v11721 = vpack.c.b16 %v11712, %v11711
  %v11722 = vpack.c.b16 %v11714, %v11713
  %11731 = vmatpush.bf16.msra.mxu0 %v11722
  %11732 = vmatpush.bf16.msra.mxu0 %v11721
  %11733 = vmatpush.bf16.msra.mxu0 %v11720
  %11734 = vmatpush.bf16.msra.mxu0 %v11719
  %11735 = vmatpush.bf16.msra.mxu0 %v11718
  %11736 = vmatpush.bf16.msra.mxu0 %v11717
  %11737 = vmatpush.bf16.msra.mxu0 %v11716
  %11738 = vmatpush.bf16.msra.mxu0 %v11715
  %11739 = vmatmul.bf16.gmra.mxu0 %v11658
  %v11740 = vpop.f32.mrf.mxu0
  %v11741 = vadd.f32 0.0, %v11740
  %v11742 = vpop.f32.mrf.mxu0
  %v11743 = vadd.f32 0.0, %v11742
  %11744 = vmatmul.bf16.gmra.mxu0 %v11659
  %v11745 = vpop.f32.mrf.mxu0
  %v11746 = vadd.f32 0.0, %v11745
  %v11747 = vpop.f32.mrf.mxu0
  %v11748 = vadd.f32 0.0, %v11747
  %11749 = vmatmul.bf16.gmra.mxu0 %v11660
  %v11750 = vpop.f32.mrf.mxu0
  %v11751 = vadd.f32 0.0, %v11750
  %v11752 = vpop.f32.mrf.mxu0
  %v11753 = vadd.f32 0.0, %v11752
  %11754 = vmatmul.bf16.gmra.mxu0 %v11661
  %v11755 = vpop.f32.mrf.mxu0
  %v11756 = vadd.f32 0.0, %v11755
  %v11757 = vpop.f32.mrf.mxu0
  %v11758 = vadd.f32 0.0, %v11757
  %11759 = vmatmul.bf16.gmra.mxu0 %v11662
  %v11760 = vpop.f32.mrf.mxu0
  %v11761 = vadd.f32 0.0, %v11760
  %v11762 = vpop.f32.mrf.mxu0
  %v11763 = vadd.f32 0.0, %v11762
  %11764 = vmatmul.bf16.gmra.mxu0 %v11663
  %v11765 = vpop.f32.mrf.mxu0
  %v11766 = vadd.f32 0.0, %v11765
  %v11767 = vpop.f32.mrf.mxu0
  %v11768 = vadd.f32 0.0, %v11767
  %11769 = vmatmul.bf16.gmra.mxu0 %v11664
  %v11770 = vpop.f32.mrf.mxu0
  %v11771 = vadd.f32 0.0, %v11770
  %v11772 = vpop.f32.mrf.mxu0
  %v11773 = vadd.f32 0.0, %v11772
  %11774 = vmatmul.bf16.gmra.mxu0 %v11665
  %v11775 = vpop.f32.mrf.mxu0
  %v11776 = vadd.f32 0.0, %v11775
  %v11777 = vpop.f32.mrf.mxu0
  %v11778 = vadd.f32 0.0, %v11777
  %11779 = vdwg.mxu0
  %v11780 = vadd.f32 %v11528, %v11741
  %v11781 = vadd.f32 %v11529, %v11743
  %v11782 = vadd.f32 %v11530, %v11746
  %v11783 = vadd.f32 %v11531, %v11748
  %v11784 = vadd.f32 %v11532, %v11751
  %v11785 = vadd.f32 %v11533, %v11753
  %v11786 = vadd.f32 %v11534, %v11756
  %v11787 = vadd.f32 %v11535, %v11758
  %v11788 = vadd.f32 %v11536, %v11761
  %v11789 = vadd.f32 %v11537, %v11763
  %v11790 = vadd.f32 %v11538, %v11766
  %v11791 = vadd.f32 %v11539, %v11768
  %v11792 = vadd.f32 %v11540, %v11771
  %v11793 = vadd.f32 %v11541, %v11773
  %v11794 = vadd.f32 %v11542, %v11776
  %v11795 = vadd.f32 %v11543, %v11778
  %s11796 = scalar_lea.vmem %s8, 448
  %v11797 = vld [vmem:[%s11796] sm:$0xf]
  %v11798 = vld [vmem:[%s11796 + $0x4] sm:$0xf]
  %v11799 = vld [vmem:[%s11796 + $0x8] sm:$0xf]
  %v11800 = vld [vmem:[%s11796 + $0xc] sm:$0xf]
  %v11801 = vld [vmem:[%s11796 + $0x10] sm:$0xf]
  %v11802 = vld [vmem:[%s11796 + $0x14] sm:$0xf]
  %v11803 = vld [vmem:[%s11796 + $0x18] sm:$0xf]
  %v11804 = vld [vmem:[%s11796 + $0x1c] sm:$0xf]
  %v11805 = vld [vmem:[%s11796 + $0x20] sm:$0xf]
  %v11806 = vld [vmem:[%s11796 + $0x24] sm:$0xf]
  %v11807 = vld [vmem:[%s11796 + $0x28] sm:$0xf]
  %v11808 = vld [vmem:[%s11796 + $0x2c] sm:$0xf]
  %v11809 = vld [vmem:[%s11796 + $0x30] sm:$0xf]
  %v11810 = vld [vmem:[%s11796 + $0x34] sm:$0xf]
  %v11811 = vld [vmem:[%s11796 + $0x38] sm:$0xf]
  %v11812 = vld [vmem:[%s11796 + $0x3c] sm:$0xf]
  %v11829 = vunpack.c.l.b16 %v11797
  %v11830 = vunpack.c.l.b16 %v11798
  %v11831 = vunpack.c.l.b16 %v11799
  %v11832 = vunpack.c.l.b16 %v11800
  %v11833 = vunpack.c.l.b16 %v11801
  %v11834 = vunpack.c.l.b16 %v11802
  %v11835 = vunpack.c.l.b16 %v11803
  %v11836 = vunpack.c.l.b16 %v11804
  %v11837 = vunpack.c.l.b16 %v11805
  %v11838 = vunpack.c.l.b16 %v11806
  %v11839 = vunpack.c.l.b16 %v11807
  %v11840 = vunpack.c.l.b16 %v11808
  %v11841 = vunpack.c.l.b16 %v11809
  %v11842 = vunpack.c.l.b16 %v11810
  %v11843 = vunpack.c.l.b16 %v11811
  %v11844 = vunpack.c.l.b16 %v11812
  %v11845 = vpack.c.b16 %v11830, %v11829
  %v11846 = vpack.c.b16 %v11832, %v11831
  %v11847 = vpack.c.b16 %v11834, %v11833
  %v11848 = vpack.c.b16 %v11836, %v11835
  %v11849 = vpack.c.b16 %v11838, %v11837
  %v11850 = vpack.c.b16 %v11840, %v11839
  %v11851 = vpack.c.b16 %v11842, %v11841
  %v11852 = vpack.c.b16 %v11844, %v11843
  %11861 = vmatpush.bf16.msra.mxu0 %v10065
  %11862 = vmatpush.bf16.msra.mxu0 %v10064
  %11863 = vmatpush.bf16.msra.mxu0 %v10063
  %11864 = vmatpush.bf16.msra.mxu0 %v10062
  %11865 = vmatpush.bf16.msra.mxu0 %v10061
  %11866 = vmatpush.bf16.msra.mxu0 %v10060
  %11867 = vmatpush.bf16.msra.mxu0 %v10059
  %11868 = vmatpush.bf16.msra.mxu0 %v10058
  %11869 = vmatmul.bf16.gmra.mxu0 %v11845
  %v11870 = vpop.f32.mrf.mxu0
  %v11871 = vadd.f32 0.0, %v11870
  %v11872 = vpop.f32.mrf.mxu0
  %v11873 = vadd.f32 0.0, %v11872
  %11874 = vmatmul.bf16.gmra.mxu0 %v11846
  %v11875 = vpop.f32.mrf.mxu0
  %v11876 = vadd.f32 0.0, %v11875
  %v11877 = vpop.f32.mrf.mxu0
  %v11878 = vadd.f32 0.0, %v11877
  %11879 = vmatmul.bf16.gmra.mxu0 %v11847
  %v11880 = vpop.f32.mrf.mxu0
  %v11881 = vadd.f32 0.0, %v11880
  %v11882 = vpop.f32.mrf.mxu0
  %v11883 = vadd.f32 0.0, %v11882
  %11884 = vmatmul.bf16.gmra.mxu0 %v11848
  %v11885 = vpop.f32.mrf.mxu0
  %v11886 = vadd.f32 0.0, %v11885
  %v11887 = vpop.f32.mrf.mxu0
  %v11888 = vadd.f32 0.0, %v11887
  %11889 = vmatmul.bf16.gmra.mxu0 %v11849
  %v11890 = vpop.f32.mrf.mxu0
  %v11891 = vadd.f32 0.0, %v11890
  %v11892 = vpop.f32.mrf.mxu0
  %v11893 = vadd.f32 0.0, %v11892
  %11894 = vmatmul.bf16.gmra.mxu0 %v11850
  %v11895 = vpop.f32.mrf.mxu0
  %v11896 = vadd.f32 0.0, %v11895
  %v11897 = vpop.f32.mrf.mxu0
  %v11898 = vadd.f32 0.0, %v11897
  %11899 = vmatmul.bf16.gmra.mxu0 %v11851
  %v11900 = vpop.f32.mrf.mxu0
  %v11901 = vadd.f32 0.0, %v11900
  %v11902 = vpop.f32.mrf.mxu0
  %v11903 = vadd.f32 0.0, %v11902
  %11904 = vmatmul.bf16.gmra.mxu0 %v11852
  %v11905 = vpop.f32.mrf.mxu0
  %v11906 = vadd.f32 0.0, %v11905
  %v11907 = vpop.f32.mrf.mxu0
  %v11908 = vadd.f32 0.0, %v11907
  %11909 = vdwg.mxu0
  %v11910 = vpack.c.bf16 %v11873, %v11871
  %v11911 = vpack.c.bf16 %v11878, %v11876
  %v11912 = vpack.c.bf16 %v11883, %v11881
  %v11913 = vpack.c.bf16 %v11888, %v11886
  %v11914 = vpack.c.bf16 %v11893, %v11891
  %v11915 = vpack.c.bf16 %v11898, %v11896
  %v11916 = vpack.c.bf16 %v11903, %v11901
  %v11917 = vpack.c.bf16 %v11908, %v11906
  %s11918 = scalar_lea.vmem %s9, 448
  %v11919 = vld [vmem:[%s11918] sm:$0xf]
  %v11920 = vld [vmem:[%s11918 + $0x4] sm:$0xf]
  %v11921 = vld [vmem:[%s11918 + $0x8] sm:$0xf]
  %v11922 = vld [vmem:[%s11918 + $0xc] sm:$0xf]
  %v11923 = vld [vmem:[%s11918 + $0x10] sm:$0xf]
  %v11924 = vld [vmem:[%s11918 + $0x14] sm:$0xf]
  %v11925 = vld [vmem:[%s11918 + $0x18] sm:$0xf]
  %v11926 = vld [vmem:[%s11918 + $0x1c] sm:$0xf]
  %v11927 = vld [vmem:[%s11918 + $0x20] sm:$0xf]
  %v11928 = vld [vmem:[%s11918 + $0x24] sm:$0xf]
  %v11929 = vld [vmem:[%s11918 + $0x28] sm:$0xf]
  %v11930 = vld [vmem:[%s11918 + $0x2c] sm:$0xf]
  %v11931 = vld [vmem:[%s11918 + $0x30] sm:$0xf]
  %v11932 = vld [vmem:[%s11918 + $0x34] sm:$0xf]
  %v11933 = vld [vmem:[%s11918 + $0x38] sm:$0xf]
  %v11934 = vld [vmem:[%s11918 + $0x3c] sm:$0xf]
  %v11951 = vunpack.c.l.b16 %v11919
  %v11952 = vunpack.c.l.b16 %v11920
  %v11953 = vunpack.c.l.b16 %v11921
  %v11954 = vunpack.c.l.b16 %v11922
  %v11955 = vunpack.c.l.b16 %v11923
  %v11956 = vunpack.c.l.b16 %v11924
  %v11957 = vunpack.c.l.b16 %v11925
  %v11958 = vunpack.c.l.b16 %v11926
  %v11959 = vunpack.c.l.b16 %v11927
  %v11960 = vunpack.c.l.b16 %v11928
  %v11961 = vunpack.c.l.b16 %v11929
  %v11962 = vunpack.c.l.b16 %v11930
  %v11963 = vunpack.c.l.b16 %v11931
  %v11964 = vunpack.c.l.b16 %v11932
  %v11965 = vunpack.c.l.b16 %v11933
  %v11966 = vunpack.c.l.b16 %v11934
  %v11967 = vpack.c.b16 %v11952, %v11951
  %v11968 = vpack.c.b16 %v11954, %v11953
  %v11969 = vpack.c.b16 %v11956, %v11955
  %v11970 = vpack.c.b16 %v11958, %v11957
  %v11971 = vpack.c.b16 %v11960, %v11959
  %v11972 = vpack.c.b16 %v11962, %v11961
  %v11973 = vpack.c.b16 %v11964, %v11963
  %v11974 = vpack.c.b16 %v11966, %v11965
  %11983 = vmatpush.bf16.msra.mxu0 %v11974
  %11984 = vmatpush.bf16.msra.mxu0 %v11973
  %11985 = vmatpush.bf16.msra.mxu0 %v11972
  %11986 = vmatpush.bf16.msra.mxu0 %v11971
  %11987 = vmatpush.bf16.msra.mxu0 %v11970
  %11988 = vmatpush.bf16.msra.mxu0 %v11969
  %11989 = vmatpush.bf16.msra.mxu0 %v11968
  %11990 = vmatpush.bf16.msra.mxu0 %v11967
  %11991 = vmatmul.bf16.gmra.mxu0 %v11910
  %v11992 = vpop.f32.mrf.mxu0
  %v11993 = vadd.f32 0.0, %v11992
  %v11994 = vpop.f32.mrf.mxu0
  %v11995 = vadd.f32 0.0, %v11994
  %11996 = vmatmul.bf16.gmra.mxu0 %v11911
  %v11997 = vpop.f32.mrf.mxu0
  %v11998 = vadd.f32 0.0, %v11997
  %v11999 = vpop.f32.mrf.mxu0
  %v12000 = vadd.f32 0.0, %v11999
  %12001 = vmatmul.bf16.gmra.mxu0 %v11912
  %v12002 = vpop.f32.mrf.mxu0
  %v12003 = vadd.f32 0.0, %v12002
  %v12004 = vpop.f32.mrf.mxu0
  %v12005 = vadd.f32 0.0, %v12004
  %12006 = vmatmul.bf16.gmra.mxu0 %v11913
  %v12007 = vpop.f32.mrf.mxu0
  %v12008 = vadd.f32 0.0, %v12007
  %v12009 = vpop.f32.mrf.mxu0
  %v12010 = vadd.f32 0.0, %v12009
  %12011 = vmatmul.bf16.gmra.mxu0 %v11914
  %v12012 = vpop.f32.mrf.mxu0
  %v12013 = vadd.f32 0.0, %v12012
  %v12014 = vpop.f32.mrf.mxu0
  %v12015 = vadd.f32 0.0, %v12014
  %12016 = vmatmul.bf16.gmra.mxu0 %v11915
  %v12017 = vpop.f32.mrf.mxu0
  %v12018 = vadd.f32 0.0, %v12017
  %v12019 = vpop.f32.mrf.mxu0
  %v12020 = vadd.f32 0.0, %v12019
  %12021 = vmatmul.bf16.gmra.mxu0 %v11916
  %v12022 = vpop.f32.mrf.mxu0
  %v12023 = vadd.f32 0.0, %v12022
  %v12024 = vpop.f32.mrf.mxu0
  %v12025 = vadd.f32 0.0, %v12024
  %12026 = vmatmul.bf16.gmra.mxu0 %v11917
  %v12027 = vpop.f32.mrf.mxu0
  %v12028 = vadd.f32 0.0, %v12027
  %v12029 = vpop.f32.mrf.mxu0
  %v12030 = vadd.f32 0.0, %v12029
  %12031 = vdwg.mxu0
  %v12032 = vadd.f32 %v11780, %v11993
  %v12033 = vadd.f32 %v11781, %v11995
  %v12034 = vadd.f32 %v11782, %v11998
  %v12035 = vadd.f32 %v11783, %v12000
  %v12036 = vadd.f32 %v11784, %v12003
  %v12037 = vadd.f32 %v11785, %v12005
  %v12038 = vadd.f32 %v11786, %v12008
  %v12039 = vadd.f32 %v11787, %v12010
  %v12040 = vadd.f32 %v11788, %v12013
  %v12041 = vadd.f32 %v11789, %v12015
  %v12042 = vadd.f32 %v11790, %v12018
  %v12043 = vadd.f32 %v11791, %v12020
  %v12044 = vadd.f32 %v11792, %v12023
  %v12045 = vadd.f32 %v11793, %v12025
  %v12046 = vadd.f32 %v11794, %v12028
  %v12047 = vadd.f32 %v11795, %v12030
  %s12048 = scalar_lea.vmem %s8, 512
  %v12049 = vld [vmem:[%s12048] sm:$0xf]
  %v12050 = vld [vmem:[%s12048 + $0x4] sm:$0xf]
  %v12051 = vld [vmem:[%s12048 + $0x8] sm:$0xf]
  %v12052 = vld [vmem:[%s12048 + $0xc] sm:$0xf]
  %v12053 = vld [vmem:[%s12048 + $0x10] sm:$0xf]
  %v12054 = vld [vmem:[%s12048 + $0x14] sm:$0xf]
  %v12055 = vld [vmem:[%s12048 + $0x18] sm:$0xf]
  %v12056 = vld [vmem:[%s12048 + $0x1c] sm:$0xf]
  %v12057 = vld [vmem:[%s12048 + $0x20] sm:$0xf]
  %v12058 = vld [vmem:[%s12048 + $0x24] sm:$0xf]
  %v12059 = vld [vmem:[%s12048 + $0x28] sm:$0xf]
  %v12060 = vld [vmem:[%s12048 + $0x2c] sm:$0xf]
  %v12061 = vld [vmem:[%s12048 + $0x30] sm:$0xf]
  %v12062 = vld [vmem:[%s12048 + $0x34] sm:$0xf]
  %v12063 = vld [vmem:[%s12048 + $0x38] sm:$0xf]
  %v12064 = vld [vmem:[%s12048 + $0x3c] sm:$0xf]
  %v12081 = vunpack.c.l.b16 %v12049
  %v12082 = vunpack.c.l.b16 %v12050
  %v12083 = vunpack.c.l.b16 %v12051
  %v12084 = vunpack.c.l.b16 %v12052
  %v12085 = vunpack.c.l.b16 %v12053
  %v12086 = vunpack.c.l.b16 %v12054
  %v12087 = vunpack.c.l.b16 %v12055
  %v12088 = vunpack.c.l.b16 %v12056
  %v12089 = vunpack.c.l.b16 %v12057
  %v12090 = vunpack.c.l.b16 %v12058
  %v12091 = vunpack.c.l.b16 %v12059
  %v12092 = vunpack.c.l.b16 %v12060
  %v12093 = vunpack.c.l.b16 %v12061
  %v12094 = vunpack.c.l.b16 %v12062
  %v12095 = vunpack.c.l.b16 %v12063
  %v12096 = vunpack.c.l.b16 %v12064
  %v12097 = vpack.c.b16 %v12082, %v12081
  %v12098 = vpack.c.b16 %v12084, %v12083
  %v12099 = vpack.c.b16 %v12086, %v12085
  %v12100 = vpack.c.b16 %v12088, %v12087
  %v12101 = vpack.c.b16 %v12090, %v12089
  %v12102 = vpack.c.b16 %v12092, %v12091
  %v12103 = vpack.c.b16 %v12094, %v12093
  %v12104 = vpack.c.b16 %v12096, %v12095
  %12113 = vmatpush.bf16.msra.mxu0 %v10065
  %12114 = vmatpush.bf16.msra.mxu0 %v10064
  %12115 = vmatpush.bf16.msra.mxu0 %v10063
  %12116 = vmatpush.bf16.msra.mxu0 %v10062
  %12117 = vmatpush.bf16.msra.mxu0 %v10061
  %12118 = vmatpush.bf16.msra.mxu0 %v10060
  %12119 = vmatpush.bf16.msra.mxu0 %v10059
  %12120 = vmatpush.bf16.msra.mxu0 %v10058
  %12121 = vmatmul.bf16.gmra.mxu0 %v12097
  %v12122 = vpop.f32.mrf.mxu0
  %v12123 = vadd.f32 0.0, %v12122
  %v12124 = vpop.f32.mrf.mxu0
  %v12125 = vadd.f32 0.0, %v12124
  %12126 = vmatmul.bf16.gmra.mxu0 %v12098
  %v12127 = vpop.f32.mrf.mxu0
  %v12128 = vadd.f32 0.0, %v12127
  %v12129 = vpop.f32.mrf.mxu0
  %v12130 = vadd.f32 0.0, %v12129
  %12131 = vmatmul.bf16.gmra.mxu0 %v12099
  %v12132 = vpop.f32.mrf.mxu0
  %v12133 = vadd.f32 0.0, %v12132
  %v12134 = vpop.f32.mrf.mxu0
  %v12135 = vadd.f32 0.0, %v12134
  %12136 = vmatmul.bf16.gmra.mxu0 %v12100
  %v12137 = vpop.f32.mrf.mxu0
  %v12138 = vadd.f32 0.0, %v12137
  %v12139 = vpop.f32.mrf.mxu0
  %v12140 = vadd.f32 0.0, %v12139
  %12141 = vmatmul.bf16.gmra.mxu0 %v12101
  %v12142 = vpop.f32.mrf.mxu0
  %v12143 = vadd.f32 0.0, %v12142
  %v12144 = vpop.f32.mrf.mxu0
  %v12145 = vadd.f32 0.0, %v12144
  %12146 = vmatmul.bf16.gmra.mxu0 %v12102
  %v12147 = vpop.f32.mrf.mxu0
  %v12148 = vadd.f32 0.0, %v12147
  %v12149 = vpop.f32.mrf.mxu0
  %v12150 = vadd.f32 0.0, %v12149
  %12151 = vmatmul.bf16.gmra.mxu0 %v12103
  %v12152 = vpop.f32.mrf.mxu0
  %v12153 = vadd.f32 0.0, %v12152
  %v12154 = vpop.f32.mrf.mxu0
  %v12155 = vadd.f32 0.0, %v12154
  %12156 = vmatmul.bf16.gmra.mxu0 %v12104
  %v12157 = vpop.f32.mrf.mxu0
  %v12158 = vadd.f32 0.0, %v12157
  %v12159 = vpop.f32.mrf.mxu0
  %v12160 = vadd.f32 0.0, %v12159
  %12161 = vdwg.mxu0
  %v12162 = vpack.c.bf16 %v12125, %v12123
  %v12163 = vpack.c.bf16 %v12130, %v12128
  %v12164 = vpack.c.bf16 %v12135, %v12133
  %v12165 = vpack.c.bf16 %v12140, %v12138
  %v12166 = vpack.c.bf16 %v12145, %v12143
  %v12167 = vpack.c.bf16 %v12150, %v12148
  %v12168 = vpack.c.bf16 %v12155, %v12153
  %v12169 = vpack.c.bf16 %v12160, %v12158
  %s12170 = scalar_lea.vmem %s9, 512
  %v12171 = vld [vmem:[%s12170] sm:$0xf]
  %v12172 = vld [vmem:[%s12170 + $0x4] sm:$0xf]
  %v12173 = vld [vmem:[%s12170 + $0x8] sm:$0xf]
  %v12174 = vld [vmem:[%s12170 + $0xc] sm:$0xf]
  %v12175 = vld [vmem:[%s12170 + $0x10] sm:$0xf]
  %v12176 = vld [vmem:[%s12170 + $0x14] sm:$0xf]
  %v12177 = vld [vmem:[%s12170 + $0x18] sm:$0xf]
  %v12178 = vld [vmem:[%s12170 + $0x1c] sm:$0xf]
  %v12179 = vld [vmem:[%s12170 + $0x20] sm:$0xf]
  %v12180 = vld [vmem:[%s12170 + $0x24] sm:$0xf]
  %v12181 = vld [vmem:[%s12170 + $0x28] sm:$0xf]
  %v12182 = vld [vmem:[%s12170 + $0x2c] sm:$0xf]
  %v12183 = vld [vmem:[%s12170 + $0x30] sm:$0xf]
  %v12184 = vld [vmem:[%s12170 + $0x34] sm:$0xf]
  %v12185 = vld [vmem:[%s12170 + $0x38] sm:$0xf]
  %v12186 = vld [vmem:[%s12170 + $0x3c] sm:$0xf]
  %v12203 = vunpack.c.l.b16 %v12171
  %v12204 = vunpack.c.l.b16 %v12172
  %v12205 = vunpack.c.l.b16 %v12173
  %v12206 = vunpack.c.l.b16 %v12174
  %v12207 = vunpack.c.l.b16 %v12175
  %v12208 = vunpack.c.l.b16 %v12176
  %v12209 = vunpack.c.l.b16 %v12177
  %v12210 = vunpack.c.l.b16 %v12178
  %v12211 = vunpack.c.l.b16 %v12179
  %v12212 = vunpack.c.l.b16 %v12180
  %v12213 = vunpack.c.l.b16 %v12181
  %v12214 = vunpack.c.l.b16 %v12182
  %v12215 = vunpack.c.l.b16 %v12183
  %v12216 = vunpack.c.l.b16 %v12184
  %v12217 = vunpack.c.l.b16 %v12185
  %v12218 = vunpack.c.l.b16 %v12186
  %v12219 = vpack.c.b16 %v12204, %v12203
  %v12220 = vpack.c.b16 %v12206, %v12205
  %v12221 = vpack.c.b16 %v12208, %v12207
  %v12222 = vpack.c.b16 %v12210, %v12209
  %v12223 = vpack.c.b16 %v12212, %v12211
  %v12224 = vpack.c.b16 %v12214, %v12213
  %v12225 = vpack.c.b16 %v12216, %v12215
  %v12226 = vpack.c.b16 %v12218, %v12217
  %12235 = vmatpush.bf16.msra.mxu0 %v12226
  %12236 = vmatpush.bf16.msra.mxu0 %v12225
  %12237 = vmatpush.bf16.msra.mxu0 %v12224
  %12238 = vmatpush.bf16.msra.mxu0 %v12223
  %12239 = vmatpush.bf16.msra.mxu0 %v12222
  %12240 = vmatpush.bf16.msra.mxu0 %v12221
  %12241 = vmatpush.bf16.msra.mxu0 %v12220
  %12242 = vmatpush.bf16.msra.mxu0 %v12219
  %12243 = vmatmul.bf16.gmra.mxu0 %v12162
  %v12244 = vpop.f32.mrf.mxu0
  %v12245 = vadd.f32 0.0, %v12244
  %v12246 = vpop.f32.mrf.mxu0
  %v12247 = vadd.f32 0.0, %v12246
  %12248 = vmatmul.bf16.gmra.mxu0 %v12163
  %v12249 = vpop.f32.mrf.mxu0
  %v12250 = vadd.f32 0.0, %v12249
  %v12251 = vpop.f32.mrf.mxu0
  %v12252 = vadd.f32 0.0, %v12251
  %12253 = vmatmul.bf16.gmra.mxu0 %v12164
  %v12254 = vpop.f32.mrf.mxu0
  %v12255 = vadd.f32 0.0, %v12254
  %v12256 = vpop.f32.mrf.mxu0
  %v12257 = vadd.f32 0.0, %v12256
  %12258 = vmatmul.bf16.gmra.mxu0 %v12165
  %v12259 = vpop.f32.mrf.mxu0
  %v12260 = vadd.f32 0.0, %v12259
  %v12261 = vpop.f32.mrf.mxu0
  %v12262 = vadd.f32 0.0, %v12261
  %12263 = vmatmul.bf16.gmra.mxu0 %v12166
  %v12264 = vpop.f32.mrf.mxu0
  %v12265 = vadd.f32 0.0, %v12264
  %v12266 = vpop.f32.mrf.mxu0
  %v12267 = vadd.f32 0.0, %v12266
  %12268 = vmatmul.bf16.gmra.mxu0 %v12167
  %v12269 = vpop.f32.mrf.mxu0
  %v12270 = vadd.f32 0.0, %v12269
  %v12271 = vpop.f32.mrf.mxu0
  %v12272 = vadd.f32 0.0, %v12271
  %12273 = vmatmul.bf16.gmra.mxu0 %v12168
  %v12274 = vpop.f32.mrf.mxu0
  %v12275 = vadd.f32 0.0, %v12274
  %v12276 = vpop.f32.mrf.mxu0
  %v12277 = vadd.f32 0.0, %v12276
  %12278 = vmatmul.bf16.gmra.mxu0 %v12169
  %v12279 = vpop.f32.mrf.mxu0
  %v12280 = vadd.f32 0.0, %v12279
  %v12281 = vpop.f32.mrf.mxu0
  %v12282 = vadd.f32 0.0, %v12281
  %12283 = vdwg.mxu0
  %v12284 = vadd.f32 %v12032, %v12245
  %v12285 = vadd.f32 %v12033, %v12247
  %v12286 = vadd.f32 %v12034, %v12250
  %v12287 = vadd.f32 %v12035, %v12252
  %v12288 = vadd.f32 %v12036, %v12255
  %v12289 = vadd.f32 %v12037, %v12257
  %v12290 = vadd.f32 %v12038, %v12260
  %v12291 = vadd.f32 %v12039, %v12262
  %v12292 = vadd.f32 %v12040, %v12265
  %v12293 = vadd.f32 %v12041, %v12267
  %v12294 = vadd.f32 %v12042, %v12270
  %v12295 = vadd.f32 %v12043, %v12272
  %v12296 = vadd.f32 %v12044, %v12275
  %v12297 = vadd.f32 %v12045, %v12277
  %v12298 = vadd.f32 %v12046, %v12280
  %v12299 = vadd.f32 %v12047, %v12282
  %v12300 = vld [vmem:[%s10] sm:$0x1]
  %v12301 = vld [vmem:[%s11] sm:$0x1]
  %v12302 = vadd.f32 %v12284, %v12285
  %v12303 = vadd.f32 %v12302, %v12286
  %v12304 = vadd.f32 %v12303, %v12287
  %v12305 = vadd.f32 %v12304, %v12288
  %v12306 = vadd.f32 %v12305, %v12289
  %v12307 = vadd.f32 %v12306, %v12290
  %v12308 = vadd.f32 %v12307, %v12291
  %v12309 = vadd.f32 %v12308, %v12292
  %v12310 = vadd.f32 %v12309, %v12293
  %v12311 = vadd.f32 %v12310, %v12294
  %v12312 = vadd.f32 %v12311, %v12295
  %v12313 = vadd.f32 %v12312, %v12296
  %v12314 = vadd.f32 %v12313, %v12297
  %v12315 = vadd.f32 %v12314, %v12298
  %v12316 = vadd.f32 %v12315, %v12299
  %v12317 = vrot.slane %v12316, 4
  %v12318 = vadd.f32 %v12316, %v12317
  %v12319 = vrot.slane %v12318, 2
  %v12320 = vadd.f32 %v12318, %v12319
  %v12321 = vrot.slane %v12320, 1
  %v12322 = vadd.f32 %v12320, %v12321
  %v12323 = vmul.f32 %v12322, 0.055555556
  %v12324 = vsub.f32 %v12284, %v12323
  %v12325 = vsub.f32 %v12285, %v12323
  %v12326 = vsub.f32 %v12286, %v12323
  %v12327 = vsub.f32 %v12287, %v12323
  %v12328 = vsub.f32 %v12288, %v12323
  %v12329 = vsub.f32 %v12289, %v12323
  %v12330 = vsub.f32 %v12290, %v12323
  %v12331 = vsub.f32 %v12291, %v12323
  %v12332 = vsub.f32 %v12292, %v12323
  %v12333 = vsub.f32 %v12293, %v12323
  %v12334 = vsub.f32 %v12294, %v12323
  %v12335 = vsub.f32 %v12295, %v12323
  %v12336 = vsub.f32 %v12296, %v12323
  %v12337 = vsub.f32 %v12297, %v12323
  %v12338 = vsub.f32 %v12298, %v12323
  %v12339 = vsub.f32 %v12299, %v12323
  %vm12340 = vcmp.lt.s32.totalorder %v676, 18
  %vm12341 = vcmp.lt.s32.totalorder %v677, 18
  %vm12342 = vcmp.lt.s32.totalorder %v678, 18
  %vm12343 = vcmp.lt.s32.totalorder %v679, 18
  %vm12344 = vcmp.lt.s32.totalorder %v680, 18
  %vm12345 = vcmp.lt.s32.totalorder %v681, 18
  %vm12346 = vcmp.lt.s32.totalorder %v682, 18
  %vm12347 = vcmp.lt.s32.totalorder %v683, 18
  %vm12348 = vcmp.lt.s32.totalorder %v684, 18
  %vm12349 = vcmp.lt.s32.totalorder %v685, 18
  %vm12350 = vcmp.lt.s32.totalorder %v686, 18
  %vm12351 = vcmp.lt.s32.totalorder %v687, 18
  %vm12352 = vcmp.lt.s32.totalorder %v688, 18
  %vm12353 = vcmp.lt.s32.totalorder %v689, 18
  %vm12354 = vcmp.lt.s32.totalorder %v690, 18
  %vm12355 = vcmp.lt.s32.totalorder %v691, 18
  %v12356 = vsel %vm12340, 1, 0
  %v12357 = vsel %vm12341, 1, 0
  %v12358 = vsel %vm12342, 1, 0
  %v12359 = vsel %vm12343, 1, 0
  %v12360 = vsel %vm12344, 1, 0
  %v12361 = vsel %vm12345, 1, 0
  %v12362 = vsel %vm12346, 1, 0
  %v12363 = vsel %vm12347, 1, 0
  %v12364 = vsel %vm12348, 1, 0
  %v12365 = vsel %vm12349, 1, 0
  %v12366 = vsel %vm12350, 1, 0
  %v12367 = vsel %vm12351, 1, 0
  %v12368 = vsel %vm12352, 1, 0
  %v12369 = vsel %vm12353, 1, 0
  %v12370 = vsel %vm12354, 1, 0
  %v12371 = vsel %vm12355, 1, 0
  %v12372 = vcvt.s32.f32 %v12356
  %v12373 = vcvt.s32.f32 %v12357
  %v12374 = vcvt.s32.f32 %v12358
  %v12375 = vcvt.s32.f32 %v12359
  %v12376 = vcvt.s32.f32 %v12360
  %v12377 = vcvt.s32.f32 %v12361
  %v12378 = vcvt.s32.f32 %v12362
  %v12379 = vcvt.s32.f32 %v12363
  %v12380 = vcvt.s32.f32 %v12364
  %v12381 = vcvt.s32.f32 %v12365
  %v12382 = vcvt.s32.f32 %v12366
  %v12383 = vcvt.s32.f32 %v12367
  %v12384 = vcvt.s32.f32 %v12368
  %v12385 = vcvt.s32.f32 %v12369
  %v12386 = vcvt.s32.f32 %v12370
  %v12387 = vcvt.s32.f32 %v12371
  %v12388 = vmul.f32 %v12324, %v12372
  %v12389 = vmul.f32 %v12325, %v12373
  %v12390 = vmul.f32 %v12326, %v12374
  %v12391 = vmul.f32 %v12327, %v12375
  %v12392 = vmul.f32 %v12328, %v12376
  %v12393 = vmul.f32 %v12329, %v12377
  %v12394 = vmul.f32 %v12330, %v12378
  %v12395 = vmul.f32 %v12331, %v12379
  %v12396 = vmul.f32 %v12332, %v12380
  %v12397 = vmul.f32 %v12333, %v12381
  %v12398 = vmul.f32 %v12334, %v12382
  %v12399 = vmul.f32 %v12335, %v12383
  %v12400 = vmul.f32 %v12336, %v12384
  %v12401 = vmul.f32 %v12337, %v12385
  %v12402 = vmul.f32 %v12338, %v12386
  %v12403 = vmul.f32 %v12339, %v12387
  %v12404 = vmul.f32 %v12388, %v12388
  %v12405 = vmul.f32 %v12389, %v12389
  %v12406 = vmul.f32 %v12390, %v12390
  %v12407 = vmul.f32 %v12391, %v12391
  %v12408 = vmul.f32 %v12392, %v12392
  %v12409 = vmul.f32 %v12393, %v12393
  %v12410 = vmul.f32 %v12394, %v12394
  %v12411 = vmul.f32 %v12395, %v12395
  %v12412 = vmul.f32 %v12396, %v12396
  %v12413 = vmul.f32 %v12397, %v12397
  %v12414 = vmul.f32 %v12398, %v12398
  %v12415 = vmul.f32 %v12399, %v12399
  %v12416 = vmul.f32 %v12400, %v12400
  %v12417 = vmul.f32 %v12401, %v12401
  %v12418 = vmul.f32 %v12402, %v12402
  %v12419 = vmul.f32 %v12403, %v12403
  %v12420 = vadd.f32 %v12404, %v12405
  %v12421 = vadd.f32 %v12420, %v12406
  %v12422 = vadd.f32 %v12421, %v12407
  %v12423 = vadd.f32 %v12422, %v12408
  %v12424 = vadd.f32 %v12423, %v12409
  %v12425 = vadd.f32 %v12424, %v12410
  %v12426 = vadd.f32 %v12425, %v12411
  %v12427 = vadd.f32 %v12426, %v12412
  %v12428 = vadd.f32 %v12427, %v12413
  %v12429 = vadd.f32 %v12428, %v12414
  %v12430 = vadd.f32 %v12429, %v12415
  %v12431 = vadd.f32 %v12430, %v12416
  %v12432 = vadd.f32 %v12431, %v12417
  %v12433 = vadd.f32 %v12432, %v12418
  %v12434 = vadd.f32 %v12433, %v12419
  %v12435 = vrot.slane %v12434, 4
  %v12436 = vadd.f32 %v12434, %v12435
  %v12437 = vrot.slane %v12436, 2
  %v12438 = vadd.f32 %v12436, %v12437
  %v12439 = vrot.slane %v12438, 1
  %v12440 = vadd.f32 %v12438, %v12439
  %v12441 = vmul.f32 %v12440, 0.055555556
  %v12442 = vadd.f32 %v12441, 1e-05
  %v12443 = vrsqrt.pop %v12442
  %v12444 = vmul.f32 %v12443, %v12442
  %v12445 = vmul.f32 %v12444, %v12443
  %v12446 = vmul.f32 0.5, %v12445
  %v12447 = vsub.f32 1.5, %v12446
  %v12448 = vmul.f32 %v12443, %v12447
  %vm12449 = vweird.f32 %v12442
  %vm12450 = vweird.f32 %v12443
  %vm12451 = vmor %vm12449, %vm12450
  %v12452 = vsel %vm12451, %v12443, %v12448
  %v12453 = vmul.f32 %v12300, %v12452
  %v12455 = vperm.slane %v12453, 0
  %v12457 = vmul.f32 %v12324, %v12455
  %v12458 = vmul.f32 %v12325, %v12455
  %v12459 = vmul.f32 %v12326, %v12455
  %v12460 = vmul.f32 %v12327, %v12455
  %v12461 = vmul.f32 %v12328, %v12455
  %v12462 = vmul.f32 %v12329, %v12455
  %v12463 = vmul.f32 %v12330, %v12455
  %v12464 = vmul.f32 %v12331, %v12455
  %v12465 = vmul.f32 %v12332, %v12455
  %v12466 = vmul.f32 %v12333, %v12455
  %v12467 = vmul.f32 %v12334, %v12455
  %v12468 = vmul.f32 %v12335, %v12455
  %v12469 = vmul.f32 %v12336, %v12455
  %v12470 = vmul.f32 %v12337, %v12455
  %v12471 = vmul.f32 %v12338, %v12455
  %v12472 = vmul.f32 %v12339, %v12455
  %v12474 = vperm.slane %v12301, 0
  %v12476 = vadd.f32 %v12457, %v12474
  %v12477 = vadd.f32 %v12458, %v12474
  %v12478 = vadd.f32 %v12459, %v12474
  %v12479 = vadd.f32 %v12460, %v12474
  %v12480 = vadd.f32 %v12461, %v12474
  %v12481 = vadd.f32 %v12462, %v12474
  %v12482 = vadd.f32 %v12463, %v12474
  %v12483 = vadd.f32 %v12464, %v12474
  %v12484 = vadd.f32 %v12465, %v12474
  %v12485 = vadd.f32 %v12466, %v12474
  %v12486 = vadd.f32 %v12467, %v12474
  %v12487 = vadd.f32 %v12468, %v12474
  %v12488 = vadd.f32 %v12469, %v12474
  %v12489 = vadd.f32 %v12470, %v12474
  %v12490 = vadd.f32 %v12471, %v12474
  %v12491 = vadd.f32 %v12472, %v12474
  %v12492 = vmul.f32 %v12476, 0.2
  %v12493 = vmul.f32 %v12477, 0.2
  %v12494 = vmul.f32 %v12478, 0.2
  %v12495 = vmul.f32 %v12479, 0.2
  %v12496 = vmul.f32 %v12480, 0.2
  %v12497 = vmul.f32 %v12481, 0.2
  %v12498 = vmul.f32 %v12482, 0.2
  %v12499 = vmul.f32 %v12483, 0.2
  %v12500 = vmul.f32 %v12484, 0.2
  %v12501 = vmul.f32 %v12485, 0.2
  %v12502 = vmul.f32 %v12486, 0.2
  %v12503 = vmul.f32 %v12487, 0.2
  %v12504 = vmul.f32 %v12488, 0.2
  %v12505 = vmul.f32 %v12489, 0.2
  %v12506 = vmul.f32 %v12490, 0.2
  %v12507 = vmul.f32 %v12491, 0.2
  %v12508 = vmax.f32 %v12476, %v12492
  %v12509 = vmax.f32 %v12477, %v12493
  %v12510 = vmax.f32 %v12478, %v12494
  %v12511 = vmax.f32 %v12479, %v12495
  %v12512 = vmax.f32 %v12480, %v12496
  %v12513 = vmax.f32 %v12481, %v12497
  %v12514 = vmax.f32 %v12482, %v12498
  %v12515 = vmax.f32 %v12483, %v12499
  %v12516 = vmax.f32 %v12484, %v12500
  %v12517 = vmax.f32 %v12485, %v12501
  %v12518 = vmax.f32 %v12486, %v12502
  %v12519 = vmax.f32 %v12487, %v12503
  %v12520 = vmax.f32 %v12488, %v12504
  %v12521 = vmax.f32 %v12489, %v12505
  %v12522 = vmax.f32 %v12490, %v12506
  %v12523 = vmax.f32 %v12491, %v12507
  %v12524 = vpack.c.bf16 %v12509, %v12508
  %v12525 = vpack.c.bf16 %v12511, %v12510
  %v12526 = vpack.c.bf16 %v12513, %v12512
  %v12527 = vpack.c.bf16 %v12515, %v12514
  %v12528 = vpack.c.bf16 %v12517, %v12516
  %v12529 = vpack.c.bf16 %v12519, %v12518
  %v12530 = vpack.c.bf16 %v12521, %v12520
  %v12531 = vpack.c.bf16 %v12523, %v12522
  %v12532 = vld [vmem:[%s12] sm:$0xf]
  %12533 = vmatpush.bf16.msra.mxu0 %v12531
  %12534 = vmatpush.bf16.msra.mxu0 %v12530
  %12535 = vmatpush.bf16.msra.mxu0 %v12529
  %12536 = vmatpush.bf16.msra.mxu0 %v12528
  %12537 = vmatpush.bf16.msra.mxu0 %v12527
  %12538 = vmatpush.bf16.msra.mxu0 %v12526
  %12539 = vmatpush.bf16.msra.mxu0 %v12525
  %12540 = vmatpush.bf16.msra.mxu0 %v12524
  %12541 = vmatmul.bf16.gmra.mxu0 %v12532
  %v12542 = vpop.f32.mrf.mxu0
  %v12543 = vadd.f32 0.0, %v12542
  %v12544 = vpop.f32.mrf.mxu0
  %12545 = vdwg.mxu0
  %v12546 = vpack.c.bf16 %v12543, %v12543
  %v12547 = vld [vmem:[%s13] sm:$0xf]
  %v12548 = vld [vmem:[%s13 + $0x4] sm:$0xf]
  %v12549 = vld [vmem:[%s13 + $0x8] sm:$0xf]
  %v12550 = vld [vmem:[%s13 + $0xc] sm:$0xf]
  %v12551 = vld [vmem:[%s13 + $0x10] sm:$0xf]
  %v12552 = vld [vmem:[%s13 + $0x14] sm:$0xf]
  %v12553 = vld [vmem:[%s13 + $0x18] sm:$0xf]
  %v12554 = vld [vmem:[%s13 + $0x1c] sm:$0xf]
  %v12555 = vld [vmem:[%s13 + $0x20] sm:$0xf]
  %v12556 = vld [vmem:[%s13 + $0x24] sm:$0xf]
  %v12557 = vld [vmem:[%s13 + $0x28] sm:$0xf]
  %v12558 = vld [vmem:[%s13 + $0x2c] sm:$0xf]
  %v12559 = vld [vmem:[%s13 + $0x30] sm:$0xf]
  %v12560 = vld [vmem:[%s13 + $0x34] sm:$0xf]
  %v12561 = vld [vmem:[%s13 + $0x38] sm:$0xf]
  %v12562 = vld [vmem:[%s13 + $0x3c] sm:$0xf]
  %s12563 = scalar_lea.vmem %s12, 4
  %v12564 = vld [vmem:[%s12563] sm:$0xf]
  %12565 = vmatpush.bf16.msra.mxu0 %v12531
  %12566 = vmatpush.bf16.msra.mxu0 %v12530
  %12567 = vmatpush.bf16.msra.mxu0 %v12529
  %12568 = vmatpush.bf16.msra.mxu0 %v12528
  %12569 = vmatpush.bf16.msra.mxu0 %v12527
  %12570 = vmatpush.bf16.msra.mxu0 %v12526
  %12571 = vmatpush.bf16.msra.mxu0 %v12525
  %12572 = vmatpush.bf16.msra.mxu0 %v12524
  %12573 = vmatmul.bf16.gmra.mxu0 %v12564
  %v12574 = vpop.f32.mrf.mxu0
  %v12575 = vadd.f32 0.0, %v12574
  %v12576 = vpop.f32.mrf.mxu0
  %12577 = vdwg.mxu0
  %v12578 = vpack.c.bf16 %v12575, %v12575
  %s12579 = scalar_lea.vmem %s13, 64
  %v12580 = vld [vmem:[%s12579] sm:$0xf]
  %v12581 = vld [vmem:[%s12579 + $0x4] sm:$0xf]
  %v12582 = vld [vmem:[%s12579 + $0x8] sm:$0xf]
  %v12583 = vld [vmem:[%s12579 + $0xc] sm:$0xf]
  %v12584 = vld [vmem:[%s12579 + $0x10] sm:$0xf]
  %v12585 = vld [vmem:[%s12579 + $0x14] sm:$0xf]
  %v12586 = vld [vmem:[%s12579 + $0x18] sm:$0xf]
  %v12587 = vld [vmem:[%s12579 + $0x1c] sm:$0xf]
  %v12588 = vld [vmem:[%s12579 + $0x20] sm:$0xf]
  %v12589 = vld [vmem:[%s12579 + $0x24] sm:$0xf]
  %v12590 = vld [vmem:[%s12579 + $0x28] sm:$0xf]
  %v12591 = vld [vmem:[%s12579 + $0x2c] sm:$0xf]
  %v12592 = vld [vmem:[%s12579 + $0x30] sm:$0xf]
  %v12593 = vld [vmem:[%s12579 + $0x34] sm:$0xf]
  %v12594 = vld [vmem:[%s12579 + $0x38] sm:$0xf]
  %v12595 = vld [vmem:[%s12579 + $0x3c] sm:$0xf]
  %v12612 = vunpack.c.l.b16 %v12580
  %v12613 = vunpack.c.l.b16 %v12581
  %v12614 = vunpack.c.l.b16 %v12582
  %v12615 = vunpack.c.l.b16 %v12583
  %v12616 = vunpack.c.l.b16 %v12584
  %v12617 = vunpack.c.l.b16 %v12585
  %v12618 = vunpack.c.l.b16 %v12586
  %v12619 = vunpack.c.l.b16 %v12587
  %v12620 = vunpack.c.l.b16 %v12588
  %v12621 = vunpack.c.l.b16 %v12589
  %v12622 = vunpack.c.l.b16 %v12590
  %v12623 = vunpack.c.l.b16 %v12591
  %v12624 = vunpack.c.l.b16 %v12592
  %v12625 = vunpack.c.l.b16 %v12593
  %v12626 = vunpack.c.l.b16 %v12594
  %v12627 = vunpack.c.l.b16 %v12595
  %v12628 = vpack.c.b16 %v12613, %v12612
  %v12629 = vpack.c.b16 %v12615, %v12614
  %v12630 = vpack.c.b16 %v12617, %v12616
  %v12631 = vpack.c.b16 %v12619, %v12618
  %v12632 = vpack.c.b16 %v12621, %v12620
  %v12633 = vpack.c.b16 %v12623, %v12622
  %v12634 = vpack.c.b16 %v12625, %v12624
  %v12635 = vpack.c.b16 %v12627, %v12626
  %12644 = vmatpush.bf16.msra.mxu0 %v12635
  %12645 = vmatpush.bf16.msra.mxu0 %v12634
  %12646 = vmatpush.bf16.msra.mxu0 %v12633
  %12647 = vmatpush.bf16.msra.mxu0 %v12632
  %12648 = vmatpush.bf16.msra.mxu0 %v12631
  %12649 = vmatpush.bf16.msra.mxu0 %v12630
  %12650 = vmatpush.bf16.msra.mxu0 %v12629
  %12651 = vmatpush.bf16.msra.mxu0 %v12628
  %12652 = vmatmul.bf16.gmra.mxu0 %v12578
  %v12653 = vpop.f32.mrf.mxu0
  %v12654 = vadd.f32 0.0, %v12653
  %v12655 = vpop.f32.mrf.mxu0
  %12656 = vdwg.mxu0
  %v12673 = vunpack.c.l.b16 %v12547
  %v12674 = vunpack.c.l.b16 %v12548
  %v12675 = vunpack.c.l.b16 %v12549
  %v12676 = vunpack.c.l.b16 %v12550
  %v12677 = vunpack.c.l.b16 %v12551
  %v12678 = vunpack.c.l.b16 %v12552
  %v12679 = vunpack.c.l.b16 %v12553
  %v12680 = vunpack.c.l.b16 %v12554
  %v12681 = vunpack.c.l.b16 %v12555
  %v12682 = vunpack.c.l.b16 %v12556
  %v12683 = vunpack.c.l.b16 %v12557
  %v12684 = vunpack.c.l.b16 %v12558
  %v12685 = vunpack.c.l.b16 %v12559
  %v12686 = vunpack.c.l.b16 %v12560
  %v12687 = vunpack.c.l.b16 %v12561
  %v12688 = vunpack.c.l.b16 %v12562
  %v12689 = vpack.c.b16 %v12674, %v12673
  %v12690 = vpack.c.b16 %v12676, %v12675
  %v12691 = vpack.c.b16 %v12678, %v12677
  %v12692 = vpack.c.b16 %v12680, %v12679
  %v12693 = vpack.c.b16 %v12682, %v12681
  %v12694 = vpack.c.b16 %v12684, %v12683
  %v12695 = vpack.c.b16 %v12686, %v12685
  %v12696 = vpack.c.b16 %v12688, %v12687
  %12705 = vmatpush.bf16.msra.mxu0 %v12696
  %12706 = vmatpush.bf16.msra.mxu0 %v12695
  %12707 = vmatpush.bf16.msra.mxu0 %v12694
  %12708 = vmatpush.bf16.msra.mxu0 %v12693
  %12709 = vmatpush.bf16.msra.mxu0 %v12692
  %12710 = vmatpush.bf16.msra.mxu0 %v12691
  %12711 = vmatpush.bf16.msra.mxu0 %v12690
  %12712 = vmatpush.bf16.msra.mxu0 %v12689
  %12713 = vmatmul.bf16.gmra.mxu0 %v12546
  %v12714 = vpop.f32.mrf.mxu0
  %v12715 = vadd.f32 %v12654, %v12714
  %v12716 = vpop.f32.mrf.mxu0
  %12717 = vdwg.mxu0
  %s12718 = scalar_lea.vmem %s12, 8
  %v12719 = vld [vmem:[%s12718] sm:$0xf]
  %12720 = vmatpush.bf16.msra.mxu0 %v12531
  %12721 = vmatpush.bf16.msra.mxu0 %v12530
  %12722 = vmatpush.bf16.msra.mxu0 %v12529
  %12723 = vmatpush.bf16.msra.mxu0 %v12528
  %12724 = vmatpush.bf16.msra.mxu0 %v12527
  %12725 = vmatpush.bf16.msra.mxu0 %v12526
  %12726 = vmatpush.bf16.msra.mxu0 %v12525
  %12727 = vmatpush.bf16.msra.mxu0 %v12524
  %12728 = vmatmul.bf16.gmra.mxu0 %v12719
  %v12729 = vpop.f32.mrf.mxu0
  %v12730 = vadd.f32 0.0, %v12729
  %v12731 = vpop.f32.mrf.mxu0
  %12732 = vdwg.mxu0
  %v12733 = vpack.c.bf16 %v12730, %v12730
  %s12734 = scalar_lea.vmem %s13, 128
  %v12735 = vld [vmem:[%s12734] sm:$0xf]
  %v12736 = vld [vmem:[%s12734 + $0x4] sm:$0xf]
  %v12737 = vld [vmem:[%s12734 + $0x8] sm:$0xf]
  %v12738 = vld [vmem:[%s12734 + $0xc] sm:$0xf]
  %v12739 = vld [vmem:[%s12734 + $0x10] sm:$0xf]
  %v12740 = vld [vmem:[%s12734 + $0x14] sm:$0xf]
  %v12741 = vld [vmem:[%s12734 + $0x18] sm:$0xf]
  %v12742 = vld [vmem:[%s12734 + $0x1c] sm:$0xf]
  %v12743 = vld [vmem:[%s12734 + $0x20] sm:$0xf]
  %v12744 = vld [vmem:[%s12734 + $0x24] sm:$0xf]
  %v12745 = vld [vmem:[%s12734 + $0x28] sm:$0xf]
  %v12746 = vld [vmem:[%s12734 + $0x2c] sm:$0xf]
  %v12747 = vld [vmem:[%s12734 + $0x30] sm:$0xf]
  %v12748 = vld [vmem:[%s12734 + $0x34] sm:$0xf]
  %v12749 = vld [vmem:[%s12734 + $0x38] sm:$0xf]
  %v12750 = vld [vmem:[%s12734 + $0x3c] sm:$0xf]
  %v12767 = vunpack.c.l.b16 %v12735
  %v12768 = vunpack.c.l.b16 %v12736
  %v12769 = vunpack.c.l.b16 %v12737
  %v12770 = vunpack.c.l.b16 %v12738
  %v12771 = vunpack.c.l.b16 %v12739
  %v12772 = vunpack.c.l.b16 %v12740
  %v12773 = vunpack.c.l.b16 %v12741
  %v12774 = vunpack.c.l.b16 %v12742
  %v12775 = vunpack.c.l.b16 %v12743
  %v12776 = vunpack.c.l.b16 %v12744
  %v12777 = vunpack.c.l.b16 %v12745
  %v12778 = vunpack.c.l.b16 %v12746
  %v12779 = vunpack.c.l.b16 %v12747
  %v12780 = vunpack.c.l.b16 %v12748
  %v12781 = vunpack.c.l.b16 %v12749
  %v12782 = vunpack.c.l.b16 %v12750
  %v12783 = vpack.c.b16 %v12768, %v12767
  %v12784 = vpack.c.b16 %v12770, %v12769
  %v12785 = vpack.c.b16 %v12772, %v12771
  %v12786 = vpack.c.b16 %v12774, %v12773
  %v12787 = vpack.c.b16 %v12776, %v12775
  %v12788 = vpack.c.b16 %v12778, %v12777
  %v12789 = vpack.c.b16 %v12780, %v12779
  %v12790 = vpack.c.b16 %v12782, %v12781
  %12799 = vmatpush.bf16.msra.mxu0 %v12790
  %12800 = vmatpush.bf16.msra.mxu0 %v12789
  %12801 = vmatpush.bf16.msra.mxu0 %v12788
  %12802 = vmatpush.bf16.msra.mxu0 %v12787
  %12803 = vmatpush.bf16.msra.mxu0 %v12786
  %12804 = vmatpush.bf16.msra.mxu0 %v12785
  %12805 = vmatpush.bf16.msra.mxu0 %v12784
  %12806 = vmatpush.bf16.msra.mxu0 %v12783
  %12807 = vmatmul.bf16.gmra.mxu0 %v12733
  %v12808 = vpop.f32.mrf.mxu0
  %v12809 = vadd.f32 0.0, %v12808
  %v12810 = vpop.f32.mrf.mxu0
  %12811 = vdwg.mxu0
  %v12812 = vadd.f32 %v12715, %v12809
  %s12813 = scalar_lea.vmem %s12, 12
  %v12814 = vld [vmem:[%s12813] sm:$0xf]
  %12815 = vmatpush.bf16.msra.mxu0 %v12531
  %12816 = vmatpush.bf16.msra.mxu0 %v12530
  %12817 = vmatpush.bf16.msra.mxu0 %v12529
  %12818 = vmatpush.bf16.msra.mxu0 %v12528
  %12819 = vmatpush.bf16.msra.mxu0 %v12527
  %12820 = vmatpush.bf16.msra.mxu0 %v12526
  %12821 = vmatpush.bf16.msra.mxu0 %v12525
  %12822 = vmatpush.bf16.msra.mxu0 %v12524
  %12823 = vmatmul.bf16.gmra.mxu0 %v12814
  %v12824 = vpop.f32.mrf.mxu0
  %v12825 = vadd.f32 0.0, %v12824
  %v12826 = vpop.f32.mrf.mxu0
  %12827 = vdwg.mxu0
  %v12828 = vpack.c.bf16 %v12825, %v12825
  %s12829 = scalar_lea.vmem %s13, 192
  %v12830 = vld [vmem:[%s12829] sm:$0xf]
  %v12831 = vld [vmem:[%s12829 + $0x4] sm:$0xf]
  %v12832 = vld [vmem:[%s12829 + $0x8] sm:$0xf]
  %v12833 = vld [vmem:[%s12829 + $0xc] sm:$0xf]
  %v12834 = vld [vmem:[%s12829 + $0x10] sm:$0xf]
  %v12835 = vld [vmem:[%s12829 + $0x14] sm:$0xf]
  %v12836 = vld [vmem:[%s12829 + $0x18] sm:$0xf]
  %v12837 = vld [vmem:[%s12829 + $0x1c] sm:$0xf]
  %v12838 = vld [vmem:[%s12829 + $0x20] sm:$0xf]
  %v12839 = vld [vmem:[%s12829 + $0x24] sm:$0xf]
  %v12840 = vld [vmem:[%s12829 + $0x28] sm:$0xf]
  %v12841 = vld [vmem:[%s12829 + $0x2c] sm:$0xf]
  %v12842 = vld [vmem:[%s12829 + $0x30] sm:$0xf]
  %v12843 = vld [vmem:[%s12829 + $0x34] sm:$0xf]
  %v12844 = vld [vmem:[%s12829 + $0x38] sm:$0xf]
  %v12845 = vld [vmem:[%s12829 + $0x3c] sm:$0xf]
  %v12862 = vunpack.c.l.b16 %v12830
  %v12863 = vunpack.c.l.b16 %v12831
  %v12864 = vunpack.c.l.b16 %v12832
  %v12865 = vunpack.c.l.b16 %v12833
  %v12866 = vunpack.c.l.b16 %v12834
  %v12867 = vunpack.c.l.b16 %v12835
  %v12868 = vunpack.c.l.b16 %v12836
  %v12869 = vunpack.c.l.b16 %v12837
  %v12870 = vunpack.c.l.b16 %v12838
  %v12871 = vunpack.c.l.b16 %v12839
  %v12872 = vunpack.c.l.b16 %v12840
  %v12873 = vunpack.c.l.b16 %v12841
  %v12874 = vunpack.c.l.b16 %v12842
  %v12875 = vunpack.c.l.b16 %v12843
  %v12876 = vunpack.c.l.b16 %v12844
  %v12877 = vunpack.c.l.b16 %v12845
  %v12878 = vpack.c.b16 %v12863, %v12862
  %v12879 = vpack.c.b16 %v12865, %v12864
  %v12880 = vpack.c.b16 %v12867, %v12866
  %v12881 = vpack.c.b16 %v12869, %v12868
  %v12882 = vpack.c.b16 %v12871, %v12870
  %v12883 = vpack.c.b16 %v12873, %v12872
  %v12884 = vpack.c.b16 %v12875, %v12874
  %v12885 = vpack.c.b16 %v12877, %v12876
  %12894 = vmatpush.bf16.msra.mxu0 %v12885
  %12895 = vmatpush.bf16.msra.mxu0 %v12884
  %12896 = vmatpush.bf16.msra.mxu0 %v12883
  %12897 = vmatpush.bf16.msra.mxu0 %v12882
  %12898 = vmatpush.bf16.msra.mxu0 %v12881
  %12899 = vmatpush.bf16.msra.mxu0 %v12880
  %12900 = vmatpush.bf16.msra.mxu0 %v12879
  %12901 = vmatpush.bf16.msra.mxu0 %v12878
  %12902 = vmatmul.bf16.gmra.mxu0 %v12828
  %v12903 = vpop.f32.mrf.mxu0
  %v12904 = vadd.f32 0.0, %v12903
  %v12905 = vpop.f32.mrf.mxu0
  %12906 = vdwg.mxu0
  %v12907 = vadd.f32 %v12812, %v12904
  %s12908 = scalar_lea.vmem %s12, 16
  %v12909 = vld [vmem:[%s12908] sm:$0xf]
  %12910 = vmatpush.bf16.msra.mxu0 %v12531
  %12911 = vmatpush.bf16.msra.mxu0 %v12530
  %12912 = vmatpush.bf16.msra.mxu0 %v12529
  %12913 = vmatpush.bf16.msra.mxu0 %v12528
  %12914 = vmatpush.bf16.msra.mxu0 %v12527
  %12915 = vmatpush.bf16.msra.mxu0 %v12526
  %12916 = vmatpush.bf16.msra.mxu0 %v12525
  %12917 = vmatpush.bf16.msra.mxu0 %v12524
  %12918 = vmatmul.bf16.gmra.mxu0 %v12909
  %v12919 = vpop.f32.mrf.mxu0
  %v12920 = vadd.f32 0.0, %v12919
  %v12921 = vpop.f32.mrf.mxu0
  %12922 = vdwg.mxu0
  %v12923 = vpack.c.bf16 %v12920, %v12920
  %s12924 = scalar_lea.vmem %s13, 256
  %v12925 = vld [vmem:[%s12924] sm:$0xf]
  %v12926 = vld [vmem:[%s12924 + $0x4] sm:$0xf]
  %v12927 = vld [vmem:[%s12924 + $0x8] sm:$0xf]
  %v12928 = vld [vmem:[%s12924 + $0xc] sm:$0xf]
  %v12929 = vld [vmem:[%s12924 + $0x10] sm:$0xf]
  %v12930 = vld [vmem:[%s12924 + $0x14] sm:$0xf]
  %v12931 = vld [vmem:[%s12924 + $0x18] sm:$0xf]
  %v12932 = vld [vmem:[%s12924 + $0x1c] sm:$0xf]
  %v12933 = vld [vmem:[%s12924 + $0x20] sm:$0xf]
  %v12934 = vld [vmem:[%s12924 + $0x24] sm:$0xf]
  %v12935 = vld [vmem:[%s12924 + $0x28] sm:$0xf]
  %v12936 = vld [vmem:[%s12924 + $0x2c] sm:$0xf]
  %v12937 = vld [vmem:[%s12924 + $0x30] sm:$0xf]
  %v12938 = vld [vmem:[%s12924 + $0x34] sm:$0xf]
  %v12939 = vld [vmem:[%s12924 + $0x38] sm:$0xf]
  %v12940 = vld [vmem:[%s12924 + $0x3c] sm:$0xf]
  %v12957 = vunpack.c.l.b16 %v12925
  %v12958 = vunpack.c.l.b16 %v12926
  %v12959 = vunpack.c.l.b16 %v12927
  %v12960 = vunpack.c.l.b16 %v12928
  %v12961 = vunpack.c.l.b16 %v12929
  %v12962 = vunpack.c.l.b16 %v12930
  %v12963 = vunpack.c.l.b16 %v12931
  %v12964 = vunpack.c.l.b16 %v12932
  %v12965 = vunpack.c.l.b16 %v12933
  %v12966 = vunpack.c.l.b16 %v12934
  %v12967 = vunpack.c.l.b16 %v12935
  %v12968 = vunpack.c.l.b16 %v12936
  %v12969 = vunpack.c.l.b16 %v12937
  %v12970 = vunpack.c.l.b16 %v12938
  %v12971 = vunpack.c.l.b16 %v12939
  %v12972 = vunpack.c.l.b16 %v12940
  %v12973 = vpack.c.b16 %v12958, %v12957
  %v12974 = vpack.c.b16 %v12960, %v12959
  %v12975 = vpack.c.b16 %v12962, %v12961
  %v12976 = vpack.c.b16 %v12964, %v12963
  %v12977 = vpack.c.b16 %v12966, %v12965
  %v12978 = vpack.c.b16 %v12968, %v12967
  %v12979 = vpack.c.b16 %v12970, %v12969
  %v12980 = vpack.c.b16 %v12972, %v12971
  %12989 = vmatpush.bf16.msra.mxu0 %v12980
  %12990 = vmatpush.bf16.msra.mxu0 %v12979
  %12991 = vmatpush.bf16.msra.mxu0 %v12978
  %12992 = vmatpush.bf16.msra.mxu0 %v12977
  %12993 = vmatpush.bf16.msra.mxu0 %v12976
  %12994 = vmatpush.bf16.msra.mxu0 %v12975
  %12995 = vmatpush.bf16.msra.mxu0 %v12974
  %12996 = vmatpush.bf16.msra.mxu0 %v12973
  %12997 = vmatmul.bf16.gmra.mxu0 %v12923
  %v12998 = vpop.f32.mrf.mxu0
  %v12999 = vadd.f32 0.0, %v12998
  %v13000 = vpop.f32.mrf.mxu0
  %13001 = vdwg.mxu0
  %v13002 = vadd.f32 %v12907, %v12999
  %s13003 = scalar_lea.vmem %s12, 20
  %v13004 = vld [vmem:[%s13003] sm:$0xf]
  %13005 = vmatpush.bf16.msra.mxu0 %v12531
  %13006 = vmatpush.bf16.msra.mxu0 %v12530
  %13007 = vmatpush.bf16.msra.mxu0 %v12529
  %13008 = vmatpush.bf16.msra.mxu0 %v12528
  %13009 = vmatpush.bf16.msra.mxu0 %v12527
  %13010 = vmatpush.bf16.msra.mxu0 %v12526
  %13011 = vmatpush.bf16.msra.mxu0 %v12525
  %13012 = vmatpush.bf16.msra.mxu0 %v12524
  %13013 = vmatmul.bf16.gmra.mxu0 %v13004
  %v13014 = vpop.f32.mrf.mxu0
  %v13015 = vadd.f32 0.0, %v13014
  %v13016 = vpop.f32.mrf.mxu0
  %13017 = vdwg.mxu0
  %v13018 = vpack.c.bf16 %v13015, %v13015
  %s13019 = scalar_lea.vmem %s13, 320
  %v13020 = vld [vmem:[%s13019] sm:$0xf]
  %v13021 = vld [vmem:[%s13019 + $0x4] sm:$0xf]
  %v13022 = vld [vmem:[%s13019 + $0x8] sm:$0xf]
  %v13023 = vld [vmem:[%s13019 + $0xc] sm:$0xf]
  %v13024 = vld [vmem:[%s13019 + $0x10] sm:$0xf]
  %v13025 = vld [vmem:[%s13019 + $0x14] sm:$0xf]
  %v13026 = vld [vmem:[%s13019 + $0x18] sm:$0xf]
  %v13027 = vld [vmem:[%s13019 + $0x1c] sm:$0xf]
  %v13028 = vld [vmem:[%s13019 + $0x20] sm:$0xf]
  %v13029 = vld [vmem:[%s13019 + $0x24] sm:$0xf]
  %v13030 = vld [vmem:[%s13019 + $0x28] sm:$0xf]
  %v13031 = vld [vmem:[%s13019 + $0x2c] sm:$0xf]
  %v13032 = vld [vmem:[%s13019 + $0x30] sm:$0xf]
  %v13033 = vld [vmem:[%s13019 + $0x34] sm:$0xf]
  %v13034 = vld [vmem:[%s13019 + $0x38] sm:$0xf]
  %v13035 = vld [vmem:[%s13019 + $0x3c] sm:$0xf]
  %v13052 = vunpack.c.l.b16 %v13020
  %v13053 = vunpack.c.l.b16 %v13021
  %v13054 = vunpack.c.l.b16 %v13022
  %v13055 = vunpack.c.l.b16 %v13023
  %v13056 = vunpack.c.l.b16 %v13024
  %v13057 = vunpack.c.l.b16 %v13025
  %v13058 = vunpack.c.l.b16 %v13026
  %v13059 = vunpack.c.l.b16 %v13027
  %v13060 = vunpack.c.l.b16 %v13028
  %v13061 = vunpack.c.l.b16 %v13029
  %v13062 = vunpack.c.l.b16 %v13030
  %v13063 = vunpack.c.l.b16 %v13031
  %v13064 = vunpack.c.l.b16 %v13032
  %v13065 = vunpack.c.l.b16 %v13033
  %v13066 = vunpack.c.l.b16 %v13034
  %v13067 = vunpack.c.l.b16 %v13035
  %v13068 = vpack.c.b16 %v13053, %v13052
  %v13069 = vpack.c.b16 %v13055, %v13054
  %v13070 = vpack.c.b16 %v13057, %v13056
  %v13071 = vpack.c.b16 %v13059, %v13058
  %v13072 = vpack.c.b16 %v13061, %v13060
  %v13073 = vpack.c.b16 %v13063, %v13062
  %v13074 = vpack.c.b16 %v13065, %v13064
  %v13075 = vpack.c.b16 %v13067, %v13066
  %13084 = vmatpush.bf16.msra.mxu0 %v13075
  %13085 = vmatpush.bf16.msra.mxu0 %v13074
  %13086 = vmatpush.bf16.msra.mxu0 %v13073
  %13087 = vmatpush.bf16.msra.mxu0 %v13072
  %13088 = vmatpush.bf16.msra.mxu0 %v13071
  %13089 = vmatpush.bf16.msra.mxu0 %v13070
  %13090 = vmatpush.bf16.msra.mxu0 %v13069
  %13091 = vmatpush.bf16.msra.mxu0 %v13068
  %13092 = vmatmul.bf16.gmra.mxu0 %v13018
  %v13093 = vpop.f32.mrf.mxu0
  %v13094 = vadd.f32 0.0, %v13093
  %v13095 = vpop.f32.mrf.mxu0
  %13096 = vdwg.mxu0
  %v13097 = vadd.f32 %v13002, %v13094
  %s13098 = scalar_lea.vmem %s12, 24
  %v13099 = vld [vmem:[%s13098] sm:$0xf]
  %13100 = vmatpush.bf16.msra.mxu0 %v12531
  %13101 = vmatpush.bf16.msra.mxu0 %v12530
  %13102 = vmatpush.bf16.msra.mxu0 %v12529
  %13103 = vmatpush.bf16.msra.mxu0 %v12528
  %13104 = vmatpush.bf16.msra.mxu0 %v12527
  %13105 = vmatpush.bf16.msra.mxu0 %v12526
  %13106 = vmatpush.bf16.msra.mxu0 %v12525
  %13107 = vmatpush.bf16.msra.mxu0 %v12524
  %13108 = vmatmul.bf16.gmra.mxu0 %v13099
  %v13109 = vpop.f32.mrf.mxu0
  %v13110 = vadd.f32 0.0, %v13109
  %v13111 = vpop.f32.mrf.mxu0
  %13112 = vdwg.mxu0
  %v13113 = vpack.c.bf16 %v13110, %v13110
  %s13114 = scalar_lea.vmem %s13, 384
  %v13115 = vld [vmem:[%s13114] sm:$0xf]
  %v13116 = vld [vmem:[%s13114 + $0x4] sm:$0xf]
  %v13117 = vld [vmem:[%s13114 + $0x8] sm:$0xf]
  %v13118 = vld [vmem:[%s13114 + $0xc] sm:$0xf]
  %v13119 = vld [vmem:[%s13114 + $0x10] sm:$0xf]
  %v13120 = vld [vmem:[%s13114 + $0x14] sm:$0xf]
  %v13121 = vld [vmem:[%s13114 + $0x18] sm:$0xf]
  %v13122 = vld [vmem:[%s13114 + $0x1c] sm:$0xf]
  %v13123 = vld [vmem:[%s13114 + $0x20] sm:$0xf]
  %v13124 = vld [vmem:[%s13114 + $0x24] sm:$0xf]
  %v13125 = vld [vmem:[%s13114 + $0x28] sm:$0xf]
  %v13126 = vld [vmem:[%s13114 + $0x2c] sm:$0xf]
  %v13127 = vld [vmem:[%s13114 + $0x30] sm:$0xf]
  %v13128 = vld [vmem:[%s13114 + $0x34] sm:$0xf]
  %v13129 = vld [vmem:[%s13114 + $0x38] sm:$0xf]
  %v13130 = vld [vmem:[%s13114 + $0x3c] sm:$0xf]
  %v13147 = vunpack.c.l.b16 %v13115
  %v13148 = vunpack.c.l.b16 %v13116
  %v13149 = vunpack.c.l.b16 %v13117
  %v13150 = vunpack.c.l.b16 %v13118
  %v13151 = vunpack.c.l.b16 %v13119
  %v13152 = vunpack.c.l.b16 %v13120
  %v13153 = vunpack.c.l.b16 %v13121
  %v13154 = vunpack.c.l.b16 %v13122
  %v13155 = vunpack.c.l.b16 %v13123
  %v13156 = vunpack.c.l.b16 %v13124
  %v13157 = vunpack.c.l.b16 %v13125
  %v13158 = vunpack.c.l.b16 %v13126
  %v13159 = vunpack.c.l.b16 %v13127
  %v13160 = vunpack.c.l.b16 %v13128
  %v13161 = vunpack.c.l.b16 %v13129
  %v13162 = vunpack.c.l.b16 %v13130
  %v13163 = vpack.c.b16 %v13148, %v13147
  %v13164 = vpack.c.b16 %v13150, %v13149
  %v13165 = vpack.c.b16 %v13152, %v13151
  %v13166 = vpack.c.b16 %v13154, %v13153
  %v13167 = vpack.c.b16 %v13156, %v13155
  %v13168 = vpack.c.b16 %v13158, %v13157
  %v13169 = vpack.c.b16 %v13160, %v13159
  %v13170 = vpack.c.b16 %v13162, %v13161
  %13179 = vmatpush.bf16.msra.mxu0 %v13170
  %13180 = vmatpush.bf16.msra.mxu0 %v13169
  %13181 = vmatpush.bf16.msra.mxu0 %v13168
  %13182 = vmatpush.bf16.msra.mxu0 %v13167
  %13183 = vmatpush.bf16.msra.mxu0 %v13166
  %13184 = vmatpush.bf16.msra.mxu0 %v13165
  %13185 = vmatpush.bf16.msra.mxu0 %v13164
  %13186 = vmatpush.bf16.msra.mxu0 %v13163
  %13187 = vmatmul.bf16.gmra.mxu0 %v13113
  %v13188 = vpop.f32.mrf.mxu0
  %v13189 = vadd.f32 0.0, %v13188
  %v13190 = vpop.f32.mrf.mxu0
  %13191 = vdwg.mxu0
  %v13192 = vadd.f32 %v13097, %v13189
  %s13193 = scalar_lea.vmem %s12, 28
  %v13194 = vld [vmem:[%s13193] sm:$0xf]
  %13195 = vmatpush.bf16.msra.mxu0 %v12531
  %13196 = vmatpush.bf16.msra.mxu0 %v12530
  %13197 = vmatpush.bf16.msra.mxu0 %v12529
  %13198 = vmatpush.bf16.msra.mxu0 %v12528
  %13199 = vmatpush.bf16.msra.mxu0 %v12527
  %13200 = vmatpush.bf16.msra.mxu0 %v12526
  %13201 = vmatpush.bf16.msra.mxu0 %v12525
  %13202 = vmatpush.bf16.msra.mxu0 %v12524
  %13203 = vmatmul.bf16.gmra.mxu0 %v13194
  %v13204 = vpop.f32.mrf.mxu0
  %v13205 = vadd.f32 0.0, %v13204
  %v13206 = vpop.f32.mrf.mxu0
  %13207 = vdwg.mxu0
  %v13208 = vpack.c.bf16 %v13205, %v13205
  %s13209 = scalar_lea.vmem %s13, 448
  %v13210 = vld [vmem:[%s13209] sm:$0xf]
  %v13211 = vld [vmem:[%s13209 + $0x4] sm:$0xf]
  %v13212 = vld [vmem:[%s13209 + $0x8] sm:$0xf]
  %v13213 = vld [vmem:[%s13209 + $0xc] sm:$0xf]
  %v13214 = vld [vmem:[%s13209 + $0x10] sm:$0xf]
  %v13215 = vld [vmem:[%s13209 + $0x14] sm:$0xf]
  %v13216 = vld [vmem:[%s13209 + $0x18] sm:$0xf]
  %v13217 = vld [vmem:[%s13209 + $0x1c] sm:$0xf]
  %v13218 = vld [vmem:[%s13209 + $0x20] sm:$0xf]
  %v13219 = vld [vmem:[%s13209 + $0x24] sm:$0xf]
  %v13220 = vld [vmem:[%s13209 + $0x28] sm:$0xf]
  %v13221 = vld [vmem:[%s13209 + $0x2c] sm:$0xf]
  %v13222 = vld [vmem:[%s13209 + $0x30] sm:$0xf]
  %v13223 = vld [vmem:[%s13209 + $0x34] sm:$0xf]
  %v13224 = vld [vmem:[%s13209 + $0x38] sm:$0xf]
  %v13225 = vld [vmem:[%s13209 + $0x3c] sm:$0xf]
  %v13242 = vunpack.c.l.b16 %v13210
  %v13243 = vunpack.c.l.b16 %v13211
  %v13244 = vunpack.c.l.b16 %v13212
  %v13245 = vunpack.c.l.b16 %v13213
  %v13246 = vunpack.c.l.b16 %v13214
  %v13247 = vunpack.c.l.b16 %v13215
  %v13248 = vunpack.c.l.b16 %v13216
  %v13249 = vunpack.c.l.b16 %v13217
  %v13250 = vunpack.c.l.b16 %v13218
  %v13251 = vunpack.c.l.b16 %v13219
  %v13252 = vunpack.c.l.b16 %v13220
  %v13253 = vunpack.c.l.b16 %v13221
  %v13254 = vunpack.c.l.b16 %v13222
  %v13255 = vunpack.c.l.b16 %v13223
  %v13256 = vunpack.c.l.b16 %v13224
  %v13257 = vunpack.c.l.b16 %v13225
  %v13258 = vpack.c.b16 %v13243, %v13242
  %v13259 = vpack.c.b16 %v13245, %v13244
  %v13260 = vpack.c.b16 %v13247, %v13246
  %v13261 = vpack.c.b16 %v13249, %v13248
  %v13262 = vpack.c.b16 %v13251, %v13250
  %v13263 = vpack.c.b16 %v13253, %v13252
  %v13264 = vpack.c.b16 %v13255, %v13254
  %v13265 = vpack.c.b16 %v13257, %v13256
  %13274 = vmatpush.bf16.msra.mxu0 %v13265
  %13275 = vmatpush.bf16.msra.mxu0 %v13264
  %13276 = vmatpush.bf16.msra.mxu0 %v13263
  %13277 = vmatpush.bf16.msra.mxu0 %v13262
  %13278 = vmatpush.bf16.msra.mxu0 %v13261
  %13279 = vmatpush.bf16.msra.mxu0 %v13260
  %13280 = vmatpush.bf16.msra.mxu0 %v13259
  %13281 = vmatpush.bf16.msra.mxu0 %v13258
  %13282 = vmatmul.bf16.gmra.mxu0 %v13208
  %v13283 = vpop.f32.mrf.mxu0
  %v13284 = vadd.f32 0.0, %v13283
  %v13285 = vpop.f32.mrf.mxu0
  %13286 = vdwg.mxu0
  %v13287 = vadd.f32 %v13192, %v13284
  %s13288 = scalar_lea.vmem %s12, 32
  %v13289 = vld [vmem:[%s13288] sm:$0xf]
  %13290 = vmatpush.bf16.msra.mxu0 %v12531
  %13291 = vmatpush.bf16.msra.mxu0 %v12530
  %13292 = vmatpush.bf16.msra.mxu0 %v12529
  %13293 = vmatpush.bf16.msra.mxu0 %v12528
  %13294 = vmatpush.bf16.msra.mxu0 %v12527
  %13295 = vmatpush.bf16.msra.mxu0 %v12526
  %13296 = vmatpush.bf16.msra.mxu0 %v12525
  %13297 = vmatpush.bf16.msra.mxu0 %v12524
  %13298 = vmatmul.bf16.gmra.mxu0 %v13289
  %v13299 = vpop.f32.mrf.mxu0
  %v13300 = vadd.f32 0.0, %v13299
  %v13301 = vpop.f32.mrf.mxu0
  %13302 = vdwg.mxu0
  %v13303 = vpack.c.bf16 %v13300, %v13300
  %s13304 = scalar_lea.vmem %s13, 512
  %v13305 = vld [vmem:[%s13304] sm:$0xf]
  %v13306 = vld [vmem:[%s13304 + $0x4] sm:$0xf]
  %v13307 = vld [vmem:[%s13304 + $0x8] sm:$0xf]
  %v13308 = vld [vmem:[%s13304 + $0xc] sm:$0xf]
  %v13309 = vld [vmem:[%s13304 + $0x10] sm:$0xf]
  %v13310 = vld [vmem:[%s13304 + $0x14] sm:$0xf]
  %v13311 = vld [vmem:[%s13304 + $0x18] sm:$0xf]
  %v13312 = vld [vmem:[%s13304 + $0x1c] sm:$0xf]
  %v13313 = vld [vmem:[%s13304 + $0x20] sm:$0xf]
  %v13314 = vld [vmem:[%s13304 + $0x24] sm:$0xf]
  %v13315 = vld [vmem:[%s13304 + $0x28] sm:$0xf]
  %v13316 = vld [vmem:[%s13304 + $0x2c] sm:$0xf]
  %v13317 = vld [vmem:[%s13304 + $0x30] sm:$0xf]
  %v13318 = vld [vmem:[%s13304 + $0x34] sm:$0xf]
  %v13319 = vld [vmem:[%s13304 + $0x38] sm:$0xf]
  %v13320 = vld [vmem:[%s13304 + $0x3c] sm:$0xf]
  %v13337 = vunpack.c.l.b16 %v13305
  %v13338 = vunpack.c.l.b16 %v13306
  %v13339 = vunpack.c.l.b16 %v13307
  %v13340 = vunpack.c.l.b16 %v13308
  %v13341 = vunpack.c.l.b16 %v13309
  %v13342 = vunpack.c.l.b16 %v13310
  %v13343 = vunpack.c.l.b16 %v13311
  %v13344 = vunpack.c.l.b16 %v13312
  %v13345 = vunpack.c.l.b16 %v13313
  %v13346 = vunpack.c.l.b16 %v13314
  %v13347 = vunpack.c.l.b16 %v13315
  %v13348 = vunpack.c.l.b16 %v13316
  %v13349 = vunpack.c.l.b16 %v13317
  %v13350 = vunpack.c.l.b16 %v13318
  %v13351 = vunpack.c.l.b16 %v13319
  %v13352 = vunpack.c.l.b16 %v13320
  %v13353 = vpack.c.b16 %v13338, %v13337
  %v13354 = vpack.c.b16 %v13340, %v13339
  %v13355 = vpack.c.b16 %v13342, %v13341
  %v13356 = vpack.c.b16 %v13344, %v13343
  %v13357 = vpack.c.b16 %v13346, %v13345
  %v13358 = vpack.c.b16 %v13348, %v13347
  %v13359 = vpack.c.b16 %v13350, %v13349
  %v13360 = vpack.c.b16 %v13352, %v13351
  %13369 = vmatpush.bf16.msra.mxu0 %v13360
  %13370 = vmatpush.bf16.msra.mxu0 %v13359
  %13371 = vmatpush.bf16.msra.mxu0 %v13358
  %13372 = vmatpush.bf16.msra.mxu0 %v13357
  %13373 = vmatpush.bf16.msra.mxu0 %v13356
  %13374 = vmatpush.bf16.msra.mxu0 %v13355
  %13375 = vmatpush.bf16.msra.mxu0 %v13354
  %13376 = vmatpush.bf16.msra.mxu0 %v13353
  %13377 = vmatmul.bf16.gmra.mxu0 %v13303
  %v13378 = vpop.f32.mrf.mxu0
  %v13379 = vadd.f32 0.0, %v13378
  %v13380 = vpop.f32.mrf.mxu0
  %13381 = vdwg.mxu0
  %v13382 = vadd.f32 %v13287, %v13379
  %v13383 = vld [vmem:[%s14] sm:$0x1]
  %v13385 = vperm.slane %v13383, 0
  %v13387 = vadd.f32 %v13382, %v13385
  %v13388 = vsub.f32 0.0, %v13387
  %v13389 = vmul.f32 %v13388, 1.442695
  %v13390 = vpow.pop %v13389
  %v13391 = vadd.f32 %v13390, 1.0
  %v13392 = vrcp.pop %v13391
  %13393 = vst [vmem:[%s15] sm:$0xff] %v13392
  // Predicated region
  $region62: #{forward.1} parent=0 // pred_check
    _
  $region63: #{forward.1} parent=0 // pred_check_branch
    %13395 = sbr.rel (0) target = $region65
  $region64: #{forward.1} parent=0 // pred_region
    _
  $region65: #{forward.1} parent=0 // pred_fallthru
    _
  // Predicated region
  $region66: #{forward.1} parent=0 // pred_check
    _
  $region67: #{forward.1} parent=0 // pred_check_branch
    %13397 = sbr.rel (0) target = $region69
  $region68: #{forward.1} parent=0 // pred_region
    _
  $region69: #{forward.1} parent=0 // pred_fallthru
    _

</llo_original>
